<compile_context>
chip_gen: v5e
topology: v5e:2x2
jax: 0.10.0
libtpu: 0.0.40
codegen_flags: <defaults>
</compile_context>

<pallas_src>
import jax
import jax.numpy as jnp
from jax.experimental import pallas as pl
from jax.experimental.pallas import tpu as pltpu

BN_EPS = 1e-5


def fold_bn(gamma, beta, mean, var):
    scale = gamma / jnp.sqrt(var + BN_EPS)
    bias = beta - mean * scale
    return scale.reshape(1, -1), bias.reshape(1, -1)


def basic_block_nhwc(x_nhwc, w1_hwio, w2_hwio, bn1_params, bn2_params):
    """BasicBlock forward (stride=1, identity residual), NHWC input."""
    N, H, W, C = x_nhwc.shape
    Cout = w1_hwio.shape[-1]
    assert Cout == C, "identity residual requires inplanes == planes"

    Wp = W + 2                        # padded row width
    P = (H + 2) * Wp                  # padded image size, flattened row-major
    Q = H * Wp                        # output rows in "shifted flat" coords
    P_pad = ((P + 2 + 7) // 8) * 8    # +2 keeps the bottom-right tap in bounds

    s1, b1 = fold_bn(*bn1_params)
    s2, b2 = fold_bn(*bn2_params)

    # bf16 activations / weights feed the MXU (f32 accumulation).
    xq = x_nhwc.astype(jnp.bfloat16)
    w1 = w1_hwio.astype(jnp.bfloat16).reshape(9, C, Cout)
    w2 = w2_hwio.astype(jnp.bfloat16).reshape(9, Cout, Cout)

    # Single zero-padded, row-flattened input stream.  The residual is read
    # from its interior inside the kernel (center-tap window).
    xp = jnp.pad(xq, ((0, 0), (1, 1), (1, 1), (0, 0))).reshape(N, P, C)
    xp = jnp.pad(xp, ((0, 0), (0, P_pad - P), (0, 0)))

    # 1.0 on real output columns (c < W), 0.0 on the 2 junk columns per row.
    colmask = ((jnp.arange(Q) % Wp) < W).astype(jnp.float32).reshape(Q, 1)

    def kernel(xp_ref, w1_ref, w2_ref, s1_ref, b1_ref, s2_ref, b2_ref,
               mask_ref, o_ref, xin_ref, mid_ref, acc_ref):
        # Stage the bf16 padded input as f32 once; all shifted-tap slicing is
        # then done on f32 (8,128)-tiled data, and operands are cast back to
        # bf16 right at the MXU dot.
        xin_ref[...] = xp_ref[...].astype(jnp.float32)

        # Zero only the top / bottom padding strips of the conv2 scratch; its
        # interior rows [Wp+1, Wp+1+Q) are fully rewritten below (junk
        # columns masked to zero land exactly on the padding columns).
        mid_ref[0:Wp + 1, :] = jnp.zeros((Wp + 1, Cout), jnp.float32)
        mid_ref[Wp + 1 + Q:P_pad, :] = jnp.zeros(
            (P_pad - Wp - 1 - Q, Cout), jnp.float32)

        def conv3x3(src_ref, w_ref):
            # 3x3 / stride-1 / pad-1 conv over the row-padded flat layout:
            # tap (dy, dx) of output row q reads flat row q + dy*Wp + dx, so
            # every tap is one contiguous (Q, C) window — no reshape/relayout.
            for t in range(9):
                dy, dx = divmod(t, 3)
                off = dy * Wp + dx
                a = src_ref[off:off + Q, :].astype(jnp.bfloat16)
                contrib = jnp.dot(a, w_ref[t],
                                  preferred_element_type=jnp.float32)
                if t == 0:
                    acc_ref[...] = contrib
                else:
                    acc_ref[...] += contrib

        # conv1 -> bn1 -> relu, stored into the zero-padded conv2 scratch.
        conv3x3(xin_ref, w1_ref)
        out1 = jnp.maximum(acc_ref[...] * s1_ref[...] + b1_ref[...], 0.0)
        mid_ref[Wp + 1:Wp + 1 + Q, :] = out1 * mask_ref[...]

        # conv2 -> bn2 -> + identity residual (center-tap window) -> relu.
        conv3x3(mid_ref, w2_ref)
        residual = xin_ref[Wp + 1:Wp + 1 + Q, :]
        out2 = acc_ref[...] * s2_ref[...] + b2_ref[...] + residual
        o_ref[...] = jnp.maximum(out2, 0.0).astype(o_ref.dtype)

    out_flat = pl.pallas_call(
        kernel,
        out_shape=jax.ShapeDtypeStruct((N, Q, Cout), jnp.float32),
        grid_spec=pltpu.PrefetchScalarGridSpec(
            num_scalar_prefetch=0,
            grid=(N,),
            in_specs=[
                pl.BlockSpec((None, P_pad, C), lambda n: (n, 0, 0)),
                pl.BlockSpec((9, C, Cout), lambda n: (0, 0, 0)),
                pl.BlockSpec((9, Cout, Cout), lambda n: (0, 0, 0)),
                pl.BlockSpec((1, Cout), lambda n: (0, 0)),
                pl.BlockSpec((1, Cout), lambda n: (0, 0)),
                pl.BlockSpec((1, Cout), lambda n: (0, 0)),
                pl.BlockSpec((1, Cout), lambda n: (0, 0)),
                pl.BlockSpec((Q, 1), lambda n: (0, 0)),
            ],
            out_specs=pl.BlockSpec((None, Q, Cout), lambda n: (n, 0, 0)),
            scratch_shapes=[
                pltpu.VMEM((P_pad, C), jnp.float32),     # staged padded input
                pltpu.VMEM((P_pad, Cout), jnp.float32),  # padded conv1 act.
                pltpu.VMEM((Q, Cout), jnp.float32),      # matmul accumulator
            ],
        ),
        compiler_params=pltpu.CompilerParams(
            dimension_semantics=("parallel",),
            vmem_limit_bytes=32 * 1024 * 1024),
    )(xp, w1, w2, s1, b1, s2, b2, colmask)

    # Drop the two junk columns per row and restore NHWC.
    return out_flat.reshape(N, H, Wp, Cout)[:, :, :W, :]


def basic_block_reference(x_nhwc, w1_hwio, w2_hwio, bn1_params, bn2_params):
    """Pure-JAX reference mirroring the kernel's bf16 matmul-input rounding."""
    def bf(a):
        return a.astype(jnp.bfloat16).astype(jnp.float32)

    def conv(x, w):
        return jax.lax.conv_general_dilated(
            x, w, window_strides=(1, 1), padding="SAME",
            dimension_numbers=("NHWC", "HWIO", "NHWC"))

    s1, b1 = fold_bn(*bn1_params)
    s2, b2 = fold_bn(*bn2_params)
    xq = bf(x_nhwc)
    out = conv(xq, bf(w1_hwio)) * s1[0] + b1[0]
    out = jnp.maximum(out, 0.0)
    out = conv(bf(out), bf(w2_hwio)) * s2[0] + b2[0]
    return jnp.maximum(out + xq, 0.0)


if __name__ == "__main__":
    # Small shapes consistent with BasicBlock(inplanes=8, planes=8, stride=1).
    N, C, H, W = 2, 8, 16, 16

    key = jax.random.PRNGKey(0)
    (k_x, k_w1, k_w2, k_g1, k_b1, k_g2, k_b2,
     k_m1, k_v1, k_m2, k_v2) = jax.random.split(key, 11)

    # Input in PyTorch NCHW convention, converted to NHWC for the kernel.
    x_nchw = jax.random.normal(k_x, (N, C, H, W), jnp.float32)
    x_nhwc = jnp.transpose(x_nchw, (0, 2, 3, 1))

    # Synthetic parameters; conv weights generated directly in HWIO
    # (equivalent to PyTorch OIHW up to the storage layout).
    w1 = jax.random.normal(k_w1, (3, 3, C, C), jnp.float32) * 0.1
    w2 = jax.random.normal(k_w2, (3, 3, C, C), jnp.float32) * 0.1
    bn1 = (1.0 + 0.1 * jax.random.normal(k_g1, (C,), jnp.float32),   # gamma
           0.1 * jax.random.normal(k_b1, (C,), jnp.float32),         # beta
           0.05 * jax.random.normal(k_m1, (C,), jnp.float32),        # mean
           1.0 + 0.1 * jnp.abs(jax.random.normal(k_v1, (C,), jnp.float32)))
    bn2 = (1.0 + 0.1 * jax.random.normal(k_g2, (C,), jnp.float32),
           0.1 * jax.random.normal(k_b2, (C,), jnp.float32),
           0.05 * jax.random.normal(k_m2, (C,), jnp.float32),
           1.0 + 0.1 * jnp.abs(jax.random.normal(k_v2, (C,), jnp.float32)))

    out = basic_block_nhwc(x_nhwc, w1, w2, bn1, bn2)
    out = jax.block_until_ready(out)

    ref = basic_block_reference(x_nhwc, w1, w2, bn1, bn2)
    assert out.shape == (N, H, W, C)
    err = float(jnp.max(jnp.abs(out - ref)))
    assert jnp.allclose(out, ref, atol=2e-3, rtol=2e-3), f"max abs err = {err}"

    # Back to NCHW to match the PyTorch module's output convention.
    out_nchw = jnp.transpose(out, (0, 3, 1, 2))
    jax.block_until_ready(out_nchw)
    print("KERNEL_OK")
</pallas_src>

<mosaic_0001>
module attributes {stable_mosaic.version = 11 : i64} {
  func.func @kernel(%arg0: i32, %arg1: memref<1x328x8xbf16, #tpu.memory_space<vmem>>, %arg2: memref<9x8x8xbf16, #tpu.memory_space<vmem>>, %arg3: memref<9x8x8xbf16, #tpu.memory_space<vmem>>, %arg4: memref<1x8xf32, #tpu.memory_space<vmem>>, %arg5: memref<1x8xf32, #tpu.memory_space<vmem>>, %arg6: memref<1x8xf32, #tpu.memory_space<vmem>>, %arg7: memref<1x8xf32, #tpu.memory_space<vmem>>, %arg8: memref<288x1xf32, #tpu.memory_space<vmem>>, %arg9: memref<1x288x8xf32, #tpu.memory_space<vmem>>, %arg10: memref<328x8xf32, #tpu.memory_space<vmem>>, %arg11: memref<328x8xf32, #tpu.memory_space<vmem>>, %arg12: memref<288x8xf32, #tpu.memory_space<vmem>>) attributes {dimension_semantics = [#tpu.dimension_semantics<parallel>], iteration_bounds = array<i64: 2>, scalar_prefetch = 0 : i64, scratch_operands = 3 : i64, tpu.core_type = #tpu.core_type<tc>, window_params = [{transform_indices = @transform_0, window_bounds = array<i64: 1, 328, 8>}, {pipeline_mode = #tpu.pipeline_mode<synchronous>, transform_indices = @transform_1, window_bounds = array<i64: 9, 8, 8>}, {pipeline_mode = #tpu.pipeline_mode<synchronous>, transform_indices = @transform_2, window_bounds = array<i64: 9, 8, 8>}, {pipeline_mode = #tpu.pipeline_mode<synchronous>, transform_indices = @transform_3, window_bounds = array<i64: 1, 8>}, {pipeline_mode = #tpu.pipeline_mode<synchronous>, transform_indices = @transform_4, window_bounds = array<i64: 1, 8>}, {pipeline_mode = #tpu.pipeline_mode<synchronous>, transform_indices = @transform_5, window_bounds = array<i64: 1, 8>}, {pipeline_mode = #tpu.pipeline_mode<synchronous>, transform_indices = @transform_6, window_bounds = array<i64: 1, 8>}, {pipeline_mode = #tpu.pipeline_mode<synchronous>, transform_indices = @transform_7, window_bounds = array<i64: 288, 1>}, {transform_indices = @transform_8, window_bounds = array<i64: 1, 288, 8>}]} {
    %c0 = arith.constant 0 : index
    %c0_0 = arith.constant 0 : index
    %c0_1 = arith.constant 0 : index
    %0 = vector.load %arg1[%c0, %c0_0, %c0_1] : memref<1x328x8xbf16, #tpu.memory_space<vmem>>, vector<1x328x8xbf16>
    %1 = vector.shape_cast %0 : vector<1x328x8xbf16> to vector<328x8xbf16>
    %2 = arith.extf %1 : vector<328x8xbf16> to vector<328x8xf32>
    %c0_2 = arith.constant 0 : index
    %c0_3 = arith.constant 0 : index
    %3 = vector.load %arg10[%c0_2, %c0_3] : memref<328x8xf32, #tpu.memory_space<vmem>>, vector<328x8xf32>
    tpu.vector_store %arg10[%c0_2, %c0_3], %2 {strides = array<i32>} : memref<328x8xf32, #tpu.memory_space<vmem>>, vector<328x8xf32>,
    %cst = arith.constant 0.000000e+00 : f32
    %4 = vector.broadcast %cst : f32 to vector<19x8xf32>
    %c0_4 = arith.constant 0 : index
    %c0_5 = arith.constant 0 : index
    %5 = vector.load %arg11[%c0_4, %c0_5] : memref<328x8xf32, #tpu.memory_space<vmem>>, vector<19x8xf32>
    tpu.vector_store %arg11[%c0_4, %c0_5], %4 {strides = array<i32>} : memref<328x8xf32, #tpu.memory_space<vmem>>, vector<19x8xf32>,
    %cst_6 = arith.constant 0.000000e+00 : f32
    %6 = vector.broadcast %cst_6 : f32 to vector<21x8xf32>
    %c307 = arith.constant 307 : index
    %c0_7 = arith.constant 0 : index
    %7 = vector.load %arg11[%c307, %c0_7] : memref<328x8xf32, #tpu.memory_space<vmem>>, vector<21x8xf32>
    tpu.vector_store %arg11[%c307, %c0_7], %6 {strides = array<i32>} : memref<328x8xf32, #tpu.memory_space<vmem>>, vector<21x8xf32>,
    %c0_8 = arith.constant 0 : index
    %c0_9 = arith.constant 0 : index
    %8 = vector.load %arg10[%c0_8, %c0_9] : memref<328x8xf32, #tpu.memory_space<vmem>>, vector<288x8xf32>
    %9 = arith.truncf %8 : vector<288x8xf32> to vector<288x8xbf16>
    %c0_10 = arith.constant 0 : index
    %c0_11 = arith.constant 0 : index
    %c0_12 = arith.constant 0 : index
    %10 = vector.load %arg2[%c0_10, %c0_11, %c0_12] : memref<9x8x8xbf16, #tpu.memory_space<vmem>>, vector<1x8x8xbf16>
    %11 = vector.shape_cast %10 : vector<1x8x8xbf16> to vector<8x8xbf16>
    %cst_13 = arith.constant dense<0.000000e+00> : vector<288x8xf32>
    %12 = tpu.matmul %9, %11, %cst_13 {dimension_numbers = #tpu.dot_dimension_numbers<[1], [0], [0], [1], [0, 0, 1, 1], [], []>} : vector<288x8xbf16>, vector<8x8xbf16>, vector<288x8xf32> -> vector<288x8xf32>
    %c0_14 = arith.constant 0 : index
    %c0_15 = arith.constant 0 : index
    %13 = vector.load %arg12[%c0_14, %c0_15] : memref<288x8xf32, #tpu.memory_space<vmem>>, vector<288x8xf32>
    tpu.vector_store %arg12[%c0_14, %c0_15], %12 {strides = array<i32>} : memref<288x8xf32, #tpu.memory_space<vmem>>, vector<288x8xf32>,
    %c1 = arith.constant 1 : index
    %c0_16 = arith.constant 0 : index
    %14 = vector.load %arg10[%c1, %c0_16] : memref<328x8xf32, #tpu.memory_space<vmem>>, vector<288x8xf32>
    %15 = arith.truncf %14 : vector<288x8xf32> to vector<288x8xbf16>
    %c1_17 = arith.constant 1 : index
    %c0_18 = arith.constant 0 : index
    %c0_19 = arith.constant 0 : index
    %16 = vector.load %arg2[%c1_17, %c0_18, %c0_19] : memref<9x8x8xbf16, #tpu.memory_space<vmem>>, vector<1x8x8xbf16>
    %17 = vector.shape_cast %16 : vector<1x8x8xbf16> to vector<8x8xbf16>
    %cst_20 = arith.constant dense<0.000000e+00> : vector<288x8xf32>
    %18 = tpu.matmul %15, %17, %cst_20 {dimension_numbers = #tpu.dot_dimension_numbers<[1], [0], [0], [1], [0, 0, 1, 1], [], []>} : vector<288x8xbf16>, vector<8x8xbf16>, vector<288x8xf32> -> vector<288x8xf32>
    %c0_21 = arith.constant 0 : index
    %c0_22 = arith.constant 0 : index
    %19 = vector.load %arg12[%c0_21, %c0_22] : memref<288x8xf32, #tpu.memory_space<vmem>>, vector<288x8xf32>
    %20 = arith.addf %19, %18 : vector<288x8xf32>
    %c0_23 = arith.constant 0 : index
    %c0_24 = arith.constant 0 : index
    %21 = vector.load %arg12[%c0_23, %c0_24] : memref<288x8xf32, #tpu.memory_space<vmem>>, vector<288x8xf32>
    tpu.vector_store %arg12[%c0_23, %c0_24], %20 {strides = array<i32>} : memref<288x8xf32, #tpu.memory_space<vmem>>, vector<288x8xf32>,
    %c2 = arith.constant 2 : index
    %c0_25 = arith.constant 0 : index
    %22 = vector.load %arg10[%c2, %c0_25] : memref<328x8xf32, #tpu.memory_space<vmem>>, vector<288x8xf32>
    %23 = arith.truncf %22 : vector<288x8xf32> to vector<288x8xbf16>
    %c2_26 = arith.constant 2 : index
    %c0_27 = arith.constant 0 : index
    %c0_28 = arith.constant 0 : index
    %24 = vector.load %arg2[%c2_26, %c0_27, %c0_28] : memref<9x8x8xbf16, #tpu.memory_space<vmem>>, vector<1x8x8xbf16>
    %25 = vector.shape_cast %24 : vector<1x8x8xbf16> to vector<8x8xbf16>
    %cst_29 = arith.constant dense<0.000000e+00> : vector<288x8xf32>
    %26 = tpu.matmul %23, %25, %cst_29 {dimension_numbers = #tpu.dot_dimension_numbers<[1], [0], [0], [1], [0, 0, 1, 1], [], []>} : vector<288x8xbf16>, vector<8x8xbf16>, vector<288x8xf32> -> vector<288x8xf32>
    %c0_30 = arith.constant 0 : index
    %c0_31 = arith.constant 0 : index
    %27 = vector.load %arg12[%c0_30, %c0_31] : memref<288x8xf32, #tpu.memory_space<vmem>>, vector<288x8xf32>
    %28 = arith.addf %27, %26 : vector<288x8xf32>
    %c0_32 = arith.constant 0 : index
    %c0_33 = arith.constant 0 : index
    %29 = vector.load %arg12[%c0_32, %c0_33] : memref<288x8xf32, #tpu.memory_space<vmem>>, vector<288x8xf32>
    tpu.vector_store %arg12[%c0_32, %c0_33], %28 {strides = array<i32>} : memref<288x8xf32, #tpu.memory_space<vmem>>, vector<288x8xf32>,
    %c18 = arith.constant 18 : index
    %c0_34 = arith.constant 0 : index
    %30 = vector.load %arg10[%c18, %c0_34] : memref<328x8xf32, #tpu.memory_space<vmem>>, vector<288x8xf32>
    %31 = arith.truncf %30 : vector<288x8xf32> to vector<288x8xbf16>
    %c3 = arith.constant 3 : index
    %c0_35 = arith.constant 0 : index
    %c0_36 = arith.constant 0 : index
    %32 = vector.load %arg2[%c3, %c0_35, %c0_36] : memref<9x8x8xbf16, #tpu.memory_space<vmem>>, vector<1x8x8xbf16>
    %33 = vector.shape_cast %32 : vector<1x8x8xbf16> to vector<8x8xbf16>
    %cst_37 = arith.constant dense<0.000000e+00> : vector<288x8xf32>
    %34 = tpu.matmul %31, %33, %cst_37 {dimension_numbers = #tpu.dot_dimension_numbers<[1], [0], [0], [1], [0, 0, 1, 1], [], []>} : vector<288x8xbf16>, vector<8x8xbf16>, vector<288x8xf32> -> vector<288x8xf32>
    %c0_38 = arith.constant 0 : index
    %c0_39 = arith.constant 0 : index
    %35 = vector.load %arg12[%c0_38, %c0_39] : memref<288x8xf32, #tpu.memory_space<vmem>>, vector<288x8xf32>
    %36 = arith.addf %35, %34 : vector<288x8xf32>
    %c0_40 = arith.constant 0 : index
    %c0_41 = arith.constant 0 : index
    %37 = vector.load %arg12[%c0_40, %c0_41] : memref<288x8xf32, #tpu.memory_space<vmem>>, vector<288x8xf32>
    tpu.vector_store %arg12[%c0_40, %c0_41], %36 {strides = array<i32>} : memref<288x8xf32, #tpu.memory_space<vmem>>, vector<288x8xf32>,
    %c19 = arith.constant 19 : index
    %c0_42 = arith.constant 0 : index
    %38 = vector.load %arg10[%c19, %c0_42] : memref<328x8xf32, #tpu.memory_space<vmem>>, vector<288x8xf32>
    %39 = arith.truncf %38 : vector<288x8xf32> to vector<288x8xbf16>
    %c4 = arith.constant 4 : index
    %c0_43 = arith.constant 0 : index
    %c0_44 = arith.constant 0 : index
    %40 = vector.load %arg2[%c4, %c0_43, %c0_44] : memref<9x8x8xbf16, #tpu.memory_space<vmem>>, vector<1x8x8xbf16>
    %41 = vector.shape_cast %40 : vector<1x8x8xbf16> to vector<8x8xbf16>
    %cst_45 = arith.constant dense<0.000000e+00> : vector<288x8xf32>
    %42 = tpu.matmul %39, %41, %cst_45 {dimension_numbers = #tpu.dot_dimension_numbers<[1], [0], [0], [1], [0, 0, 1, 1], [], []>} : vector<288x8xbf16>, vector<8x8xbf16>, vector<288x8xf32> -> vector<288x8xf32>
    %c0_46 = arith.constant 0 : index
    %c0_47 = arith.constant 0 : index
    %43 = vector.load %arg12[%c0_46, %c0_47] : memref<288x8xf32, #tpu.memory_space<vmem>>, vector<288x8xf32>
    %44 = arith.addf %43, %42 : vector<288x8xf32>
    %c0_48 = arith.constant 0 : index
    %c0_49 = arith.constant 0 : index
    %45 = vector.load %arg12[%c0_48, %c0_49] : memref<288x8xf32, #tpu.memory_space<vmem>>, vector<288x8xf32>
    tpu.vector_store %arg12[%c0_48, %c0_49], %44 {strides = array<i32>} : memref<288x8xf32, #tpu.memory_space<vmem>>, vector<288x8xf32>,
    %c20 = arith.constant 20 : index
    %c0_50 = arith.constant 0 : index
    %46 = vector.load %arg10[%c20, %c0_50] : memref<328x8xf32, #tpu.memory_space<vmem>>, vector<288x8xf32>
    %47 = arith.truncf %46 : vector<288x8xf32> to vector<288x8xbf16>
    %c5 = arith.constant 5 : index
    %c0_51 = arith.constant 0 : index
    %c0_52 = arith.constant 0 : index
    %48 = vector.load %arg2[%c5, %c0_51, %c0_52] : memref<9x8x8xbf16, #tpu.memory_space<vmem>>, vector<1x8x8xbf16>
    %49 = vector.shape_cast %48 : vector<1x8x8xbf16> to vector<8x8xbf16>
    %cst_53 = arith.constant dense<0.000000e+00> : vector<288x8xf32>
    %50 = tpu.matmul %47, %49, %cst_53 {dimension_numbers = #tpu.dot_dimension_numbers<[1], [0], [0], [1], [0, 0, 1, 1], [], []>} : vector<288x8xbf16>, vector<8x8xbf16>, vector<288x8xf32> -> vector<288x8xf32>
    %c0_54 = arith.constant 0 : index
    %c0_55 = arith.constant 0 : index
    %51 = vector.load %arg12[%c0_54, %c0_55] : memref<288x8xf32, #tpu.memory_space<vmem>>, vector<288x8xf32>
    %52 = arith.addf %51, %50 : vector<288x8xf32>
    %c0_56 = arith.constant 0 : index
    %c0_57 = arith.constant 0 : index
    %53 = vector.load %arg12[%c0_56, %c0_57] : memref<288x8xf32, #tpu.memory_space<vmem>>, vector<288x8xf32>
    tpu.vector_store %arg12[%c0_56, %c0_57], %52 {strides = array<i32>} : memref<288x8xf32, #tpu.memory_space<vmem>>, vector<288x8xf32>,
    %c36 = arith.constant 36 : index
    %c0_58 = arith.constant 0 : index
    %54 = vector.load %arg10[%c36, %c0_58] : memref<328x8xf32, #tpu.memory_space<vmem>>, vector<288x8xf32>
    %55 = arith.truncf %54 : vector<288x8xf32> to vector<288x8xbf16>
    %c6 = arith.constant 6 : index
    %c0_59 = arith.constant 0 : index
    %c0_60 = arith.constant 0 : index
    %56 = vector.load %arg2[%c6, %c0_59, %c0_60] : memref<9x8x8xbf16, #tpu.memory_space<vmem>>, vector<1x8x8xbf16>
    %57 = vector.shape_cast %56 : vector<1x8x8xbf16> to vector<8x8xbf16>
    %cst_61 = arith.constant dense<0.000000e+00> : vector<288x8xf32>
    %58 = tpu.matmul %55, %57, %cst_61 {dimension_numbers = #tpu.dot_dimension_numbers<[1], [0], [0], [1], [0, 0, 1, 1], [], []>} : vector<288x8xbf16>, vector<8x8xbf16>, vector<288x8xf32> -> vector<288x8xf32>
    %c0_62 = arith.constant 0 : index
    %c0_63 = arith.constant 0 : index
    %59 = vector.load %arg12[%c0_62, %c0_63] : memref<288x8xf32, #tpu.memory_space<vmem>>, vector<288x8xf32>
    %60 = arith.addf %59, %58 : vector<288x8xf32>
    %c0_64 = arith.constant 0 : index
    %c0_65 = arith.constant 0 : index
    %61 = vector.load %arg12[%c0_64, %c0_65] : memref<288x8xf32, #tpu.memory_space<vmem>>, vector<288x8xf32>
    tpu.vector_store %arg12[%c0_64, %c0_65], %60 {strides = array<i32>} : memref<288x8xf32, #tpu.memory_space<vmem>>, vector<288x8xf32>,
    %c37 = arith.constant 37 : index
    %c0_66 = arith.constant 0 : index
    %62 = vector.load %arg10[%c37, %c0_66] : memref<328x8xf32, #tpu.memory_space<vmem>>, vector<288x8xf32>
    %63 = arith.truncf %62 : vector<288x8xf32> to vector<288x8xbf16>
    %c7 = arith.constant 7 : index
    %c0_67 = arith.constant 0 : index
    %c0_68 = arith.constant 0 : index
    %64 = vector.load %arg2[%c7, %c0_67, %c0_68] : memref<9x8x8xbf16, #tpu.memory_space<vmem>>, vector<1x8x8xbf16>
    %65 = vector.shape_cast %64 : vector<1x8x8xbf16> to vector<8x8xbf16>
    %cst_69 = arith.constant dense<0.000000e+00> : vector<288x8xf32>
    %66 = tpu.matmul %63, %65, %cst_69 {dimension_numbers = #tpu.dot_dimension_numbers<[1], [0], [0], [1], [0, 0, 1, 1], [], []>} : vector<288x8xbf16>, vector<8x8xbf16>, vector<288x8xf32> -> vector<288x8xf32>
    %c0_70 = arith.constant 0 : index
    %c0_71 = arith.constant 0 : index
    %67 = vector.load %arg12[%c0_70, %c0_71] : memref<288x8xf32, #tpu.memory_space<vmem>>, vector<288x8xf32>
    %68 = arith.addf %67, %66 : vector<288x8xf32>
    %c0_72 = arith.constant 0 : index
    %c0_73 = arith.constant 0 : index
    %69 = vector.load %arg12[%c0_72, %c0_73] : memref<288x8xf32, #tpu.memory_space<vmem>>, vector<288x8xf32>
    tpu.vector_store %arg12[%c0_72, %c0_73], %68 {strides = array<i32>} : memref<288x8xf32, #tpu.memory_space<vmem>>, vector<288x8xf32>,
    %c38 = arith.constant 38 : index
    %c0_74 = arith.constant 0 : index
    %70 = vector.load %arg10[%c38, %c0_74] : memref<328x8xf32, #tpu.memory_space<vmem>>, vector<288x8xf32>
    %71 = arith.truncf %70 : vector<288x8xf32> to vector<288x8xbf16>
    %c8 = arith.constant 8 : index
    %c0_75 = arith.constant 0 : index
    %c0_76 = arith.constant 0 : index
    %72 = vector.load %arg2[%c8, %c0_75, %c0_76] : memref<9x8x8xbf16, #tpu.memory_space<vmem>>, vector<1x8x8xbf16>
    %73 = vector.shape_cast %72 : vector<1x8x8xbf16> to vector<8x8xbf16>
    %cst_77 = arith.constant dense<0.000000e+00> : vector<288x8xf32>
    %74 = tpu.matmul %71, %73, %cst_77 {dimension_numbers = #tpu.dot_dimension_numbers<[1], [0], [0], [1], [0, 0, 1, 1], [], []>} : vector<288x8xbf16>, vector<8x8xbf16>, vector<288x8xf32> -> vector<288x8xf32>
    %c0_78 = arith.constant 0 : index
    %c0_79 = arith.constant 0 : index
    %75 = vector.load %arg12[%c0_78, %c0_79] : memref<288x8xf32, #tpu.memory_space<vmem>>, vector<288x8xf32>
    %76 = arith.addf %75, %74 : vector<288x8xf32>
    %c0_80 = arith.constant 0 : index
    %c0_81 = arith.constant 0 : index
    %77 = vector.load %arg12[%c0_80, %c0_81] : memref<288x8xf32, #tpu.memory_space<vmem>>, vector<288x8xf32>
    tpu.vector_store %arg12[%c0_80, %c0_81], %76 {strides = array<i32>} : memref<288x8xf32, #tpu.memory_space<vmem>>, vector<288x8xf32>,
    %c0_82 = arith.constant 0 : index
    %c0_83 = arith.constant 0 : index
    %78 = vector.load %arg12[%c0_82, %c0_83] : memref<288x8xf32, #tpu.memory_space<vmem>>, vector<288x8xf32>
    %c0_84 = arith.constant 0 : index
    %c0_85 = arith.constant 0 : index
    %79 = vector.load %arg4[%c0_84, %c0_85] : memref<1x8xf32, #tpu.memory_space<vmem>>, vector<1x8xf32>
    %80 = vector.broadcast %79 : vector<1x8xf32> to vector<288x8xf32>
    %81 = arith.mulf %78, %80 : vector<288x8xf32>
    %c0_86 = arith.constant 0 : index
    %c0_87 = arith.constant 0 : index
    %82 = vector.load %arg5[%c0_86, %c0_87] : memref<1x8xf32, #tpu.memory_space<vmem>>, vector<1x8xf32>
    %83 = vector.broadcast %82 : vector<1x8xf32> to vector<288x8xf32>
    %84 = arith.addf %81, %83 : vector<288x8xf32>
    %cst_88 = arith.constant 0.000000e+00 : f32
    %85 = vector.broadcast %cst_88 : f32 to vector<288x8xf32>
    %86 = arith.maximumf %84, %85 : vector<288x8xf32>
    %c0_89 = arith.constant 0 : index
    %c0_90 = arith.constant 0 : index
    %87 = vector.load %arg8[%c0_89, %c0_90] : memref<288x1xf32, #tpu.memory_space<vmem>>, vector<288x1xf32>
    %88 = vector.broadcast %87 : vector<288x1xf32> to vector<288x8xf32>
    %89 = arith.mulf %86, %88 : vector<288x8xf32>
    %c19_91 = arith.constant 19 : index
    %c0_92 = arith.constant 0 : index
    %90 = vector.load %arg11[%c19_91, %c0_92] : memref<328x8xf32, #tpu.memory_space<vmem>>, vector<288x8xf32>
    tpu.vector_store %arg11[%c19_91, %c0_92], %89 {strides = array<i32>} : memref<328x8xf32, #tpu.memory_space<vmem>>, vector<288x8xf32>,
    %c0_93 = arith.constant 0 : index
    %c0_94 = arith.constant 0 : index
    %91 = vector.load %arg11[%c0_93, %c0_94] : memref<328x8xf32, #tpu.memory_space<vmem>>, vector<288x8xf32>
    %92 = arith.truncf %91 : vector<288x8xf32> to vector<288x8xbf16>
    %c0_95 = arith.constant 0 : index
    %c0_96 = arith.constant 0 : index
    %c0_97 = arith.constant 0 : index
    %93 = vector.load %arg3[%c0_95, %c0_96, %c0_97] : memref<9x8x8xbf16, #tpu.memory_space<vmem>>, vector<1x8x8xbf16>
    %94 = vector.shape_cast %93 : vector<1x8x8xbf16> to vector<8x8xbf16>
    %cst_98 = arith.constant dense<0.000000e+00> : vector<288x8xf32>
    %95 = tpu.matmul %92, %94, %cst_98 {dimension_numbers = #tpu.dot_dimension_numbers<[1], [0], [0], [1], [0, 0, 1, 1], [], []>} : vector<288x8xbf16>, vector<8x8xbf16>, vector<288x8xf32> -> vector<288x8xf32>
    %c0_99 = arith.constant 0 : index
    %c0_100 = arith.constant 0 : index
    %96 = vector.load %arg12[%c0_99, %c0_100] : memref<288x8xf32, #tpu.memory_space<vmem>>, vector<288x8xf32>
    tpu.vector_store %arg12[%c0_99, %c0_100], %95 {strides = array<i32>} : memref<288x8xf32, #tpu.memory_space<vmem>>, vector<288x8xf32>,
    %c1_101 = arith.constant 1 : index
    %c0_102 = arith.constant 0 : index
    %97 = vector.load %arg11[%c1_101, %c0_102] : memref<328x8xf32, #tpu.memory_space<vmem>>, vector<288x8xf32>
    %98 = arith.truncf %97 : vector<288x8xf32> to vector<288x8xbf16>
    %c1_103 = arith.constant 1 : index
    %c0_104 = arith.constant 0 : index
    %c0_105 = arith.constant 0 : index
    %99 = vector.load %arg3[%c1_103, %c0_104, %c0_105] : memref<9x8x8xbf16, #tpu.memory_space<vmem>>, vector<1x8x8xbf16>
    %100 = vector.shape_cast %99 : vector<1x8x8xbf16> to vector<8x8xbf16>
    %cst_106 = arith.constant dense<0.000000e+00> : vector<288x8xf32>
    %101 = tpu.matmul %98, %100, %cst_106 {dimension_numbers = #tpu.dot_dimension_numbers<[1], [0], [0], [1], [0, 0, 1, 1], [], []>} : vector<288x8xbf16>, vector<8x8xbf16>, vector<288x8xf32> -> vector<288x8xf32>
    %c0_107 = arith.constant 0 : index
    %c0_108 = arith.constant 0 : index
    %102 = vector.load %arg12[%c0_107, %c0_108] : memref<288x8xf32, #tpu.memory_space<vmem>>, vector<288x8xf32>
    %103 = arith.addf %102, %101 : vector<288x8xf32>
    %c0_109 = arith.constant 0 : index
    %c0_110 = arith.constant 0 : index
    %104 = vector.load %arg12[%c0_109, %c0_110] : memref<288x8xf32, #tpu.memory_space<vmem>>, vector<288x8xf32>
    tpu.vector_store %arg12[%c0_109, %c0_110], %103 {strides = array<i32>} : memref<288x8xf32, #tpu.memory_space<vmem>>, vector<288x8xf32>,
    %c2_111 = arith.constant 2 : index
    %c0_112 = arith.constant 0 : index
    %105 = vector.load %arg11[%c2_111, %c0_112] : memref<328x8xf32, #tpu.memory_space<vmem>>, vector<288x8xf32>
    %106 = arith.truncf %105 : vector<288x8xf32> to vector<288x8xbf16>
    %c2_113 = arith.constant 2 : index
    %c0_114 = arith.constant 0 : index
    %c0_115 = arith.constant 0 : index
    %107 = vector.load %arg3[%c2_113, %c0_114, %c0_115] : memref<9x8x8xbf16, #tpu.memory_space<vmem>>, vector<1x8x8xbf16>
    %108 = vector.shape_cast %107 : vector<1x8x8xbf16> to vector<8x8xbf16>
    %cst_116 = arith.constant dense<0.000000e+00> : vector<288x8xf32>
    %109 = tpu.matmul %106, %108, %cst_116 {dimension_numbers = #tpu.dot_dimension_numbers<[1], [0], [0], [1], [0, 0, 1, 1], [], []>} : vector<288x8xbf16>, vector<8x8xbf16>, vector<288x8xf32> -> vector<288x8xf32>
    %c0_117 = arith.constant 0 : index
    %c0_118 = arith.constant 0 : index
    %110 = vector.load %arg12[%c0_117, %c0_118] : memref<288x8xf32, #tpu.memory_space<vmem>>, vector<288x8xf32>
    %111 = arith.addf %110, %109 : vector<288x8xf32>
    %c0_119 = arith.constant 0 : index
    %c0_120 = arith.constant 0 : index
    %112 = vector.load %arg12[%c0_119, %c0_120] : memref<288x8xf32, #tpu.memory_space<vmem>>, vector<288x8xf32>
    tpu.vector_store %arg12[%c0_119, %c0_120], %111 {strides = array<i32>} : memref<288x8xf32, #tpu.memory_space<vmem>>, vector<288x8xf32>,
    %c18_121 = arith.constant 18 : index
    %c0_122 = arith.constant 0 : index
    %113 = vector.load %arg11[%c18_121, %c0_122] : memref<328x8xf32, #tpu.memory_space<vmem>>, vector<288x8xf32>
    %114 = arith.truncf %113 : vector<288x8xf32> to vector<288x8xbf16>
    %c3_123 = arith.constant 3 : index
    %c0_124 = arith.constant 0 : index
    %c0_125 = arith.constant 0 : index
    %115 = vector.load %arg3[%c3_123, %c0_124, %c0_125] : memref<9x8x8xbf16, #tpu.memory_space<vmem>>, vector<1x8x8xbf16>
    %116 = vector.shape_cast %115 : vector<1x8x8xbf16> to vector<8x8xbf16>
    %cst_126 = arith.constant dense<0.000000e+00> : vector<288x8xf32>
    %117 = tpu.matmul %114, %116, %cst_126 {dimension_numbers = #tpu.dot_dimension_numbers<[1], [0], [0], [1], [0, 0, 1, 1], [], []>} : vector<288x8xbf16>, vector<8x8xbf16>, vector<288x8xf32> -> vector<288x8xf32>
    %c0_127 = arith.constant 0 : index
    %c0_128 = arith.constant 0 : index
    %118 = vector.load %arg12[%c0_127, %c0_128] : memref<288x8xf32, #tpu.memory_space<vmem>>, vector<288x8xf32>
    %119 = arith.addf %118, %117 : vector<288x8xf32>
    %c0_129 = arith.constant 0 : index
    %c0_130 = arith.constant 0 : index
    %120 = vector.load %arg12[%c0_129, %c0_130] : memref<288x8xf32, #tpu.memory_space<vmem>>, vector<288x8xf32>
    tpu.vector_store %arg12[%c0_129, %c0_130], %119 {strides = array<i32>} : memref<288x8xf32, #tpu.memory_space<vmem>>, vector<288x8xf32>,
    %c19_131 = arith.constant 19 : index
    %c0_132 = arith.constant 0 : index
    %121 = vector.load %arg11[%c19_131, %c0_132] : memref<328x8xf32, #tpu.memory_space<vmem>>, vector<288x8xf32>
    %122 = arith.truncf %121 : vector<288x8xf32> to vector<288x8xbf16>
    %c4_133 = arith.constant 4 : index
    %c0_134 = arith.constant 0 : index
    %c0_135 = arith.constant 0 : index
    %123 = vector.load %arg3[%c4_133, %c0_134, %c0_135] : memref<9x8x8xbf16, #tpu.memory_space<vmem>>, vector<1x8x8xbf16>
    %124 = vector.shape_cast %123 : vector<1x8x8xbf16> to vector<8x8xbf16>
    %cst_136 = arith.constant dense<0.000000e+00> : vector<288x8xf32>
    %125 = tpu.matmul %122, %124, %cst_136 {dimension_numbers = #tpu.dot_dimension_numbers<[1], [0], [0], [1], [0, 0, 1, 1], [], []>} : vector<288x8xbf16>, vector<8x8xbf16>, vector<288x8xf32> -> vector<288x8xf32>
    %c0_137 = arith.constant 0 : index
    %c0_138 = arith.constant 0 : index
    %126 = vector.load %arg12[%c0_137, %c0_138] : memref<288x8xf32, #tpu.memory_space<vmem>>, vector<288x8xf32>
    %127 = arith.addf %126, %125 : vector<288x8xf32>
    %c0_139 = arith.constant 0 : index
    %c0_140 = arith.constant 0 : index
    %128 = vector.load %arg12[%c0_139, %c0_140] : memref<288x8xf32, #tpu.memory_space<vmem>>, vector<288x8xf32>
    tpu.vector_store %arg12[%c0_139, %c0_140], %127 {strides = array<i32>} : memref<288x8xf32, #tpu.memory_space<vmem>>, vector<288x8xf32>,
    %c20_141 = arith.constant 20 : index
    %c0_142 = arith.constant 0 : index
    %129 = vector.load %arg11[%c20_141, %c0_142] : memref<328x8xf32, #tpu.memory_space<vmem>>, vector<288x8xf32>
    %130 = arith.truncf %129 : vector<288x8xf32> to vector<288x8xbf16>
    %c5_143 = arith.constant 5 : index
    %c0_144 = arith.constant 0 : index
    %c0_145 = arith.constant 0 : index
    %131 = vector.load %arg3[%c5_143, %c0_144, %c0_145] : memref<9x8x8xbf16, #tpu.memory_space<vmem>>, vector<1x8x8xbf16>
    %132 = vector.shape_cast %131 : vector<1x8x8xbf16> to vector<8x8xbf16>
    %cst_146 = arith.constant dense<0.000000e+00> : vector<288x8xf32>
    %133 = tpu.matmul %130, %132, %cst_146 {dimension_numbers = #tpu.dot_dimension_numbers<[1], [0], [0], [1], [0, 0, 1, 1], [], []>} : vector<288x8xbf16>, vector<8x8xbf16>, vector<288x8xf32> -> vector<288x8xf32>
    %c0_147 = arith.constant 0 : index
    %c0_148 = arith.constant 0 : index
    %134 = vector.load %arg12[%c0_147, %c0_148] : memref<288x8xf32, #tpu.memory_space<vmem>>, vector<288x8xf32>
    %135 = arith.addf %134, %133 : vector<288x8xf32>
    %c0_149 = arith.constant 0 : index
    %c0_150 = arith.constant 0 : index
    %136 = vector.load %arg12[%c0_149, %c0_150] : memref<288x8xf32, #tpu.memory_space<vmem>>, vector<288x8xf32>
    tpu.vector_store %arg12[%c0_149, %c0_150], %135 {strides = array<i32>} : memref<288x8xf32, #tpu.memory_space<vmem>>, vector<288x8xf32>,
    %c36_151 = arith.constant 36 : index
    %c0_152 = arith.constant 0 : index
    %137 = vector.load %arg11[%c36_151, %c0_152] : memref<328x8xf32, #tpu.memory_space<vmem>>, vector<288x8xf32>
    %138 = arith.truncf %137 : vector<288x8xf32> to vector<288x8xbf16>
    %c6_153 = arith.constant 6 : index
    %c0_154 = arith.constant 0 : index
    %c0_155 = arith.constant 0 : index
    %139 = vector.load %arg3[%c6_153, %c0_154, %c0_155] : memref<9x8x8xbf16, #tpu.memory_space<vmem>>, vector<1x8x8xbf16>
    %140 = vector.shape_cast %139 : vector<1x8x8xbf16> to vector<8x8xbf16>
    %cst_156 = arith.constant dense<0.000000e+00> : vector<288x8xf32>
    %141 = tpu.matmul %138, %140, %cst_156 {dimension_numbers = #tpu.dot_dimension_numbers<[1], [0], [0], [1], [0, 0, 1, 1], [], []>} : vector<288x8xbf16>, vector<8x8xbf16>, vector<288x8xf32> -> vector<288x8xf32>
    %c0_157 = arith.constant 0 : index
    %c0_158 = arith.constant 0 : index
    %142 = vector.load %arg12[%c0_157, %c0_158] : memref<288x8xf32, #tpu.memory_space<vmem>>, vector<288x8xf32>
    %143 = arith.addf %142, %141 : vector<288x8xf32>
    %c0_159 = arith.constant 0 : index
    %c0_160 = arith.constant 0 : index
    %144 = vector.load %arg12[%c0_159, %c0_160] : memref<288x8xf32, #tpu.memory_space<vmem>>, vector<288x8xf32>
    tpu.vector_store %arg12[%c0_159, %c0_160], %143 {strides = array<i32>} : memref<288x8xf32, #tpu.memory_space<vmem>>, vector<288x8xf32>,
    %c37_161 = arith.constant 37 : index
    %c0_162 = arith.constant 0 : index
    %145 = vector.load %arg11[%c37_161, %c0_162] : memref<328x8xf32, #tpu.memory_space<vmem>>, vector<288x8xf32>
    %146 = arith.truncf %145 : vector<288x8xf32> to vector<288x8xbf16>
    %c7_163 = arith.constant 7 : index
    %c0_164 = arith.constant 0 : index
    %c0_165 = arith.constant 0 : index
    %147 = vector.load %arg3[%c7_163, %c0_164, %c0_165] : memref<9x8x8xbf16, #tpu.memory_space<vmem>>, vector<1x8x8xbf16>
    %148 = vector.shape_cast %147 : vector<1x8x8xbf16> to vector<8x8xbf16>
    %cst_166 = arith.constant dense<0.000000e+00> : vector<288x8xf32>
    %149 = tpu.matmul %146, %148, %cst_166 {dimension_numbers = #tpu.dot_dimension_numbers<[1], [0], [0], [1], [0, 0, 1, 1], [], []>} : vector<288x8xbf16>, vector<8x8xbf16>, vector<288x8xf32> -> vector<288x8xf32>
    %c0_167 = arith.constant 0 : index
    %c0_168 = arith.constant 0 : index
    %150 = vector.load %arg12[%c0_167, %c0_168] : memref<288x8xf32, #tpu.memory_space<vmem>>, vector<288x8xf32>
    %151 = arith.addf %150, %149 : vector<288x8xf32>
    %c0_169 = arith.constant 0 : index
    %c0_170 = arith.constant 0 : index
    %152 = vector.load %arg12[%c0_169, %c0_170] : memref<288x8xf32, #tpu.memory_space<vmem>>, vector<288x8xf32>
    tpu.vector_store %arg12[%c0_169, %c0_170], %151 {strides = array<i32>} : memref<288x8xf32, #tpu.memory_space<vmem>>, vector<288x8xf32>,
    %c38_171 = arith.constant 38 : index
    %c0_172 = arith.constant 0 : index
    %153 = vector.load %arg11[%c38_171, %c0_172] : memref<328x8xf32, #tpu.memory_space<vmem>>, vector<288x8xf32>
    %154 = arith.truncf %153 : vector<288x8xf32> to vector<288x8xbf16>
    %c8_173 = arith.constant 8 : index
    %c0_174 = arith.constant 0 : index
    %c0_175 = arith.constant 0 : index
    %155 = vector.load %arg3[%c8_173, %c0_174, %c0_175] : memref<9x8x8xbf16, #tpu.memory_space<vmem>>, vector<1x8x8xbf16>
    %156 = vector.shape_cast %155 : vector<1x8x8xbf16> to vector<8x8xbf16>
    %cst_176 = arith.constant dense<0.000000e+00> : vector<288x8xf32>
    %157 = tpu.matmul %154, %156, %cst_176 {dimension_numbers = #tpu.dot_dimension_numbers<[1], [0], [0], [1], [0, 0, 1, 1], [], []>} : vector<288x8xbf16>, vector<8x8xbf16>, vector<288x8xf32> -> vector<288x8xf32>
    %c0_177 = arith.constant 0 : index
    %c0_178 = arith.constant 0 : index
    %158 = vector.load %arg12[%c0_177, %c0_178] : memref<288x8xf32, #tpu.memory_space<vmem>>, vector<288x8xf32>
    %159 = arith.addf %158, %157 : vector<288x8xf32>
    %c0_179 = arith.constant 0 : index
    %c0_180 = arith.constant 0 : index
    %160 = vector.load %arg12[%c0_179, %c0_180] : memref<288x8xf32, #tpu.memory_space<vmem>>, vector<288x8xf32>
    tpu.vector_store %arg12[%c0_179, %c0_180], %159 {strides = array<i32>} : memref<288x8xf32, #tpu.memory_space<vmem>>, vector<288x8xf32>,
    %c19_181 = arith.constant 19 : index
    %c0_182 = arith.constant 0 : index
    %161 = vector.load %arg10[%c19_181, %c0_182] : memref<328x8xf32, #tpu.memory_space<vmem>>, vector<288x8xf32>
    %c0_183 = arith.constant 0 : index
    %c0_184 = arith.constant 0 : index
    %162 = vector.load %arg12[%c0_183, %c0_184] : memref<288x8xf32, #tpu.memory_space<vmem>>, vector<288x8xf32>
    %c0_185 = arith.constant 0 : index
    %c0_186 = arith.constant 0 : index
    %163 = vector.load %arg6[%c0_185, %c0_186] : memref<1x8xf32, #tpu.memory_space<vmem>>, vector<1x8xf32>
    %164 = vector.broadcast %163 : vector<1x8xf32> to vector<288x8xf32>
    %165 = arith.mulf %162, %164 : vector<288x8xf32>
    %c0_187 = arith.constant 0 : index
    %c0_188 = arith.constant 0 : index
    %166 = vector.load %arg7[%c0_187, %c0_188] : memref<1x8xf32, #tpu.memory_space<vmem>>, vector<1x8xf32>
    %167 = vector.broadcast %166 : vector<1x8xf32> to vector<288x8xf32>
    %168 = arith.addf %165, %167 : vector<288x8xf32>
    %169 = arith.addf %168, %161 : vector<288x8xf32>
    %cst_189 = arith.constant 0.000000e+00 : f32
    %170 = vector.broadcast %cst_189 : f32 to vector<288x8xf32>
    %171 = arith.maximumf %169, %170 : vector<288x8xf32>
    %c0_190 = arith.constant 0 : index
    %c0_191 = arith.constant 0 : index
    %c0_192 = arith.constant 0 : index
    %172 = vector.load %arg9[%c0_190, %c0_191, %c0_192] : memref<1x288x8xf32, #tpu.memory_space<vmem>>, vector<1x288x8xf32>
    %173 = vector.shape_cast %172 : vector<1x288x8xf32> to vector<288x8xf32>
    %174 = vector.shape_cast %171 : vector<288x8xf32> to vector<1x288x8xf32>
    tpu.vector_store %arg9[%c0_190, %c0_191, %c0_192], %174 {strides = array<i32>} : memref<1x288x8xf32, #tpu.memory_space<vmem>>, vector<1x288x8xf32>,
    return
  }
  func.func @transform_0(%arg0: i32) -> (i32, i32, i32) {
    %c0_i32 = arith.constant 0 : i32
    %c0_i32_0 = arith.constant 0 : i32
    %c0_i32_1 = arith.constant 0 : i32
    return %arg0, %c0_i32, %c0_i32_0 : i32, i32, i32
  }
  func.func @transform_1(%arg0: i32) -> (i32, i32, i32) {
    %c0_i32 = arith.constant 0 : i32
    %c0_i32_0 = arith.constant 0 : i32
    %c0_i32_1 = arith.constant 0 : i32
    %c0_i32_2 = arith.constant 0 : i32
    return %c0_i32, %c0_i32_0, %c0_i32_1 : i32, i32, i32
  }
  func.func @transform_2(%arg0: i32) -> (i32, i32, i32) {
    %c0_i32 = arith.constant 0 : i32
    %c0_i32_0 = arith.constant 0 : i32
    %c0_i32_1 = arith.constant 0 : i32
    %c0_i32_2 = arith.constant 0 : i32
    return %c0_i32, %c0_i32_0, %c0_i32_1 : i32, i32, i32
  }
  func.func @transform_3(%arg0: i32) -> (i32, i32) {
    %c0_i32 = arith.constant 0 : i32
    %c0_i32_0 = arith.constant 0 : i32
    %c0_i32_1 = arith.constant 0 : i32
    return %c0_i32, %c0_i32_0 : i32, i32
  }
  func.func @transform_4(%arg0: i32) -> (i32, i32) {
    %c0_i32 = arith.constant 0 : i32
    %c0_i32_0 = arith.constant 0 : i32
    %c0_i32_1 = arith.constant 0 : i32
    return %c0_i32, %c0_i32_0 : i32, i32
  }
  func.func @transform_5(%arg0: i32) -> (i32, i32) {
    %c0_i32 = arith.constant 0 : i32
    %c0_i32_0 = arith.constant 0 : i32
    %c0_i32_1 = arith.constant 0 : i32
    return %c0_i32, %c0_i32_0 : i32, i32
  }
  func.func @transform_6(%arg0: i32) -> (i32, i32) {
    %c0_i32 = arith.constant 0 : i32
    %c0_i32_0 = arith.constant 0 : i32
    %c0_i32_1 = arith.constant 0 : i32
    return %c0_i32, %c0_i32_0 : i32, i32
  }
  func.func @transform_7(%arg0: i32) -> (i32, i32) {
    %c0_i32 = arith.constant 0 : i32
    %c0_i32_0 = arith.constant 0 : i32
    %c0_i32_1 = arith.constant 0 : i32
    return %c0_i32, %c0_i32_0 : i32, i32
  }
  func.func @transform_8(%arg0: i32) -> (i32, i32, i32) {
    %c0_i32 = arith.constant 0 : i32
    %c0_i32_0 = arith.constant 0 : i32
    %c0_i32_1 = arith.constant 0 : i32
    return %arg0, %c0_i32, %c0_i32_0 : i32, i32, i32
  }
}

</mosaic_0001>

<llo_original>
// kernel: tpu_custom_call.1
$region0: #{tpu_custom_call.1}
  #allocation0 [shape = 'u32[]', space=smem, size = 0x4, offset = 0x4, fixed_abs, tag = 'smem constant byte address 0x4 - core index']
  #allocation1 [shape = 'u32[72,128]{1,0:T(1,128)}', space=vmem, size = 0x9000, scoped, tag = 'internal scratch']
  #allocation2 [shape = 'f32[328,8]{1,0:T(8,128)}', space=vmem, size = 0x29000, scoped, tag = 'scratch operand']
  #allocation3 [shape = 'f32[328,8]{1,0:T(8,128)}', space=vmem, size = 0x29000, scoped, tag = 'scratch operand']
  #allocation4 [shape = 'f32[288,8]{1,0:T(8,128)}', space=vmem, size = 0x24000, scoped, tag = 'scratch operand']
  %s0 = inlined_call_operand.vmem [shape: bf16[2,328,8], index: 0, kind: input, shape index: {}]
  %s1 = inlined_call_operand.vmem [shape: bf16[9,8,8], index: 1, kind: input, shape index: {}]
  %s2 = inlined_call_operand.vmem [shape: bf16[9,8,8], index: 2, kind: input, shape index: {}]
  %s3 = inlined_call_operand.vmem [shape: f32[1,8], index: 3, kind: input, shape index: {}]
  %s4 = inlined_call_operand.vmem [shape: f32[1,8], index: 4, kind: input, shape index: {}]
  %s5 = inlined_call_operand.vmem [shape: f32[1,8], index: 5, kind: input, shape index: {}]
  %s6 = inlined_call_operand.vmem [shape: f32[1,8], index: 6, kind: input, shape index: {}]
  %s7 = inlined_call_operand.vmem [shape: f32[288,1], index: 7, kind: input, shape index: {}]
  %s8 = inlined_call_operand.vmem [shape: f32[2,288,8], index: 8, kind: output, shape index: {}]
  %s9 = sld [smem:[#allocation0]]
  $region65: #{tpu_custom_call.1} parent=0
    _
  %s11 = ssub.s32 1, %s9
  %s12 = scalar_select 0, %s11, %s9
  loop: start=0, step=1, limit=4
  $region2: #{tpu_custom_call.1} parent=0 // loop_pre_header
    _
  $region3: #{tpu_custom_call.1} parent=0 // loop_header
    %s14 = sphi 0, %s18
    %p15 = scmp.ge.s32.totalorder %s14, 4
    %s24 = sphi 0, %s26
    %s27 = sphi 0, %s24
    %s28 = sphi 0, %s27
    %s44 = sphi 0, %s28
    %s48 = sphi 0, %s48
    %s50 = sphi 0, %s48
    %s51 = sphi 0, %s50
    %s65 = sphi 0, %s51
    %s69 = sphi 0, %s69
    %s71 = sphi 0, %s69
    %s72 = sphi 0, %s71
    %s86 = sphi 0, %s72
    %s90 = sphi 0, %s90
    %s92 = sphi 0, %s90
    %s93 = sphi 0, %s92
    %s107 = sphi 0, %s93
    %s111 = sphi 0, %s111
    %s113 = sphi 0, %s111
    %s114 = sphi 0, %s113
    %s128 = sphi 0, %s114
    %s132 = sphi 0, %s132
    %s134 = sphi 0, %s132
    %s135 = sphi 0, %s134
    %s149 = sphi 0, %s135
    %s153 = sphi 0, %s153
    %s155 = sphi 0, %s153
    %s156 = sphi 0, %s155
    %s170 = sphi 0, %s156
    %s174 = sphi 0, %s174
    %s176 = sphi 0, %s174
    %s177 = sphi 0, %s176
    %s191 = sphi 0, %s177
    %s197 = sphi 0, %s199
    %s200 = sphi 0, %s197
    %s201 = sphi 0, %s200
    %s217 = sphi 0, %s201
  $region4: #{tpu_custom_call.1} parent=0 // loop_header_branch
    %17 = sbr.rel (%p15) target = $region8
  $region5: #{tpu_custom_call.1} parent=0 // loop_body
    %s19 = ssub.s32 %s14, 1
    %s20 = ssub.s32 %s14, 2
    %s21 = sadd.s32 %s14, 1
    %s22 = ssub.s32 %s14, %s21
    %p23 = scmp.eq.s32.totalorder %s22, 0
    %s25 = sadd.s32 %s24, 1
    %s26 = scalar_select %p23, %s24, %s25
    %p29 = pneg %p23
    %p30 = scmp.eq.s32.totalorder %s14, 1
    %p31 = por %p29, %p30
    %p32 = scmp.ne.s32.totalorder %s24, %s27
    %p33 = scmp.eq.s32.totalorder %s14, 0
    %p34 = por %p32, %p33
    %p35 = scmp.ne.s32.totalorder %s24, %s27
    %p36 = scmp.eq.s32.totalorder %s19, 1
    %p37 = por %p35, %p36
    %p38 = scmp.ne.s32.totalorder %s27, %s28
    %p39 = scmp.eq.s32.totalorder %s19, 0
    %p40 = por %p38, %p39
    %p41 = scmp.ne.s32.totalorder %s27, %s28
    %p42 = scmp.eq.s32.totalorder %s20, 1
    %p43 = por %p41, %p42
    %p45 = scmp.ne.s32.totalorder %s28, %s44
    %p46 = scmp.eq.s32.totalorder %s20, 0
    %p47 = por %p45, %p46
    %s49 = sadd.s32 %s48, 1
    %p52 = scmp.eq.s32.totalorder %s14, 1
    %p53 = scmp.ne.s32.totalorder %s48, %s50
    %p54 = scmp.eq.s32.totalorder %s14, 0
    %p55 = por %p53, %p54
    %p56 = scmp.ne.s32.totalorder %s48, %s50
    %p57 = scmp.eq.s32.totalorder %s19, 1
    %p58 = por %p56, %p57
    %p59 = scmp.ne.s32.totalorder %s50, %s51
    %p60 = scmp.eq.s32.totalorder %s19, 0
    %p61 = por %p59, %p60
    %p62 = scmp.ne.s32.totalorder %s50, %s51
    %p63 = scmp.eq.s32.totalorder %s20, 1
    %p64 = por %p62, %p63
    %p66 = scmp.ne.s32.totalorder %s51, %s65
    %p67 = scmp.eq.s32.totalorder %s20, 0
    %p68 = por %p66, %p67
    %s70 = sadd.s32 %s69, 1
    %p73 = scmp.eq.s32.totalorder %s14, 1
    %p74 = scmp.ne.s32.totalorder %s69, %s71
    %p75 = scmp.eq.s32.totalorder %s14, 0
    %p76 = por %p74, %p75
    %p77 = scmp.ne.s32.totalorder %s69, %s71
    %p78 = scmp.eq.s32.totalorder %s19, 1
    %p79 = por %p77, %p78
    %p80 = scmp.ne.s32.totalorder %s71, %s72
    %p81 = scmp.eq.s32.totalorder %s19, 0
    %p82 = por %p80, %p81
    %p83 = scmp.ne.s32.totalorder %s71, %s72
    %p84 = scmp.eq.s32.totalorder %s20, 1
    %p85 = por %p83, %p84
    %p87 = scmp.ne.s32.totalorder %s72, %s86
    %p88 = scmp.eq.s32.totalorder %s20, 0
    %p89 = por %p87, %p88
    %s91 = sadd.s32 %s90, 1
    %p94 = scmp.eq.s32.totalorder %s14, 1
    %p95 = scmp.ne.s32.totalorder %s90, %s92
    %p96 = scmp.eq.s32.totalorder %s14, 0
    %p97 = por %p95, %p96
    %p98 = scmp.ne.s32.totalorder %s90, %s92
    %p99 = scmp.eq.s32.totalorder %s19, 1
    %p100 = por %p98, %p99
    %p101 = scmp.ne.s32.totalorder %s92, %s93
    %p102 = scmp.eq.s32.totalorder %s19, 0
    %p103 = por %p101, %p102
    %p104 = scmp.ne.s32.totalorder %s92, %s93
    %p105 = scmp.eq.s32.totalorder %s20, 1
    %p106 = por %p104, %p105
    %p108 = scmp.ne.s32.totalorder %s93, %s107
    %p109 = scmp.eq.s32.totalorder %s20, 0
    %p110 = por %p108, %p109
    %s112 = sadd.s32 %s111, 1
    %p115 = scmp.eq.s32.totalorder %s14, 1
    %p116 = scmp.ne.s32.totalorder %s111, %s113
    %p117 = scmp.eq.s32.totalorder %s14, 0
    %p118 = por %p116, %p117
    %p119 = scmp.ne.s32.totalorder %s111, %s113
    %p120 = scmp.eq.s32.totalorder %s19, 1
    %p121 = por %p119, %p120
    %p122 = scmp.ne.s32.totalorder %s113, %s114
    %p123 = scmp.eq.s32.totalorder %s19, 0
    %p124 = por %p122, %p123
    %p125 = scmp.ne.s32.totalorder %s113, %s114
    %p126 = scmp.eq.s32.totalorder %s20, 1
    %p127 = por %p125, %p126
    %p129 = scmp.ne.s32.totalorder %s114, %s128
    %p130 = scmp.eq.s32.totalorder %s20, 0
    %p131 = por %p129, %p130
    %s133 = sadd.s32 %s132, 1
    %p136 = scmp.eq.s32.totalorder %s14, 1
    %p137 = scmp.ne.s32.totalorder %s132, %s134
    %p138 = scmp.eq.s32.totalorder %s14, 0
    %p139 = por %p137, %p138
    %p140 = scmp.ne.s32.totalorder %s132, %s134
    %p141 = scmp.eq.s32.totalorder %s19, 1
    %p142 = por %p140, %p141
    %p143 = scmp.ne.s32.totalorder %s134, %s135
    %p144 = scmp.eq.s32.totalorder %s19, 0
    %p145 = por %p143, %p144
    %p146 = scmp.ne.s32.totalorder %s134, %s135
    %p147 = scmp.eq.s32.totalorder %s20, 1
    %p148 = por %p146, %p147
    %p150 = scmp.ne.s32.totalorder %s135, %s149
    %p151 = scmp.eq.s32.totalorder %s20, 0
    %p152 = por %p150, %p151
    %s154 = sadd.s32 %s153, 1
    %p157 = scmp.eq.s32.totalorder %s14, 1
    %p158 = scmp.ne.s32.totalorder %s153, %s155
    %p159 = scmp.eq.s32.totalorder %s14, 0
    %p160 = por %p158, %p159
    %p161 = scmp.ne.s32.totalorder %s153, %s155
    %p162 = scmp.eq.s32.totalorder %s19, 1
    %p163 = por %p161, %p162
    %p164 = scmp.ne.s32.totalorder %s155, %s156
    %p165 = scmp.eq.s32.totalorder %s19, 0
    %p166 = por %p164, %p165
    %p167 = scmp.ne.s32.totalorder %s155, %s156
    %p168 = scmp.eq.s32.totalorder %s20, 1
    %p169 = por %p167, %p168
    %p171 = scmp.ne.s32.totalorder %s156, %s170
    %p172 = scmp.eq.s32.totalorder %s20, 0
    %p173 = por %p171, %p172
    %s175 = sadd.s32 %s174, 1
    %p178 = scmp.eq.s32.totalorder %s14, 1
    %p179 = scmp.ne.s32.totalorder %s174, %s176
    %p180 = scmp.eq.s32.totalorder %s14, 0
    %p181 = por %p179, %p180
    %p182 = scmp.ne.s32.totalorder %s174, %s176
    %p183 = scmp.eq.s32.totalorder %s19, 1
    %p184 = por %p182, %p183
    %p185 = scmp.ne.s32.totalorder %s176, %s177
    %p186 = scmp.eq.s32.totalorder %s19, 0
    %p187 = por %p185, %p186
    %p188 = scmp.ne.s32.totalorder %s176, %s177
    %p189 = scmp.eq.s32.totalorder %s20, 1
    %p190 = por %p188, %p189
    %p192 = scmp.ne.s32.totalorder %s177, %s191
    %p193 = scmp.eq.s32.totalorder %s20, 0
    %p194 = por %p192, %p193
    %s195 = ssub.s32 %s14, %s21
    %p196 = scmp.eq.s32.totalorder %s195, 0
    %s198 = sadd.s32 %s197, 1
    %s199 = scalar_select %p196, %s197, %s198
    %p202 = pneg %p196
    %p203 = scmp.eq.s32.totalorder %s14, 1
    %p204 = por %p202, %p203
    %p205 = scmp.ne.s32.totalorder %s197, %s200
    %p206 = scmp.eq.s32.totalorder %s14, 0
    %p207 = por %p205, %p206
    %p208 = scmp.ne.s32.totalorder %s197, %s200
    %p209 = scmp.eq.s32.totalorder %s19, 1
    %p210 = por %p208, %p209
    %p211 = scmp.ne.s32.totalorder %s200, %s201
    %p212 = scmp.eq.s32.totalorder %s19, 0
    %p213 = por %p211, %p212
    %p214 = scmp.ne.s32.totalorder %s200, %s201
    %p215 = scmp.eq.s32.totalorder %s20, 1
    %p216 = por %p214, %p215
    %p218 = scmp.ne.s32.totalorder %s201, %s217
    %p219 = scmp.eq.s32.totalorder %s20, 0
    %p220 = por %p218, %p219
    %p221 = scmp.le.s32.totalorder 1, %s14
    %p222 = scmp.lt.s32.totalorder %s14, 3
    %p223 = pnand %p221, %p222
    %p224 = pneg %p223
    // Predicated region
    $region9: #{tpu_custom_call.1} parent=5 // pred_check
      _
    $region10: #{tpu_custom_call.1} parent=5 // pred_check_branch
      %226 = sbr.rel (%p223) target = $region12
    $region11: #{tpu_custom_call.1} parent=5 // pred_region
      %s227 = ssub.s32 %s14, 1
      // Predicated region
      $region13: #{tpu_custom_call.1} parent=11 // pred_check
        %p228 = pneg %p61
      $region14: #{tpu_custom_call.1} parent=11 // pred_check_branch
        %230 = sbr.rel (%p228) target = $region16
      $region15: #{tpu_custom_call.1} parent=11 // pred_region
        _
      $region16: #{tpu_custom_call.1} parent=11 // pred_fallthru
        _
      // Predicated region
      $region17: #{tpu_custom_call.1} parent=11 // pred_check
        %p231 = pneg %p82
      $region18: #{tpu_custom_call.1} parent=11 // pred_check_branch
        %233 = sbr.rel (%p231) target = $region20
      $region19: #{tpu_custom_call.1} parent=11 // pred_region
        _
      $region20: #{tpu_custom_call.1} parent=11 // pred_fallthru
        _
      // Predicated region
      $region21: #{tpu_custom_call.1} parent=11 // pred_check
        %p234 = pneg %p103
      $region22: #{tpu_custom_call.1} parent=11 // pred_check_branch
        %236 = sbr.rel (%p234) target = $region24
      $region23: #{tpu_custom_call.1} parent=11 // pred_region
        _
      $region24: #{tpu_custom_call.1} parent=11 // pred_fallthru
        _
      // Predicated region
      $region25: #{tpu_custom_call.1} parent=11 // pred_check
        %p237 = pneg %p124
      $region26: #{tpu_custom_call.1} parent=11 // pred_check_branch
        %239 = sbr.rel (%p237) target = $region28
      $region27: #{tpu_custom_call.1} parent=11 // pred_region
        _
      $region28: #{tpu_custom_call.1} parent=11 // pred_fallthru
        _
      // Predicated region
      $region29: #{tpu_custom_call.1} parent=11 // pred_check
        %p240 = pneg %p145
      $region30: #{tpu_custom_call.1} parent=11 // pred_check_branch
        %242 = sbr.rel (%p240) target = $region32
      $region31: #{tpu_custom_call.1} parent=11 // pred_region
        _
      $region32: #{tpu_custom_call.1} parent=11 // pred_fallthru
        _
      // Predicated region
      $region33: #{tpu_custom_call.1} parent=11 // pred_check
        %p243 = pneg %p166
      $region34: #{tpu_custom_call.1} parent=11 // pred_check_branch
        %245 = sbr.rel (%p243) target = $region36
      $region35: #{tpu_custom_call.1} parent=11 // pred_region
        _
      $region36: #{tpu_custom_call.1} parent=11 // pred_fallthru
        _
      // Predicated region
      $region37: #{tpu_custom_call.1} parent=11 // pred_check
        %p246 = pneg %p187
      $region38: #{tpu_custom_call.1} parent=11 // pred_check_branch
        %248 = sbr.rel (%p246) target = $region40
      $region39: #{tpu_custom_call.1} parent=11 // pred_region
        _
      $region40: #{tpu_custom_call.1} parent=11 // pred_fallthru
        _
    $region12: #{tpu_custom_call.1} parent=5 // pred_fallthru
      _
    %p249 = scmp.lt.s32.totalorder %s14, 2
    // Predicated region
    $region41: #{tpu_custom_call.1} parent=5 // pred_check
      %p250 = pneg %p249
    $region42: #{tpu_custom_call.1} parent=5 // pred_check_branch
      %252 = sbr.rel (%p250) target = $region44
    $region43: #{tpu_custom_call.1} parent=5 // pred_region
      // Predicated region
      $region45: #{tpu_custom_call.1} parent=43 // pred_check
        %p253 = pneg %p34
      $region46: #{tpu_custom_call.1} parent=43 // pred_check_branch
        %255 = sbr.rel (%p253) target = $region48
      $region47: #{tpu_custom_call.1} parent=43 // pred_region
        %p256 = scmp.lt.s32.totalorder %s14, 1
        %s257 = scalar_select %p256, %s14, 1
        %s258 = smul.addr %s257, 41
        %s259 = smul.addr %s258, 4
        %s260 = scalar_lea.vmem %s0, %s259
      $region48: #{tpu_custom_call.1} parent=43 // pred_fallthru
        _
    $region44: #{tpu_custom_call.1} parent=5 // pred_fallthru
      _
    %p261 = scmp.le.s32.totalorder 1, %s14
    %p262 = scmp.lt.s32.totalorder %s14, 3
    %p263 = pnand %p261, %p262
    %p264 = pneg %p263
    // Predicated region
    $region49: #{tpu_custom_call.1} parent=5 // pred_check
      _
    $region50: #{tpu_custom_call.1} parent=5 // pred_check_branch
      %266 = sbr.rel (%p263) target = $region52
    $region51: #{tpu_custom_call.1} parent=5 // pred_region
      %s267 = ssub.s32 %s14, 1
      %p268 = scmp.lt.s32.totalorder %s19, 1
      %s269 = scalar_select %p268, %s19, 1
      %s270 = smul.addr %s269, 41
      %s271 = smul.addr %s270, 4
      %s272 = scalar_lea.vmem %s0, %s271
      %p273 = pneg %p40
      %p274 = pneg %p37
      %p275 = pneg %p61
      %p276 = pneg %p58
      %p277 = pneg %p82
      %p278 = pneg %p79
      %p279 = pneg %p103
      %p280 = pneg %p100
      %p281 = pneg %p124
      %p282 = pneg %p121
      %p283 = pneg %p145
      %p284 = pneg %p142
      %p285 = pneg %p166
      %p286 = pneg %p163
      %p287 = pneg %p187
      %p288 = pneg %p184
      %p289 = pneg %p213
      %p290 = pneg %p210
      %p291 = scmp.lt.s32.totalorder %s19, 1
      %s292 = scalar_select %p291, %s19, 1
      %s293 = smul.addr %s292, 36
      %s294 = smul.addr %s293, 8
      %s295 = scalar_lea.vmem %s8, %s294
      %p296 = scmp.lt.s32.totalorder %s19, 1
      %s297 = scalar_select %p296, %s19, 1
      %s298 = smul.addr %s297, 41
      %s299 = smul.addr %s298, 4
      %s300 = scalar_lea.vmem %s0, %s299
      %p301 = scmp.lt.s32.totalorder %s19, 1
      %s302 = scalar_select %p301, %s19, 1
      %s303 = smul.addr %s302, 36
      %s304 = smul.addr %s303, 8
      %s305 = scalar_lea.vmem %s8, %s304
      %v307 = vld [vmem:[%s300] sm:$0xf]
      %v308 = vld [vmem:[%s300 + $0x4] sm:$0xf]
      %v309 = vld [vmem:[%s300 + $0x8] sm:$0xf]
      %v310 = vld [vmem:[%s300 + $0xc] sm:$0xf]
      %v311 = vld [vmem:[%s300 + $0x10] sm:$0xf]
      %v312 = vld [vmem:[%s300 + $0x14] sm:$0xf]
      %v313 = vld [vmem:[%s300 + $0x18] sm:$0xf]
      %v314 = vld [vmem:[%s300 + $0x1c] sm:$0xf]
      %v315 = vld [vmem:[%s300 + $0x20] sm:$0xf]
      %v316 = vld [vmem:[%s300 + $0x24] sm:$0xf]
      %v317 = vld [vmem:[%s300 + $0x28] sm:$0xf]
      %v318 = vld [vmem:[%s300 + $0x2c] sm:$0xf]
      %v319 = vld [vmem:[%s300 + $0x30] sm:$0xf]
      %v320 = vld [vmem:[%s300 + $0x34] sm:$0xf]
      %v321 = vld [vmem:[%s300 + $0x38] sm:$0xf]
      %v322 = vld [vmem:[%s300 + $0x3c] sm:$0xf]
      %v323 = vld [vmem:[%s300 + $0x40] sm:$0xf]
      %v324 = vld [vmem:[%s300 + $0x44] sm:$0xf]
      %v325 = vld [vmem:[%s300 + $0x48] sm:$0xf]
      %v326 = vld [vmem:[%s300 + $0x4c] sm:$0xf]
      %v327 = vld [vmem:[%s300 + $0x50] sm:$0xf]
      %v328 = vld [vmem:[%s300 + $0x54] sm:$0xf]
      %v329 = vld [vmem:[%s300 + $0x58] sm:$0xf]
      %v330 = vld [vmem:[%s300 + $0x5c] sm:$0xf]
      %v331 = vld [vmem:[%s300 + $0x60] sm:$0xf]
      %v332 = vld [vmem:[%s300 + $0x64] sm:$0xf]
      %v333 = vld [vmem:[%s300 + $0x68] sm:$0xf]
      %v334 = vld [vmem:[%s300 + $0x6c] sm:$0xf]
      %v335 = vld [vmem:[%s300 + $0x70] sm:$0xf]
      %v336 = vld [vmem:[%s300 + $0x74] sm:$0xf]
      %v337 = vld [vmem:[%s300 + $0x78] sm:$0xf]
      %v338 = vld [vmem:[%s300 + $0x7c] sm:$0xf]
      %v339 = vld [vmem:[%s300 + $0x80] sm:$0xf]
      %v340 = vld [vmem:[%s300 + $0x84] sm:$0xf]
      %v341 = vld [vmem:[%s300 + $0x88] sm:$0xf]
      %v342 = vld [vmem:[%s300 + $0x8c] sm:$0xf]
      %v343 = vld [vmem:[%s300 + $0x90] sm:$0xf]
      %v344 = vld [vmem:[%s300 + $0x94] sm:$0xf]
      %v345 = vld [vmem:[%s300 + $0x98] sm:$0xf]
      %v346 = vld [vmem:[%s300 + $0x9c] sm:$0xf]
      %v347 = vld [vmem:[%s300 + $0xa0] sm:$0xf]
      %v348 = vunpack.c.l.bf16 %v307
      %v349 = vunpack.c.l.bf16 %v308
      %v350 = vunpack.c.l.bf16 %v309
      %v351 = vunpack.c.l.bf16 %v310
      %v352 = vunpack.c.l.bf16 %v311
      %v353 = vunpack.c.l.bf16 %v312
      %v354 = vunpack.c.l.bf16 %v313
      %v355 = vunpack.c.l.bf16 %v314
      %v356 = vunpack.c.l.bf16 %v315
      %v357 = vunpack.c.l.bf16 %v316
      %v358 = vunpack.c.l.bf16 %v317
      %v359 = vunpack.c.l.bf16 %v318
      %v360 = vunpack.c.l.bf16 %v319
      %v361 = vunpack.c.l.bf16 %v320
      %v362 = vunpack.c.l.bf16 %v321
      %v363 = vunpack.c.l.bf16 %v322
      %v364 = vunpack.c.l.bf16 %v323
      %v365 = vunpack.c.l.bf16 %v324
      %v366 = vunpack.c.l.bf16 %v325
      %v367 = vunpack.c.l.bf16 %v326
      %v368 = vunpack.c.l.bf16 %v327
      %v369 = vunpack.c.l.bf16 %v328
      %v370 = vunpack.c.l.bf16 %v329
      %v371 = vunpack.c.l.bf16 %v330
      %v372 = vunpack.c.l.bf16 %v331
      %v373 = vunpack.c.l.bf16 %v332
      %v374 = vunpack.c.l.bf16 %v333
      %v375 = vunpack.c.l.bf16 %v334
      %v376 = vunpack.c.l.bf16 %v335
      %v377 = vunpack.c.l.bf16 %v336
      %v378 = vunpack.c.l.bf16 %v337
      %v379 = vunpack.c.l.bf16 %v338
      %v380 = vunpack.c.l.bf16 %v339
      %v381 = vunpack.c.l.bf16 %v340
      %v382 = vunpack.c.l.bf16 %v341
      %v383 = vunpack.c.l.bf16 %v342
      %v384 = vunpack.c.l.bf16 %v343
      %v385 = vunpack.c.l.bf16 %v344
      %v386 = vunpack.c.l.bf16 %v345
      %v387 = vunpack.c.l.bf16 %v346
      %v388 = vunpack.c.l.bf16 %v347
      %vm389 = vcmask 64512
      %390 = vst.msk [vmem:[#allocation2] sm:$0xff] %vm389, %v348
      %391 = vst.msk [vmem:[#allocation2 + $0x8] sm:$0xff] %vm389, %v349
      %392 = vst.msk [vmem:[#allocation2 + $0x10] sm:$0xff] %vm389, %v350
      %393 = vst.msk [vmem:[#allocation2 + $0x18] sm:$0xff] %vm389, %v351
      %394 = vst.msk [vmem:[#allocation2 + $0x20] sm:$0xff] %vm389, %v352
      %395 = vst.msk [vmem:[#allocation2 + $0x28] sm:$0xff] %vm389, %v353
      %396 = vst.msk [vmem:[#allocation2 + $0x30] sm:$0xff] %vm389, %v354
      %397 = vst.msk [vmem:[#allocation2 + $0x38] sm:$0xff] %vm389, %v355
      %398 = vst.msk [vmem:[#allocation2 + $0x40] sm:$0xff] %vm389, %v356
      %399 = vst.msk [vmem:[#allocation2 + $0x48] sm:$0xff] %vm389, %v357
      %400 = vst.msk [vmem:[#allocation2 + $0x50] sm:$0xff] %vm389, %v358
      %401 = vst.msk [vmem:[#allocation2 + $0x58] sm:$0xff] %vm389, %v359
      %402 = vst.msk [vmem:[#allocation2 + $0x60] sm:$0xff] %vm389, %v360
      %403 = vst.msk [vmem:[#allocation2 + $0x68] sm:$0xff] %vm389, %v361
      %404 = vst.msk [vmem:[#allocation2 + $0x70] sm:$0xff] %vm389, %v362
      %405 = vst.msk [vmem:[#allocation2 + $0x78] sm:$0xff] %vm389, %v363
      %406 = vst.msk [vmem:[#allocation2 + $0x80] sm:$0xff] %vm389, %v364
      %407 = vst.msk [vmem:[#allocation2 + $0x88] sm:$0xff] %vm389, %v365
      %408 = vst.msk [vmem:[#allocation2 + $0x90] sm:$0xff] %vm389, %v366
      %409 = vst.msk [vmem:[#allocation2 + $0x98] sm:$0xff] %vm389, %v367
      %410 = vst.msk [vmem:[#allocation2 + $0xa0] sm:$0xff] %vm389, %v368
      %411 = vst.msk [vmem:[#allocation2 + $0xa8] sm:$0xff] %vm389, %v369
      %412 = vst.msk [vmem:[#allocation2 + $0xb0] sm:$0xff] %vm389, %v370
      %413 = vst.msk [vmem:[#allocation2 + $0xb8] sm:$0xff] %vm389, %v371
      %414 = vst.msk [vmem:[#allocation2 + $0xc0] sm:$0xff] %vm389, %v372
      %415 = vst.msk [vmem:[#allocation2 + $0xc8] sm:$0xff] %vm389, %v373
      %416 = vst.msk [vmem:[#allocation2 + $0xd0] sm:$0xff] %vm389, %v374
      %417 = vst.msk [vmem:[#allocation2 + $0xd8] sm:$0xff] %vm389, %v375
      %418 = vst.msk [vmem:[#allocation2 + $0xe0] sm:$0xff] %vm389, %v376
      %419 = vst.msk [vmem:[#allocation2 + $0xe8] sm:$0xff] %vm389, %v377
      %420 = vst.msk [vmem:[#allocation2 + $0xf0] sm:$0xff] %vm389, %v378
      %421 = vst.msk [vmem:[#allocation2 + $0xf8] sm:$0xff] %vm389, %v379
      %422 = vst.msk [vmem:[#allocation2 + $0x100] sm:$0xff] %vm389, %v380
      %423 = vst.msk [vmem:[#allocation2 + $0x108] sm:$0xff] %vm389, %v381
      %424 = vst.msk [vmem:[#allocation2 + $0x110] sm:$0xff] %vm389, %v382
      %425 = vst.msk [vmem:[#allocation2 + $0x118] sm:$0xff] %vm389, %v383
      %426 = vst.msk [vmem:[#allocation2 + $0x120] sm:$0xff] %vm389, %v384
      %427 = vst.msk [vmem:[#allocation2 + $0x128] sm:$0xff] %vm389, %v385
      %428 = vst.msk [vmem:[#allocation2 + $0x130] sm:$0xff] %vm389, %v386
      %429 = vst.msk [vmem:[#allocation2 + $0x138] sm:$0xff] %vm389, %v387
      %430 = vst.msk [vmem:[#allocation2 + $0x140] sm:$0xff] %vm389, %v388
      %431 = vst.msk [vmem:[#allocation3] sm:$0xff] %vm389, 0.0
      %432 = vst.msk [vmem:[#allocation3 + $0x8] sm:$0xff] %vm389, 0.0
      %vm433 = vcmask 59392
      %434 = vst.msk [vmem:[#allocation3 + $0x10] sm:$0x7] %vm433, 0.0
      %435 = vst.msk [vmem:[#allocation3 + $0x133] sm:$0xff] %vm389, 0.0
      %436 = vst.msk [vmem:[#allocation3 + $0x13b] sm:$0xff] %vm389, 0.0
      %vm437 = vcmask 61440
      %438 = vst.msk [vmem:[#allocation3 + $0x143] sm:$0x1f] %vm437, 0.0
      %v439 = vld [vmem:[#allocation2] sm:$0xff]
      %v440 = vld [vmem:[#allocation2 + $0x8] sm:$0xff]
      %v441 = vld [vmem:[#allocation2 + $0x10] sm:$0xff]
      %v442 = vld [vmem:[#allocation2 + $0x18] sm:$0xff]
      %v443 = vld [vmem:[#allocation2 + $0x20] sm:$0xff]
      %v444 = vld [vmem:[#allocation2 + $0x28] sm:$0xff]
      %v445 = vld [vmem:[#allocation2 + $0x30] sm:$0xff]
      %v446 = vld [vmem:[#allocation2 + $0x38] sm:$0xff]
      %v447 = vld [vmem:[#allocation2 + $0x40] sm:$0xff]
      %v448 = vld [vmem:[#allocation2 + $0x48] sm:$0xff]
      %v449 = vld [vmem:[#allocation2 + $0x50] sm:$0xff]
      %v450 = vld [vmem:[#allocation2 + $0x58] sm:$0xff]
      %v451 = vld [vmem:[#allocation2 + $0x60] sm:$0xff]
      %v452 = vld [vmem:[#allocation2 + $0x68] sm:$0xff]
      %v453 = vld [vmem:[#allocation2 + $0x70] sm:$0xff]
      %v454 = vld [vmem:[#allocation2 + $0x78] sm:$0xff]
      %v455 = vld [vmem:[#allocation2 + $0x80] sm:$0xff]
      %v456 = vld [vmem:[#allocation2 + $0x88] sm:$0xff]
      %v457 = vld [vmem:[#allocation2 + $0x90] sm:$0xff]
      %v458 = vld [vmem:[#allocation2 + $0x98] sm:$0xff]
      %v459 = vld [vmem:[#allocation2 + $0xa0] sm:$0xff]
      %v460 = vld [vmem:[#allocation2 + $0xa8] sm:$0xff]
      %v461 = vld [vmem:[#allocation2 + $0xb0] sm:$0xff]
      %v462 = vld [vmem:[#allocation2 + $0xb8] sm:$0xff]
      %v463 = vld [vmem:[#allocation2 + $0xc0] sm:$0xff]
      %v464 = vld [vmem:[#allocation2 + $0xc8] sm:$0xff]
      %v465 = vld [vmem:[#allocation2 + $0xd0] sm:$0xff]
      %v466 = vld [vmem:[#allocation2 + $0xd8] sm:$0xff]
      %v467 = vld [vmem:[#allocation2 + $0xe0] sm:$0xff]
      %v468 = vld [vmem:[#allocation2 + $0xe8] sm:$0xff]
      %v469 = vld [vmem:[#allocation2 + $0xf0] sm:$0xff]
      %v470 = vld [vmem:[#allocation2 + $0xf8] sm:$0xff]
      %v471 = vld [vmem:[#allocation2 + $0x100] sm:$0xff]
      %v472 = vld [vmem:[#allocation2 + $0x108] sm:$0xff]
      %v473 = vld [vmem:[#allocation2 + $0x110] sm:$0xff]
      %v474 = vld [vmem:[#allocation2 + $0x118] sm:$0xff]
      %v475 = vpack.c.bf16 %v440, %v439
      %v476 = vpack.c.bf16 %v442, %v441
      %v477 = vpack.c.bf16 %v444, %v443
      %v478 = vpack.c.bf16 %v446, %v445
      %v479 = vpack.c.bf16 %v448, %v447
      %v480 = vpack.c.bf16 %v450, %v449
      %v481 = vpack.c.bf16 %v452, %v451
      %v482 = vpack.c.bf16 %v454, %v453
      %v483 = vpack.c.bf16 %v456, %v455
      %v484 = vpack.c.bf16 %v458, %v457
      %v485 = vpack.c.bf16 %v460, %v459
      %v486 = vpack.c.bf16 %v462, %v461
      %v487 = vpack.c.bf16 %v464, %v463
      %v488 = vpack.c.bf16 %v466, %v465
      %v489 = vpack.c.bf16 %v468, %v467
      %v490 = vpack.c.bf16 %v470, %v469
      %v491 = vpack.c.bf16 %v472, %v471
      %v492 = vpack.c.bf16 %v474, %v473
      %v493 = vld [vmem:[%s1] sm:$0xf]
      %v495 = vsel %vm389, %v475, 0
      %v498 = vsel %vm389, %v476, 0
      %v501 = vsel %vm389, %v477, 0
      %v504 = vsel %vm389, %v478, 0
      %v507 = vsel %vm389, %v479, 0
      %v510 = vsel %vm389, %v480, 0
      %v513 = vsel %vm389, %v481, 0
      %v516 = vsel %vm389, %v482, 0
      %v519 = vsel %vm389, %v483, 0
      %v522 = vsel %vm389, %v484, 0
      %v525 = vsel %vm389, %v485, 0
      %v528 = vsel %vm389, %v486, 0
      %v531 = vsel %vm389, %v487, 0
      %v534 = vsel %vm389, %v488, 0
      %v537 = vsel %vm389, %v489, 0
      %v540 = vsel %vm389, %v490, 0
      %v543 = vsel %vm389, %v491, 0
      %v546 = vsel %vm389, %v492, 0
      %vm548 = vcmask 1043456
      %v550 = vsel %vm548, %v493, 0
      %552 = vmatpush.bf16.msra.mxu0 0
      %553 = vmatpush.bf16.msra.mxu0 0
      %554 = vmatpush.bf16.msra.mxu0 0
      %555 = vmatpush.bf16.msra.mxu0 0
      %556 = vmatpush.bf16.msra.mxu0 0
      %557 = vmatpush.bf16.msra.mxu0 0
      %558 = vmatpush.bf16.msra.mxu0 0
      %559 = vmatpush.bf16.msra.mxu0 %v550
      %560 = vmatmul.bf16.gmra.mxu0 %v495
      %v561 = vpop.f32.mrf.mxu0
      %v562 = vadd.f32 0.0, %v561
      %v563 = vpop.f32.mrf.mxu0
      %v564 = vadd.f32 0.0, %v563
      %565 = vmatmul.bf16.gmra.mxu0 %v498
      %v566 = vpop.f32.mrf.mxu0
      %v567 = vadd.f32 0.0, %v566
      %v568 = vpop.f32.mrf.mxu0
      %v569 = vadd.f32 0.0, %v568
      %570 = vmatmul.bf16.gmra.mxu0 %v501
      %v571 = vpop.f32.mrf.mxu0
      %v572 = vadd.f32 0.0, %v571
      %v573 = vpop.f32.mrf.mxu0
      %v574 = vadd.f32 0.0, %v573
      %575 = vmatmul.bf16.gmra.mxu0 %v504
      %v576 = vpop.f32.mrf.mxu0
      %v577 = vadd.f32 0.0, %v576
      %v578 = vpop.f32.mrf.mxu0
      %v579 = vadd.f32 0.0, %v578
      %580 = vmatmul.bf16.gmra.mxu0 %v507
      %v581 = vpop.f32.mrf.mxu0
      %v582 = vadd.f32 0.0, %v581
      %v583 = vpop.f32.mrf.mxu0
      %v584 = vadd.f32 0.0, %v583
      %585 = vmatmul.bf16.gmra.mxu0 %v510
      %v586 = vpop.f32.mrf.mxu0
      %v587 = vadd.f32 0.0, %v586
      %v588 = vpop.f32.mrf.mxu0
      %v589 = vadd.f32 0.0, %v588
      %590 = vmatmul.bf16.gmra.mxu0 %v513
      %v591 = vpop.f32.mrf.mxu0
      %v592 = vadd.f32 0.0, %v591
      %v593 = vpop.f32.mrf.mxu0
      %v594 = vadd.f32 0.0, %v593
      %595 = vmatmul.bf16.gmra.mxu0 %v516
      %v596 = vpop.f32.mrf.mxu0
      %v597 = vadd.f32 0.0, %v596
      %v598 = vpop.f32.mrf.mxu0
      %v599 = vadd.f32 0.0, %v598
      %600 = vmatmul.bf16.gmra.mxu0 %v519
      %v601 = vpop.f32.mrf.mxu0
      %v602 = vadd.f32 0.0, %v601
      %v603 = vpop.f32.mrf.mxu0
      %v604 = vadd.f32 0.0, %v603
      %605 = vmatmul.bf16.gmra.mxu0 %v522
      %v606 = vpop.f32.mrf.mxu0
      %v607 = vadd.f32 0.0, %v606
      %v608 = vpop.f32.mrf.mxu0
      %v609 = vadd.f32 0.0, %v608
      %610 = vmatmul.bf16.gmra.mxu0 %v525
      %v611 = vpop.f32.mrf.mxu0
      %v612 = vadd.f32 0.0, %v611
      %v613 = vpop.f32.mrf.mxu0
      %v614 = vadd.f32 0.0, %v613
      %615 = vmatmul.bf16.gmra.mxu0 %v528
      %v616 = vpop.f32.mrf.mxu0
      %v617 = vadd.f32 0.0, %v616
      %v618 = vpop.f32.mrf.mxu0
      %v619 = vadd.f32 0.0, %v618
      %620 = vmatmul.bf16.gmra.mxu0 %v531
      %v621 = vpop.f32.mrf.mxu0
      %v622 = vadd.f32 0.0, %v621
      %v623 = vpop.f32.mrf.mxu0
      %v624 = vadd.f32 0.0, %v623
      %625 = vmatmul.bf16.gmra.mxu0 %v534
      %v626 = vpop.f32.mrf.mxu0
      %v627 = vadd.f32 0.0, %v626
      %v628 = vpop.f32.mrf.mxu0
      %v629 = vadd.f32 0.0, %v628
      %630 = vmatmul.bf16.gmra.mxu0 %v537
      %v631 = vpop.f32.mrf.mxu0
      %v632 = vadd.f32 0.0, %v631
      %v633 = vpop.f32.mrf.mxu0
      %v634 = vadd.f32 0.0, %v633
      %635 = vmatmul.bf16.gmra.mxu0 %v540
      %v636 = vpop.f32.mrf.mxu0
      %v637 = vadd.f32 0.0, %v636
      %v638 = vpop.f32.mrf.mxu0
      %v639 = vadd.f32 0.0, %v638
      %640 = vmatmul.bf16.gmra.mxu0 %v543
      %v641 = vpop.f32.mrf.mxu0
      %v642 = vadd.f32 0.0, %v641
      %v643 = vpop.f32.mrf.mxu0
      %v644 = vadd.f32 0.0, %v643
      %645 = vmatmul.bf16.gmra.mxu0 %v546
      %v646 = vpop.f32.mrf.mxu0
      %v647 = vadd.f32 0.0, %v646
      %v648 = vpop.f32.mrf.mxu0
      %v649 = vadd.f32 0.0, %v648
      %650 = vdwg.mxu0
      %651 = vst.msk [vmem:[#allocation4] sm:$0xff] %vm389, %v562
      %652 = vst.msk [vmem:[#allocation4 + $0x8] sm:$0xff] %vm389, %v564
      %653 = vst.msk [vmem:[#allocation4 + $0x10] sm:$0xff] %vm389, %v567
      %654 = vst.msk [vmem:[#allocation4 + $0x18] sm:$0xff] %vm389, %v569
      %655 = vst.msk [vmem:[#allocation4 + $0x20] sm:$0xff] %vm389, %v572
      %656 = vst.msk [vmem:[#allocation4 + $0x28] sm:$0xff] %vm389, %v574
      %657 = vst.msk [vmem:[#allocation4 + $0x30] sm:$0xff] %vm389, %v577
      %658 = vst.msk [vmem:[#allocation4 + $0x38] sm:$0xff] %vm389, %v579
      %659 = vst.msk [vmem:[#allocation4 + $0x40] sm:$0xff] %vm389, %v582
      %660 = vst.msk [vmem:[#allocation4 + $0x48] sm:$0xff] %vm389, %v584
      %661 = vst.msk [vmem:[#allocation4 + $0x50] sm:$0xff] %vm389, %v587
      %662 = vst.msk [vmem:[#allocation4 + $0x58] sm:$0xff] %vm389, %v589
      %663 = vst.msk [vmem:[#allocation4 + $0x60] sm:$0xff] %vm389, %v592
      %664 = vst.msk [vmem:[#allocation4 + $0x68] sm:$0xff] %vm389, %v594
      %665 = vst.msk [vmem:[#allocation4 + $0x70] sm:$0xff] %vm389, %v597
      %666 = vst.msk [vmem:[#allocation4 + $0x78] sm:$0xff] %vm389, %v599
      %667 = vst.msk [vmem:[#allocation4 + $0x80] sm:$0xff] %vm389, %v602
      %668 = vst.msk [vmem:[#allocation4 + $0x88] sm:$0xff] %vm389, %v604
      %669 = vst.msk [vmem:[#allocation4 + $0x90] sm:$0xff] %vm389, %v607
      %670 = vst.msk [vmem:[#allocation4 + $0x98] sm:$0xff] %vm389, %v609
      %671 = vst.msk [vmem:[#allocation4 + $0xa0] sm:$0xff] %vm389, %v612
      %672 = vst.msk [vmem:[#allocation4 + $0xa8] sm:$0xff] %vm389, %v614
      %673 = vst.msk [vmem:[#allocation4 + $0xb0] sm:$0xff] %vm389, %v617
      %674 = vst.msk [vmem:[#allocation4 + $0xb8] sm:$0xff] %vm389, %v619
      %675 = vst.msk [vmem:[#allocation4 + $0xc0] sm:$0xff] %vm389, %v622
      %676 = vst.msk [vmem:[#allocation4 + $0xc8] sm:$0xff] %vm389, %v624
      %677 = vst.msk [vmem:[#allocation4 + $0xd0] sm:$0xff] %vm389, %v627
      %678 = vst.msk [vmem:[#allocation4 + $0xd8] sm:$0xff] %vm389, %v629
      %679 = vst.msk [vmem:[#allocation4 + $0xe0] sm:$0xff] %vm389, %v632
      %680 = vst.msk [vmem:[#allocation4 + $0xe8] sm:$0xff] %vm389, %v634
      %681 = vst.msk [vmem:[#allocation4 + $0xf0] sm:$0xff] %vm389, %v637
      %682 = vst.msk [vmem:[#allocation4 + $0xf8] sm:$0xff] %vm389, %v639
      %683 = vst.msk [vmem:[#allocation4 + $0x100] sm:$0xff] %vm389, %v642
      %684 = vst.msk [vmem:[#allocation4 + $0x108] sm:$0xff] %vm389, %v644
      %685 = vst.msk [vmem:[#allocation4 + $0x110] sm:$0xff] %vm389, %v647
      %686 = vst.msk [vmem:[#allocation4 + $0x118] sm:$0xff] %vm389, %v649
      %v687 = vld [vmem:[#allocation2 + $0x1] sm:$0xff]
      %v688 = vld [vmem:[#allocation2 + $0x9] sm:$0xff]
      %v689 = vld [vmem:[#allocation2 + $0x11] sm:$0xff]
      %v690 = vld [vmem:[#allocation2 + $0x19] sm:$0xff]
      %v691 = vld [vmem:[#allocation2 + $0x21] sm:$0xff]
      %v692 = vld [vmem:[#allocation2 + $0x29] sm:$0xff]
      %v693 = vld [vmem:[#allocation2 + $0x31] sm:$0xff]
      %v694 = vld [vmem:[#allocation2 + $0x39] sm:$0xff]
      %v695 = vld [vmem:[#allocation2 + $0x41] sm:$0xff]
      %v696 = vld [vmem:[#allocation2 + $0x49] sm:$0xff]
      %v697 = vld [vmem:[#allocation2 + $0x51] sm:$0xff]
      %v698 = vld [vmem:[#allocation2 + $0x59] sm:$0xff]
      %v699 = vld [vmem:[#allocation2 + $0x61] sm:$0xff]
      %v700 = vld [vmem:[#allocation2 + $0x69] sm:$0xff]
      %v701 = vld [vmem:[#allocation2 + $0x71] sm:$0xff]
      %v702 = vld [vmem:[#allocation2 + $0x79] sm:$0xff]
      %v703 = vld [vmem:[#allocation2 + $0x81] sm:$0xff]
      %v704 = vld [vmem:[#allocation2 + $0x89] sm:$0xff]
      %v705 = vld [vmem:[#allocation2 + $0x91] sm:$0xff]
      %v706 = vld [vmem:[#allocation2 + $0x99] sm:$0xff]
      %v707 = vld [vmem:[#allocation2 + $0xa1] sm:$0xff]
      %v708 = vld [vmem:[#allocation2 + $0xa9] sm:$0xff]
      %v709 = vld [vmem:[#allocation2 + $0xb1] sm:$0xff]
      %v710 = vld [vmem:[#allocation2 + $0xb9] sm:$0xff]
      %v711 = vld [vmem:[#allocation2 + $0xc1] sm:$0xff]
      %v712 = vld [vmem:[#allocation2 + $0xc9] sm:$0xff]
      %v713 = vld [vmem:[#allocation2 + $0xd1] sm:$0xff]
      %v714 = vld [vmem:[#allocation2 + $0xd9] sm:$0xff]
      %v715 = vld [vmem:[#allocation2 + $0xe1] sm:$0xff]
      %v716 = vld [vmem:[#allocation2 + $0xe9] sm:$0xff]
      %v717 = vld [vmem:[#allocation2 + $0xf1] sm:$0xff]
      %v718 = vld [vmem:[#allocation2 + $0xf9] sm:$0xff]
      %v719 = vld [vmem:[#allocation2 + $0x101] sm:$0xff]
      %v720 = vld [vmem:[#allocation2 + $0x109] sm:$0xff]
      %v721 = vld [vmem:[#allocation2 + $0x111] sm:$0xff]
      %v722 = vld [vmem:[#allocation2 + $0x119] sm:$0xff]
      %v723 = vpack.c.bf16 %v688, %v687
      %v724 = vpack.c.bf16 %v690, %v689
      %v725 = vpack.c.bf16 %v692, %v691
      %v726 = vpack.c.bf16 %v694, %v693
      %v727 = vpack.c.bf16 %v696, %v695
      %v728 = vpack.c.bf16 %v698, %v697
      %v729 = vpack.c.bf16 %v700, %v699
      %v730 = vpack.c.bf16 %v702, %v701
      %v731 = vpack.c.bf16 %v704, %v703
      %v732 = vpack.c.bf16 %v706, %v705
      %v733 = vpack.c.bf16 %v708, %v707
      %v734 = vpack.c.bf16 %v710, %v709
      %v735 = vpack.c.bf16 %v712, %v711
      %v736 = vpack.c.bf16 %v714, %v713
      %v737 = vpack.c.bf16 %v716, %v715
      %v738 = vpack.c.bf16 %v718, %v717
      %v739 = vpack.c.bf16 %v720, %v719
      %v740 = vpack.c.bf16 %v722, %v721
      %s741 = scalar_lea.vmem %s1, 4
      %v742 = vld [vmem:[%s741] sm:$0xf]
      %v744 = vsel %vm389, %v723, 0
      %v747 = vsel %vm389, %v724, 0
      %v750 = vsel %vm389, %v725, 0
      %v753 = vsel %vm389, %v726, 0
      %v756 = vsel %vm389, %v727, 0
      %v759 = vsel %vm389, %v728, 0
      %v762 = vsel %vm389, %v729, 0
      %v765 = vsel %vm389, %v730, 0
      %v768 = vsel %vm389, %v731, 0
      %v771 = vsel %vm389, %v732, 0
      %v774 = vsel %vm389, %v733, 0
      %v777 = vsel %vm389, %v734, 0
      %v780 = vsel %vm389, %v735, 0
      %v783 = vsel %vm389, %v736, 0
      %v786 = vsel %vm389, %v737, 0
      %v789 = vsel %vm389, %v738, 0
      %v792 = vsel %vm389, %v739, 0
      %v795 = vsel %vm389, %v740, 0
      %v798 = vsel %vm548, %v742, 0
      %800 = vmatpush.bf16.msra.mxu0 0
      %801 = vmatpush.bf16.msra.mxu0 0
      %802 = vmatpush.bf16.msra.mxu0 0
      %803 = vmatpush.bf16.msra.mxu0 0
      %804 = vmatpush.bf16.msra.mxu0 0
      %805 = vmatpush.bf16.msra.mxu0 0
      %806 = vmatpush.bf16.msra.mxu0 0
      %807 = vmatpush.bf16.msra.mxu0 %v798
      %808 = vmatmul.bf16.gmra.mxu0 %v744
      %v809 = vpop.f32.mrf.mxu0
      %v810 = vadd.f32 0.0, %v809
      %v811 = vpop.f32.mrf.mxu0
      %v812 = vadd.f32 0.0, %v811
      %813 = vmatmul.bf16.gmra.mxu0 %v747
      %v814 = vpop.f32.mrf.mxu0
      %v815 = vadd.f32 0.0, %v814
      %v816 = vpop.f32.mrf.mxu0
      %v817 = vadd.f32 0.0, %v816
      %818 = vmatmul.bf16.gmra.mxu0 %v750
      %v819 = vpop.f32.mrf.mxu0
      %v820 = vadd.f32 0.0, %v819
      %v821 = vpop.f32.mrf.mxu0
      %v822 = vadd.f32 0.0, %v821
      %823 = vmatmul.bf16.gmra.mxu0 %v753
      %v824 = vpop.f32.mrf.mxu0
      %v825 = vadd.f32 0.0, %v824
      %v826 = vpop.f32.mrf.mxu0
      %v827 = vadd.f32 0.0, %v826
      %828 = vmatmul.bf16.gmra.mxu0 %v756
      %v829 = vpop.f32.mrf.mxu0
      %v830 = vadd.f32 0.0, %v829
      %v831 = vpop.f32.mrf.mxu0
      %v832 = vadd.f32 0.0, %v831
      %833 = vmatmul.bf16.gmra.mxu0 %v759
      %v834 = vpop.f32.mrf.mxu0
      %v835 = vadd.f32 0.0, %v834
      %v836 = vpop.f32.mrf.mxu0
      %v837 = vadd.f32 0.0, %v836
      %838 = vmatmul.bf16.gmra.mxu0 %v762
      %v839 = vpop.f32.mrf.mxu0
      %v840 = vadd.f32 0.0, %v839
      %v841 = vpop.f32.mrf.mxu0
      %v842 = vadd.f32 0.0, %v841
      %843 = vmatmul.bf16.gmra.mxu0 %v765
      %v844 = vpop.f32.mrf.mxu0
      %v845 = vadd.f32 0.0, %v844
      %v846 = vpop.f32.mrf.mxu0
      %v847 = vadd.f32 0.0, %v846
      %848 = vmatmul.bf16.gmra.mxu0 %v768
      %v849 = vpop.f32.mrf.mxu0
      %v850 = vadd.f32 0.0, %v849
      %v851 = vpop.f32.mrf.mxu0
      %v852 = vadd.f32 0.0, %v851
      %853 = vmatmul.bf16.gmra.mxu0 %v771
      %v854 = vpop.f32.mrf.mxu0
      %v855 = vadd.f32 0.0, %v854
      %v856 = vpop.f32.mrf.mxu0
      %v857 = vadd.f32 0.0, %v856
      %858 = vmatmul.bf16.gmra.mxu0 %v774
      %v859 = vpop.f32.mrf.mxu0
      %v860 = vadd.f32 0.0, %v859
      %v861 = vpop.f32.mrf.mxu0
      %v862 = vadd.f32 0.0, %v861
      %863 = vmatmul.bf16.gmra.mxu0 %v777
      %v864 = vpop.f32.mrf.mxu0
      %v865 = vadd.f32 0.0, %v864
      %v866 = vpop.f32.mrf.mxu0
      %v867 = vadd.f32 0.0, %v866
      %868 = vmatmul.bf16.gmra.mxu0 %v780
      %v869 = vpop.f32.mrf.mxu0
      %v870 = vadd.f32 0.0, %v869
      %v871 = vpop.f32.mrf.mxu0
      %v872 = vadd.f32 0.0, %v871
      %873 = vmatmul.bf16.gmra.mxu0 %v783
      %v874 = vpop.f32.mrf.mxu0
      %v875 = vadd.f32 0.0, %v874
      %v876 = vpop.f32.mrf.mxu0
      %v877 = vadd.f32 0.0, %v876
      %878 = vmatmul.bf16.gmra.mxu0 %v786
      %v879 = vpop.f32.mrf.mxu0
      %v880 = vadd.f32 0.0, %v879
      %v881 = vpop.f32.mrf.mxu0
      %v882 = vadd.f32 0.0, %v881
      %883 = vmatmul.bf16.gmra.mxu0 %v789
      %v884 = vpop.f32.mrf.mxu0
      %v885 = vadd.f32 0.0, %v884
      %v886 = vpop.f32.mrf.mxu0
      %v887 = vadd.f32 0.0, %v886
      %888 = vmatmul.bf16.gmra.mxu0 %v792
      %v889 = vpop.f32.mrf.mxu0
      %v890 = vadd.f32 0.0, %v889
      %v891 = vpop.f32.mrf.mxu0
      %v892 = vadd.f32 0.0, %v891
      %893 = vmatmul.bf16.gmra.mxu0 %v795
      %v894 = vpop.f32.mrf.mxu0
      %v895 = vadd.f32 0.0, %v894
      %v896 = vpop.f32.mrf.mxu0
      %v897 = vadd.f32 0.0, %v896
      %898 = vdwg.mxu0
      %v899 = vld [vmem:[#allocation4] sm:$0xff]
      %v900 = vld [vmem:[#allocation4 + $0x8] sm:$0xff]
      %v901 = vld [vmem:[#allocation4 + $0x10] sm:$0xff]
      %v902 = vld [vmem:[#allocation4 + $0x18] sm:$0xff]
      %v903 = vld [vmem:[#allocation4 + $0x20] sm:$0xff]
      %v904 = vld [vmem:[#allocation4 + $0x28] sm:$0xff]
      %v905 = vld [vmem:[#allocation4 + $0x30] sm:$0xff]
      %v906 = vld [vmem:[#allocation4 + $0x38] sm:$0xff]
      %v907 = vld [vmem:[#allocation4 + $0x40] sm:$0xff]
      %v908 = vld [vmem:[#allocation4 + $0x48] sm:$0xff]
      %v909 = vld [vmem:[#allocation4 + $0x50] sm:$0xff]
      %v910 = vld [vmem:[#allocation4 + $0x58] sm:$0xff]
      %v911 = vld [vmem:[#allocation4 + $0x60] sm:$0xff]
      %v912 = vld [vmem:[#allocation4 + $0x68] sm:$0xff]
      %v913 = vld [vmem:[#allocation4 + $0x70] sm:$0xff]
      %v914 = vld [vmem:[#allocation4 + $0x78] sm:$0xff]
      %v915 = vld [vmem:[#allocation4 + $0x80] sm:$0xff]
      %v916 = vld [vmem:[#allocation4 + $0x88] sm:$0xff]
      %v917 = vld [vmem:[#allocation4 + $0x90] sm:$0xff]
      %v918 = vld [vmem:[#allocation4 + $0x98] sm:$0xff]
      %v919 = vld [vmem:[#allocation4 + $0xa0] sm:$0xff]
      %v920 = vld [vmem:[#allocation4 + $0xa8] sm:$0xff]
      %v921 = vld [vmem:[#allocation4 + $0xb0] sm:$0xff]
      %v922 = vld [vmem:[#allocation4 + $0xb8] sm:$0xff]
      %v923 = vld [vmem:[#allocation4 + $0xc0] sm:$0xff]
      %v924 = vld [vmem:[#allocation4 + $0xc8] sm:$0xff]
      %v925 = vld [vmem:[#allocation4 + $0xd0] sm:$0xff]
      %v926 = vld [vmem:[#allocation4 + $0xd8] sm:$0xff]
      %v927 = vld [vmem:[#allocation4 + $0xe0] sm:$0xff]
      %v928 = vld [vmem:[#allocation4 + $0xe8] sm:$0xff]
      %v929 = vld [vmem:[#allocation4 + $0xf0] sm:$0xff]
      %v930 = vld [vmem:[#allocation4 + $0xf8] sm:$0xff]
      %v931 = vld [vmem:[#allocation4 + $0x100] sm:$0xff]
      %v932 = vld [vmem:[#allocation4 + $0x108] sm:$0xff]
      %v933 = vld [vmem:[#allocation4 + $0x110] sm:$0xff]
      %v934 = vld [vmem:[#allocation4 + $0x118] sm:$0xff]
      %v935 = vadd.f32 %v899, %v810
      %v936 = vadd.f32 %v900, %v812
      %v937 = vadd.f32 %v901, %v815
      %v938 = vadd.f32 %v902, %v817
      %v939 = vadd.f32 %v903, %v820
      %v940 = vadd.f32 %v904, %v822
      %v941 = vadd.f32 %v905, %v825
      %v942 = vadd.f32 %v906, %v827
      %v943 = vadd.f32 %v907, %v830
      %v944 = vadd.f32 %v908, %v832
      %v945 = vadd.f32 %v909, %v835
      %v946 = vadd.f32 %v910, %v837
      %v947 = vadd.f32 %v911, %v840
      %v948 = vadd.f32 %v912, %v842
      %v949 = vadd.f32 %v913, %v845
      %v950 = vadd.f32 %v914, %v847
      %v951 = vadd.f32 %v915, %v850
      %v952 = vadd.f32 %v916, %v852
      %v953 = vadd.f32 %v917, %v855
      %v954 = vadd.f32 %v918, %v857
      %v955 = vadd.f32 %v919, %v860
      %v956 = vadd.f32 %v920, %v862
      %v957 = vadd.f32 %v921, %v865
      %v958 = vadd.f32 %v922, %v867
      %v959 = vadd.f32 %v923, %v870
      %v960 = vadd.f32 %v924, %v872
      %v961 = vadd.f32 %v925, %v875
      %v962 = vadd.f32 %v926, %v877
      %v963 = vadd.f32 %v927, %v880
      %v964 = vadd.f32 %v928, %v882
      %v965 = vadd.f32 %v929, %v885
      %v966 = vadd.f32 %v930, %v887
      %v967 = vadd.f32 %v931, %v890
      %v968 = vadd.f32 %v932, %v892
      %v969 = vadd.f32 %v933, %v895
      %v970 = vadd.f32 %v934, %v897
      %971 = vst.msk [vmem:[#allocation4] sm:$0xff] %vm389, %v935
      %972 = vst.msk [vmem:[#allocation4 + $0x8] sm:$0xff] %vm389, %v936
      %973 = vst.msk [vmem:[#allocation4 + $0x10] sm:$0xff] %vm389, %v937
      %974 = vst.msk [vmem:[#allocation4 + $0x18] sm:$0xff] %vm389, %v938
      %975 = vst.msk [vmem:[#allocation4 + $0x20] sm:$0xff] %vm389, %v939
      %976 = vst.msk [vmem:[#allocation4 + $0x28] sm:$0xff] %vm389, %v940
      %977 = vst.msk [vmem:[#allocation4 + $0x30] sm:$0xff] %vm389, %v941
      %978 = vst.msk [vmem:[#allocation4 + $0x38] sm:$0xff] %vm389, %v942
      %979 = vst.msk [vmem:[#allocation4 + $0x40] sm:$0xff] %vm389, %v943
      %980 = vst.msk [vmem:[#allocation4 + $0x48] sm:$0xff] %vm389, %v944
      %981 = vst.msk [vmem:[#allocation4 + $0x50] sm:$0xff] %vm389, %v945
      %982 = vst.msk [vmem:[#allocation4 + $0x58] sm:$0xff] %vm389, %v946
      %983 = vst.msk [vmem:[#allocation4 + $0x60] sm:$0xff] %vm389, %v947
      %984 = vst.msk [vmem:[#allocation4 + $0x68] sm:$0xff] %vm389, %v948
      %985 = vst.msk [vmem:[#allocation4 + $0x70] sm:$0xff] %vm389, %v949
      %986 = vst.msk [vmem:[#allocation4 + $0x78] sm:$0xff] %vm389, %v950
      %987 = vst.msk [vmem:[#allocation4 + $0x80] sm:$0xff] %vm389, %v951
      %988 = vst.msk [vmem:[#allocation4 + $0x88] sm:$0xff] %vm389, %v952
      %989 = vst.msk [vmem:[#allocation4 + $0x90] sm:$0xff] %vm389, %v953
      %990 = vst.msk [vmem:[#allocation4 + $0x98] sm:$0xff] %vm389, %v954
      %991 = vst.msk [vmem:[#allocation4 + $0xa0] sm:$0xff] %vm389, %v955
      %992 = vst.msk [vmem:[#allocation4 + $0xa8] sm:$0xff] %vm389, %v956
      %993 = vst.msk [vmem:[#allocation4 + $0xb0] sm:$0xff] %vm389, %v957
      %994 = vst.msk [vmem:[#allocation4 + $0xb8] sm:$0xff] %vm389, %v958
      %995 = vst.msk [vmem:[#allocation4 + $0xc0] sm:$0xff] %vm389, %v959
      %996 = vst.msk [vmem:[#allocation4 + $0xc8] sm:$0xff] %vm389, %v960
      %997 = vst.msk [vmem:[#allocation4 + $0xd0] sm:$0xff] %vm389, %v961
      %998 = vst.msk [vmem:[#allocation4 + $0xd8] sm:$0xff] %vm389, %v962
      %999 = vst.msk [vmem:[#allocation4 + $0xe0] sm:$0xff] %vm389, %v963
      %1000 = vst.msk [vmem:[#allocation4 + $0xe8] sm:$0xff] %vm389, %v964
      %1001 = vst.msk [vmem:[#allocation4 + $0xf0] sm:$0xff] %vm389, %v965
      %1002 = vst.msk [vmem:[#allocation4 + $0xf8] sm:$0xff] %vm389, %v966
      %1003 = vst.msk [vmem:[#allocation4 + $0x100] sm:$0xff] %vm389, %v967
      %1004 = vst.msk [vmem:[#allocation4 + $0x108] sm:$0xff] %vm389, %v968
      %1005 = vst.msk [vmem:[#allocation4 + $0x110] sm:$0xff] %vm389, %v969
      %1006 = vst.msk [vmem:[#allocation4 + $0x118] sm:$0xff] %vm389, %v970
      %v1007 = vld [vmem:[#allocation2 + $0x2] sm:$0xff]
      %v1008 = vld [vmem:[#allocation2 + $0xa] sm:$0xff]
      %v1009 = vld [vmem:[#allocation2 + $0x12] sm:$0xff]
      %v1010 = vld [vmem:[#allocation2 + $0x1a] sm:$0xff]
      %v1011 = vld [vmem:[#allocation2 + $0x22] sm:$0xff]
      %v1012 = vld [vmem:[#allocation2 + $0x2a] sm:$0xff]
      %v1013 = vld [vmem:[#allocation2 + $0x32] sm:$0xff]
      %v1014 = vld [vmem:[#allocation2 + $0x3a] sm:$0xff]
      %v1015 = vld [vmem:[#allocation2 + $0x42] sm:$0xff]
      %v1016 = vld [vmem:[#allocation2 + $0x4a] sm:$0xff]
      %v1017 = vld [vmem:[#allocation2 + $0x52] sm:$0xff]
      %v1018 = vld [vmem:[#allocation2 + $0x5a] sm:$0xff]
      %v1019 = vld [vmem:[#allocation2 + $0x62] sm:$0xff]
      %v1020 = vld [vmem:[#allocation2 + $0x6a] sm:$0xff]
      %v1021 = vld [vmem:[#allocation2 + $0x72] sm:$0xff]
      %v1022 = vld [vmem:[#allocation2 + $0x7a] sm:$0xff]
      %v1023 = vld [vmem:[#allocation2 + $0x82] sm:$0xff]
      %v1024 = vld [vmem:[#allocation2 + $0x8a] sm:$0xff]
      %v1025 = vld [vmem:[#allocation2 + $0x92] sm:$0xff]
      %v1026 = vld [vmem:[#allocation2 + $0x9a] sm:$0xff]
      %v1027 = vld [vmem:[#allocation2 + $0xa2] sm:$0xff]
      %v1028 = vld [vmem:[#allocation2 + $0xaa] sm:$0xff]
      %v1029 = vld [vmem:[#allocation2 + $0xb2] sm:$0xff]
      %v1030 = vld [vmem:[#allocation2 + $0xba] sm:$0xff]
      %v1031 = vld [vmem:[#allocation2 + $0xc2] sm:$0xff]
      %v1032 = vld [vmem:[#allocation2 + $0xca] sm:$0xff]
      %v1033 = vld [vmem:[#allocation2 + $0xd2] sm:$0xff]
      %v1034 = vld [vmem:[#allocation2 + $0xda] sm:$0xff]
      %v1035 = vld [vmem:[#allocation2 + $0xe2] sm:$0xff]
      %v1036 = vld [vmem:[#allocation2 + $0xea] sm:$0xff]
      %v1037 = vld [vmem:[#allocation2 + $0xf2] sm:$0xff]
      %v1038 = vld [vmem:[#allocation2 + $0xfa] sm:$0xff]
      %v1039 = vld [vmem:[#allocation2 + $0x102] sm:$0xff]
      %v1040 = vld [vmem:[#allocation2 + $0x10a] sm:$0xff]
      %v1041 = vld [vmem:[#allocation2 + $0x112] sm:$0xff]
      %v1042 = vld [vmem:[#allocation2 + $0x11a] sm:$0xff]
      %v1043 = vpack.c.bf16 %v1008, %v1007
      %v1044 = vpack.c.bf16 %v1010, %v1009
      %v1045 = vpack.c.bf16 %v1012, %v1011
      %v1046 = vpack.c.bf16 %v1014, %v1013
      %v1047 = vpack.c.bf16 %v1016, %v1015
      %v1048 = vpack.c.bf16 %v1018, %v1017
      %v1049 = vpack.c.bf16 %v1020, %v1019
      %v1050 = vpack.c.bf16 %v1022, %v1021
      %v1051 = vpack.c.bf16 %v1024, %v1023
      %v1052 = vpack.c.bf16 %v1026, %v1025
      %v1053 = vpack.c.bf16 %v1028, %v1027
      %v1054 = vpack.c.bf16 %v1030, %v1029
      %v1055 = vpack.c.bf16 %v1032, %v1031
      %v1056 = vpack.c.bf16 %v1034, %v1033
      %v1057 = vpack.c.bf16 %v1036, %v1035
      %v1058 = vpack.c.bf16 %v1038, %v1037
      %v1059 = vpack.c.bf16 %v1040, %v1039
      %v1060 = vpack.c.bf16 %v1042, %v1041
      %s1061 = scalar_lea.vmem %s1, 8
      %v1062 = vld [vmem:[%s1061] sm:$0xf]
      %v1064 = vsel %vm389, %v1043, 0
      %v1067 = vsel %vm389, %v1044, 0
      %v1070 = vsel %vm389, %v1045, 0
      %v1073 = vsel %vm389, %v1046, 0
      %v1076 = vsel %vm389, %v1047, 0
      %v1079 = vsel %vm389, %v1048, 0
      %v1082 = vsel %vm389, %v1049, 0
      %v1085 = vsel %vm389, %v1050, 0
      %v1088 = vsel %vm389, %v1051, 0
      %v1091 = vsel %vm389, %v1052, 0
      %v1094 = vsel %vm389, %v1053, 0
      %v1097 = vsel %vm389, %v1054, 0
      %v1100 = vsel %vm389, %v1055, 0
      %v1103 = vsel %vm389, %v1056, 0
      %v1106 = vsel %vm389, %v1057, 0
      %v1109 = vsel %vm389, %v1058, 0
      %v1112 = vsel %vm389, %v1059, 0
      %v1115 = vsel %vm389, %v1060, 0
      %v1118 = vsel %vm548, %v1062, 0
      %1120 = vmatpush.bf16.msra.mxu0 0
      %1121 = vmatpush.bf16.msra.mxu0 0
      %1122 = vmatpush.bf16.msra.mxu0 0
      %1123 = vmatpush.bf16.msra.mxu0 0
      %1124 = vmatpush.bf16.msra.mxu0 0
      %1125 = vmatpush.bf16.msra.mxu0 0
      %1126 = vmatpush.bf16.msra.mxu0 0
      %1127 = vmatpush.bf16.msra.mxu0 %v1118
      %1128 = vmatmul.bf16.gmra.mxu0 %v1064
      %v1129 = vpop.f32.mrf.mxu0
      %v1130 = vadd.f32 0.0, %v1129
      %v1131 = vpop.f32.mrf.mxu0
      %v1132 = vadd.f32 0.0, %v1131
      %1133 = vmatmul.bf16.gmra.mxu0 %v1067
      %v1134 = vpop.f32.mrf.mxu0
      %v1135 = vadd.f32 0.0, %v1134
      %v1136 = vpop.f32.mrf.mxu0
      %v1137 = vadd.f32 0.0, %v1136
      %1138 = vmatmul.bf16.gmra.mxu0 %v1070
      %v1139 = vpop.f32.mrf.mxu0
      %v1140 = vadd.f32 0.0, %v1139
      %v1141 = vpop.f32.mrf.mxu0
      %v1142 = vadd.f32 0.0, %v1141
      %1143 = vmatmul.bf16.gmra.mxu0 %v1073
      %v1144 = vpop.f32.mrf.mxu0
      %v1145 = vadd.f32 0.0, %v1144
      %v1146 = vpop.f32.mrf.mxu0
      %v1147 = vadd.f32 0.0, %v1146
      %1148 = vmatmul.bf16.gmra.mxu0 %v1076
      %v1149 = vpop.f32.mrf.mxu0
      %v1150 = vadd.f32 0.0, %v1149
      %v1151 = vpop.f32.mrf.mxu0
      %v1152 = vadd.f32 0.0, %v1151
      %1153 = vmatmul.bf16.gmra.mxu0 %v1079
      %v1154 = vpop.f32.mrf.mxu0
      %v1155 = vadd.f32 0.0, %v1154
      %v1156 = vpop.f32.mrf.mxu0
      %v1157 = vadd.f32 0.0, %v1156
      %1158 = vmatmul.bf16.gmra.mxu0 %v1082
      %v1159 = vpop.f32.mrf.mxu0
      %v1160 = vadd.f32 0.0, %v1159
      %v1161 = vpop.f32.mrf.mxu0
      %v1162 = vadd.f32 0.0, %v1161
      %1163 = vmatmul.bf16.gmra.mxu0 %v1085
      %v1164 = vpop.f32.mrf.mxu0
      %v1165 = vadd.f32 0.0, %v1164
      %v1166 = vpop.f32.mrf.mxu0
      %v1167 = vadd.f32 0.0, %v1166
      %1168 = vmatmul.bf16.gmra.mxu0 %v1088
      %v1169 = vpop.f32.mrf.mxu0
      %v1170 = vadd.f32 0.0, %v1169
      %v1171 = vpop.f32.mrf.mxu0
      %v1172 = vadd.f32 0.0, %v1171
      %1173 = vmatmul.bf16.gmra.mxu0 %v1091
      %v1174 = vpop.f32.mrf.mxu0
      %v1175 = vadd.f32 0.0, %v1174
      %v1176 = vpop.f32.mrf.mxu0
      %v1177 = vadd.f32 0.0, %v1176
      %1178 = vmatmul.bf16.gmra.mxu0 %v1094
      %v1179 = vpop.f32.mrf.mxu0
      %v1180 = vadd.f32 0.0, %v1179
      %v1181 = vpop.f32.mrf.mxu0
      %v1182 = vadd.f32 0.0, %v1181
      %1183 = vmatmul.bf16.gmra.mxu0 %v1097
      %v1184 = vpop.f32.mrf.mxu0
      %v1185 = vadd.f32 0.0, %v1184
      %v1186 = vpop.f32.mrf.mxu0
      %v1187 = vadd.f32 0.0, %v1186
      %1188 = vmatmul.bf16.gmra.mxu0 %v1100
      %v1189 = vpop.f32.mrf.mxu0
      %v1190 = vadd.f32 0.0, %v1189
      %v1191 = vpop.f32.mrf.mxu0
      %v1192 = vadd.f32 0.0, %v1191
      %1193 = vmatmul.bf16.gmra.mxu0 %v1103
      %v1194 = vpop.f32.mrf.mxu0
      %v1195 = vadd.f32 0.0, %v1194
      %v1196 = vpop.f32.mrf.mxu0
      %v1197 = vadd.f32 0.0, %v1196
      %1198 = vmatmul.bf16.gmra.mxu0 %v1106
      %v1199 = vpop.f32.mrf.mxu0
      %v1200 = vadd.f32 0.0, %v1199
      %v1201 = vpop.f32.mrf.mxu0
      %v1202 = vadd.f32 0.0, %v1201
      %1203 = vmatmul.bf16.gmra.mxu0 %v1109
      %v1204 = vpop.f32.mrf.mxu0
      %v1205 = vadd.f32 0.0, %v1204
      %v1206 = vpop.f32.mrf.mxu0
      %v1207 = vadd.f32 0.0, %v1206
      %1208 = vmatmul.bf16.gmra.mxu0 %v1112
      %v1209 = vpop.f32.mrf.mxu0
      %v1210 = vadd.f32 0.0, %v1209
      %v1211 = vpop.f32.mrf.mxu0
      %v1212 = vadd.f32 0.0, %v1211
      %1213 = vmatmul.bf16.gmra.mxu0 %v1115
      %v1214 = vpop.f32.mrf.mxu0
      %v1215 = vadd.f32 0.0, %v1214
      %v1216 = vpop.f32.mrf.mxu0
      %v1217 = vadd.f32 0.0, %v1216
      %1218 = vdwg.mxu0
      %v1219 = vld [vmem:[#allocation4] sm:$0xff]
      %v1220 = vld [vmem:[#allocation4 + $0x8] sm:$0xff]
      %v1221 = vld [vmem:[#allocation4 + $0x10] sm:$0xff]
      %v1222 = vld [vmem:[#allocation4 + $0x18] sm:$0xff]
      %v1223 = vld [vmem:[#allocation4 + $0x20] sm:$0xff]
      %v1224 = vld [vmem:[#allocation4 + $0x28] sm:$0xff]
      %v1225 = vld [vmem:[#allocation4 + $0x30] sm:$0xff]
      %v1226 = vld [vmem:[#allocation4 + $0x38] sm:$0xff]
      %v1227 = vld [vmem:[#allocation4 + $0x40] sm:$0xff]
      %v1228 = vld [vmem:[#allocation4 + $0x48] sm:$0xff]
      %v1229 = vld [vmem:[#allocation4 + $0x50] sm:$0xff]
      %v1230 = vld [vmem:[#allocation4 + $0x58] sm:$0xff]
      %v1231 = vld [vmem:[#allocation4 + $0x60] sm:$0xff]
      %v1232 = vld [vmem:[#allocation4 + $0x68] sm:$0xff]
      %v1233 = vld [vmem:[#allocation4 + $0x70] sm:$0xff]
      %v1234 = vld [vmem:[#allocation4 + $0x78] sm:$0xff]
      %v1235 = vld [vmem:[#allocation4 + $0x80] sm:$0xff]
      %v1236 = vld [vmem:[#allocation4 + $0x88] sm:$0xff]
      %v1237 = vld [vmem:[#allocation4 + $0x90] sm:$0xff]
      %v1238 = vld [vmem:[#allocation4 + $0x98] sm:$0xff]
      %v1239 = vld [vmem:[#allocation4 + $0xa0] sm:$0xff]
      %v1240 = vld [vmem:[#allocation4 + $0xa8] sm:$0xff]
      %v1241 = vld [vmem:[#allocation4 + $0xb0] sm:$0xff]
      %v1242 = vld [vmem:[#allocation4 + $0xb8] sm:$0xff]
      %v1243 = vld [vmem:[#allocation4 + $0xc0] sm:$0xff]
      %v1244 = vld [vmem:[#allocation4 + $0xc8] sm:$0xff]
      %v1245 = vld [vmem:[#allocation4 + $0xd0] sm:$0xff]
      %v1246 = vld [vmem:[#allocation4 + $0xd8] sm:$0xff]
      %v1247 = vld [vmem:[#allocation4 + $0xe0] sm:$0xff]
      %v1248 = vld [vmem:[#allocation4 + $0xe8] sm:$0xff]
      %v1249 = vld [vmem:[#allocation4 + $0xf0] sm:$0xff]
      %v1250 = vld [vmem:[#allocation4 + $0xf8] sm:$0xff]
      %v1251 = vld [vmem:[#allocation4 + $0x100] sm:$0xff]
      %v1252 = vld [vmem:[#allocation4 + $0x108] sm:$0xff]
      %v1253 = vld [vmem:[#allocation4 + $0x110] sm:$0xff]
      %v1254 = vld [vmem:[#allocation4 + $0x118] sm:$0xff]
      %v1255 = vadd.f32 %v1219, %v1130
      %v1256 = vadd.f32 %v1220, %v1132
      %v1257 = vadd.f32 %v1221, %v1135
      %v1258 = vadd.f32 %v1222, %v1137
      %v1259 = vadd.f32 %v1223, %v1140
      %v1260 = vadd.f32 %v1224, %v1142
      %v1261 = vadd.f32 %v1225, %v1145
      %v1262 = vadd.f32 %v1226, %v1147
      %v1263 = vadd.f32 %v1227, %v1150
      %v1264 = vadd.f32 %v1228, %v1152
      %v1265 = vadd.f32 %v1229, %v1155
      %v1266 = vadd.f32 %v1230, %v1157
      %v1267 = vadd.f32 %v1231, %v1160
      %v1268 = vadd.f32 %v1232, %v1162
      %v1269 = vadd.f32 %v1233, %v1165
      %v1270 = vadd.f32 %v1234, %v1167
      %v1271 = vadd.f32 %v1235, %v1170
      %v1272 = vadd.f32 %v1236, %v1172
      %v1273 = vadd.f32 %v1237, %v1175
      %v1274 = vadd.f32 %v1238, %v1177
      %v1275 = vadd.f32 %v1239, %v1180
      %v1276 = vadd.f32 %v1240, %v1182
      %v1277 = vadd.f32 %v1241, %v1185
      %v1278 = vadd.f32 %v1242, %v1187
      %v1279 = vadd.f32 %v1243, %v1190
      %v1280 = vadd.f32 %v1244, %v1192
      %v1281 = vadd.f32 %v1245, %v1195
      %v1282 = vadd.f32 %v1246, %v1197
      %v1283 = vadd.f32 %v1247, %v1200
      %v1284 = vadd.f32 %v1248, %v1202
      %v1285 = vadd.f32 %v1249, %v1205
      %v1286 = vadd.f32 %v1250, %v1207
      %v1287 = vadd.f32 %v1251, %v1210
      %v1288 = vadd.f32 %v1252, %v1212
      %v1289 = vadd.f32 %v1253, %v1215
      %v1290 = vadd.f32 %v1254, %v1217
      %1291 = vst.msk [vmem:[#allocation4] sm:$0xff] %vm389, %v1255
      %1292 = vst.msk [vmem:[#allocation4 + $0x8] sm:$0xff] %vm389, %v1256
      %1293 = vst.msk [vmem:[#allocation4 + $0x10] sm:$0xff] %vm389, %v1257
      %1294 = vst.msk [vmem:[#allocation4 + $0x18] sm:$0xff] %vm389, %v1258
      %1295 = vst.msk [vmem:[#allocation4 + $0x20] sm:$0xff] %vm389, %v1259
      %1296 = vst.msk [vmem:[#allocation4 + $0x28] sm:$0xff] %vm389, %v1260
      %1297 = vst.msk [vmem:[#allocation4 + $0x30] sm:$0xff] %vm389, %v1261
      %1298 = vst.msk [vmem:[#allocation4 + $0x38] sm:$0xff] %vm389, %v1262
      %1299 = vst.msk [vmem:[#allocation4 + $0x40] sm:$0xff] %vm389, %v1263
      %1300 = vst.msk [vmem:[#allocation4 + $0x48] sm:$0xff] %vm389, %v1264
      %1301 = vst.msk [vmem:[#allocation4 + $0x50] sm:$0xff] %vm389, %v1265
      %1302 = vst.msk [vmem:[#allocation4 + $0x58] sm:$0xff] %vm389, %v1266
      %1303 = vst.msk [vmem:[#allocation4 + $0x60] sm:$0xff] %vm389, %v1267
      %1304 = vst.msk [vmem:[#allocation4 + $0x68] sm:$0xff] %vm389, %v1268
      %1305 = vst.msk [vmem:[#allocation4 + $0x70] sm:$0xff] %vm389, %v1269
      %1306 = vst.msk [vmem:[#allocation4 + $0x78] sm:$0xff] %vm389, %v1270
      %1307 = vst.msk [vmem:[#allocation4 + $0x80] sm:$0xff] %vm389, %v1271
      %1308 = vst.msk [vmem:[#allocation4 + $0x88] sm:$0xff] %vm389, %v1272
      %1309 = vst.msk [vmem:[#allocation4 + $0x90] sm:$0xff] %vm389, %v1273
      %1310 = vst.msk [vmem:[#allocation4 + $0x98] sm:$0xff] %vm389, %v1274
      %1311 = vst.msk [vmem:[#allocation4 + $0xa0] sm:$0xff] %vm389, %v1275
      %1312 = vst.msk [vmem:[#allocation4 + $0xa8] sm:$0xff] %vm389, %v1276
      %1313 = vst.msk [vmem:[#allocation4 + $0xb0] sm:$0xff] %vm389, %v1277
      %1314 = vst.msk [vmem:[#allocation4 + $0xb8] sm:$0xff] %vm389, %v1278
      %1315 = vst.msk [vmem:[#allocation4 + $0xc0] sm:$0xff] %vm389, %v1279
      %1316 = vst.msk [vmem:[#allocation4 + $0xc8] sm:$0xff] %vm389, %v1280
      %1317 = vst.msk [vmem:[#allocation4 + $0xd0] sm:$0xff] %vm389, %v1281
      %1318 = vst.msk [vmem:[#allocation4 + $0xd8] sm:$0xff] %vm389, %v1282
      %1319 = vst.msk [vmem:[#allocation4 + $0xe0] sm:$0xff] %vm389, %v1283
      %1320 = vst.msk [vmem:[#allocation4 + $0xe8] sm:$0xff] %vm389, %v1284
      %1321 = vst.msk [vmem:[#allocation4 + $0xf0] sm:$0xff] %vm389, %v1285
      %1322 = vst.msk [vmem:[#allocation4 + $0xf8] sm:$0xff] %vm389, %v1286
      %1323 = vst.msk [vmem:[#allocation4 + $0x100] sm:$0xff] %vm389, %v1287
      %1324 = vst.msk [vmem:[#allocation4 + $0x108] sm:$0xff] %vm389, %v1288
      %1325 = vst.msk [vmem:[#allocation4 + $0x110] sm:$0xff] %vm389, %v1289
      %1326 = vst.msk [vmem:[#allocation4 + $0x118] sm:$0xff] %vm389, %v1290
      %v1327 = vld [vmem:[#allocation2 + $0x12] sm:$0xff]
      %v1328 = vld [vmem:[#allocation2 + $0x1a] sm:$0xff]
      %v1329 = vld [vmem:[#allocation2 + $0x22] sm:$0xff]
      %v1330 = vld [vmem:[#allocation2 + $0x2a] sm:$0xff]
      %v1331 = vld [vmem:[#allocation2 + $0x32] sm:$0xff]
      %v1332 = vld [vmem:[#allocation2 + $0x3a] sm:$0xff]
      %v1333 = vld [vmem:[#allocation2 + $0x42] sm:$0xff]
      %v1334 = vld [vmem:[#allocation2 + $0x4a] sm:$0xff]
      %v1335 = vld [vmem:[#allocation2 + $0x52] sm:$0xff]
      %v1336 = vld [vmem:[#allocation2 + $0x5a] sm:$0xff]
      %v1337 = vld [vmem:[#allocation2 + $0x62] sm:$0xff]
      %v1338 = vld [vmem:[#allocation2 + $0x6a] sm:$0xff]
      %v1339 = vld [vmem:[#allocation2 + $0x72] sm:$0xff]
      %v1340 = vld [vmem:[#allocation2 + $0x7a] sm:$0xff]
      %v1341 = vld [vmem:[#allocation2 + $0x82] sm:$0xff]
      %v1342 = vld [vmem:[#allocation2 + $0x8a] sm:$0xff]
      %v1343 = vld [vmem:[#allocation2 + $0x92] sm:$0xff]
      %v1344 = vld [vmem:[#allocation2 + $0x9a] sm:$0xff]
      %v1345 = vld [vmem:[#allocation2 + $0xa2] sm:$0xff]
      %v1346 = vld [vmem:[#allocation2 + $0xaa] sm:$0xff]
      %v1347 = vld [vmem:[#allocation2 + $0xb2] sm:$0xff]
      %v1348 = vld [vmem:[#allocation2 + $0xba] sm:$0xff]
      %v1349 = vld [vmem:[#allocation2 + $0xc2] sm:$0xff]
      %v1350 = vld [vmem:[#allocation2 + $0xca] sm:$0xff]
      %v1351 = vld [vmem:[#allocation2 + $0xd2] sm:$0xff]
      %v1352 = vld [vmem:[#allocation2 + $0xda] sm:$0xff]
      %v1353 = vld [vmem:[#allocation2 + $0xe2] sm:$0xff]
      %v1354 = vld [vmem:[#allocation2 + $0xea] sm:$0xff]
      %v1355 = vld [vmem:[#allocation2 + $0xf2] sm:$0xff]
      %v1356 = vld [vmem:[#allocation2 + $0xfa] sm:$0xff]
      %v1357 = vld [vmem:[#allocation2 + $0x102] sm:$0xff]
      %v1358 = vld [vmem:[#allocation2 + $0x10a] sm:$0xff]
      %v1359 = vld [vmem:[#allocation2 + $0x112] sm:$0xff]
      %v1360 = vld [vmem:[#allocation2 + $0x11a] sm:$0xff]
      %v1361 = vld [vmem:[#allocation2 + $0x122] sm:$0xff]
      %v1362 = vld [vmem:[#allocation2 + $0x12a] sm:$0xff]
      %v1363 = vpack.c.bf16 %v1328, %v1327
      %v1364 = vpack.c.bf16 %v1330, %v1329
      %v1365 = vpack.c.bf16 %v1332, %v1331
      %v1366 = vpack.c.bf16 %v1334, %v1333
      %v1367 = vpack.c.bf16 %v1336, %v1335
      %v1368 = vpack.c.bf16 %v1338, %v1337
      %v1369 = vpack.c.bf16 %v1340, %v1339
      %v1370 = vpack.c.bf16 %v1342, %v1341
      %v1371 = vpack.c.bf16 %v1344, %v1343
      %v1372 = vpack.c.bf16 %v1346, %v1345
      %v1373 = vpack.c.bf16 %v1348, %v1347
      %v1374 = vpack.c.bf16 %v1350, %v1349
      %v1375 = vpack.c.bf16 %v1352, %v1351
      %v1376 = vpack.c.bf16 %v1354, %v1353
      %v1377 = vpack.c.bf16 %v1356, %v1355
      %v1378 = vpack.c.bf16 %v1358, %v1357
      %v1379 = vpack.c.bf16 %v1360, %v1359
      %v1380 = vpack.c.bf16 %v1362, %v1361
      %s1381 = scalar_lea.vmem %s1, 12
      %v1382 = vld [vmem:[%s1381] sm:$0xf]
      %v1384 = vsel %vm389, %v1363, 0
      %v1387 = vsel %vm389, %v1364, 0
      %v1390 = vsel %vm389, %v1365, 0
      %v1393 = vsel %vm389, %v1366, 0
      %v1396 = vsel %vm389, %v1367, 0
      %v1399 = vsel %vm389, %v1368, 0
      %v1402 = vsel %vm389, %v1369, 0
      %v1405 = vsel %vm389, %v1370, 0
      %v1408 = vsel %vm389, %v1371, 0
      %v1411 = vsel %vm389, %v1372, 0
      %v1414 = vsel %vm389, %v1373, 0
      %v1417 = vsel %vm389, %v1374, 0
      %v1420 = vsel %vm389, %v1375, 0
      %v1423 = vsel %vm389, %v1376, 0
      %v1426 = vsel %vm389, %v1377, 0
      %v1429 = vsel %vm389, %v1378, 0
      %v1432 = vsel %vm389, %v1379, 0
      %v1435 = vsel %vm389, %v1380, 0
      %v1438 = vsel %vm548, %v1382, 0
      %1440 = vmatpush.bf16.msra.mxu0 0
      %1441 = vmatpush.bf16.msra.mxu0 0
      %1442 = vmatpush.bf16.msra.mxu0 0
      %1443 = vmatpush.bf16.msra.mxu0 0
      %1444 = vmatpush.bf16.msra.mxu0 0
      %1445 = vmatpush.bf16.msra.mxu0 0
      %1446 = vmatpush.bf16.msra.mxu0 0
      %1447 = vmatpush.bf16.msra.mxu0 %v1438
      %1448 = vmatmul.bf16.gmra.mxu0 %v1384
      %v1449 = vpop.f32.mrf.mxu0
      %v1450 = vadd.f32 0.0, %v1449
      %v1451 = vpop.f32.mrf.mxu0
      %v1452 = vadd.f32 0.0, %v1451
      %1453 = vmatmul.bf16.gmra.mxu0 %v1387
      %v1454 = vpop.f32.mrf.mxu0
      %v1455 = vadd.f32 0.0, %v1454
      %v1456 = vpop.f32.mrf.mxu0
      %v1457 = vadd.f32 0.0, %v1456
      %1458 = vmatmul.bf16.gmra.mxu0 %v1390
      %v1459 = vpop.f32.mrf.mxu0
      %v1460 = vadd.f32 0.0, %v1459
      %v1461 = vpop.f32.mrf.mxu0
      %v1462 = vadd.f32 0.0, %v1461
      %1463 = vmatmul.bf16.gmra.mxu0 %v1393
      %v1464 = vpop.f32.mrf.mxu0
      %v1465 = vadd.f32 0.0, %v1464
      %v1466 = vpop.f32.mrf.mxu0
      %v1467 = vadd.f32 0.0, %v1466
      %1468 = vmatmul.bf16.gmra.mxu0 %v1396
      %v1469 = vpop.f32.mrf.mxu0
      %v1470 = vadd.f32 0.0, %v1469
      %v1471 = vpop.f32.mrf.mxu0
      %v1472 = vadd.f32 0.0, %v1471
      %1473 = vmatmul.bf16.gmra.mxu0 %v1399
      %v1474 = vpop.f32.mrf.mxu0
      %v1475 = vadd.f32 0.0, %v1474
      %v1476 = vpop.f32.mrf.mxu0
      %v1477 = vadd.f32 0.0, %v1476
      %1478 = vmatmul.bf16.gmra.mxu0 %v1402
      %v1479 = vpop.f32.mrf.mxu0
      %v1480 = vadd.f32 0.0, %v1479
      %v1481 = vpop.f32.mrf.mxu0
      %v1482 = vadd.f32 0.0, %v1481
      %1483 = vmatmul.bf16.gmra.mxu0 %v1405
      %v1484 = vpop.f32.mrf.mxu0
      %v1485 = vadd.f32 0.0, %v1484
      %v1486 = vpop.f32.mrf.mxu0
      %v1487 = vadd.f32 0.0, %v1486
      %1488 = vmatmul.bf16.gmra.mxu0 %v1408
      %v1489 = vpop.f32.mrf.mxu0
      %v1490 = vadd.f32 0.0, %v1489
      %v1491 = vpop.f32.mrf.mxu0
      %v1492 = vadd.f32 0.0, %v1491
      %1493 = vmatmul.bf16.gmra.mxu0 %v1411
      %v1494 = vpop.f32.mrf.mxu0
      %v1495 = vadd.f32 0.0, %v1494
      %v1496 = vpop.f32.mrf.mxu0
      %v1497 = vadd.f32 0.0, %v1496
      %1498 = vmatmul.bf16.gmra.mxu0 %v1414
      %v1499 = vpop.f32.mrf.mxu0
      %v1500 = vadd.f32 0.0, %v1499
      %v1501 = vpop.f32.mrf.mxu0
      %v1502 = vadd.f32 0.0, %v1501
      %1503 = vmatmul.bf16.gmra.mxu0 %v1417
      %v1504 = vpop.f32.mrf.mxu0
      %v1505 = vadd.f32 0.0, %v1504
      %v1506 = vpop.f32.mrf.mxu0
      %v1507 = vadd.f32 0.0, %v1506
      %1508 = vmatmul.bf16.gmra.mxu0 %v1420
      %v1509 = vpop.f32.mrf.mxu0
      %v1510 = vadd.f32 0.0, %v1509
      %v1511 = vpop.f32.mrf.mxu0
      %v1512 = vadd.f32 0.0, %v1511
      %1513 = vmatmul.bf16.gmra.mxu0 %v1423
      %v1514 = vpop.f32.mrf.mxu0
      %v1515 = vadd.f32 0.0, %v1514
      %v1516 = vpop.f32.mrf.mxu0
      %v1517 = vadd.f32 0.0, %v1516
      %1518 = vmatmul.bf16.gmra.mxu0 %v1426
      %v1519 = vpop.f32.mrf.mxu0
      %v1520 = vadd.f32 0.0, %v1519
      %v1521 = vpop.f32.mrf.mxu0
      %v1522 = vadd.f32 0.0, %v1521
      %1523 = vmatmul.bf16.gmra.mxu0 %v1429
      %v1524 = vpop.f32.mrf.mxu0
      %v1525 = vadd.f32 0.0, %v1524
      %v1526 = vpop.f32.mrf.mxu0
      %v1527 = vadd.f32 0.0, %v1526
      %1528 = vmatmul.bf16.gmra.mxu0 %v1432
      %v1529 = vpop.f32.mrf.mxu0
      %v1530 = vadd.f32 0.0, %v1529
      %v1531 = vpop.f32.mrf.mxu0
      %v1532 = vadd.f32 0.0, %v1531
      %1533 = vmatmul.bf16.gmra.mxu0 %v1435
      %v1534 = vpop.f32.mrf.mxu0
      %v1535 = vadd.f32 0.0, %v1534
      %v1536 = vpop.f32.mrf.mxu0
      %v1537 = vadd.f32 0.0, %v1536
      %1538 = vdwg.mxu0
      %v1539 = vld [vmem:[#allocation4] sm:$0xff]
      %v1540 = vld [vmem:[#allocation4 + $0x8] sm:$0xff]
      %v1541 = vld [vmem:[#allocation4 + $0x10] sm:$0xff]
      %v1542 = vld [vmem:[#allocation4 + $0x18] sm:$0xff]
      %v1543 = vld [vmem:[#allocation4 + $0x20] sm:$0xff]
      %v1544 = vld [vmem:[#allocation4 + $0x28] sm:$0xff]
      %v1545 = vld [vmem:[#allocation4 + $0x30] sm:$0xff]
      %v1546 = vld [vmem:[#allocation4 + $0x38] sm:$0xff]
      %v1547 = vld [vmem:[#allocation4 + $0x40] sm:$0xff]
      %v1548 = vld [vmem:[#allocation4 + $0x48] sm:$0xff]
      %v1549 = vld [vmem:[#allocation4 + $0x50] sm:$0xff]
      %v1550 = vld [vmem:[#allocation4 + $0x58] sm:$0xff]
      %v1551 = vld [vmem:[#allocation4 + $0x60] sm:$0xff]
      %v1552 = vld [vmem:[#allocation4 + $0x68] sm:$0xff]
      %v1553 = vld [vmem:[#allocation4 + $0x70] sm:$0xff]
      %v1554 = vld [vmem:[#allocation4 + $0x78] sm:$0xff]
      %v1555 = vld [vmem:[#allocation4 + $0x80] sm:$0xff]
      %v1556 = vld [vmem:[#allocation4 + $0x88] sm:$0xff]
      %v1557 = vld [vmem:[#allocation4 + $0x90] sm:$0xff]
      %v1558 = vld [vmem:[#allocation4 + $0x98] sm:$0xff]
      %v1559 = vld [vmem:[#allocation4 + $0xa0] sm:$0xff]
      %v1560 = vld [vmem:[#allocation4 + $0xa8] sm:$0xff]
      %v1561 = vld [vmem:[#allocation4 + $0xb0] sm:$0xff]
      %v1562 = vld [vmem:[#allocation4 + $0xb8] sm:$0xff]
      %v1563 = vld [vmem:[#allocation4 + $0xc0] sm:$0xff]
      %v1564 = vld [vmem:[#allocation4 + $0xc8] sm:$0xff]
      %v1565 = vld [vmem:[#allocation4 + $0xd0] sm:$0xff]
      %v1566 = vld [vmem:[#allocation4 + $0xd8] sm:$0xff]
      %v1567 = vld [vmem:[#allocation4 + $0xe0] sm:$0xff]
      %v1568 = vld [vmem:[#allocation4 + $0xe8] sm:$0xff]
      %v1569 = vld [vmem:[#allocation4 + $0xf0] sm:$0xff]
      %v1570 = vld [vmem:[#allocation4 + $0xf8] sm:$0xff]
      %v1571 = vld [vmem:[#allocation4 + $0x100] sm:$0xff]
      %v1572 = vld [vmem:[#allocation4 + $0x108] sm:$0xff]
      %v1573 = vld [vmem:[#allocation4 + $0x110] sm:$0xff]
      %v1574 = vld [vmem:[#allocation4 + $0x118] sm:$0xff]
      %v1575 = vadd.f32 %v1539, %v1450
      %v1576 = vadd.f32 %v1540, %v1452
      %v1577 = vadd.f32 %v1541, %v1455
      %v1578 = vadd.f32 %v1542, %v1457
      %v1579 = vadd.f32 %v1543, %v1460
      %v1580 = vadd.f32 %v1544, %v1462
      %v1581 = vadd.f32 %v1545, %v1465
      %v1582 = vadd.f32 %v1546, %v1467
      %v1583 = vadd.f32 %v1547, %v1470
      %v1584 = vadd.f32 %v1548, %v1472
      %v1585 = vadd.f32 %v1549, %v1475
      %v1586 = vadd.f32 %v1550, %v1477
      %v1587 = vadd.f32 %v1551, %v1480
      %v1588 = vadd.f32 %v1552, %v1482
      %v1589 = vadd.f32 %v1553, %v1485
      %v1590 = vadd.f32 %v1554, %v1487
      %v1591 = vadd.f32 %v1555, %v1490
      %v1592 = vadd.f32 %v1556, %v1492
      %v1593 = vadd.f32 %v1557, %v1495
      %v1594 = vadd.f32 %v1558, %v1497
      %v1595 = vadd.f32 %v1559, %v1500
      %v1596 = vadd.f32 %v1560, %v1502
      %v1597 = vadd.f32 %v1561, %v1505
      %v1598 = vadd.f32 %v1562, %v1507
      %v1599 = vadd.f32 %v1563, %v1510
      %v1600 = vadd.f32 %v1564, %v1512
      %v1601 = vadd.f32 %v1565, %v1515
      %v1602 = vadd.f32 %v1566, %v1517
      %v1603 = vadd.f32 %v1567, %v1520
      %v1604 = vadd.f32 %v1568, %v1522
      %v1605 = vadd.f32 %v1569, %v1525
      %v1606 = vadd.f32 %v1570, %v1527
      %v1607 = vadd.f32 %v1571, %v1530
      %v1608 = vadd.f32 %v1572, %v1532
      %v1609 = vadd.f32 %v1573, %v1535
      %v1610 = vadd.f32 %v1574, %v1537
      %1611 = vst.msk [vmem:[#allocation4] sm:$0xff] %vm389, %v1575
      %1612 = vst.msk [vmem:[#allocation4 + $0x8] sm:$0xff] %vm389, %v1576
      %1613 = vst.msk [vmem:[#allocation4 + $0x10] sm:$0xff] %vm389, %v1577
      %1614 = vst.msk [vmem:[#allocation4 + $0x18] sm:$0xff] %vm389, %v1578
      %1615 = vst.msk [vmem:[#allocation4 + $0x20] sm:$0xff] %vm389, %v1579
      %1616 = vst.msk [vmem:[#allocation4 + $0x28] sm:$0xff] %vm389, %v1580
      %1617 = vst.msk [vmem:[#allocation4 + $0x30] sm:$0xff] %vm389, %v1581
      %1618 = vst.msk [vmem:[#allocation4 + $0x38] sm:$0xff] %vm389, %v1582
      %1619 = vst.msk [vmem:[#allocation4 + $0x40] sm:$0xff] %vm389, %v1583
      %1620 = vst.msk [vmem:[#allocation4 + $0x48] sm:$0xff] %vm389, %v1584
      %1621 = vst.msk [vmem:[#allocation4 + $0x50] sm:$0xff] %vm389, %v1585
      %1622 = vst.msk [vmem:[#allocation4 + $0x58] sm:$0xff] %vm389, %v1586
      %1623 = vst.msk [vmem:[#allocation4 + $0x60] sm:$0xff] %vm389, %v1587
      %1624 = vst.msk [vmem:[#allocation4 + $0x68] sm:$0xff] %vm389, %v1588
      %1625 = vst.msk [vmem:[#allocation4 + $0x70] sm:$0xff] %vm389, %v1589
      %1626 = vst.msk [vmem:[#allocation4 + $0x78] sm:$0xff] %vm389, %v1590
      %1627 = vst.msk [vmem:[#allocation4 + $0x80] sm:$0xff] %vm389, %v1591
      %1628 = vst.msk [vmem:[#allocation4 + $0x88] sm:$0xff] %vm389, %v1592
      %1629 = vst.msk [vmem:[#allocation4 + $0x90] sm:$0xff] %vm389, %v1593
      %1630 = vst.msk [vmem:[#allocation4 + $0x98] sm:$0xff] %vm389, %v1594
      %1631 = vst.msk [vmem:[#allocation4 + $0xa0] sm:$0xff] %vm389, %v1595
      %1632 = vst.msk [vmem:[#allocation4 + $0xa8] sm:$0xff] %vm389, %v1596
      %1633 = vst.msk [vmem:[#allocation4 + $0xb0] sm:$0xff] %vm389, %v1597
      %1634 = vst.msk [vmem:[#allocation4 + $0xb8] sm:$0xff] %vm389, %v1598
      %1635 = vst.msk [vmem:[#allocation4 + $0xc0] sm:$0xff] %vm389, %v1599
      %1636 = vst.msk [vmem:[#allocation4 + $0xc8] sm:$0xff] %vm389, %v1600
      %1637 = vst.msk [vmem:[#allocation4 + $0xd0] sm:$0xff] %vm389, %v1601
      %1638 = vst.msk [vmem:[#allocation4 + $0xd8] sm:$0xff] %vm389, %v1602
      %1639 = vst.msk [vmem:[#allocation4 + $0xe0] sm:$0xff] %vm389, %v1603
      %1640 = vst.msk [vmem:[#allocation4 + $0xe8] sm:$0xff] %vm389, %v1604
      %1641 = vst.msk [vmem:[#allocation4 + $0xf0] sm:$0xff] %vm389, %v1605
      %1642 = vst.msk [vmem:[#allocation4 + $0xf8] sm:$0xff] %vm389, %v1606
      %1643 = vst.msk [vmem:[#allocation4 + $0x100] sm:$0xff] %vm389, %v1607
      %1644 = vst.msk [vmem:[#allocation4 + $0x108] sm:$0xff] %vm389, %v1608
      %1645 = vst.msk [vmem:[#allocation4 + $0x110] sm:$0xff] %vm389, %v1609
      %1646 = vst.msk [vmem:[#allocation4 + $0x118] sm:$0xff] %vm389, %v1610
      %v1647 = vld [vmem:[#allocation2 + $0x13] sm:$0xff]
      %v1648 = vld [vmem:[#allocation2 + $0x1b] sm:$0xff]
      %v1649 = vld [vmem:[#allocation2 + $0x23] sm:$0xff]
      %v1650 = vld [vmem:[#allocation2 + $0x2b] sm:$0xff]
      %v1651 = vld [vmem:[#allocation2 + $0x33] sm:$0xff]
      %v1652 = vld [vmem:[#allocation2 + $0x3b] sm:$0xff]
      %v1653 = vld [vmem:[#allocation2 + $0x43] sm:$0xff]
      %v1654 = vld [vmem:[#allocation2 + $0x4b] sm:$0xff]
      %v1655 = vld [vmem:[#allocation2 + $0x53] sm:$0xff]
      %v1656 = vld [vmem:[#allocation2 + $0x5b] sm:$0xff]
      %v1657 = vld [vmem:[#allocation2 + $0x63] sm:$0xff]
      %v1658 = vld [vmem:[#allocation2 + $0x6b] sm:$0xff]
      %v1659 = vld [vmem:[#allocation2 + $0x73] sm:$0xff]
      %v1660 = vld [vmem:[#allocation2 + $0x7b] sm:$0xff]
      %v1661 = vld [vmem:[#allocation2 + $0x83] sm:$0xff]
      %v1662 = vld [vmem:[#allocation2 + $0x8b] sm:$0xff]
      %v1663 = vld [vmem:[#allocation2 + $0x93] sm:$0xff]
      %v1664 = vld [vmem:[#allocation2 + $0x9b] sm:$0xff]
      %v1665 = vld [vmem:[#allocation2 + $0xa3] sm:$0xff]
      %v1666 = vld [vmem:[#allocation2 + $0xab] sm:$0xff]
      %v1667 = vld [vmem:[#allocation2 + $0xb3] sm:$0xff]
      %v1668 = vld [vmem:[#allocation2 + $0xbb] sm:$0xff]
      %v1669 = vld [vmem:[#allocation2 + $0xc3] sm:$0xff]
      %v1670 = vld [vmem:[#allocation2 + $0xcb] sm:$0xff]
      %v1671 = vld [vmem:[#allocation2 + $0xd3] sm:$0xff]
      %v1672 = vld [vmem:[#allocation2 + $0xdb] sm:$0xff]
      %v1673 = vld [vmem:[#allocation2 + $0xe3] sm:$0xff]
      %v1674 = vld [vmem:[#allocation2 + $0xeb] sm:$0xff]
      %v1675 = vld [vmem:[#allocation2 + $0xf3] sm:$0xff]
      %v1676 = vld [vmem:[#allocation2 + $0xfb] sm:$0xff]
      %v1677 = vld [vmem:[#allocation2 + $0x103] sm:$0xff]
      %v1678 = vld [vmem:[#allocation2 + $0x10b] sm:$0xff]
      %v1679 = vld [vmem:[#allocation2 + $0x113] sm:$0xff]
      %v1680 = vld [vmem:[#allocation2 + $0x11b] sm:$0xff]
      %v1681 = vld [vmem:[#allocation2 + $0x123] sm:$0xff]
      %v1682 = vld [vmem:[#allocation2 + $0x12b] sm:$0xff]
      %v1683 = vpack.c.bf16 %v1648, %v1647
      %v1684 = vpack.c.bf16 %v1650, %v1649
      %v1685 = vpack.c.bf16 %v1652, %v1651
      %v1686 = vpack.c.bf16 %v1654, %v1653
      %v1687 = vpack.c.bf16 %v1656, %v1655
      %v1688 = vpack.c.bf16 %v1658, %v1657
      %v1689 = vpack.c.bf16 %v1660, %v1659
      %v1690 = vpack.c.bf16 %v1662, %v1661
      %v1691 = vpack.c.bf16 %v1664, %v1663
      %v1692 = vpack.c.bf16 %v1666, %v1665
      %v1693 = vpack.c.bf16 %v1668, %v1667
      %v1694 = vpack.c.bf16 %v1670, %v1669
      %v1695 = vpack.c.bf16 %v1672, %v1671
      %v1696 = vpack.c.bf16 %v1674, %v1673
      %v1697 = vpack.c.bf16 %v1676, %v1675
      %v1698 = vpack.c.bf16 %v1678, %v1677
      %v1699 = vpack.c.bf16 %v1680, %v1679
      %v1700 = vpack.c.bf16 %v1682, %v1681
      %s1701 = scalar_lea.vmem %s1, 16
      %v1702 = vld [vmem:[%s1701] sm:$0xf]
      %v1704 = vsel %vm389, %v1683, 0
      %v1707 = vsel %vm389, %v1684, 0
      %v1710 = vsel %vm389, %v1685, 0
      %v1713 = vsel %vm389, %v1686, 0
      %v1716 = vsel %vm389, %v1687, 0
      %v1719 = vsel %vm389, %v1688, 0
      %v1722 = vsel %vm389, %v1689, 0
      %v1725 = vsel %vm389, %v1690, 0
      %v1728 = vsel %vm389, %v1691, 0
      %v1731 = vsel %vm389, %v1692, 0
      %v1734 = vsel %vm389, %v1693, 0
      %v1737 = vsel %vm389, %v1694, 0
      %v1740 = vsel %vm389, %v1695, 0
      %v1743 = vsel %vm389, %v1696, 0
      %v1746 = vsel %vm389, %v1697, 0
      %v1749 = vsel %vm389, %v1698, 0
      %v1752 = vsel %vm389, %v1699, 0
      %v1755 = vsel %vm389, %v1700, 0
      %v1758 = vsel %vm548, %v1702, 0
      %1760 = vmatpush.bf16.msra.mxu0 0
      %1761 = vmatpush.bf16.msra.mxu0 0
      %1762 = vmatpush.bf16.msra.mxu0 0
      %1763 = vmatpush.bf16.msra.mxu0 0
      %1764 = vmatpush.bf16.msra.mxu0 0
      %1765 = vmatpush.bf16.msra.mxu0 0
      %1766 = vmatpush.bf16.msra.mxu0 0
      %1767 = vmatpush.bf16.msra.mxu0 %v1758
      %1768 = vmatmul.bf16.gmra.mxu0 %v1704
      %v1769 = vpop.f32.mrf.mxu0
      %v1770 = vadd.f32 0.0, %v1769
      %v1771 = vpop.f32.mrf.mxu0
      %v1772 = vadd.f32 0.0, %v1771
      %1773 = vmatmul.bf16.gmra.mxu0 %v1707
      %v1774 = vpop.f32.mrf.mxu0
      %v1775 = vadd.f32 0.0, %v1774
      %v1776 = vpop.f32.mrf.mxu0
      %v1777 = vadd.f32 0.0, %v1776
      %1778 = vmatmul.bf16.gmra.mxu0 %v1710
      %v1779 = vpop.f32.mrf.mxu0
      %v1780 = vadd.f32 0.0, %v1779
      %v1781 = vpop.f32.mrf.mxu0
      %v1782 = vadd.f32 0.0, %v1781
      %1783 = vmatmul.bf16.gmra.mxu0 %v1713
      %v1784 = vpop.f32.mrf.mxu0
      %v1785 = vadd.f32 0.0, %v1784
      %v1786 = vpop.f32.mrf.mxu0
      %v1787 = vadd.f32 0.0, %v1786
      %1788 = vmatmul.bf16.gmra.mxu0 %v1716
      %v1789 = vpop.f32.mrf.mxu0
      %v1790 = vadd.f32 0.0, %v1789
      %v1791 = vpop.f32.mrf.mxu0
      %v1792 = vadd.f32 0.0, %v1791
      %1793 = vmatmul.bf16.gmra.mxu0 %v1719
      %v1794 = vpop.f32.mrf.mxu0
      %v1795 = vadd.f32 0.0, %v1794
      %v1796 = vpop.f32.mrf.mxu0
      %v1797 = vadd.f32 0.0, %v1796
      %1798 = vmatmul.bf16.gmra.mxu0 %v1722
      %v1799 = vpop.f32.mrf.mxu0
      %v1800 = vadd.f32 0.0, %v1799
      %v1801 = vpop.f32.mrf.mxu0
      %v1802 = vadd.f32 0.0, %v1801
      %1803 = vmatmul.bf16.gmra.mxu0 %v1725
      %v1804 = vpop.f32.mrf.mxu0
      %v1805 = vadd.f32 0.0, %v1804
      %v1806 = vpop.f32.mrf.mxu0
      %v1807 = vadd.f32 0.0, %v1806
      %1808 = vmatmul.bf16.gmra.mxu0 %v1728
      %v1809 = vpop.f32.mrf.mxu0
      %v1810 = vadd.f32 0.0, %v1809
      %v1811 = vpop.f32.mrf.mxu0
      %v1812 = vadd.f32 0.0, %v1811
      %1813 = vmatmul.bf16.gmra.mxu0 %v1731
      %v1814 = vpop.f32.mrf.mxu0
      %v1815 = vadd.f32 0.0, %v1814
      %v1816 = vpop.f32.mrf.mxu0
      %v1817 = vadd.f32 0.0, %v1816
      %1818 = vmatmul.bf16.gmra.mxu0 %v1734
      %v1819 = vpop.f32.mrf.mxu0
      %v1820 = vadd.f32 0.0, %v1819
      %v1821 = vpop.f32.mrf.mxu0
      %v1822 = vadd.f32 0.0, %v1821
      %1823 = vmatmul.bf16.gmra.mxu0 %v1737
      %v1824 = vpop.f32.mrf.mxu0
      %v1825 = vadd.f32 0.0, %v1824
      %v1826 = vpop.f32.mrf.mxu0
      %v1827 = vadd.f32 0.0, %v1826
      %1828 = vmatmul.bf16.gmra.mxu0 %v1740
      %v1829 = vpop.f32.mrf.mxu0
      %v1830 = vadd.f32 0.0, %v1829
      %v1831 = vpop.f32.mrf.mxu0
      %v1832 = vadd.f32 0.0, %v1831
      %1833 = vmatmul.bf16.gmra.mxu0 %v1743
      %v1834 = vpop.f32.mrf.mxu0
      %v1835 = vadd.f32 0.0, %v1834
      %v1836 = vpop.f32.mrf.mxu0
      %v1837 = vadd.f32 0.0, %v1836
      %1838 = vmatmul.bf16.gmra.mxu0 %v1746
      %v1839 = vpop.f32.mrf.mxu0
      %v1840 = vadd.f32 0.0, %v1839
      %v1841 = vpop.f32.mrf.mxu0
      %v1842 = vadd.f32 0.0, %v1841
      %1843 = vmatmul.bf16.gmra.mxu0 %v1749
      %v1844 = vpop.f32.mrf.mxu0
      %v1845 = vadd.f32 0.0, %v1844
      %v1846 = vpop.f32.mrf.mxu0
      %v1847 = vadd.f32 0.0, %v1846
      %1848 = vmatmul.bf16.gmra.mxu0 %v1752
      %v1849 = vpop.f32.mrf.mxu0
      %v1850 = vadd.f32 0.0, %v1849
      %v1851 = vpop.f32.mrf.mxu0
      %v1852 = vadd.f32 0.0, %v1851
      %1853 = vmatmul.bf16.gmra.mxu0 %v1755
      %v1854 = vpop.f32.mrf.mxu0
      %v1855 = vadd.f32 0.0, %v1854
      %v1856 = vpop.f32.mrf.mxu0
      %v1857 = vadd.f32 0.0, %v1856
      %1858 = vdwg.mxu0
      %v1859 = vld [vmem:[#allocation4] sm:$0xff]
      %v1860 = vld [vmem:[#allocation4 + $0x8] sm:$0xff]
      %v1861 = vld [vmem:[#allocation4 + $0x10] sm:$0xff]
      %v1862 = vld [vmem:[#allocation4 + $0x18] sm:$0xff]
      %v1863 = vld [vmem:[#allocation4 + $0x20] sm:$0xff]
      %v1864 = vld [vmem:[#allocation4 + $0x28] sm:$0xff]
      %v1865 = vld [vmem:[#allocation4 + $0x30] sm:$0xff]
      %v1866 = vld [vmem:[#allocation4 + $0x38] sm:$0xff]
      %v1867 = vld [vmem:[#allocation4 + $0x40] sm:$0xff]
      %v1868 = vld [vmem:[#allocation4 + $0x48] sm:$0xff]
      %v1869 = vld [vmem:[#allocation4 + $0x50] sm:$0xff]
      %v1870 = vld [vmem:[#allocation4 + $0x58] sm:$0xff]
      %v1871 = vld [vmem:[#allocation4 + $0x60] sm:$0xff]
      %v1872 = vld [vmem:[#allocation4 + $0x68] sm:$0xff]
      %v1873 = vld [vmem:[#allocation4 + $0x70] sm:$0xff]
      %v1874 = vld [vmem:[#allocation4 + $0x78] sm:$0xff]
      %v1875 = vld [vmem:[#allocation4 + $0x80] sm:$0xff]
      %v1876 = vld [vmem:[#allocation4 + $0x88] sm:$0xff]
      %v1877 = vld [vmem:[#allocation4 + $0x90] sm:$0xff]
      %v1878 = vld [vmem:[#allocation4 + $0x98] sm:$0xff]
      %v1879 = vld [vmem:[#allocation4 + $0xa0] sm:$0xff]
      %v1880 = vld [vmem:[#allocation4 + $0xa8] sm:$0xff]
      %v1881 = vld [vmem:[#allocation4 + $0xb0] sm:$0xff]
      %v1882 = vld [vmem:[#allocation4 + $0xb8] sm:$0xff]
      %v1883 = vld [vmem:[#allocation4 + $0xc0] sm:$0xff]
      %v1884 = vld [vmem:[#allocation4 + $0xc8] sm:$0xff]
      %v1885 = vld [vmem:[#allocation4 + $0xd0] sm:$0xff]
      %v1886 = vld [vmem:[#allocation4 + $0xd8] sm:$0xff]
      %v1887 = vld [vmem:[#allocation4 + $0xe0] sm:$0xff]
      %v1888 = vld [vmem:[#allocation4 + $0xe8] sm:$0xff]
      %v1889 = vld [vmem:[#allocation4 + $0xf0] sm:$0xff]
      %v1890 = vld [vmem:[#allocation4 + $0xf8] sm:$0xff]
      %v1891 = vld [vmem:[#allocation4 + $0x100] sm:$0xff]
      %v1892 = vld [vmem:[#allocation4 + $0x108] sm:$0xff]
      %v1893 = vld [vmem:[#allocation4 + $0x110] sm:$0xff]
      %v1894 = vld [vmem:[#allocation4 + $0x118] sm:$0xff]
      %v1895 = vadd.f32 %v1859, %v1770
      %v1896 = vadd.f32 %v1860, %v1772
      %v1897 = vadd.f32 %v1861, %v1775
      %v1898 = vadd.f32 %v1862, %v1777
      %v1899 = vadd.f32 %v1863, %v1780
      %v1900 = vadd.f32 %v1864, %v1782
      %v1901 = vadd.f32 %v1865, %v1785
      %v1902 = vadd.f32 %v1866, %v1787
      %v1903 = vadd.f32 %v1867, %v1790
      %v1904 = vadd.f32 %v1868, %v1792
      %v1905 = vadd.f32 %v1869, %v1795
      %v1906 = vadd.f32 %v1870, %v1797
      %v1907 = vadd.f32 %v1871, %v1800
      %v1908 = vadd.f32 %v1872, %v1802
      %v1909 = vadd.f32 %v1873, %v1805
      %v1910 = vadd.f32 %v1874, %v1807
      %v1911 = vadd.f32 %v1875, %v1810
      %v1912 = vadd.f32 %v1876, %v1812
      %v1913 = vadd.f32 %v1877, %v1815
      %v1914 = vadd.f32 %v1878, %v1817
      %v1915 = vadd.f32 %v1879, %v1820
      %v1916 = vadd.f32 %v1880, %v1822
      %v1917 = vadd.f32 %v1881, %v1825
      %v1918 = vadd.f32 %v1882, %v1827
      %v1919 = vadd.f32 %v1883, %v1830
      %v1920 = vadd.f32 %v1884, %v1832
      %v1921 = vadd.f32 %v1885, %v1835
      %v1922 = vadd.f32 %v1886, %v1837
      %v1923 = vadd.f32 %v1887, %v1840
      %v1924 = vadd.f32 %v1888, %v1842
      %v1925 = vadd.f32 %v1889, %v1845
      %v1926 = vadd.f32 %v1890, %v1847
      %v1927 = vadd.f32 %v1891, %v1850
      %v1928 = vadd.f32 %v1892, %v1852
      %v1929 = vadd.f32 %v1893, %v1855
      %v1930 = vadd.f32 %v1894, %v1857
      %1931 = vst.msk [vmem:[#allocation4] sm:$0xff] %vm389, %v1895
      %1932 = vst.msk [vmem:[#allocation4 + $0x8] sm:$0xff] %vm389, %v1896
      %1933 = vst.msk [vmem:[#allocation4 + $0x10] sm:$0xff] %vm389, %v1897
      %1934 = vst.msk [vmem:[#allocation4 + $0x18] sm:$0xff] %vm389, %v1898
      %1935 = vst.msk [vmem:[#allocation4 + $0x20] sm:$0xff] %vm389, %v1899
      %1936 = vst.msk [vmem:[#allocation4 + $0x28] sm:$0xff] %vm389, %v1900
      %1937 = vst.msk [vmem:[#allocation4 + $0x30] sm:$0xff] %vm389, %v1901
      %1938 = vst.msk [vmem:[#allocation4 + $0x38] sm:$0xff] %vm389, %v1902
      %1939 = vst.msk [vmem:[#allocation4 + $0x40] sm:$0xff] %vm389, %v1903
      %1940 = vst.msk [vmem:[#allocation4 + $0x48] sm:$0xff] %vm389, %v1904
      %1941 = vst.msk [vmem:[#allocation4 + $0x50] sm:$0xff] %vm389, %v1905
      %1942 = vst.msk [vmem:[#allocation4 + $0x58] sm:$0xff] %vm389, %v1906
      %1943 = vst.msk [vmem:[#allocation4 + $0x60] sm:$0xff] %vm389, %v1907
      %1944 = vst.msk [vmem:[#allocation4 + $0x68] sm:$0xff] %vm389, %v1908
      %1945 = vst.msk [vmem:[#allocation4 + $0x70] sm:$0xff] %vm389, %v1909
      %1946 = vst.msk [vmem:[#allocation4 + $0x78] sm:$0xff] %vm389, %v1910
      %1947 = vst.msk [vmem:[#allocation4 + $0x80] sm:$0xff] %vm389, %v1911
      %1948 = vst.msk [vmem:[#allocation4 + $0x88] sm:$0xff] %vm389, %v1912
      %1949 = vst.msk [vmem:[#allocation4 + $0x90] sm:$0xff] %vm389, %v1913
      %1950 = vst.msk [vmem:[#allocation4 + $0x98] sm:$0xff] %vm389, %v1914
      %1951 = vst.msk [vmem:[#allocation4 + $0xa0] sm:$0xff] %vm389, %v1915
      %1952 = vst.msk [vmem:[#allocation4 + $0xa8] sm:$0xff] %vm389, %v1916
      %1953 = vst.msk [vmem:[#allocation4 + $0xb0] sm:$0xff] %vm389, %v1917
      %1954 = vst.msk [vmem:[#allocation4 + $0xb8] sm:$0xff] %vm389, %v1918
      %1955 = vst.msk [vmem:[#allocation4 + $0xc0] sm:$0xff] %vm389, %v1919
      %1956 = vst.msk [vmem:[#allocation4 + $0xc8] sm:$0xff] %vm389, %v1920
      %1957 = vst.msk [vmem:[#allocation4 + $0xd0] sm:$0xff] %vm389, %v1921
      %1958 = vst.msk [vmem:[#allocation4 + $0xd8] sm:$0xff] %vm389, %v1922
      %1959 = vst.msk [vmem:[#allocation4 + $0xe0] sm:$0xff] %vm389, %v1923
      %1960 = vst.msk [vmem:[#allocation4 + $0xe8] sm:$0xff] %vm389, %v1924
      %1961 = vst.msk [vmem:[#allocation4 + $0xf0] sm:$0xff] %vm389, %v1925
      %1962 = vst.msk [vmem:[#allocation4 + $0xf8] sm:$0xff] %vm389, %v1926
      %1963 = vst.msk [vmem:[#allocation4 + $0x100] sm:$0xff] %vm389, %v1927
      %1964 = vst.msk [vmem:[#allocation4 + $0x108] sm:$0xff] %vm389, %v1928
      %1965 = vst.msk [vmem:[#allocation4 + $0x110] sm:$0xff] %vm389, %v1929
      %1966 = vst.msk [vmem:[#allocation4 + $0x118] sm:$0xff] %vm389, %v1930
      %v1967 = vld [vmem:[#allocation2 + $0x14] sm:$0xff]
      %v1968 = vld [vmem:[#allocation2 + $0x1c] sm:$0xff]
      %v1969 = vld [vmem:[#allocation2 + $0x24] sm:$0xff]
      %v1970 = vld [vmem:[#allocation2 + $0x2c] sm:$0xff]
      %v1971 = vld [vmem:[#allocation2 + $0x34] sm:$0xff]
      %v1972 = vld [vmem:[#allocation2 + $0x3c] sm:$0xff]
      %v1973 = vld [vmem:[#allocation2 + $0x44] sm:$0xff]
      %v1974 = vld [vmem:[#allocation2 + $0x4c] sm:$0xff]
      %v1975 = vld [vmem:[#allocation2 + $0x54] sm:$0xff]
      %v1976 = vld [vmem:[#allocation2 + $0x5c] sm:$0xff]
      %v1977 = vld [vmem:[#allocation2 + $0x64] sm:$0xff]
      %v1978 = vld [vmem:[#allocation2 + $0x6c] sm:$0xff]
      %v1979 = vld [vmem:[#allocation2 + $0x74] sm:$0xff]
      %v1980 = vld [vmem:[#allocation2 + $0x7c] sm:$0xff]
      %v1981 = vld [vmem:[#allocation2 + $0x84] sm:$0xff]
      %v1982 = vld [vmem:[#allocation2 + $0x8c] sm:$0xff]
      %v1983 = vld [vmem:[#allocation2 + $0x94] sm:$0xff]
      %v1984 = vld [vmem:[#allocation2 + $0x9c] sm:$0xff]
      %v1985 = vld [vmem:[#allocation2 + $0xa4] sm:$0xff]
      %v1986 = vld [vmem:[#allocation2 + $0xac] sm:$0xff]
      %v1987 = vld [vmem:[#allocation2 + $0xb4] sm:$0xff]
      %v1988 = vld [vmem:[#allocation2 + $0xbc] sm:$0xff]
      %v1989 = vld [vmem:[#allocation2 + $0xc4] sm:$0xff]
      %v1990 = vld [vmem:[#allocation2 + $0xcc] sm:$0xff]
      %v1991 = vld [vmem:[#allocation2 + $0xd4] sm:$0xff]
      %v1992 = vld [vmem:[#allocation2 + $0xdc] sm:$0xff]
      %v1993 = vld [vmem:[#allocation2 + $0xe4] sm:$0xff]
      %v1994 = vld [vmem:[#allocation2 + $0xec] sm:$0xff]
      %v1995 = vld [vmem:[#allocation2 + $0xf4] sm:$0xff]
      %v1996 = vld [vmem:[#allocation2 + $0xfc] sm:$0xff]
      %v1997 = vld [vmem:[#allocation2 + $0x104] sm:$0xff]
      %v1998 = vld [vmem:[#allocation2 + $0x10c] sm:$0xff]
      %v1999 = vld [vmem:[#allocation2 + $0x114] sm:$0xff]
      %v2000 = vld [vmem:[#allocation2 + $0x11c] sm:$0xff]
      %v2001 = vld [vmem:[#allocation2 + $0x124] sm:$0xff]
      %v2002 = vld [vmem:[#allocation2 + $0x12c] sm:$0xff]
      %v2003 = vpack.c.bf16 %v1968, %v1967
      %v2004 = vpack.c.bf16 %v1970, %v1969
      %v2005 = vpack.c.bf16 %v1972, %v1971
      %v2006 = vpack.c.bf16 %v1974, %v1973
      %v2007 = vpack.c.bf16 %v1976, %v1975
      %v2008 = vpack.c.bf16 %v1978, %v1977
      %v2009 = vpack.c.bf16 %v1980, %v1979
      %v2010 = vpack.c.bf16 %v1982, %v1981
      %v2011 = vpack.c.bf16 %v1984, %v1983
      %v2012 = vpack.c.bf16 %v1986, %v1985
      %v2013 = vpack.c.bf16 %v1988, %v1987
      %v2014 = vpack.c.bf16 %v1990, %v1989
      %v2015 = vpack.c.bf16 %v1992, %v1991
      %v2016 = vpack.c.bf16 %v1994, %v1993
      %v2017 = vpack.c.bf16 %v1996, %v1995
      %v2018 = vpack.c.bf16 %v1998, %v1997
      %v2019 = vpack.c.bf16 %v2000, %v1999
      %v2020 = vpack.c.bf16 %v2002, %v2001
      %s2021 = scalar_lea.vmem %s1, 20
      %v2022 = vld [vmem:[%s2021] sm:$0xf]
      %v2024 = vsel %vm389, %v2003, 0
      %v2027 = vsel %vm389, %v2004, 0
      %v2030 = vsel %vm389, %v2005, 0
      %v2033 = vsel %vm389, %v2006, 0
      %v2036 = vsel %vm389, %v2007, 0
      %v2039 = vsel %vm389, %v2008, 0
      %v2042 = vsel %vm389, %v2009, 0
      %v2045 = vsel %vm389, %v2010, 0
      %v2048 = vsel %vm389, %v2011, 0
      %v2051 = vsel %vm389, %v2012, 0
      %v2054 = vsel %vm389, %v2013, 0
      %v2057 = vsel %vm389, %v2014, 0
      %v2060 = vsel %vm389, %v2015, 0
      %v2063 = vsel %vm389, %v2016, 0
      %v2066 = vsel %vm389, %v2017, 0
      %v2069 = vsel %vm389, %v2018, 0
      %v2072 = vsel %vm389, %v2019, 0
      %v2075 = vsel %vm389, %v2020, 0
      %v2078 = vsel %vm548, %v2022, 0
      %2080 = vmatpush.bf16.msra.mxu0 0
      %2081 = vmatpush.bf16.msra.mxu0 0
      %2082 = vmatpush.bf16.msra.mxu0 0
      %2083 = vmatpush.bf16.msra.mxu0 0
      %2084 = vmatpush.bf16.msra.mxu0 0
      %2085 = vmatpush.bf16.msra.mxu0 0
      %2086 = vmatpush.bf16.msra.mxu0 0
      %2087 = vmatpush.bf16.msra.mxu0 %v2078
      %2088 = vmatmul.bf16.gmra.mxu0 %v2024
      %v2089 = vpop.f32.mrf.mxu0
      %v2090 = vadd.f32 0.0, %v2089
      %v2091 = vpop.f32.mrf.mxu0
      %v2092 = vadd.f32 0.0, %v2091
      %2093 = vmatmul.bf16.gmra.mxu0 %v2027
      %v2094 = vpop.f32.mrf.mxu0
      %v2095 = vadd.f32 0.0, %v2094
      %v2096 = vpop.f32.mrf.mxu0
      %v2097 = vadd.f32 0.0, %v2096
      %2098 = vmatmul.bf16.gmra.mxu0 %v2030
      %v2099 = vpop.f32.mrf.mxu0
      %v2100 = vadd.f32 0.0, %v2099
      %v2101 = vpop.f32.mrf.mxu0
      %v2102 = vadd.f32 0.0, %v2101
      %2103 = vmatmul.bf16.gmra.mxu0 %v2033
      %v2104 = vpop.f32.mrf.mxu0
      %v2105 = vadd.f32 0.0, %v2104
      %v2106 = vpop.f32.mrf.mxu0
      %v2107 = vadd.f32 0.0, %v2106
      %2108 = vmatmul.bf16.gmra.mxu0 %v2036
      %v2109 = vpop.f32.mrf.mxu0
      %v2110 = vadd.f32 0.0, %v2109
      %v2111 = vpop.f32.mrf.mxu0
      %v2112 = vadd.f32 0.0, %v2111
      %2113 = vmatmul.bf16.gmra.mxu0 %v2039
      %v2114 = vpop.f32.mrf.mxu0
      %v2115 = vadd.f32 0.0, %v2114
      %v2116 = vpop.f32.mrf.mxu0
      %v2117 = vadd.f32 0.0, %v2116
      %2118 = vmatmul.bf16.gmra.mxu0 %v2042
      %v2119 = vpop.f32.mrf.mxu0
      %v2120 = vadd.f32 0.0, %v2119
      %v2121 = vpop.f32.mrf.mxu0
      %v2122 = vadd.f32 0.0, %v2121
      %2123 = vmatmul.bf16.gmra.mxu0 %v2045
      %v2124 = vpop.f32.mrf.mxu0
      %v2125 = vadd.f32 0.0, %v2124
      %v2126 = vpop.f32.mrf.mxu0
      %v2127 = vadd.f32 0.0, %v2126
      %2128 = vmatmul.bf16.gmra.mxu0 %v2048
      %v2129 = vpop.f32.mrf.mxu0
      %v2130 = vadd.f32 0.0, %v2129
      %v2131 = vpop.f32.mrf.mxu0
      %v2132 = vadd.f32 0.0, %v2131
      %2133 = vmatmul.bf16.gmra.mxu0 %v2051
      %v2134 = vpop.f32.mrf.mxu0
      %v2135 = vadd.f32 0.0, %v2134
      %v2136 = vpop.f32.mrf.mxu0
      %v2137 = vadd.f32 0.0, %v2136
      %2138 = vmatmul.bf16.gmra.mxu0 %v2054
      %v2139 = vpop.f32.mrf.mxu0
      %v2140 = vadd.f32 0.0, %v2139
      %v2141 = vpop.f32.mrf.mxu0
      %v2142 = vadd.f32 0.0, %v2141
      %2143 = vmatmul.bf16.gmra.mxu0 %v2057
      %v2144 = vpop.f32.mrf.mxu0
      %v2145 = vadd.f32 0.0, %v2144
      %v2146 = vpop.f32.mrf.mxu0
      %v2147 = vadd.f32 0.0, %v2146
      %2148 = vmatmul.bf16.gmra.mxu0 %v2060
      %v2149 = vpop.f32.mrf.mxu0
      %v2150 = vadd.f32 0.0, %v2149
      %v2151 = vpop.f32.mrf.mxu0
      %v2152 = vadd.f32 0.0, %v2151
      %2153 = vmatmul.bf16.gmra.mxu0 %v2063
      %v2154 = vpop.f32.mrf.mxu0
      %v2155 = vadd.f32 0.0, %v2154
      %v2156 = vpop.f32.mrf.mxu0
      %v2157 = vadd.f32 0.0, %v2156
      %2158 = vmatmul.bf16.gmra.mxu0 %v2066
      %v2159 = vpop.f32.mrf.mxu0
      %v2160 = vadd.f32 0.0, %v2159
      %v2161 = vpop.f32.mrf.mxu0
      %v2162 = vadd.f32 0.0, %v2161
      %2163 = vmatmul.bf16.gmra.mxu0 %v2069
      %v2164 = vpop.f32.mrf.mxu0
      %v2165 = vadd.f32 0.0, %v2164
      %v2166 = vpop.f32.mrf.mxu0
      %v2167 = vadd.f32 0.0, %v2166
      %2168 = vmatmul.bf16.gmra.mxu0 %v2072
      %v2169 = vpop.f32.mrf.mxu0
      %v2170 = vadd.f32 0.0, %v2169
      %v2171 = vpop.f32.mrf.mxu0
      %v2172 = vadd.f32 0.0, %v2171
      %2173 = vmatmul.bf16.gmra.mxu0 %v2075
      %v2174 = vpop.f32.mrf.mxu0
      %v2175 = vadd.f32 0.0, %v2174
      %v2176 = vpop.f32.mrf.mxu0
      %v2177 = vadd.f32 0.0, %v2176
      %2178 = vdwg.mxu0
      %v2179 = vld [vmem:[#allocation4] sm:$0xff]
      %v2180 = vld [vmem:[#allocation4 + $0x8] sm:$0xff]
      %v2181 = vld [vmem:[#allocation4 + $0x10] sm:$0xff]
      %v2182 = vld [vmem:[#allocation4 + $0x18] sm:$0xff]
      %v2183 = vld [vmem:[#allocation4 + $0x20] sm:$0xff]
      %v2184 = vld [vmem:[#allocation4 + $0x28] sm:$0xff]
      %v2185 = vld [vmem:[#allocation4 + $0x30] sm:$0xff]
      %v2186 = vld [vmem:[#allocation4 + $0x38] sm:$0xff]
      %v2187 = vld [vmem:[#allocation4 + $0x40] sm:$0xff]
      %v2188 = vld [vmem:[#allocation4 + $0x48] sm:$0xff]
      %v2189 = vld [vmem:[#allocation4 + $0x50] sm:$0xff]
      %v2190 = vld [vmem:[#allocation4 + $0x58] sm:$0xff]
      %v2191 = vld [vmem:[#allocation4 + $0x60] sm:$0xff]
      %v2192 = vld [vmem:[#allocation4 + $0x68] sm:$0xff]
      %v2193 = vld [vmem:[#allocation4 + $0x70] sm:$0xff]
      %v2194 = vld [vmem:[#allocation4 + $0x78] sm:$0xff]
      %v2195 = vld [vmem:[#allocation4 + $0x80] sm:$0xff]
      %v2196 = vld [vmem:[#allocation4 + $0x88] sm:$0xff]
      %v2197 = vld [vmem:[#allocation4 + $0x90] sm:$0xff]
      %v2198 = vld [vmem:[#allocation4 + $0x98] sm:$0xff]
      %v2199 = vld [vmem:[#allocation4 + $0xa0] sm:$0xff]
      %v2200 = vld [vmem:[#allocation4 + $0xa8] sm:$0xff]
      %v2201 = vld [vmem:[#allocation4 + $0xb0] sm:$0xff]
      %v2202 = vld [vmem:[#allocation4 + $0xb8] sm:$0xff]
      %v2203 = vld [vmem:[#allocation4 + $0xc0] sm:$0xff]
      %v2204 = vld [vmem:[#allocation4 + $0xc8] sm:$0xff]
      %v2205 = vld [vmem:[#allocation4 + $0xd0] sm:$0xff]
      %v2206 = vld [vmem:[#allocation4 + $0xd8] sm:$0xff]
      %v2207 = vld [vmem:[#allocation4 + $0xe0] sm:$0xff]
      %v2208 = vld [vmem:[#allocation4 + $0xe8] sm:$0xff]
      %v2209 = vld [vmem:[#allocation4 + $0xf0] sm:$0xff]
      %v2210 = vld [vmem:[#allocation4 + $0xf8] sm:$0xff]
      %v2211 = vld [vmem:[#allocation4 + $0x100] sm:$0xff]
      %v2212 = vld [vmem:[#allocation4 + $0x108] sm:$0xff]
      %v2213 = vld [vmem:[#allocation4 + $0x110] sm:$0xff]
      %v2214 = vld [vmem:[#allocation4 + $0x118] sm:$0xff]
      %v2215 = vadd.f32 %v2179, %v2090
      %v2216 = vadd.f32 %v2180, %v2092
      %v2217 = vadd.f32 %v2181, %v2095
      %v2218 = vadd.f32 %v2182, %v2097
      %v2219 = vadd.f32 %v2183, %v2100
      %v2220 = vadd.f32 %v2184, %v2102
      %v2221 = vadd.f32 %v2185, %v2105
      %v2222 = vadd.f32 %v2186, %v2107
      %v2223 = vadd.f32 %v2187, %v2110
      %v2224 = vadd.f32 %v2188, %v2112
      %v2225 = vadd.f32 %v2189, %v2115
      %v2226 = vadd.f32 %v2190, %v2117
      %v2227 = vadd.f32 %v2191, %v2120
      %v2228 = vadd.f32 %v2192, %v2122
      %v2229 = vadd.f32 %v2193, %v2125
      %v2230 = vadd.f32 %v2194, %v2127
      %v2231 = vadd.f32 %v2195, %v2130
      %v2232 = vadd.f32 %v2196, %v2132
      %v2233 = vadd.f32 %v2197, %v2135
      %v2234 = vadd.f32 %v2198, %v2137
      %v2235 = vadd.f32 %v2199, %v2140
      %v2236 = vadd.f32 %v2200, %v2142
      %v2237 = vadd.f32 %v2201, %v2145
      %v2238 = vadd.f32 %v2202, %v2147
      %v2239 = vadd.f32 %v2203, %v2150
      %v2240 = vadd.f32 %v2204, %v2152
      %v2241 = vadd.f32 %v2205, %v2155
      %v2242 = vadd.f32 %v2206, %v2157
      %v2243 = vadd.f32 %v2207, %v2160
      %v2244 = vadd.f32 %v2208, %v2162
      %v2245 = vadd.f32 %v2209, %v2165
      %v2246 = vadd.f32 %v2210, %v2167
      %v2247 = vadd.f32 %v2211, %v2170
      %v2248 = vadd.f32 %v2212, %v2172
      %v2249 = vadd.f32 %v2213, %v2175
      %v2250 = vadd.f32 %v2214, %v2177
      %2251 = vst.msk [vmem:[#allocation4] sm:$0xff] %vm389, %v2215
      %2252 = vst.msk [vmem:[#allocation4 + $0x8] sm:$0xff] %vm389, %v2216
      %2253 = vst.msk [vmem:[#allocation4 + $0x10] sm:$0xff] %vm389, %v2217
      %2254 = vst.msk [vmem:[#allocation4 + $0x18] sm:$0xff] %vm389, %v2218
      %2255 = vst.msk [vmem:[#allocation4 + $0x20] sm:$0xff] %vm389, %v2219
      %2256 = vst.msk [vmem:[#allocation4 + $0x28] sm:$0xff] %vm389, %v2220
      %2257 = vst.msk [vmem:[#allocation4 + $0x30] sm:$0xff] %vm389, %v2221
      %2258 = vst.msk [vmem:[#allocation4 + $0x38] sm:$0xff] %vm389, %v2222
      %2259 = vst.msk [vmem:[#allocation4 + $0x40] sm:$0xff] %vm389, %v2223
      %2260 = vst.msk [vmem:[#allocation4 + $0x48] sm:$0xff] %vm389, %v2224
      %2261 = vst.msk [vmem:[#allocation4 + $0x50] sm:$0xff] %vm389, %v2225
      %2262 = vst.msk [vmem:[#allocation4 + $0x58] sm:$0xff] %vm389, %v2226
      %2263 = vst.msk [vmem:[#allocation4 + $0x60] sm:$0xff] %vm389, %v2227
      %2264 = vst.msk [vmem:[#allocation4 + $0x68] sm:$0xff] %vm389, %v2228
      %2265 = vst.msk [vmem:[#allocation4 + $0x70] sm:$0xff] %vm389, %v2229
      %2266 = vst.msk [vmem:[#allocation4 + $0x78] sm:$0xff] %vm389, %v2230
      %2267 = vst.msk [vmem:[#allocation4 + $0x80] sm:$0xff] %vm389, %v2231
      %2268 = vst.msk [vmem:[#allocation4 + $0x88] sm:$0xff] %vm389, %v2232
      %2269 = vst.msk [vmem:[#allocation4 + $0x90] sm:$0xff] %vm389, %v2233
      %2270 = vst.msk [vmem:[#allocation4 + $0x98] sm:$0xff] %vm389, %v2234
      %2271 = vst.msk [vmem:[#allocation4 + $0xa0] sm:$0xff] %vm389, %v2235
      %2272 = vst.msk [vmem:[#allocation4 + $0xa8] sm:$0xff] %vm389, %v2236
      %2273 = vst.msk [vmem:[#allocation4 + $0xb0] sm:$0xff] %vm389, %v2237
      %2274 = vst.msk [vmem:[#allocation4 + $0xb8] sm:$0xff] %vm389, %v2238
      %2275 = vst.msk [vmem:[#allocation4 + $0xc0] sm:$0xff] %vm389, %v2239
      %2276 = vst.msk [vmem:[#allocation4 + $0xc8] sm:$0xff] %vm389, %v2240
      %2277 = vst.msk [vmem:[#allocation4 + $0xd0] sm:$0xff] %vm389, %v2241
      %2278 = vst.msk [vmem:[#allocation4 + $0xd8] sm:$0xff] %vm389, %v2242
      %2279 = vst.msk [vmem:[#allocation4 + $0xe0] sm:$0xff] %vm389, %v2243
      %2280 = vst.msk [vmem:[#allocation4 + $0xe8] sm:$0xff] %vm389, %v2244
      %2281 = vst.msk [vmem:[#allocation4 + $0xf0] sm:$0xff] %vm389, %v2245
      %2282 = vst.msk [vmem:[#allocation4 + $0xf8] sm:$0xff] %vm389, %v2246
      %2283 = vst.msk [vmem:[#allocation4 + $0x100] sm:$0xff] %vm389, %v2247
      %2284 = vst.msk [vmem:[#allocation4 + $0x108] sm:$0xff] %vm389, %v2248
      %2285 = vst.msk [vmem:[#allocation4 + $0x110] sm:$0xff] %vm389, %v2249
      %2286 = vst.msk [vmem:[#allocation4 + $0x118] sm:$0xff] %vm389, %v2250
      %v2287 = vld [vmem:[#allocation2 + $0x24] sm:$0xff]
      %v2288 = vld [vmem:[#allocation2 + $0x2c] sm:$0xff]
      %v2289 = vld [vmem:[#allocation2 + $0x34] sm:$0xff]
      %v2290 = vld [vmem:[#allocation2 + $0x3c] sm:$0xff]
      %v2291 = vld [vmem:[#allocation2 + $0x44] sm:$0xff]
      %v2292 = vld [vmem:[#allocation2 + $0x4c] sm:$0xff]
      %v2293 = vld [vmem:[#allocation2 + $0x54] sm:$0xff]
      %v2294 = vld [vmem:[#allocation2 + $0x5c] sm:$0xff]
      %v2295 = vld [vmem:[#allocation2 + $0x64] sm:$0xff]
      %v2296 = vld [vmem:[#allocation2 + $0x6c] sm:$0xff]
      %v2297 = vld [vmem:[#allocation2 + $0x74] sm:$0xff]
      %v2298 = vld [vmem:[#allocation2 + $0x7c] sm:$0xff]
      %v2299 = vld [vmem:[#allocation2 + $0x84] sm:$0xff]
      %v2300 = vld [vmem:[#allocation2 + $0x8c] sm:$0xff]
      %v2301 = vld [vmem:[#allocation2 + $0x94] sm:$0xff]
      %v2302 = vld [vmem:[#allocation2 + $0x9c] sm:$0xff]
      %v2303 = vld [vmem:[#allocation2 + $0xa4] sm:$0xff]
      %v2304 = vld [vmem:[#allocation2 + $0xac] sm:$0xff]
      %v2305 = vld [vmem:[#allocation2 + $0xb4] sm:$0xff]
      %v2306 = vld [vmem:[#allocation2 + $0xbc] sm:$0xff]
      %v2307 = vld [vmem:[#allocation2 + $0xc4] sm:$0xff]
      %v2308 = vld [vmem:[#allocation2 + $0xcc] sm:$0xff]
      %v2309 = vld [vmem:[#allocation2 + $0xd4] sm:$0xff]
      %v2310 = vld [vmem:[#allocation2 + $0xdc] sm:$0xff]
      %v2311 = vld [vmem:[#allocation2 + $0xe4] sm:$0xff]
      %v2312 = vld [vmem:[#allocation2 + $0xec] sm:$0xff]
      %v2313 = vld [vmem:[#allocation2 + $0xf4] sm:$0xff]
      %v2314 = vld [vmem:[#allocation2 + $0xfc] sm:$0xff]
      %v2315 = vld [vmem:[#allocation2 + $0x104] sm:$0xff]
      %v2316 = vld [vmem:[#allocation2 + $0x10c] sm:$0xff]
      %v2317 = vld [vmem:[#allocation2 + $0x114] sm:$0xff]
      %v2318 = vld [vmem:[#allocation2 + $0x11c] sm:$0xff]
      %v2319 = vld [vmem:[#allocation2 + $0x124] sm:$0xff]
      %v2320 = vld [vmem:[#allocation2 + $0x12c] sm:$0xff]
      %v2321 = vld [vmem:[#allocation2 + $0x134] sm:$0xff]
      %v2322 = vld [vmem:[#allocation2 + $0x13c] sm:$0xff]
      %v2323 = vpack.c.bf16 %v2288, %v2287
      %v2324 = vpack.c.bf16 %v2290, %v2289
      %v2325 = vpack.c.bf16 %v2292, %v2291
      %v2326 = vpack.c.bf16 %v2294, %v2293
      %v2327 = vpack.c.bf16 %v2296, %v2295
      %v2328 = vpack.c.bf16 %v2298, %v2297
      %v2329 = vpack.c.bf16 %v2300, %v2299
      %v2330 = vpack.c.bf16 %v2302, %v2301
      %v2331 = vpack.c.bf16 %v2304, %v2303
      %v2332 = vpack.c.bf16 %v2306, %v2305
      %v2333 = vpack.c.bf16 %v2308, %v2307
      %v2334 = vpack.c.bf16 %v2310, %v2309
      %v2335 = vpack.c.bf16 %v2312, %v2311
      %v2336 = vpack.c.bf16 %v2314, %v2313
      %v2337 = vpack.c.bf16 %v2316, %v2315
      %v2338 = vpack.c.bf16 %v2318, %v2317
      %v2339 = vpack.c.bf16 %v2320, %v2319
      %v2340 = vpack.c.bf16 %v2322, %v2321
      %s2341 = scalar_lea.vmem %s1, 24
      %v2342 = vld [vmem:[%s2341] sm:$0xf]
      %v2344 = vsel %vm389, %v2323, 0
      %v2347 = vsel %vm389, %v2324, 0
      %v2350 = vsel %vm389, %v2325, 0
      %v2353 = vsel %vm389, %v2326, 0
      %v2356 = vsel %vm389, %v2327, 0
      %v2359 = vsel %vm389, %v2328, 0
      %v2362 = vsel %vm389, %v2329, 0
      %v2365 = vsel %vm389, %v2330, 0
      %v2368 = vsel %vm389, %v2331, 0
      %v2371 = vsel %vm389, %v2332, 0
      %v2374 = vsel %vm389, %v2333, 0
      %v2377 = vsel %vm389, %v2334, 0
      %v2380 = vsel %vm389, %v2335, 0
      %v2383 = vsel %vm389, %v2336, 0
      %v2386 = vsel %vm389, %v2337, 0
      %v2389 = vsel %vm389, %v2338, 0
      %v2392 = vsel %vm389, %v2339, 0
      %v2395 = vsel %vm389, %v2340, 0
      %v2398 = vsel %vm548, %v2342, 0
      %2400 = vmatpush.bf16.msra.mxu0 0
      %2401 = vmatpush.bf16.msra.mxu0 0
      %2402 = vmatpush.bf16.msra.mxu0 0
      %2403 = vmatpush.bf16.msra.mxu0 0
      %2404 = vmatpush.bf16.msra.mxu0 0
      %2405 = vmatpush.bf16.msra.mxu0 0
      %2406 = vmatpush.bf16.msra.mxu0 0
      %2407 = vmatpush.bf16.msra.mxu0 %v2398
      %2408 = vmatmul.bf16.gmra.mxu0 %v2344
      %v2409 = vpop.f32.mrf.mxu0
      %v2410 = vadd.f32 0.0, %v2409
      %v2411 = vpop.f32.mrf.mxu0
      %v2412 = vadd.f32 0.0, %v2411
      %2413 = vmatmul.bf16.gmra.mxu0 %v2347
      %v2414 = vpop.f32.mrf.mxu0
      %v2415 = vadd.f32 0.0, %v2414
      %v2416 = vpop.f32.mrf.mxu0
      %v2417 = vadd.f32 0.0, %v2416
      %2418 = vmatmul.bf16.gmra.mxu0 %v2350
      %v2419 = vpop.f32.mrf.mxu0
      %v2420 = vadd.f32 0.0, %v2419
      %v2421 = vpop.f32.mrf.mxu0
      %v2422 = vadd.f32 0.0, %v2421
      %2423 = vmatmul.bf16.gmra.mxu0 %v2353
      %v2424 = vpop.f32.mrf.mxu0
      %v2425 = vadd.f32 0.0, %v2424
      %v2426 = vpop.f32.mrf.mxu0
      %v2427 = vadd.f32 0.0, %v2426
      %2428 = vmatmul.bf16.gmra.mxu0 %v2356
      %v2429 = vpop.f32.mrf.mxu0
      %v2430 = vadd.f32 0.0, %v2429
      %v2431 = vpop.f32.mrf.mxu0
      %v2432 = vadd.f32 0.0, %v2431
      %2433 = vmatmul.bf16.gmra.mxu0 %v2359
      %v2434 = vpop.f32.mrf.mxu0
      %v2435 = vadd.f32 0.0, %v2434
      %v2436 = vpop.f32.mrf.mxu0
      %v2437 = vadd.f32 0.0, %v2436
      %2438 = vmatmul.bf16.gmra.mxu0 %v2362
      %v2439 = vpop.f32.mrf.mxu0
      %v2440 = vadd.f32 0.0, %v2439
      %v2441 = vpop.f32.mrf.mxu0
      %v2442 = vadd.f32 0.0, %v2441
      %2443 = vmatmul.bf16.gmra.mxu0 %v2365
      %v2444 = vpop.f32.mrf.mxu0
      %v2445 = vadd.f32 0.0, %v2444
      %v2446 = vpop.f32.mrf.mxu0
      %v2447 = vadd.f32 0.0, %v2446
      %2448 = vmatmul.bf16.gmra.mxu0 %v2368
      %v2449 = vpop.f32.mrf.mxu0
      %v2450 = vadd.f32 0.0, %v2449
      %v2451 = vpop.f32.mrf.mxu0
      %v2452 = vadd.f32 0.0, %v2451
      %2453 = vmatmul.bf16.gmra.mxu0 %v2371
      %v2454 = vpop.f32.mrf.mxu0
      %v2455 = vadd.f32 0.0, %v2454
      %v2456 = vpop.f32.mrf.mxu0
      %v2457 = vadd.f32 0.0, %v2456
      %2458 = vmatmul.bf16.gmra.mxu0 %v2374
      %v2459 = vpop.f32.mrf.mxu0
      %v2460 = vadd.f32 0.0, %v2459
      %v2461 = vpop.f32.mrf.mxu0
      %v2462 = vadd.f32 0.0, %v2461
      %2463 = vmatmul.bf16.gmra.mxu0 %v2377
      %v2464 = vpop.f32.mrf.mxu0
      %v2465 = vadd.f32 0.0, %v2464
      %v2466 = vpop.f32.mrf.mxu0
      %v2467 = vadd.f32 0.0, %v2466
      %2468 = vmatmul.bf16.gmra.mxu0 %v2380
      %v2469 = vpop.f32.mrf.mxu0
      %v2470 = vadd.f32 0.0, %v2469
      %v2471 = vpop.f32.mrf.mxu0
      %v2472 = vadd.f32 0.0, %v2471
      %2473 = vmatmul.bf16.gmra.mxu0 %v2383
      %v2474 = vpop.f32.mrf.mxu0
      %v2475 = vadd.f32 0.0, %v2474
      %v2476 = vpop.f32.mrf.mxu0
      %v2477 = vadd.f32 0.0, %v2476
      %2478 = vmatmul.bf16.gmra.mxu0 %v2386
      %v2479 = vpop.f32.mrf.mxu0
      %v2480 = vadd.f32 0.0, %v2479
      %v2481 = vpop.f32.mrf.mxu0
      %v2482 = vadd.f32 0.0, %v2481
      %2483 = vmatmul.bf16.gmra.mxu0 %v2389
      %v2484 = vpop.f32.mrf.mxu0
      %v2485 = vadd.f32 0.0, %v2484
      %v2486 = vpop.f32.mrf.mxu0
      %v2487 = vadd.f32 0.0, %v2486
      %2488 = vmatmul.bf16.gmra.mxu0 %v2392
      %v2489 = vpop.f32.mrf.mxu0
      %v2490 = vadd.f32 0.0, %v2489
      %v2491 = vpop.f32.mrf.mxu0
      %v2492 = vadd.f32 0.0, %v2491
      %2493 = vmatmul.bf16.gmra.mxu0 %v2395
      %v2494 = vpop.f32.mrf.mxu0
      %v2495 = vadd.f32 0.0, %v2494
      %v2496 = vpop.f32.mrf.mxu0
      %v2497 = vadd.f32 0.0, %v2496
      %2498 = vdwg.mxu0
      %v2499 = vld [vmem:[#allocation4] sm:$0xff]
      %v2500 = vld [vmem:[#allocation4 + $0x8] sm:$0xff]
      %v2501 = vld [vmem:[#allocation4 + $0x10] sm:$0xff]
      %v2502 = vld [vmem:[#allocation4 + $0x18] sm:$0xff]
      %v2503 = vld [vmem:[#allocation4 + $0x20] sm:$0xff]
      %v2504 = vld [vmem:[#allocation4 + $0x28] sm:$0xff]
      %v2505 = vld [vmem:[#allocation4 + $0x30] sm:$0xff]
      %v2506 = vld [vmem:[#allocation4 + $0x38] sm:$0xff]
      %v2507 = vld [vmem:[#allocation4 + $0x40] sm:$0xff]
      %v2508 = vld [vmem:[#allocation4 + $0x48] sm:$0xff]
      %v2509 = vld [vmem:[#allocation4 + $0x50] sm:$0xff]
      %v2510 = vld [vmem:[#allocation4 + $0x58] sm:$0xff]
      %v2511 = vld [vmem:[#allocation4 + $0x60] sm:$0xff]
      %v2512 = vld [vmem:[#allocation4 + $0x68] sm:$0xff]
      %v2513 = vld [vmem:[#allocation4 + $0x70] sm:$0xff]
      %v2514 = vld [vmem:[#allocation4 + $0x78] sm:$0xff]
      %v2515 = vld [vmem:[#allocation4 + $0x80] sm:$0xff]
      %v2516 = vld [vmem:[#allocation4 + $0x88] sm:$0xff]
      %v2517 = vld [vmem:[#allocation4 + $0x90] sm:$0xff]
      %v2518 = vld [vmem:[#allocation4 + $0x98] sm:$0xff]
      %v2519 = vld [vmem:[#allocation4 + $0xa0] sm:$0xff]
      %v2520 = vld [vmem:[#allocation4 + $0xa8] sm:$0xff]
      %v2521 = vld [vmem:[#allocation4 + $0xb0] sm:$0xff]
      %v2522 = vld [vmem:[#allocation4 + $0xb8] sm:$0xff]
      %v2523 = vld [vmem:[#allocation4 + $0xc0] sm:$0xff]
      %v2524 = vld [vmem:[#allocation4 + $0xc8] sm:$0xff]
      %v2525 = vld [vmem:[#allocation4 + $0xd0] sm:$0xff]
      %v2526 = vld [vmem:[#allocation4 + $0xd8] sm:$0xff]
      %v2527 = vld [vmem:[#allocation4 + $0xe0] sm:$0xff]
      %v2528 = vld [vmem:[#allocation4 + $0xe8] sm:$0xff]
      %v2529 = vld [vmem:[#allocation4 + $0xf0] sm:$0xff]
      %v2530 = vld [vmem:[#allocation4 + $0xf8] sm:$0xff]
      %v2531 = vld [vmem:[#allocation4 + $0x100] sm:$0xff]
      %v2532 = vld [vmem:[#allocation4 + $0x108] sm:$0xff]
      %v2533 = vld [vmem:[#allocation4 + $0x110] sm:$0xff]
      %v2534 = vld [vmem:[#allocation4 + $0x118] sm:$0xff]
      %v2535 = vadd.f32 %v2499, %v2410
      %v2536 = vadd.f32 %v2500, %v2412
      %v2537 = vadd.f32 %v2501, %v2415
      %v2538 = vadd.f32 %v2502, %v2417
      %v2539 = vadd.f32 %v2503, %v2420
      %v2540 = vadd.f32 %v2504, %v2422
      %v2541 = vadd.f32 %v2505, %v2425
      %v2542 = vadd.f32 %v2506, %v2427
      %v2543 = vadd.f32 %v2507, %v2430
      %v2544 = vadd.f32 %v2508, %v2432
      %v2545 = vadd.f32 %v2509, %v2435
      %v2546 = vadd.f32 %v2510, %v2437
      %v2547 = vadd.f32 %v2511, %v2440
      %v2548 = vadd.f32 %v2512, %v2442
      %v2549 = vadd.f32 %v2513, %v2445
      %v2550 = vadd.f32 %v2514, %v2447
      %v2551 = vadd.f32 %v2515, %v2450
      %v2552 = vadd.f32 %v2516, %v2452
      %v2553 = vadd.f32 %v2517, %v2455
      %v2554 = vadd.f32 %v2518, %v2457
      %v2555 = vadd.f32 %v2519, %v2460
      %v2556 = vadd.f32 %v2520, %v2462
      %v2557 = vadd.f32 %v2521, %v2465
      %v2558 = vadd.f32 %v2522, %v2467
      %v2559 = vadd.f32 %v2523, %v2470
      %v2560 = vadd.f32 %v2524, %v2472
      %v2561 = vadd.f32 %v2525, %v2475
      %v2562 = vadd.f32 %v2526, %v2477
      %v2563 = vadd.f32 %v2527, %v2480
      %v2564 = vadd.f32 %v2528, %v2482
      %v2565 = vadd.f32 %v2529, %v2485
      %v2566 = vadd.f32 %v2530, %v2487
      %v2567 = vadd.f32 %v2531, %v2490
      %v2568 = vadd.f32 %v2532, %v2492
      %v2569 = vadd.f32 %v2533, %v2495
      %v2570 = vadd.f32 %v2534, %v2497
      %2571 = vst.msk [vmem:[#allocation4] sm:$0xff] %vm389, %v2535
      %2572 = vst.msk [vmem:[#allocation4 + $0x8] sm:$0xff] %vm389, %v2536
      %2573 = vst.msk [vmem:[#allocation4 + $0x10] sm:$0xff] %vm389, %v2537
      %2574 = vst.msk [vmem:[#allocation4 + $0x18] sm:$0xff] %vm389, %v2538
      %2575 = vst.msk [vmem:[#allocation4 + $0x20] sm:$0xff] %vm389, %v2539
      %2576 = vst.msk [vmem:[#allocation4 + $0x28] sm:$0xff] %vm389, %v2540
      %2577 = vst.msk [vmem:[#allocation4 + $0x30] sm:$0xff] %vm389, %v2541
      %2578 = vst.msk [vmem:[#allocation4 + $0x38] sm:$0xff] %vm389, %v2542
      %2579 = vst.msk [vmem:[#allocation4 + $0x40] sm:$0xff] %vm389, %v2543
      %2580 = vst.msk [vmem:[#allocation4 + $0x48] sm:$0xff] %vm389, %v2544
      %2581 = vst.msk [vmem:[#allocation4 + $0x50] sm:$0xff] %vm389, %v2545
      %2582 = vst.msk [vmem:[#allocation4 + $0x58] sm:$0xff] %vm389, %v2546
      %2583 = vst.msk [vmem:[#allocation4 + $0x60] sm:$0xff] %vm389, %v2547
      %2584 = vst.msk [vmem:[#allocation4 + $0x68] sm:$0xff] %vm389, %v2548
      %2585 = vst.msk [vmem:[#allocation4 + $0x70] sm:$0xff] %vm389, %v2549
      %2586 = vst.msk [vmem:[#allocation4 + $0x78] sm:$0xff] %vm389, %v2550
      %2587 = vst.msk [vmem:[#allocation4 + $0x80] sm:$0xff] %vm389, %v2551
      %2588 = vst.msk [vmem:[#allocation4 + $0x88] sm:$0xff] %vm389, %v2552
      %2589 = vst.msk [vmem:[#allocation4 + $0x90] sm:$0xff] %vm389, %v2553
      %2590 = vst.msk [vmem:[#allocation4 + $0x98] sm:$0xff] %vm389, %v2554
      %2591 = vst.msk [vmem:[#allocation4 + $0xa0] sm:$0xff] %vm389, %v2555
      %2592 = vst.msk [vmem:[#allocation4 + $0xa8] sm:$0xff] %vm389, %v2556
      %2593 = vst.msk [vmem:[#allocation4 + $0xb0] sm:$0xff] %vm389, %v2557
      %2594 = vst.msk [vmem:[#allocation4 + $0xb8] sm:$0xff] %vm389, %v2558
      %2595 = vst.msk [vmem:[#allocation4 + $0xc0] sm:$0xff] %vm389, %v2559
      %2596 = vst.msk [vmem:[#allocation4 + $0xc8] sm:$0xff] %vm389, %v2560
      %2597 = vst.msk [vmem:[#allocation4 + $0xd0] sm:$0xff] %vm389, %v2561
      %2598 = vst.msk [vmem:[#allocation4 + $0xd8] sm:$0xff] %vm389, %v2562
      %2599 = vst.msk [vmem:[#allocation4 + $0xe0] sm:$0xff] %vm389, %v2563
      %2600 = vst.msk [vmem:[#allocation4 + $0xe8] sm:$0xff] %vm389, %v2564
      %2601 = vst.msk [vmem:[#allocation4 + $0xf0] sm:$0xff] %vm389, %v2565
      %2602 = vst.msk [vmem:[#allocation4 + $0xf8] sm:$0xff] %vm389, %v2566
      %2603 = vst.msk [vmem:[#allocation4 + $0x100] sm:$0xff] %vm389, %v2567
      %2604 = vst.msk [vmem:[#allocation4 + $0x108] sm:$0xff] %vm389, %v2568
      %2605 = vst.msk [vmem:[#allocation4 + $0x110] sm:$0xff] %vm389, %v2569
      %2606 = vst.msk [vmem:[#allocation4 + $0x118] sm:$0xff] %vm389, %v2570
      %v2607 = vld [vmem:[#allocation2 + $0x25] sm:$0xff]
      %v2608 = vld [vmem:[#allocation2 + $0x2d] sm:$0xff]
      %v2609 = vld [vmem:[#allocation2 + $0x35] sm:$0xff]
      %v2610 = vld [vmem:[#allocation2 + $0x3d] sm:$0xff]
      %v2611 = vld [vmem:[#allocation2 + $0x45] sm:$0xff]
      %v2612 = vld [vmem:[#allocation2 + $0x4d] sm:$0xff]
      %v2613 = vld [vmem:[#allocation2 + $0x55] sm:$0xff]
      %v2614 = vld [vmem:[#allocation2 + $0x5d] sm:$0xff]
      %v2615 = vld [vmem:[#allocation2 + $0x65] sm:$0xff]
      %v2616 = vld [vmem:[#allocation2 + $0x6d] sm:$0xff]
      %v2617 = vld [vmem:[#allocation2 + $0x75] sm:$0xff]
      %v2618 = vld [vmem:[#allocation2 + $0x7d] sm:$0xff]
      %v2619 = vld [vmem:[#allocation2 + $0x85] sm:$0xff]
      %v2620 = vld [vmem:[#allocation2 + $0x8d] sm:$0xff]
      %v2621 = vld [vmem:[#allocation2 + $0x95] sm:$0xff]
      %v2622 = vld [vmem:[#allocation2 + $0x9d] sm:$0xff]
      %v2623 = vld [vmem:[#allocation2 + $0xa5] sm:$0xff]
      %v2624 = vld [vmem:[#allocation2 + $0xad] sm:$0xff]
      %v2625 = vld [vmem:[#allocation2 + $0xb5] sm:$0xff]
      %v2626 = vld [vmem:[#allocation2 + $0xbd] sm:$0xff]
      %v2627 = vld [vmem:[#allocation2 + $0xc5] sm:$0xff]
      %v2628 = vld [vmem:[#allocation2 + $0xcd] sm:$0xff]
      %v2629 = vld [vmem:[#allocation2 + $0xd5] sm:$0xff]
      %v2630 = vld [vmem:[#allocation2 + $0xdd] sm:$0xff]
      %v2631 = vld [vmem:[#allocation2 + $0xe5] sm:$0xff]
      %v2632 = vld [vmem:[#allocation2 + $0xed] sm:$0xff]
      %v2633 = vld [vmem:[#allocation2 + $0xf5] sm:$0xff]
      %v2634 = vld [vmem:[#allocation2 + $0xfd] sm:$0xff]
      %v2635 = vld [vmem:[#allocation2 + $0x105] sm:$0xff]
      %v2636 = vld [vmem:[#allocation2 + $0x10d] sm:$0xff]
      %v2637 = vld [vmem:[#allocation2 + $0x115] sm:$0xff]
      %v2638 = vld [vmem:[#allocation2 + $0x11d] sm:$0xff]
      %v2639 = vld [vmem:[#allocation2 + $0x125] sm:$0xff]
      %v2640 = vld [vmem:[#allocation2 + $0x12d] sm:$0xff]
      %v2641 = vld [vmem:[#allocation2 + $0x135] sm:$0xff]
      %v2642 = vld [vmem:[#allocation2 + $0x13d] sm:$0xff]
      %v2643 = vpack.c.bf16 %v2608, %v2607
      %v2644 = vpack.c.bf16 %v2610, %v2609
      %v2645 = vpack.c.bf16 %v2612, %v2611
      %v2646 = vpack.c.bf16 %v2614, %v2613
      %v2647 = vpack.c.bf16 %v2616, %v2615
      %v2648 = vpack.c.bf16 %v2618, %v2617
      %v2649 = vpack.c.bf16 %v2620, %v2619
      %v2650 = vpack.c.bf16 %v2622, %v2621
      %v2651 = vpack.c.bf16 %v2624, %v2623
      %v2652 = vpack.c.bf16 %v2626, %v2625
      %v2653 = vpack.c.bf16 %v2628, %v2627
      %v2654 = vpack.c.bf16 %v2630, %v2629
      %v2655 = vpack.c.bf16 %v2632, %v2631
      %v2656 = vpack.c.bf16 %v2634, %v2633
      %v2657 = vpack.c.bf16 %v2636, %v2635
      %v2658 = vpack.c.bf16 %v2638, %v2637
      %v2659 = vpack.c.bf16 %v2640, %v2639
      %v2660 = vpack.c.bf16 %v2642, %v2641
      %s2661 = scalar_lea.vmem %s1, 28
      %v2662 = vld [vmem:[%s2661] sm:$0xf]
      %v2664 = vsel %vm389, %v2643, 0
      %v2667 = vsel %vm389, %v2644, 0
      %v2670 = vsel %vm389, %v2645, 0
      %v2673 = vsel %vm389, %v2646, 0
      %v2676 = vsel %vm389, %v2647, 0
      %v2679 = vsel %vm389, %v2648, 0
      %v2682 = vsel %vm389, %v2649, 0
      %v2685 = vsel %vm389, %v2650, 0
      %v2688 = vsel %vm389, %v2651, 0
      %v2691 = vsel %vm389, %v2652, 0
      %v2694 = vsel %vm389, %v2653, 0
      %v2697 = vsel %vm389, %v2654, 0
      %v2700 = vsel %vm389, %v2655, 0
      %v2703 = vsel %vm389, %v2656, 0
      %v2706 = vsel %vm389, %v2657, 0
      %v2709 = vsel %vm389, %v2658, 0
      %v2712 = vsel %vm389, %v2659, 0
      %v2715 = vsel %vm389, %v2660, 0
      %v2718 = vsel %vm548, %v2662, 0
      %2720 = vmatpush.bf16.msra.mxu0 0
      %2721 = vmatpush.bf16.msra.mxu0 0
      %2722 = vmatpush.bf16.msra.mxu0 0
      %2723 = vmatpush.bf16.msra.mxu0 0
      %2724 = vmatpush.bf16.msra.mxu0 0
      %2725 = vmatpush.bf16.msra.mxu0 0
      %2726 = vmatpush.bf16.msra.mxu0 0
      %2727 = vmatpush.bf16.msra.mxu0 %v2718
      %2728 = vmatmul.bf16.gmra.mxu0 %v2664
      %v2729 = vpop.f32.mrf.mxu0
      %v2730 = vadd.f32 0.0, %v2729
      %v2731 = vpop.f32.mrf.mxu0
      %v2732 = vadd.f32 0.0, %v2731
      %2733 = vmatmul.bf16.gmra.mxu0 %v2667
      %v2734 = vpop.f32.mrf.mxu0
      %v2735 = vadd.f32 0.0, %v2734
      %v2736 = vpop.f32.mrf.mxu0
      %v2737 = vadd.f32 0.0, %v2736
      %2738 = vmatmul.bf16.gmra.mxu0 %v2670
      %v2739 = vpop.f32.mrf.mxu0
      %v2740 = vadd.f32 0.0, %v2739
      %v2741 = vpop.f32.mrf.mxu0
      %v2742 = vadd.f32 0.0, %v2741
      %2743 = vmatmul.bf16.gmra.mxu0 %v2673
      %v2744 = vpop.f32.mrf.mxu0
      %v2745 = vadd.f32 0.0, %v2744
      %v2746 = vpop.f32.mrf.mxu0
      %v2747 = vadd.f32 0.0, %v2746
      %2748 = vmatmul.bf16.gmra.mxu0 %v2676
      %v2749 = vpop.f32.mrf.mxu0
      %v2750 = vadd.f32 0.0, %v2749
      %v2751 = vpop.f32.mrf.mxu0
      %v2752 = vadd.f32 0.0, %v2751
      %2753 = vmatmul.bf16.gmra.mxu0 %v2679
      %v2754 = vpop.f32.mrf.mxu0
      %v2755 = vadd.f32 0.0, %v2754
      %v2756 = vpop.f32.mrf.mxu0
      %v2757 = vadd.f32 0.0, %v2756
      %2758 = vmatmul.bf16.gmra.mxu0 %v2682
      %v2759 = vpop.f32.mrf.mxu0
      %v2760 = vadd.f32 0.0, %v2759
      %v2761 = vpop.f32.mrf.mxu0
      %v2762 = vadd.f32 0.0, %v2761
      %2763 = vmatmul.bf16.gmra.mxu0 %v2685
      %v2764 = vpop.f32.mrf.mxu0
      %v2765 = vadd.f32 0.0, %v2764
      %v2766 = vpop.f32.mrf.mxu0
      %v2767 = vadd.f32 0.0, %v2766
      %2768 = vmatmul.bf16.gmra.mxu0 %v2688
      %v2769 = vpop.f32.mrf.mxu0
      %v2770 = vadd.f32 0.0, %v2769
      %v2771 = vpop.f32.mrf.mxu0
      %v2772 = vadd.f32 0.0, %v2771
      %2773 = vmatmul.bf16.gmra.mxu0 %v2691
      %v2774 = vpop.f32.mrf.mxu0
      %v2775 = vadd.f32 0.0, %v2774
      %v2776 = vpop.f32.mrf.mxu0
      %v2777 = vadd.f32 0.0, %v2776
      %2778 = vmatmul.bf16.gmra.mxu0 %v2694
      %v2779 = vpop.f32.mrf.mxu0
      %v2780 = vadd.f32 0.0, %v2779
      %v2781 = vpop.f32.mrf.mxu0
      %v2782 = vadd.f32 0.0, %v2781
      %2783 = vmatmul.bf16.gmra.mxu0 %v2697
      %v2784 = vpop.f32.mrf.mxu0
      %v2785 = vadd.f32 0.0, %v2784
      %v2786 = vpop.f32.mrf.mxu0
      %v2787 = vadd.f32 0.0, %v2786
      %2788 = vmatmul.bf16.gmra.mxu0 %v2700
      %v2789 = vpop.f32.mrf.mxu0
      %v2790 = vadd.f32 0.0, %v2789
      %v2791 = vpop.f32.mrf.mxu0
      %v2792 = vadd.f32 0.0, %v2791
      %2793 = vmatmul.bf16.gmra.mxu0 %v2703
      %v2794 = vpop.f32.mrf.mxu0
      %v2795 = vadd.f32 0.0, %v2794
      %v2796 = vpop.f32.mrf.mxu0
      %v2797 = vadd.f32 0.0, %v2796
      %2798 = vmatmul.bf16.gmra.mxu0 %v2706
      %v2799 = vpop.f32.mrf.mxu0
      %v2800 = vadd.f32 0.0, %v2799
      %v2801 = vpop.f32.mrf.mxu0
      %v2802 = vadd.f32 0.0, %v2801
      %2803 = vmatmul.bf16.gmra.mxu0 %v2709
      %v2804 = vpop.f32.mrf.mxu0
      %v2805 = vadd.f32 0.0, %v2804
      %v2806 = vpop.f32.mrf.mxu0
      %v2807 = vadd.f32 0.0, %v2806
      %2808 = vmatmul.bf16.gmra.mxu0 %v2712
      %v2809 = vpop.f32.mrf.mxu0
      %v2810 = vadd.f32 0.0, %v2809
      %v2811 = vpop.f32.mrf.mxu0
      %v2812 = vadd.f32 0.0, %v2811
      %2813 = vmatmul.bf16.gmra.mxu0 %v2715
      %v2814 = vpop.f32.mrf.mxu0
      %v2815 = vadd.f32 0.0, %v2814
      %v2816 = vpop.f32.mrf.mxu0
      %v2817 = vadd.f32 0.0, %v2816
      %2818 = vdwg.mxu0
      %v2819 = vld [vmem:[#allocation4] sm:$0xff]
      %v2820 = vld [vmem:[#allocation4 + $0x8] sm:$0xff]
      %v2821 = vld [vmem:[#allocation4 + $0x10] sm:$0xff]
      %v2822 = vld [vmem:[#allocation4 + $0x18] sm:$0xff]
      %v2823 = vld [vmem:[#allocation4 + $0x20] sm:$0xff]
      %v2824 = vld [vmem:[#allocation4 + $0x28] sm:$0xff]
      %v2825 = vld [vmem:[#allocation4 + $0x30] sm:$0xff]
      %v2826 = vld [vmem:[#allocation4 + $0x38] sm:$0xff]
      %v2827 = vld [vmem:[#allocation4 + $0x40] sm:$0xff]
      %v2828 = vld [vmem:[#allocation4 + $0x48] sm:$0xff]
      %v2829 = vld [vmem:[#allocation4 + $0x50] sm:$0xff]
      %v2830 = vld [vmem:[#allocation4 + $0x58] sm:$0xff]
      %v2831 = vld [vmem:[#allocation4 + $0x60] sm:$0xff]
      %v2832 = vld [vmem:[#allocation4 + $0x68] sm:$0xff]
      %v2833 = vld [vmem:[#allocation4 + $0x70] sm:$0xff]
      %v2834 = vld [vmem:[#allocation4 + $0x78] sm:$0xff]
      %v2835 = vld [vmem:[#allocation4 + $0x80] sm:$0xff]
      %v2836 = vld [vmem:[#allocation4 + $0x88] sm:$0xff]
      %v2837 = vld [vmem:[#allocation4 + $0x90] sm:$0xff]
      %v2838 = vld [vmem:[#allocation4 + $0x98] sm:$0xff]
      %v2839 = vld [vmem:[#allocation4 + $0xa0] sm:$0xff]
      %v2840 = vld [vmem:[#allocation4 + $0xa8] sm:$0xff]
      %v2841 = vld [vmem:[#allocation4 + $0xb0] sm:$0xff]
      %v2842 = vld [vmem:[#allocation4 + $0xb8] sm:$0xff]
      %v2843 = vld [vmem:[#allocation4 + $0xc0] sm:$0xff]
      %v2844 = vld [vmem:[#allocation4 + $0xc8] sm:$0xff]
      %v2845 = vld [vmem:[#allocation4 + $0xd0] sm:$0xff]
      %v2846 = vld [vmem:[#allocation4 + $0xd8] sm:$0xff]
      %v2847 = vld [vmem:[#allocation4 + $0xe0] sm:$0xff]
      %v2848 = vld [vmem:[#allocation4 + $0xe8] sm:$0xff]
      %v2849 = vld [vmem:[#allocation4 + $0xf0] sm:$0xff]
      %v2850 = vld [vmem:[#allocation4 + $0xf8] sm:$0xff]
      %v2851 = vld [vmem:[#allocation4 + $0x100] sm:$0xff]
      %v2852 = vld [vmem:[#allocation4 + $0x108] sm:$0xff]
      %v2853 = vld [vmem:[#allocation4 + $0x110] sm:$0xff]
      %v2854 = vld [vmem:[#allocation4 + $0x118] sm:$0xff]
      %v2855 = vadd.f32 %v2819, %v2730
      %v2856 = vadd.f32 %v2820, %v2732
      %v2857 = vadd.f32 %v2821, %v2735
      %v2858 = vadd.f32 %v2822, %v2737
      %v2859 = vadd.f32 %v2823, %v2740
      %v2860 = vadd.f32 %v2824, %v2742
      %v2861 = vadd.f32 %v2825, %v2745
      %v2862 = vadd.f32 %v2826, %v2747
      %v2863 = vadd.f32 %v2827, %v2750
      %v2864 = vadd.f32 %v2828, %v2752
      %v2865 = vadd.f32 %v2829, %v2755
      %v2866 = vadd.f32 %v2830, %v2757
      %v2867 = vadd.f32 %v2831, %v2760
      %v2868 = vadd.f32 %v2832, %v2762
      %v2869 = vadd.f32 %v2833, %v2765
      %v2870 = vadd.f32 %v2834, %v2767
      %v2871 = vadd.f32 %v2835, %v2770
      %v2872 = vadd.f32 %v2836, %v2772
      %v2873 = vadd.f32 %v2837, %v2775
      %v2874 = vadd.f32 %v2838, %v2777
      %v2875 = vadd.f32 %v2839, %v2780
      %v2876 = vadd.f32 %v2840, %v2782
      %v2877 = vadd.f32 %v2841, %v2785
      %v2878 = vadd.f32 %v2842, %v2787
      %v2879 = vadd.f32 %v2843, %v2790
      %v2880 = vadd.f32 %v2844, %v2792
      %v2881 = vadd.f32 %v2845, %v2795
      %v2882 = vadd.f32 %v2846, %v2797
      %v2883 = vadd.f32 %v2847, %v2800
      %v2884 = vadd.f32 %v2848, %v2802
      %v2885 = vadd.f32 %v2849, %v2805
      %v2886 = vadd.f32 %v2850, %v2807
      %v2887 = vadd.f32 %v2851, %v2810
      %v2888 = vadd.f32 %v2852, %v2812
      %v2889 = vadd.f32 %v2853, %v2815
      %v2890 = vadd.f32 %v2854, %v2817
      %2891 = vst.msk [vmem:[#allocation4] sm:$0xff] %vm389, %v2855
      %2892 = vst.msk [vmem:[#allocation4 + $0x8] sm:$0xff] %vm389, %v2856
      %2893 = vst.msk [vmem:[#allocation4 + $0x10] sm:$0xff] %vm389, %v2857
      %2894 = vst.msk [vmem:[#allocation4 + $0x18] sm:$0xff] %vm389, %v2858
      %2895 = vst.msk [vmem:[#allocation4 + $0x20] sm:$0xff] %vm389, %v2859
      %2896 = vst.msk [vmem:[#allocation4 + $0x28] sm:$0xff] %vm389, %v2860
      %2897 = vst.msk [vmem:[#allocation4 + $0x30] sm:$0xff] %vm389, %v2861
      %2898 = vst.msk [vmem:[#allocation4 + $0x38] sm:$0xff] %vm389, %v2862
      %2899 = vst.msk [vmem:[#allocation4 + $0x40] sm:$0xff] %vm389, %v2863
      %2900 = vst.msk [vmem:[#allocation4 + $0x48] sm:$0xff] %vm389, %v2864
      %2901 = vst.msk [vmem:[#allocation4 + $0x50] sm:$0xff] %vm389, %v2865
      %2902 = vst.msk [vmem:[#allocation4 + $0x58] sm:$0xff] %vm389, %v2866
      %2903 = vst.msk [vmem:[#allocation4 + $0x60] sm:$0xff] %vm389, %v2867
      %2904 = vst.msk [vmem:[#allocation4 + $0x68] sm:$0xff] %vm389, %v2868
      %2905 = vst.msk [vmem:[#allocation4 + $0x70] sm:$0xff] %vm389, %v2869
      %2906 = vst.msk [vmem:[#allocation4 + $0x78] sm:$0xff] %vm389, %v2870
      %2907 = vst.msk [vmem:[#allocation4 + $0x80] sm:$0xff] %vm389, %v2871
      %2908 = vst.msk [vmem:[#allocation4 + $0x88] sm:$0xff] %vm389, %v2872
      %2909 = vst.msk [vmem:[#allocation4 + $0x90] sm:$0xff] %vm389, %v2873
      %2910 = vst.msk [vmem:[#allocation4 + $0x98] sm:$0xff] %vm389, %v2874
      %2911 = vst.msk [vmem:[#allocation4 + $0xa0] sm:$0xff] %vm389, %v2875
      %2912 = vst.msk [vmem:[#allocation4 + $0xa8] sm:$0xff] %vm389, %v2876
      %2913 = vst.msk [vmem:[#allocation4 + $0xb0] sm:$0xff] %vm389, %v2877
      %2914 = vst.msk [vmem:[#allocation4 + $0xb8] sm:$0xff] %vm389, %v2878
      %2915 = vst.msk [vmem:[#allocation4 + $0xc0] sm:$0xff] %vm389, %v2879
      %2916 = vst.msk [vmem:[#allocation4 + $0xc8] sm:$0xff] %vm389, %v2880
      %2917 = vst.msk [vmem:[#allocation4 + $0xd0] sm:$0xff] %vm389, %v2881
      %2918 = vst.msk [vmem:[#allocation4 + $0xd8] sm:$0xff] %vm389, %v2882
      %2919 = vst.msk [vmem:[#allocation4 + $0xe0] sm:$0xff] %vm389, %v2883
      %2920 = vst.msk [vmem:[#allocation4 + $0xe8] sm:$0xff] %vm389, %v2884
      %2921 = vst.msk [vmem:[#allocation4 + $0xf0] sm:$0xff] %vm389, %v2885
      %2922 = vst.msk [vmem:[#allocation4 + $0xf8] sm:$0xff] %vm389, %v2886
      %2923 = vst.msk [vmem:[#allocation4 + $0x100] sm:$0xff] %vm389, %v2887
      %2924 = vst.msk [vmem:[#allocation4 + $0x108] sm:$0xff] %vm389, %v2888
      %2925 = vst.msk [vmem:[#allocation4 + $0x110] sm:$0xff] %vm389, %v2889
      %2926 = vst.msk [vmem:[#allocation4 + $0x118] sm:$0xff] %vm389, %v2890
      %v2927 = vld [vmem:[#allocation2 + $0x26] sm:$0xff]
      %v2928 = vld [vmem:[#allocation2 + $0x2e] sm:$0xff]
      %v2929 = vld [vmem:[#allocation2 + $0x36] sm:$0xff]
      %v2930 = vld [vmem:[#allocation2 + $0x3e] sm:$0xff]
      %v2931 = vld [vmem:[#allocation2 + $0x46] sm:$0xff]
      %v2932 = vld [vmem:[#allocation2 + $0x4e] sm:$0xff]
      %v2933 = vld [vmem:[#allocation2 + $0x56] sm:$0xff]
      %v2934 = vld [vmem:[#allocation2 + $0x5e] sm:$0xff]
      %v2935 = vld [vmem:[#allocation2 + $0x66] sm:$0xff]
      %v2936 = vld [vmem:[#allocation2 + $0x6e] sm:$0xff]
      %v2937 = vld [vmem:[#allocation2 + $0x76] sm:$0xff]
      %v2938 = vld [vmem:[#allocation2 + $0x7e] sm:$0xff]
      %v2939 = vld [vmem:[#allocation2 + $0x86] sm:$0xff]
      %v2940 = vld [vmem:[#allocation2 + $0x8e] sm:$0xff]
      %v2941 = vld [vmem:[#allocation2 + $0x96] sm:$0xff]
      %v2942 = vld [vmem:[#allocation2 + $0x9e] sm:$0xff]
      %v2943 = vld [vmem:[#allocation2 + $0xa6] sm:$0xff]
      %v2944 = vld [vmem:[#allocation2 + $0xae] sm:$0xff]
      %v2945 = vld [vmem:[#allocation2 + $0xb6] sm:$0xff]
      %v2946 = vld [vmem:[#allocation2 + $0xbe] sm:$0xff]
      %v2947 = vld [vmem:[#allocation2 + $0xc6] sm:$0xff]
      %v2948 = vld [vmem:[#allocation2 + $0xce] sm:$0xff]
      %v2949 = vld [vmem:[#allocation2 + $0xd6] sm:$0xff]
      %v2950 = vld [vmem:[#allocation2 + $0xde] sm:$0xff]
      %v2951 = vld [vmem:[#allocation2 + $0xe6] sm:$0xff]
      %v2952 = vld [vmem:[#allocation2 + $0xee] sm:$0xff]
      %v2953 = vld [vmem:[#allocation2 + $0xf6] sm:$0xff]
      %v2954 = vld [vmem:[#allocation2 + $0xfe] sm:$0xff]
      %v2955 = vld [vmem:[#allocation2 + $0x106] sm:$0xff]
      %v2956 = vld [vmem:[#allocation2 + $0x10e] sm:$0xff]
      %v2957 = vld [vmem:[#allocation2 + $0x116] sm:$0xff]
      %v2958 = vld [vmem:[#allocation2 + $0x11e] sm:$0xff]
      %v2959 = vld [vmem:[#allocation2 + $0x126] sm:$0xff]
      %v2960 = vld [vmem:[#allocation2 + $0x12e] sm:$0xff]
      %v2961 = vld [vmem:[#allocation2 + $0x136] sm:$0xff]
      %v2962 = vld [vmem:[#allocation2 + $0x13e] sm:$0xff]
      %v2963 = vpack.c.bf16 %v2928, %v2927
      %v2964 = vpack.c.bf16 %v2930, %v2929
      %v2965 = vpack.c.bf16 %v2932, %v2931
      %v2966 = vpack.c.bf16 %v2934, %v2933
      %v2967 = vpack.c.bf16 %v2936, %v2935
      %v2968 = vpack.c.bf16 %v2938, %v2937
      %v2969 = vpack.c.bf16 %v2940, %v2939
      %v2970 = vpack.c.bf16 %v2942, %v2941
      %v2971 = vpack.c.bf16 %v2944, %v2943
      %v2972 = vpack.c.bf16 %v2946, %v2945
      %v2973 = vpack.c.bf16 %v2948, %v2947
      %v2974 = vpack.c.bf16 %v2950, %v2949
      %v2975 = vpack.c.bf16 %v2952, %v2951
      %v2976 = vpack.c.bf16 %v2954, %v2953
      %v2977 = vpack.c.bf16 %v2956, %v2955
      %v2978 = vpack.c.bf16 %v2958, %v2957
      %v2979 = vpack.c.bf16 %v2960, %v2959
      %v2980 = vpack.c.bf16 %v2962, %v2961
      %s2981 = scalar_lea.vmem %s1, 32
      %v2982 = vld [vmem:[%s2981] sm:$0xf]
      %v2984 = vsel %vm389, %v2963, 0
      %v2987 = vsel %vm389, %v2964, 0
      %v2990 = vsel %vm389, %v2965, 0
      %v2993 = vsel %vm389, %v2966, 0
      %v2996 = vsel %vm389, %v2967, 0
      %v2999 = vsel %vm389, %v2968, 0
      %v3002 = vsel %vm389, %v2969, 0
      %v3005 = vsel %vm389, %v2970, 0
      %v3008 = vsel %vm389, %v2971, 0
      %v3011 = vsel %vm389, %v2972, 0
      %v3014 = vsel %vm389, %v2973, 0
      %v3017 = vsel %vm389, %v2974, 0
      %v3020 = vsel %vm389, %v2975, 0
      %v3023 = vsel %vm389, %v2976, 0
      %v3026 = vsel %vm389, %v2977, 0
      %v3029 = vsel %vm389, %v2978, 0
      %v3032 = vsel %vm389, %v2979, 0
      %v3035 = vsel %vm389, %v2980, 0
      %v3038 = vsel %vm548, %v2982, 0
      %3040 = vmatpush.bf16.msra.mxu0 0
      %3041 = vmatpush.bf16.msra.mxu0 0
      %3042 = vmatpush.bf16.msra.mxu0 0
      %3043 = vmatpush.bf16.msra.mxu0 0
      %3044 = vmatpush.bf16.msra.mxu0 0
      %3045 = vmatpush.bf16.msra.mxu0 0
      %3046 = vmatpush.bf16.msra.mxu0 0
      %3047 = vmatpush.bf16.msra.mxu0 %v3038
      %3048 = vmatmul.bf16.gmra.mxu0 %v2984
      %v3049 = vpop.f32.mrf.mxu0
      %v3050 = vadd.f32 0.0, %v3049
      %v3051 = vpop.f32.mrf.mxu0
      %v3052 = vadd.f32 0.0, %v3051
      %3053 = vmatmul.bf16.gmra.mxu0 %v2987
      %v3054 = vpop.f32.mrf.mxu0
      %v3055 = vadd.f32 0.0, %v3054
      %v3056 = vpop.f32.mrf.mxu0
      %v3057 = vadd.f32 0.0, %v3056
      %3058 = vmatmul.bf16.gmra.mxu0 %v2990
      %v3059 = vpop.f32.mrf.mxu0
      %v3060 = vadd.f32 0.0, %v3059
      %v3061 = vpop.f32.mrf.mxu0
      %v3062 = vadd.f32 0.0, %v3061
      %3063 = vmatmul.bf16.gmra.mxu0 %v2993
      %v3064 = vpop.f32.mrf.mxu0
      %v3065 = vadd.f32 0.0, %v3064
      %v3066 = vpop.f32.mrf.mxu0
      %v3067 = vadd.f32 0.0, %v3066
      %3068 = vmatmul.bf16.gmra.mxu0 %v2996
      %v3069 = vpop.f32.mrf.mxu0
      %v3070 = vadd.f32 0.0, %v3069
      %v3071 = vpop.f32.mrf.mxu0
      %v3072 = vadd.f32 0.0, %v3071
      %3073 = vmatmul.bf16.gmra.mxu0 %v2999
      %v3074 = vpop.f32.mrf.mxu0
      %v3075 = vadd.f32 0.0, %v3074
      %v3076 = vpop.f32.mrf.mxu0
      %v3077 = vadd.f32 0.0, %v3076
      %3078 = vmatmul.bf16.gmra.mxu0 %v3002
      %v3079 = vpop.f32.mrf.mxu0
      %v3080 = vadd.f32 0.0, %v3079
      %v3081 = vpop.f32.mrf.mxu0
      %v3082 = vadd.f32 0.0, %v3081
      %3083 = vmatmul.bf16.gmra.mxu0 %v3005
      %v3084 = vpop.f32.mrf.mxu0
      %v3085 = vadd.f32 0.0, %v3084
      %v3086 = vpop.f32.mrf.mxu0
      %v3087 = vadd.f32 0.0, %v3086
      %3088 = vmatmul.bf16.gmra.mxu0 %v3008
      %v3089 = vpop.f32.mrf.mxu0
      %v3090 = vadd.f32 0.0, %v3089
      %v3091 = vpop.f32.mrf.mxu0
      %v3092 = vadd.f32 0.0, %v3091
      %3093 = vmatmul.bf16.gmra.mxu0 %v3011
      %v3094 = vpop.f32.mrf.mxu0
      %v3095 = vadd.f32 0.0, %v3094
      %v3096 = vpop.f32.mrf.mxu0
      %v3097 = vadd.f32 0.0, %v3096
      %3098 = vmatmul.bf16.gmra.mxu0 %v3014
      %v3099 = vpop.f32.mrf.mxu0
      %v3100 = vadd.f32 0.0, %v3099
      %v3101 = vpop.f32.mrf.mxu0
      %v3102 = vadd.f32 0.0, %v3101
      %3103 = vmatmul.bf16.gmra.mxu0 %v3017
      %v3104 = vpop.f32.mrf.mxu0
      %v3105 = vadd.f32 0.0, %v3104
      %v3106 = vpop.f32.mrf.mxu0
      %v3107 = vadd.f32 0.0, %v3106
      %3108 = vmatmul.bf16.gmra.mxu0 %v3020
      %v3109 = vpop.f32.mrf.mxu0
      %v3110 = vadd.f32 0.0, %v3109
      %v3111 = vpop.f32.mrf.mxu0
      %v3112 = vadd.f32 0.0, %v3111
      %3113 = vmatmul.bf16.gmra.mxu0 %v3023
      %v3114 = vpop.f32.mrf.mxu0
      %v3115 = vadd.f32 0.0, %v3114
      %v3116 = vpop.f32.mrf.mxu0
      %v3117 = vadd.f32 0.0, %v3116
      %3118 = vmatmul.bf16.gmra.mxu0 %v3026
      %v3119 = vpop.f32.mrf.mxu0
      %v3120 = vadd.f32 0.0, %v3119
      %v3121 = vpop.f32.mrf.mxu0
      %v3122 = vadd.f32 0.0, %v3121
      %3123 = vmatmul.bf16.gmra.mxu0 %v3029
      %v3124 = vpop.f32.mrf.mxu0
      %v3125 = vadd.f32 0.0, %v3124
      %v3126 = vpop.f32.mrf.mxu0
      %v3127 = vadd.f32 0.0, %v3126
      %3128 = vmatmul.bf16.gmra.mxu0 %v3032
      %v3129 = vpop.f32.mrf.mxu0
      %v3130 = vadd.f32 0.0, %v3129
      %v3131 = vpop.f32.mrf.mxu0
      %v3132 = vadd.f32 0.0, %v3131
      %3133 = vmatmul.bf16.gmra.mxu0 %v3035
      %v3134 = vpop.f32.mrf.mxu0
      %v3135 = vadd.f32 0.0, %v3134
      %v3136 = vpop.f32.mrf.mxu0
      %v3137 = vadd.f32 0.0, %v3136
      %3138 = vdwg.mxu0
      %v3139 = vld [vmem:[#allocation4] sm:$0xff]
      %v3140 = vld [vmem:[#allocation4 + $0x8] sm:$0xff]
      %v3141 = vld [vmem:[#allocation4 + $0x10] sm:$0xff]
      %v3142 = vld [vmem:[#allocation4 + $0x18] sm:$0xff]
      %v3143 = vld [vmem:[#allocation4 + $0x20] sm:$0xff]
      %v3144 = vld [vmem:[#allocation4 + $0x28] sm:$0xff]
      %v3145 = vld [vmem:[#allocation4 + $0x30] sm:$0xff]
      %v3146 = vld [vmem:[#allocation4 + $0x38] sm:$0xff]
      %v3147 = vld [vmem:[#allocation4 + $0x40] sm:$0xff]
      %v3148 = vld [vmem:[#allocation4 + $0x48] sm:$0xff]
      %v3149 = vld [vmem:[#allocation4 + $0x50] sm:$0xff]
      %v3150 = vld [vmem:[#allocation4 + $0x58] sm:$0xff]
      %v3151 = vld [vmem:[#allocation4 + $0x60] sm:$0xff]
      %v3152 = vld [vmem:[#allocation4 + $0x68] sm:$0xff]
      %v3153 = vld [vmem:[#allocation4 + $0x70] sm:$0xff]
      %v3154 = vld [vmem:[#allocation4 + $0x78] sm:$0xff]
      %v3155 = vld [vmem:[#allocation4 + $0x80] sm:$0xff]
      %v3156 = vld [vmem:[#allocation4 + $0x88] sm:$0xff]
      %v3157 = vld [vmem:[#allocation4 + $0x90] sm:$0xff]
      %v3158 = vld [vmem:[#allocation4 + $0x98] sm:$0xff]
      %v3159 = vld [vmem:[#allocation4 + $0xa0] sm:$0xff]
      %v3160 = vld [vmem:[#allocation4 + $0xa8] sm:$0xff]
      %v3161 = vld [vmem:[#allocation4 + $0xb0] sm:$0xff]
      %v3162 = vld [vmem:[#allocation4 + $0xb8] sm:$0xff]
      %v3163 = vld [vmem:[#allocation4 + $0xc0] sm:$0xff]
      %v3164 = vld [vmem:[#allocation4 + $0xc8] sm:$0xff]
      %v3165 = vld [vmem:[#allocation4 + $0xd0] sm:$0xff]
      %v3166 = vld [vmem:[#allocation4 + $0xd8] sm:$0xff]
      %v3167 = vld [vmem:[#allocation4 + $0xe0] sm:$0xff]
      %v3168 = vld [vmem:[#allocation4 + $0xe8] sm:$0xff]
      %v3169 = vld [vmem:[#allocation4 + $0xf0] sm:$0xff]
      %v3170 = vld [vmem:[#allocation4 + $0xf8] sm:$0xff]
      %v3171 = vld [vmem:[#allocation4 + $0x100] sm:$0xff]
      %v3172 = vld [vmem:[#allocation4 + $0x108] sm:$0xff]
      %v3173 = vld [vmem:[#allocation4 + $0x110] sm:$0xff]
      %v3174 = vld [vmem:[#allocation4 + $0x118] sm:$0xff]
      %v3175 = vadd.f32 %v3139, %v3050
      %v3176 = vadd.f32 %v3140, %v3052
      %v3177 = vadd.f32 %v3141, %v3055
      %v3178 = vadd.f32 %v3142, %v3057
      %v3179 = vadd.f32 %v3143, %v3060
      %v3180 = vadd.f32 %v3144, %v3062
      %v3181 = vadd.f32 %v3145, %v3065
      %v3182 = vadd.f32 %v3146, %v3067
      %v3183 = vadd.f32 %v3147, %v3070
      %v3184 = vadd.f32 %v3148, %v3072
      %v3185 = vadd.f32 %v3149, %v3075
      %v3186 = vadd.f32 %v3150, %v3077
      %v3187 = vadd.f32 %v3151, %v3080
      %v3188 = vadd.f32 %v3152, %v3082
      %v3189 = vadd.f32 %v3153, %v3085
      %v3190 = vadd.f32 %v3154, %v3087
      %v3191 = vadd.f32 %v3155, %v3090
      %v3192 = vadd.f32 %v3156, %v3092
      %v3193 = vadd.f32 %v3157, %v3095
      %v3194 = vadd.f32 %v3158, %v3097
      %v3195 = vadd.f32 %v3159, %v3100
      %v3196 = vadd.f32 %v3160, %v3102
      %v3197 = vadd.f32 %v3161, %v3105
      %v3198 = vadd.f32 %v3162, %v3107
      %v3199 = vadd.f32 %v3163, %v3110
      %v3200 = vadd.f32 %v3164, %v3112
      %v3201 = vadd.f32 %v3165, %v3115
      %v3202 = vadd.f32 %v3166, %v3117
      %v3203 = vadd.f32 %v3167, %v3120
      %v3204 = vadd.f32 %v3168, %v3122
      %v3205 = vadd.f32 %v3169, %v3125
      %v3206 = vadd.f32 %v3170, %v3127
      %v3207 = vadd.f32 %v3171, %v3130
      %v3208 = vadd.f32 %v3172, %v3132
      %v3209 = vadd.f32 %v3173, %v3135
      %v3210 = vadd.f32 %v3174, %v3137
      %3211 = vst.msk [vmem:[#allocation4] sm:$0xff] %vm389, %v3175
      %3212 = vst.msk [vmem:[#allocation4 + $0x8] sm:$0xff] %vm389, %v3176
      %3213 = vst.msk [vmem:[#allocation4 + $0x10] sm:$0xff] %vm389, %v3177
      %3214 = vst.msk [vmem:[#allocation4 + $0x18] sm:$0xff] %vm389, %v3178
      %3215 = vst.msk [vmem:[#allocation4 + $0x20] sm:$0xff] %vm389, %v3179
      %3216 = vst.msk [vmem:[#allocation4 + $0x28] sm:$0xff] %vm389, %v3180
      %3217 = vst.msk [vmem:[#allocation4 + $0x30] sm:$0xff] %vm389, %v3181
      %3218 = vst.msk [vmem:[#allocation4 + $0x38] sm:$0xff] %vm389, %v3182
      %3219 = vst.msk [vmem:[#allocation4 + $0x40] sm:$0xff] %vm389, %v3183
      %3220 = vst.msk [vmem:[#allocation4 + $0x48] sm:$0xff] %vm389, %v3184
      %3221 = vst.msk [vmem:[#allocation4 + $0x50] sm:$0xff] %vm389, %v3185
      %3222 = vst.msk [vmem:[#allocation4 + $0x58] sm:$0xff] %vm389, %v3186
      %3223 = vst.msk [vmem:[#allocation4 + $0x60] sm:$0xff] %vm389, %v3187
      %3224 = vst.msk [vmem:[#allocation4 + $0x68] sm:$0xff] %vm389, %v3188
      %3225 = vst.msk [vmem:[#allocation4 + $0x70] sm:$0xff] %vm389, %v3189
      %3226 = vst.msk [vmem:[#allocation4 + $0x78] sm:$0xff] %vm389, %v3190
      %3227 = vst.msk [vmem:[#allocation4 + $0x80] sm:$0xff] %vm389, %v3191
      %3228 = vst.msk [vmem:[#allocation4 + $0x88] sm:$0xff] %vm389, %v3192
      %3229 = vst.msk [vmem:[#allocation4 + $0x90] sm:$0xff] %vm389, %v3193
      %3230 = vst.msk [vmem:[#allocation4 + $0x98] sm:$0xff] %vm389, %v3194
      %3231 = vst.msk [vmem:[#allocation4 + $0xa0] sm:$0xff] %vm389, %v3195
      %3232 = vst.msk [vmem:[#allocation4 + $0xa8] sm:$0xff] %vm389, %v3196
      %3233 = vst.msk [vmem:[#allocation4 + $0xb0] sm:$0xff] %vm389, %v3197
      %3234 = vst.msk [vmem:[#allocation4 + $0xb8] sm:$0xff] %vm389, %v3198
      %3235 = vst.msk [vmem:[#allocation4 + $0xc0] sm:$0xff] %vm389, %v3199
      %3236 = vst.msk [vmem:[#allocation4 + $0xc8] sm:$0xff] %vm389, %v3200
      %3237 = vst.msk [vmem:[#allocation4 + $0xd0] sm:$0xff] %vm389, %v3201
      %3238 = vst.msk [vmem:[#allocation4 + $0xd8] sm:$0xff] %vm389, %v3202
      %3239 = vst.msk [vmem:[#allocation4 + $0xe0] sm:$0xff] %vm389, %v3203
      %3240 = vst.msk [vmem:[#allocation4 + $0xe8] sm:$0xff] %vm389, %v3204
      %3241 = vst.msk [vmem:[#allocation4 + $0xf0] sm:$0xff] %vm389, %v3205
      %3242 = vst.msk [vmem:[#allocation4 + $0xf8] sm:$0xff] %vm389, %v3206
      %3243 = vst.msk [vmem:[#allocation4 + $0x100] sm:$0xff] %vm389, %v3207
      %3244 = vst.msk [vmem:[#allocation4 + $0x108] sm:$0xff] %vm389, %v3208
      %3245 = vst.msk [vmem:[#allocation4 + $0x110] sm:$0xff] %vm389, %v3209
      %3246 = vst.msk [vmem:[#allocation4 + $0x118] sm:$0xff] %vm389, %v3210
      %v3247 = vld [vmem:[#allocation4] sm:$0xff]
      %v3248 = vld [vmem:[#allocation4 + $0x8] sm:$0xff]
      %v3249 = vld [vmem:[#allocation4 + $0x10] sm:$0xff]
      %v3250 = vld [vmem:[#allocation4 + $0x18] sm:$0xff]
      %v3251 = vld [vmem:[#allocation4 + $0x20] sm:$0xff]
      %v3252 = vld [vmem:[#allocation4 + $0x28] sm:$0xff]
      %v3253 = vld [vmem:[#allocation4 + $0x30] sm:$0xff]
      %v3254 = vld [vmem:[#allocation4 + $0x38] sm:$0xff]
      %v3255 = vld [vmem:[#allocation4 + $0x40] sm:$0xff]
      %v3256 = vld [vmem:[#allocation4 + $0x48] sm:$0xff]
      %v3257 = vld [vmem:[#allocation4 + $0x50] sm:$0xff]
      %v3258 = vld [vmem:[#allocation4 + $0x58] sm:$0xff]
      %v3259 = vld [vmem:[#allocation4 + $0x60] sm:$0xff]
      %v3260 = vld [vmem:[#allocation4 + $0x68] sm:$0xff]
      %v3261 = vld [vmem:[#allocation4 + $0x70] sm:$0xff]
      %v3262 = vld [vmem:[#allocation4 + $0x78] sm:$0xff]
      %v3263 = vld [vmem:[#allocation4 + $0x80] sm:$0xff]
      %v3264 = vld [vmem:[#allocation4 + $0x88] sm:$0xff]
      %v3265 = vld [vmem:[#allocation4 + $0x90] sm:$0xff]
      %v3266 = vld [vmem:[#allocation4 + $0x98] sm:$0xff]
      %v3267 = vld [vmem:[#allocation4 + $0xa0] sm:$0xff]
      %v3268 = vld [vmem:[#allocation4 + $0xa8] sm:$0xff]
      %v3269 = vld [vmem:[#allocation4 + $0xb0] sm:$0xff]
      %v3270 = vld [vmem:[#allocation4 + $0xb8] sm:$0xff]
      %v3271 = vld [vmem:[#allocation4 + $0xc0] sm:$0xff]
      %v3272 = vld [vmem:[#allocation4 + $0xc8] sm:$0xff]
      %v3273 = vld [vmem:[#allocation4 + $0xd0] sm:$0xff]
      %v3274 = vld [vmem:[#allocation4 + $0xd8] sm:$0xff]
      %v3275 = vld [vmem:[#allocation4 + $0xe0] sm:$0xff]
      %v3276 = vld [vmem:[#allocation4 + $0xe8] sm:$0xff]
      %v3277 = vld [vmem:[#allocation4 + $0xf0] sm:$0xff]
      %v3278 = vld [vmem:[#allocation4 + $0xf8] sm:$0xff]
      %v3279 = vld [vmem:[#allocation4 + $0x100] sm:$0xff]
      %v3280 = vld [vmem:[#allocation4 + $0x108] sm:$0xff]
      %v3281 = vld [vmem:[#allocation4 + $0x110] sm:$0xff]
      %v3282 = vld [vmem:[#allocation4 + $0x118] sm:$0xff]
      %v3283 = vld [vmem:[%s3] sm:$0x1]
      %v3285 = vperm.slane %v3283, 0
      %v3287 = vmul.f32 %v3247, %v3285
      %v3288 = vmul.f32 %v3248, %v3285
      %v3289 = vmul.f32 %v3249, %v3285
      %v3290 = vmul.f32 %v3250, %v3285
      %v3291 = vmul.f32 %v3251, %v3285
      %v3292 = vmul.f32 %v3252, %v3285
      %v3293 = vmul.f32 %v3253, %v3285
      %v3294 = vmul.f32 %v3254, %v3285
      %v3295 = vmul.f32 %v3255, %v3285
      %v3296 = vmul.f32 %v3256, %v3285
      %v3297 = vmul.f32 %v3257, %v3285
      %v3298 = vmul.f32 %v3258, %v3285
      %v3299 = vmul.f32 %v3259, %v3285
      %v3300 = vmul.f32 %v3260, %v3285
      %v3301 = vmul.f32 %v3261, %v3285
      %v3302 = vmul.f32 %v3262, %v3285
      %v3303 = vmul.f32 %v3263, %v3285
      %v3304 = vmul.f32 %v3264, %v3285
      %v3305 = vmul.f32 %v3265, %v3285
      %v3306 = vmul.f32 %v3266, %v3285
      %v3307 = vmul.f32 %v3267, %v3285
      %v3308 = vmul.f32 %v3268, %v3285
      %v3309 = vmul.f32 %v3269, %v3285
      %v3310 = vmul.f32 %v3270, %v3285
      %v3311 = vmul.f32 %v3271, %v3285
      %v3312 = vmul.f32 %v3272, %v3285
      %v3313 = vmul.f32 %v3273, %v3285
      %v3314 = vmul.f32 %v3274, %v3285
      %v3315 = vmul.f32 %v3275, %v3285
      %v3316 = vmul.f32 %v3276, %v3285
      %v3317 = vmul.f32 %v3277, %v3285
      %v3318 = vmul.f32 %v3278, %v3285
      %v3319 = vmul.f32 %v3279, %v3285
      %v3320 = vmul.f32 %v3280, %v3285
      %v3321 = vmul.f32 %v3281, %v3285
      %v3322 = vmul.f32 %v3282, %v3285
      %v3323 = vld [vmem:[%s4] sm:$0x1]
      %v3325 = vperm.slane %v3323, 0
      %v3327 = vadd.f32 %v3287, %v3325
      %v3328 = vadd.f32 %v3288, %v3325
      %v3329 = vadd.f32 %v3289, %v3325
      %v3330 = vadd.f32 %v3290, %v3325
      %v3331 = vadd.f32 %v3291, %v3325
      %v3332 = vadd.f32 %v3292, %v3325
      %v3333 = vadd.f32 %v3293, %v3325
      %v3334 = vadd.f32 %v3294, %v3325
      %v3335 = vadd.f32 %v3295, %v3325
      %v3336 = vadd.f32 %v3296, %v3325
      %v3337 = vadd.f32 %v3297, %v3325
      %v3338 = vadd.f32 %v3298, %v3325
      %v3339 = vadd.f32 %v3299, %v3325
      %v3340 = vadd.f32 %v3300, %v3325
      %v3341 = vadd.f32 %v3301, %v3325
      %v3342 = vadd.f32 %v3302, %v3325
      %v3343 = vadd.f32 %v3303, %v3325
      %v3344 = vadd.f32 %v3304, %v3325
      %v3345 = vadd.f32 %v3305, %v3325
      %v3346 = vadd.f32 %v3306, %v3325
      %v3347 = vadd.f32 %v3307, %v3325
      %v3348 = vadd.f32 %v3308, %v3325
      %v3349 = vadd.f32 %v3309, %v3325
      %v3350 = vadd.f32 %v3310, %v3325
      %v3351 = vadd.f32 %v3311, %v3325
      %v3352 = vadd.f32 %v3312, %v3325
      %v3353 = vadd.f32 %v3313, %v3325
      %v3354 = vadd.f32 %v3314, %v3325
      %v3355 = vadd.f32 %v3315, %v3325
      %v3356 = vadd.f32 %v3316, %v3325
      %v3357 = vadd.f32 %v3317, %v3325
      %v3358 = vadd.f32 %v3318, %v3325
      %v3359 = vadd.f32 %v3319, %v3325
      %v3360 = vadd.f32 %v3320, %v3325
      %v3361 = vadd.f32 %v3321, %v3325
      %v3362 = vadd.f32 %v3322, %v3325
      %v3363 = vmax.f32 %v3327, 0.0
      %v3364 = vmax.f32 %v3328, 0.0
      %v3365 = vmax.f32 %v3329, 0.0
      %v3366 = vmax.f32 %v3330, 0.0
      %v3367 = vmax.f32 %v3331, 0.0
      %v3368 = vmax.f32 %v3332, 0.0
      %v3369 = vmax.f32 %v3333, 0.0
      %v3370 = vmax.f32 %v3334, 0.0
      %v3371 = vmax.f32 %v3335, 0.0
      %v3372 = vmax.f32 %v3336, 0.0
      %v3373 = vmax.f32 %v3337, 0.0
      %v3374 = vmax.f32 %v3338, 0.0
      %v3375 = vmax.f32 %v3339, 0.0
      %v3376 = vmax.f32 %v3340, 0.0
      %v3377 = vmax.f32 %v3341, 0.0
      %v3378 = vmax.f32 %v3342, 0.0
      %v3379 = vmax.f32 %v3343, 0.0
      %v3380 = vmax.f32 %v3344, 0.0
      %v3381 = vmax.f32 %v3345, 0.0
      %v3382 = vmax.f32 %v3346, 0.0
      %v3383 = vmax.f32 %v3347, 0.0
      %v3384 = vmax.f32 %v3348, 0.0
      %v3385 = vmax.f32 %v3349, 0.0
      %v3386 = vmax.f32 %v3350, 0.0
      %v3387 = vmax.f32 %v3351, 0.0
      %v3388 = vmax.f32 %v3352, 0.0
      %v3389 = vmax.f32 %v3353, 0.0
      %v3390 = vmax.f32 %v3354, 0.0
      %v3391 = vmax.f32 %v3355, 0.0
      %v3392 = vmax.f32 %v3356, 0.0
      %v3393 = vmax.f32 %v3357, 0.0
      %v3394 = vmax.f32 %v3358, 0.0
      %v3395 = vmax.f32 %v3359, 0.0
      %v3396 = vmax.f32 %v3360, 0.0
      %v3397 = vmax.f32 %v3361, 0.0
      %v3398 = vmax.f32 %v3362, 0.0
      %v3399 = vld [vmem:[%s7] sm:$0xff]
      %v3400 = vld [vmem:[%s7 + $0x8] sm:$0xff]
      %v3401 = vld [vmem:[%s7 + $0x10] sm:$0xff]
      %v3402 = vld [vmem:[%s7 + $0x18] sm:$0xff]
      %v3403 = vld [vmem:[%s7 + $0x20] sm:$0xff]
      %v3404 = vld [vmem:[%s7 + $0x28] sm:$0xff]
      %v3405 = vld [vmem:[%s7 + $0x30] sm:$0xff]
      %v3406 = vld [vmem:[%s7 + $0x38] sm:$0xff]
      %v3407 = vld [vmem:[%s7 + $0x40] sm:$0xff]
      %v3408 = vld [vmem:[%s7 + $0x48] sm:$0xff]
      %v3409 = vld [vmem:[%s7 + $0x50] sm:$0xff]
      %v3410 = vld [vmem:[%s7 + $0x58] sm:$0xff]
      %v3411 = vld [vmem:[%s7 + $0x60] sm:$0xff]
      %v3412 = vld [vmem:[%s7 + $0x68] sm:$0xff]
      %v3413 = vld [vmem:[%s7 + $0x70] sm:$0xff]
      %v3414 = vld [vmem:[%s7 + $0x78] sm:$0xff]
      %v3415 = vld [vmem:[%s7 + $0x80] sm:$0xff]
      %v3416 = vld [vmem:[%s7 + $0x88] sm:$0xff]
      %v3417 = vld [vmem:[%s7 + $0x90] sm:$0xff]
      %v3418 = vld [vmem:[%s7 + $0x98] sm:$0xff]
      %v3419 = vld [vmem:[%s7 + $0xa0] sm:$0xff]
      %v3420 = vld [vmem:[%s7 + $0xa8] sm:$0xff]
      %v3421 = vld [vmem:[%s7 + $0xb0] sm:$0xff]
      %v3422 = vld [vmem:[%s7 + $0xb8] sm:$0xff]
      %v3423 = vld [vmem:[%s7 + $0xc0] sm:$0xff]
      %v3424 = vld [vmem:[%s7 + $0xc8] sm:$0xff]
      %v3425 = vld [vmem:[%s7 + $0xd0] sm:$0xff]
      %v3426 = vld [vmem:[%s7 + $0xd8] sm:$0xff]
      %v3427 = vld [vmem:[%s7 + $0xe0] sm:$0xff]
      %v3428 = vld [vmem:[%s7 + $0xe8] sm:$0xff]
      %v3429 = vld [vmem:[%s7 + $0xf0] sm:$0xff]
      %v3430 = vld [vmem:[%s7 + $0xf8] sm:$0xff]
      %v3431 = vld [vmem:[%s7 + $0x100] sm:$0xff]
      %v3432 = vld [vmem:[%s7 + $0x108] sm:$0xff]
      %v3433 = vld [vmem:[%s7 + $0x110] sm:$0xff]
      %v3434 = vld [vmem:[%s7 + $0x118] sm:$0xff]
      %3436 = vset.pattern.permute.xlu0 0
      %3437 = vperm.xlu0 %3436, %v3399
      %v3438 = vpop.permute.xlu0 %3437
      %3441 = vset.pattern.permute.xlu0 0
      %3442 = vperm.xlu0 %3441, %v3400
      %v3443 = vpop.permute.xlu0 %3442
      %3446 = vset.pattern.permute.xlu0 0
      %3447 = vperm.xlu0 %3446, %v3401
      %v3448 = vpop.permute.xlu0 %3447
      %3451 = vset.pattern.permute.xlu0 0
      %3452 = vperm.xlu0 %3451, %v3402
      %v3453 = vpop.permute.xlu0 %3452
      %3456 = vset.pattern.permute.xlu0 0
      %3457 = vperm.xlu0 %3456, %v3403
      %v3458 = vpop.permute.xlu0 %3457
      %3461 = vset.pattern.permute.xlu0 0
      %3462 = vperm.xlu0 %3461, %v3404
      %v3463 = vpop.permute.xlu0 %3462
      %3466 = vset.pattern.permute.xlu0 0
      %3467 = vperm.xlu0 %3466, %v3405
      %v3468 = vpop.permute.xlu0 %3467
      %3471 = vset.pattern.permute.xlu0 0
      %3472 = vperm.xlu0 %3471, %v3406
      %v3473 = vpop.permute.xlu0 %3472
      %3476 = vset.pattern.permute.xlu0 0
      %3477 = vperm.xlu0 %3476, %v3407
      %v3478 = vpop.permute.xlu0 %3477
      %3481 = vset.pattern.permute.xlu0 0
      %3482 = vperm.xlu0 %3481, %v3408
      %v3483 = vpop.permute.xlu0 %3482
      %3486 = vset.pattern.permute.xlu0 0
      %3487 = vperm.xlu0 %3486, %v3409
      %v3488 = vpop.permute.xlu0 %3487
      %3491 = vset.pattern.permute.xlu0 0
      %3492 = vperm.xlu0 %3491, %v3410
      %v3493 = vpop.permute.xlu0 %3492
      %3496 = vset.pattern.permute.xlu0 0
      %3497 = vperm.xlu0 %3496, %v3411
      %v3498 = vpop.permute.xlu0 %3497
      %3501 = vset.pattern.permute.xlu0 0
      %3502 = vperm.xlu0 %3501, %v3412
      %v3503 = vpop.permute.xlu0 %3502
      %3506 = vset.pattern.permute.xlu0 0
      %3507 = vperm.xlu0 %3506, %v3413
      %v3508 = vpop.permute.xlu0 %3507
      %3511 = vset.pattern.permute.xlu0 0
      %3512 = vperm.xlu0 %3511, %v3414
      %v3513 = vpop.permute.xlu0 %3512
      %3516 = vset.pattern.permute.xlu0 0
      %3517 = vperm.xlu0 %3516, %v3415
      %v3518 = vpop.permute.xlu0 %3517
      %3521 = vset.pattern.permute.xlu0 0
      %3522 = vperm.xlu0 %3521, %v3416
      %v3523 = vpop.permute.xlu0 %3522
      %3526 = vset.pattern.permute.xlu0 0
      %3527 = vperm.xlu0 %3526, %v3417
      %v3528 = vpop.permute.xlu0 %3527
      %3531 = vset.pattern.permute.xlu0 0
      %3532 = vperm.xlu0 %3531, %v3418
      %v3533 = vpop.permute.xlu0 %3532
      %3536 = vset.pattern.permute.xlu0 0
      %3537 = vperm.xlu0 %3536, %v3419
      %v3538 = vpop.permute.xlu0 %3537
      %3541 = vset.pattern.permute.xlu0 0
      %3542 = vperm.xlu0 %3541, %v3420
      %v3543 = vpop.permute.xlu0 %3542
      %3546 = vset.pattern.permute.xlu0 0
      %3547 = vperm.xlu0 %3546, %v3421
      %v3548 = vpop.permute.xlu0 %3547
      %3551 = vset.pattern.permute.xlu0 0
      %3552 = vperm.xlu0 %3551, %v3422
      %v3553 = vpop.permute.xlu0 %3552
      %3556 = vset.pattern.permute.xlu0 0
      %3557 = vperm.xlu0 %3556, %v3423
      %v3558 = vpop.permute.xlu0 %3557
      %3561 = vset.pattern.permute.xlu0 0
      %3562 = vperm.xlu0 %3561, %v3424
      %v3563 = vpop.permute.xlu0 %3562
      %3566 = vset.pattern.permute.xlu0 0
      %3567 = vperm.xlu0 %3566, %v3425
      %v3568 = vpop.permute.xlu0 %3567
      %3571 = vset.pattern.permute.xlu0 0
      %3572 = vperm.xlu0 %3571, %v3426
      %v3573 = vpop.permute.xlu0 %3572
      %3576 = vset.pattern.permute.xlu0 0
      %3577 = vperm.xlu0 %3576, %v3427
      %v3578 = vpop.permute.xlu0 %3577
      %3581 = vset.pattern.permute.xlu0 0
      %3582 = vperm.xlu0 %3581, %v3428
      %v3583 = vpop.permute.xlu0 %3582
      %3586 = vset.pattern.permute.xlu0 0
      %3587 = vperm.xlu0 %3586, %v3429
      %v3588 = vpop.permute.xlu0 %3587
      %3591 = vset.pattern.permute.xlu0 0
      %3592 = vperm.xlu0 %3591, %v3430
      %v3593 = vpop.permute.xlu0 %3592
      %3596 = vset.pattern.permute.xlu0 0
      %3597 = vperm.xlu0 %3596, %v3431
      %v3598 = vpop.permute.xlu0 %3597
      %3601 = vset.pattern.permute.xlu0 0
      %3602 = vperm.xlu0 %3601, %v3432
      %v3603 = vpop.permute.xlu0 %3602
      %3606 = vset.pattern.permute.xlu0 0
      %3607 = vperm.xlu0 %3606, %v3433
      %v3608 = vpop.permute.xlu0 %3607
      %3611 = vset.pattern.permute.xlu0 0
      %3612 = vperm.xlu0 %3611, %v3434
      %v3613 = vpop.permute.xlu0 %3612
      %v3615 = vmul.f32 %v3363, %v3438
      %v3616 = vmul.f32 %v3364, %v3443
      %v3617 = vmul.f32 %v3365, %v3448
      %v3618 = vmul.f32 %v3366, %v3453
      %v3619 = vmul.f32 %v3367, %v3458
      %v3620 = vmul.f32 %v3368, %v3463
      %v3621 = vmul.f32 %v3369, %v3468
      %v3622 = vmul.f32 %v3370, %v3473
      %v3623 = vmul.f32 %v3371, %v3478
      %v3624 = vmul.f32 %v3372, %v3483
      %v3625 = vmul.f32 %v3373, %v3488
      %v3626 = vmul.f32 %v3374, %v3493
      %v3627 = vmul.f32 %v3375, %v3498
      %v3628 = vmul.f32 %v3376, %v3503
      %v3629 = vmul.f32 %v3377, %v3508
      %v3630 = vmul.f32 %v3378, %v3513
      %v3631 = vmul.f32 %v3379, %v3518
      %v3632 = vmul.f32 %v3380, %v3523
      %v3633 = vmul.f32 %v3381, %v3528
      %v3634 = vmul.f32 %v3382, %v3533
      %v3635 = vmul.f32 %v3383, %v3538
      %v3636 = vmul.f32 %v3384, %v3543
      %v3637 = vmul.f32 %v3385, %v3548
      %v3638 = vmul.f32 %v3386, %v3553
      %v3639 = vmul.f32 %v3387, %v3558
      %v3640 = vmul.f32 %v3388, %v3563
      %v3641 = vmul.f32 %v3389, %v3568
      %v3642 = vmul.f32 %v3390, %v3573
      %v3643 = vmul.f32 %v3391, %v3578
      %v3644 = vmul.f32 %v3392, %v3583
      %v3645 = vmul.f32 %v3393, %v3588
      %v3646 = vmul.f32 %v3394, %v3593
      %v3647 = vmul.f32 %v3395, %v3598
      %v3648 = vmul.f32 %v3396, %v3603
      %v3649 = vmul.f32 %v3397, %v3608
      %v3650 = vmul.f32 %v3398, %v3613
      %3651 = vst.msk [vmem:[#allocation3 + $0x13] sm:$0xff] %vm389, %v3615
      %3652 = vst.msk [vmem:[#allocation3 + $0x1b] sm:$0xff] %vm389, %v3616
      %3653 = vst.msk [vmem:[#allocation3 + $0x23] sm:$0xff] %vm389, %v3617
      %3654 = vst.msk [vmem:[#allocation3 + $0x2b] sm:$0xff] %vm389, %v3618
      %3655 = vst.msk [vmem:[#allocation3 + $0x33] sm:$0xff] %vm389, %v3619
      %3656 = vst.msk [vmem:[#allocation3 + $0x3b] sm:$0xff] %vm389, %v3620
      %3657 = vst.msk [vmem:[#allocation3 + $0x43] sm:$0xff] %vm389, %v3621
      %3658 = vst.msk [vmem:[#allocation3 + $0x4b] sm:$0xff] %vm389, %v3622
      %3659 = vst.msk [vmem:[#allocation3 + $0x53] sm:$0xff] %vm389, %v3623
      %3660 = vst.msk [vmem:[#allocation3 + $0x5b] sm:$0xff] %vm389, %v3624
      %3661 = vst.msk [vmem:[#allocation3 + $0x63] sm:$0xff] %vm389, %v3625
      %3662 = vst.msk [vmem:[#allocation3 + $0x6b] sm:$0xff] %vm389, %v3626
      %3663 = vst.msk [vmem:[#allocation3 + $0x73] sm:$0xff] %vm389, %v3627
      %3664 = vst.msk [vmem:[#allocation3 + $0x7b] sm:$0xff] %vm389, %v3628
      %3665 = vst.msk [vmem:[#allocation3 + $0x83] sm:$0xff] %vm389, %v3629
      %3666 = vst.msk [vmem:[#allocation3 + $0x8b] sm:$0xff] %vm389, %v3630
      %3667 = vst.msk [vmem:[#allocation3 + $0x93] sm:$0xff] %vm389, %v3631
      %3668 = vst.msk [vmem:[#allocation3 + $0x9b] sm:$0xff] %vm389, %v3632
      %3669 = vst.msk [vmem:[#allocation3 + $0xa3] sm:$0xff] %vm389, %v3633
      %3670 = vst.msk [vmem:[#allocation3 + $0xab] sm:$0xff] %vm389, %v3634
      %3671 = vst.msk [vmem:[#allocation3 + $0xb3] sm:$0xff] %vm389, %v3635
      %3672 = vst.msk [vmem:[#allocation3 + $0xbb] sm:$0xff] %vm389, %v3636
      %3673 = vst.msk [vmem:[#allocation3 + $0xc3] sm:$0xff] %vm389, %v3637
      %3674 = vst.msk [vmem:[#allocation3 + $0xcb] sm:$0xff] %vm389, %v3638
      %3675 = vst.msk [vmem:[#allocation3 + $0xd3] sm:$0xff] %vm389, %v3639
      %3676 = vst.msk [vmem:[#allocation3 + $0xdb] sm:$0xff] %vm389, %v3640
      %3677 = vst.msk [vmem:[#allocation3 + $0xe3] sm:$0xff] %vm389, %v3641
      %3678 = vst.msk [vmem:[#allocation3 + $0xeb] sm:$0xff] %vm389, %v3642
      %3679 = vst.msk [vmem:[#allocation3 + $0xf3] sm:$0xff] %vm389, %v3643
      %3680 = vst.msk [vmem:[#allocation3 + $0xfb] sm:$0xff] %vm389, %v3644
      %3681 = vst.msk [vmem:[#allocation3 + $0x103] sm:$0xff] %vm389, %v3645
      %3682 = vst.msk [vmem:[#allocation3 + $0x10b] sm:$0xff] %vm389, %v3646
      %3683 = vst.msk [vmem:[#allocation3 + $0x113] sm:$0xff] %vm389, %v3647
      %3684 = vst.msk [vmem:[#allocation3 + $0x11b] sm:$0xff] %vm389, %v3648
      %3685 = vst.msk [vmem:[#allocation3 + $0x123] sm:$0xff] %vm389, %v3649
      %3686 = vst.msk [vmem:[#allocation3 + $0x12b] sm:$0xff] %vm389, %v3650
      %v3687 = vld [vmem:[#allocation3] sm:$0xff]
      %v3688 = vld [vmem:[#allocation3 + $0x8] sm:$0xff]
      %v3689 = vld [vmem:[#allocation3 + $0x10] sm:$0xff]
      %v3690 = vld [vmem:[#allocation3 + $0x18] sm:$0xff]
      %v3691 = vld [vmem:[#allocation3 + $0x20] sm:$0xff]
      %v3692 = vld [vmem:[#allocation3 + $0x28] sm:$0xff]
      %v3693 = vld [vmem:[#allocation3 + $0x30] sm:$0xff]
      %v3694 = vld [vmem:[#allocation3 + $0x38] sm:$0xff]
      %v3695 = vld [vmem:[#allocation3 + $0x40] sm:$0xff]
      %v3696 = vld [vmem:[#allocation3 + $0x48] sm:$0xff]
      %v3697 = vld [vmem:[#allocation3 + $0x50] sm:$0xff]
      %v3698 = vld [vmem:[#allocation3 + $0x58] sm:$0xff]
      %v3699 = vld [vmem:[#allocation3 + $0x60] sm:$0xff]
      %v3700 = vld [vmem:[#allocation3 + $0x68] sm:$0xff]
      %v3701 = vld [vmem:[#allocation3 + $0x70] sm:$0xff]
      %v3702 = vld [vmem:[#allocation3 + $0x78] sm:$0xff]
      %v3703 = vld [vmem:[#allocation3 + $0x80] sm:$0xff]
      %v3704 = vld [vmem:[#allocation3 + $0x88] sm:$0xff]
      %v3705 = vld [vmem:[#allocation3 + $0x90] sm:$0xff]
      %v3706 = vld [vmem:[#allocation3 + $0x98] sm:$0xff]
      %v3707 = vld [vmem:[#allocation3 + $0xa0] sm:$0xff]
      %v3708 = vld [vmem:[#allocation3 + $0xa8] sm:$0xff]
      %v3709 = vld [vmem:[#allocation3 + $0xb0] sm:$0xff]
      %v3710 = vld [vmem:[#allocation3 + $0xb8] sm:$0xff]
      %v3711 = vld [vmem:[#allocation3 + $0xc0] sm:$0xff]
      %v3712 = vld [vmem:[#allocation3 + $0xc8] sm:$0xff]
      %v3713 = vld [vmem:[#allocation3 + $0xd0] sm:$0xff]
      %v3714 = vld [vmem:[#allocation3 + $0xd8] sm:$0xff]
      %v3715 = vld [vmem:[#allocation3 + $0xe0] sm:$0xff]
      %v3716 = vld [vmem:[#allocation3 + $0xe8] sm:$0xff]
      %v3717 = vld [vmem:[#allocation3 + $0xf0] sm:$0xff]
      %v3718 = vld [vmem:[#allocation3 + $0xf8] sm:$0xff]
      %v3719 = vld [vmem:[#allocation3 + $0x100] sm:$0xff]
      %v3720 = vld [vmem:[#allocation3 + $0x108] sm:$0xff]
      %v3721 = vld [vmem:[#allocation3 + $0x110] sm:$0xff]
      %v3722 = vld [vmem:[#allocation3 + $0x118] sm:$0xff]
      %v3723 = vpack.c.bf16 %v3688, %v3687
      %v3724 = vpack.c.bf16 %v3690, %v3689
      %v3725 = vpack.c.bf16 %v3692, %v3691
      %v3726 = vpack.c.bf16 %v3694, %v3693
      %v3727 = vpack.c.bf16 %v3696, %v3695
      %v3728 = vpack.c.bf16 %v3698, %v3697
      %v3729 = vpack.c.bf16 %v3700, %v3699
      %v3730 = vpack.c.bf16 %v3702, %v3701
      %v3731 = vpack.c.bf16 %v3704, %v3703
      %v3732 = vpack.c.bf16 %v3706, %v3705
      %v3733 = vpack.c.bf16 %v3708, %v3707
      %v3734 = vpack.c.bf16 %v3710, %v3709
      %v3735 = vpack.c.bf16 %v3712, %v3711
      %v3736 = vpack.c.bf16 %v3714, %v3713
      %v3737 = vpack.c.bf16 %v3716, %v3715
      %v3738 = vpack.c.bf16 %v3718, %v3717
      %v3739 = vpack.c.bf16 %v3720, %v3719
      %v3740 = vpack.c.bf16 %v3722, %v3721
      %v3741 = vld [vmem:[%s2] sm:$0xf]
      %v3743 = vsel %vm389, %v3723, 0
      %v3746 = vsel %vm389, %v3724, 0
      %v3749 = vsel %vm389, %v3725, 0
      %v3752 = vsel %vm389, %v3726, 0
      %v3755 = vsel %vm389, %v3727, 0
      %v3758 = vsel %vm389, %v3728, 0
      %v3761 = vsel %vm389, %v3729, 0
      %v3764 = vsel %vm389, %v3730, 0
      %v3767 = vsel %vm389, %v3731, 0
      %v3770 = vsel %vm389, %v3732, 0
      %v3773 = vsel %vm389, %v3733, 0
      %v3776 = vsel %vm389, %v3734, 0
      %v3779 = vsel %vm389, %v3735, 0
      %v3782 = vsel %vm389, %v3736, 0
      %v3785 = vsel %vm389, %v3737, 0
      %v3788 = vsel %vm389, %v3738, 0
      %v3791 = vsel %vm389, %v3739, 0
      %v3794 = vsel %vm389, %v3740, 0
      %v3797 = vsel %vm548, %v3741, 0
      %3799 = vmatpush.bf16.msra.mxu0 0
      %3800 = vmatpush.bf16.msra.mxu0 0
      %3801 = vmatpush.bf16.msra.mxu0 0
      %3802 = vmatpush.bf16.msra.mxu0 0
      %3803 = vmatpush.bf16.msra.mxu0 0
      %3804 = vmatpush.bf16.msra.mxu0 0
      %3805 = vmatpush.bf16.msra.mxu0 0
      %3806 = vmatpush.bf16.msra.mxu0 %v3797
      %3807 = vmatmul.bf16.gmra.mxu0 %v3743
      %v3808 = vpop.f32.mrf.mxu0
      %v3809 = vadd.f32 0.0, %v3808
      %v3810 = vpop.f32.mrf.mxu0
      %v3811 = vadd.f32 0.0, %v3810
      %3812 = vmatmul.bf16.gmra.mxu0 %v3746
      %v3813 = vpop.f32.mrf.mxu0
      %v3814 = vadd.f32 0.0, %v3813
      %v3815 = vpop.f32.mrf.mxu0
      %v3816 = vadd.f32 0.0, %v3815
      %3817 = vmatmul.bf16.gmra.mxu0 %v3749
      %v3818 = vpop.f32.mrf.mxu0
      %v3819 = vadd.f32 0.0, %v3818
      %v3820 = vpop.f32.mrf.mxu0
      %v3821 = vadd.f32 0.0, %v3820
      %3822 = vmatmul.bf16.gmra.mxu0 %v3752
      %v3823 = vpop.f32.mrf.mxu0
      %v3824 = vadd.f32 0.0, %v3823
      %v3825 = vpop.f32.mrf.mxu0
      %v3826 = vadd.f32 0.0, %v3825
      %3827 = vmatmul.bf16.gmra.mxu0 %v3755
      %v3828 = vpop.f32.mrf.mxu0
      %v3829 = vadd.f32 0.0, %v3828
      %v3830 = vpop.f32.mrf.mxu0
      %v3831 = vadd.f32 0.0, %v3830
      %3832 = vmatmul.bf16.gmra.mxu0 %v3758
      %v3833 = vpop.f32.mrf.mxu0
      %v3834 = vadd.f32 0.0, %v3833
      %v3835 = vpop.f32.mrf.mxu0
      %v3836 = vadd.f32 0.0, %v3835
      %3837 = vmatmul.bf16.gmra.mxu0 %v3761
      %v3838 = vpop.f32.mrf.mxu0
      %v3839 = vadd.f32 0.0, %v3838
      %v3840 = vpop.f32.mrf.mxu0
      %v3841 = vadd.f32 0.0, %v3840
      %3842 = vmatmul.bf16.gmra.mxu0 %v3764
      %v3843 = vpop.f32.mrf.mxu0
      %v3844 = vadd.f32 0.0, %v3843
      %v3845 = vpop.f32.mrf.mxu0
      %v3846 = vadd.f32 0.0, %v3845
      %3847 = vmatmul.bf16.gmra.mxu0 %v3767
      %v3848 = vpop.f32.mrf.mxu0
      %v3849 = vadd.f32 0.0, %v3848
      %v3850 = vpop.f32.mrf.mxu0
      %v3851 = vadd.f32 0.0, %v3850
      %3852 = vmatmul.bf16.gmra.mxu0 %v3770
      %v3853 = vpop.f32.mrf.mxu0
      %v3854 = vadd.f32 0.0, %v3853
      %v3855 = vpop.f32.mrf.mxu0
      %v3856 = vadd.f32 0.0, %v3855
      %3857 = vmatmul.bf16.gmra.mxu0 %v3773
      %v3858 = vpop.f32.mrf.mxu0
      %v3859 = vadd.f32 0.0, %v3858
      %v3860 = vpop.f32.mrf.mxu0
      %v3861 = vadd.f32 0.0, %v3860
      %3862 = vmatmul.bf16.gmra.mxu0 %v3776
      %v3863 = vpop.f32.mrf.mxu0
      %v3864 = vadd.f32 0.0, %v3863
      %v3865 = vpop.f32.mrf.mxu0
      %v3866 = vadd.f32 0.0, %v3865
      %3867 = vmatmul.bf16.gmra.mxu0 %v3779
      %v3868 = vpop.f32.mrf.mxu0
      %v3869 = vadd.f32 0.0, %v3868
      %v3870 = vpop.f32.mrf.mxu0
      %v3871 = vadd.f32 0.0, %v3870
      %3872 = vmatmul.bf16.gmra.mxu0 %v3782
      %v3873 = vpop.f32.mrf.mxu0
      %v3874 = vadd.f32 0.0, %v3873
      %v3875 = vpop.f32.mrf.mxu0
      %v3876 = vadd.f32 0.0, %v3875
      %3877 = vmatmul.bf16.gmra.mxu0 %v3785
      %v3878 = vpop.f32.mrf.mxu0
      %v3879 = vadd.f32 0.0, %v3878
      %v3880 = vpop.f32.mrf.mxu0
      %v3881 = vadd.f32 0.0, %v3880
      %3882 = vmatmul.bf16.gmra.mxu0 %v3788
      %v3883 = vpop.f32.mrf.mxu0
      %v3884 = vadd.f32 0.0, %v3883
      %v3885 = vpop.f32.mrf.mxu0
      %v3886 = vadd.f32 0.0, %v3885
      %3887 = vmatmul.bf16.gmra.mxu0 %v3791
      %v3888 = vpop.f32.mrf.mxu0
      %v3889 = vadd.f32 0.0, %v3888
      %v3890 = vpop.f32.mrf.mxu0
      %v3891 = vadd.f32 0.0, %v3890
      %3892 = vmatmul.bf16.gmra.mxu0 %v3794
      %v3893 = vpop.f32.mrf.mxu0
      %v3894 = vadd.f32 0.0, %v3893
      %v3895 = vpop.f32.mrf.mxu0
      %v3896 = vadd.f32 0.0, %v3895
      %3897 = vdwg.mxu0
      %3898 = vst.msk [vmem:[#allocation4] sm:$0xff] %vm389, %v3809
      %3899 = vst.msk [vmem:[#allocation4 + $0x8] sm:$0xff] %vm389, %v3811
      %3900 = vst.msk [vmem:[#allocation4 + $0x10] sm:$0xff] %vm389, %v3814
      %3901 = vst.msk [vmem:[#allocation4 + $0x18] sm:$0xff] %vm389, %v3816
      %3902 = vst.msk [vmem:[#allocation4 + $0x20] sm:$0xff] %vm389, %v3819
      %3903 = vst.msk [vmem:[#allocation4 + $0x28] sm:$0xff] %vm389, %v3821
      %3904 = vst.msk [vmem:[#allocation4 + $0x30] sm:$0xff] %vm389, %v3824
      %3905 = vst.msk [vmem:[#allocation4 + $0x38] sm:$0xff] %vm389, %v3826
      %3906 = vst.msk [vmem:[#allocation4 + $0x40] sm:$0xff] %vm389, %v3829
      %3907 = vst.msk [vmem:[#allocation4 + $0x48] sm:$0xff] %vm389, %v3831
      %3908 = vst.msk [vmem:[#allocation4 + $0x50] sm:$0xff] %vm389, %v3834
      %3909 = vst.msk [vmem:[#allocation4 + $0x58] sm:$0xff] %vm389, %v3836
      %3910 = vst.msk [vmem:[#allocation4 + $0x60] sm:$0xff] %vm389, %v3839
      %3911 = vst.msk [vmem:[#allocation4 + $0x68] sm:$0xff] %vm389, %v3841
      %3912 = vst.msk [vmem:[#allocation4 + $0x70] sm:$0xff] %vm389, %v3844
      %3913 = vst.msk [vmem:[#allocation4 + $0x78] sm:$0xff] %vm389, %v3846
      %3914 = vst.msk [vmem:[#allocation4 + $0x80] sm:$0xff] %vm389, %v3849
      %3915 = vst.msk [vmem:[#allocation4 + $0x88] sm:$0xff] %vm389, %v3851
      %3916 = vst.msk [vmem:[#allocation4 + $0x90] sm:$0xff] %vm389, %v3854
      %3917 = vst.msk [vmem:[#allocation4 + $0x98] sm:$0xff] %vm389, %v3856
      %3918 = vst.msk [vmem:[#allocation4 + $0xa0] sm:$0xff] %vm389, %v3859
      %3919 = vst.msk [vmem:[#allocation4 + $0xa8] sm:$0xff] %vm389, %v3861
      %3920 = vst.msk [vmem:[#allocation4 + $0xb0] sm:$0xff] %vm389, %v3864
      %3921 = vst.msk [vmem:[#allocation4 + $0xb8] sm:$0xff] %vm389, %v3866
      %3922 = vst.msk [vmem:[#allocation4 + $0xc0] sm:$0xff] %vm389, %v3869
      %3923 = vst.msk [vmem:[#allocation4 + $0xc8] sm:$0xff] %vm389, %v3871
      %3924 = vst.msk [vmem:[#allocation4 + $0xd0] sm:$0xff] %vm389, %v3874
      %3925 = vst.msk [vmem:[#allocation4 + $0xd8] sm:$0xff] %vm389, %v3876
      %3926 = vst.msk [vmem:[#allocation4 + $0xe0] sm:$0xff] %vm389, %v3879
      %3927 = vst.msk [vmem:[#allocation4 + $0xe8] sm:$0xff] %vm389, %v3881
      %3928 = vst.msk [vmem:[#allocation4 + $0xf0] sm:$0xff] %vm389, %v3884
      %3929 = vst.msk [vmem:[#allocation4 + $0xf8] sm:$0xff] %vm389, %v3886
      %3930 = vst.msk [vmem:[#allocation4 + $0x100] sm:$0xff] %vm389, %v3889
      %3931 = vst.msk [vmem:[#allocation4 + $0x108] sm:$0xff] %vm389, %v3891
      %3932 = vst.msk [vmem:[#allocation4 + $0x110] sm:$0xff] %vm389, %v3894
      %3933 = vst.msk [vmem:[#allocation4 + $0x118] sm:$0xff] %vm389, %v3896
      %v3934 = vld [vmem:[#allocation3 + $0x1] sm:$0xff]
      %v3935 = vld [vmem:[#allocation3 + $0x9] sm:$0xff]
      %v3936 = vld [vmem:[#allocation3 + $0x11] sm:$0xff]
      %v3937 = vld [vmem:[#allocation3 + $0x19] sm:$0xff]
      %v3938 = vld [vmem:[#allocation3 + $0x21] sm:$0xff]
      %v3939 = vld [vmem:[#allocation3 + $0x29] sm:$0xff]
      %v3940 = vld [vmem:[#allocation3 + $0x31] sm:$0xff]
      %v3941 = vld [vmem:[#allocation3 + $0x39] sm:$0xff]
      %v3942 = vld [vmem:[#allocation3 + $0x41] sm:$0xff]
      %v3943 = vld [vmem:[#allocation3 + $0x49] sm:$0xff]
      %v3944 = vld [vmem:[#allocation3 + $0x51] sm:$0xff]
      %v3945 = vld [vmem:[#allocation3 + $0x59] sm:$0xff]
      %v3946 = vld [vmem:[#allocation3 + $0x61] sm:$0xff]
      %v3947 = vld [vmem:[#allocation3 + $0x69] sm:$0xff]
      %v3948 = vld [vmem:[#allocation3 + $0x71] sm:$0xff]
      %v3949 = vld [vmem:[#allocation3 + $0x79] sm:$0xff]
      %v3950 = vld [vmem:[#allocation3 + $0x81] sm:$0xff]
      %v3951 = vld [vmem:[#allocation3 + $0x89] sm:$0xff]
      %v3952 = vld [vmem:[#allocation3 + $0x91] sm:$0xff]
      %v3953 = vld [vmem:[#allocation3 + $0x99] sm:$0xff]
      %v3954 = vld [vmem:[#allocation3 + $0xa1] sm:$0xff]
      %v3955 = vld [vmem:[#allocation3 + $0xa9] sm:$0xff]
      %v3956 = vld [vmem:[#allocation3 + $0xb1] sm:$0xff]
      %v3957 = vld [vmem:[#allocation3 + $0xb9] sm:$0xff]
      %v3958 = vld [vmem:[#allocation3 + $0xc1] sm:$0xff]
      %v3959 = vld [vmem:[#allocation3 + $0xc9] sm:$0xff]
      %v3960 = vld [vmem:[#allocation3 + $0xd1] sm:$0xff]
      %v3961 = vld [vmem:[#allocation3 + $0xd9] sm:$0xff]
      %v3962 = vld [vmem:[#allocation3 + $0xe1] sm:$0xff]
      %v3963 = vld [vmem:[#allocation3 + $0xe9] sm:$0xff]
      %v3964 = vld [vmem:[#allocation3 + $0xf1] sm:$0xff]
      %v3965 = vld [vmem:[#allocation3 + $0xf9] sm:$0xff]
      %v3966 = vld [vmem:[#allocation3 + $0x101] sm:$0xff]
      %v3967 = vld [vmem:[#allocation3 + $0x109] sm:$0xff]
      %v3968 = vld [vmem:[#allocation3 + $0x111] sm:$0xff]
      %v3969 = vld [vmem:[#allocation3 + $0x119] sm:$0xff]
      %v3970 = vpack.c.bf16 %v3935, %v3934
      %v3971 = vpack.c.bf16 %v3937, %v3936
      %v3972 = vpack.c.bf16 %v3939, %v3938
      %v3973 = vpack.c.bf16 %v3941, %v3940
      %v3974 = vpack.c.bf16 %v3943, %v3942
      %v3975 = vpack.c.bf16 %v3945, %v3944
      %v3976 = vpack.c.bf16 %v3947, %v3946
      %v3977 = vpack.c.bf16 %v3949, %v3948
      %v3978 = vpack.c.bf16 %v3951, %v3950
      %v3979 = vpack.c.bf16 %v3953, %v3952
      %v3980 = vpack.c.bf16 %v3955, %v3954
      %v3981 = vpack.c.bf16 %v3957, %v3956
      %v3982 = vpack.c.bf16 %v3959, %v3958
      %v3983 = vpack.c.bf16 %v3961, %v3960
      %v3984 = vpack.c.bf16 %v3963, %v3962
      %v3985 = vpack.c.bf16 %v3965, %v3964
      %v3986 = vpack.c.bf16 %v3967, %v3966
      %v3987 = vpack.c.bf16 %v3969, %v3968
      %s3988 = scalar_lea.vmem %s2, 4
      %v3989 = vld [vmem:[%s3988] sm:$0xf]
      %v3991 = vsel %vm389, %v3970, 0
      %v3994 = vsel %vm389, %v3971, 0
      %v3997 = vsel %vm389, %v3972, 0
      %v4000 = vsel %vm389, %v3973, 0
      %v4003 = vsel %vm389, %v3974, 0
      %v4006 = vsel %vm389, %v3975, 0
      %v4009 = vsel %vm389, %v3976, 0
      %v4012 = vsel %vm389, %v3977, 0
      %v4015 = vsel %vm389, %v3978, 0
      %v4018 = vsel %vm389, %v3979, 0
      %v4021 = vsel %vm389, %v3980, 0
      %v4024 = vsel %vm389, %v3981, 0
      %v4027 = vsel %vm389, %v3982, 0
      %v4030 = vsel %vm389, %v3983, 0
      %v4033 = vsel %vm389, %v3984, 0
      %v4036 = vsel %vm389, %v3985, 0
      %v4039 = vsel %vm389, %v3986, 0
      %v4042 = vsel %vm389, %v3987, 0
      %v4045 = vsel %vm548, %v3989, 0
      %4047 = vmatpush.bf16.msra.mxu0 0
      %4048 = vmatpush.bf16.msra.mxu0 0
      %4049 = vmatpush.bf16.msra.mxu0 0
      %4050 = vmatpush.bf16.msra.mxu0 0
      %4051 = vmatpush.bf16.msra.mxu0 0
      %4052 = vmatpush.bf16.msra.mxu0 0
      %4053 = vmatpush.bf16.msra.mxu0 0
      %4054 = vmatpush.bf16.msra.mxu0 %v4045
      %4055 = vmatmul.bf16.gmra.mxu0 %v3991
      %v4056 = vpop.f32.mrf.mxu0
      %v4057 = vadd.f32 0.0, %v4056
      %v4058 = vpop.f32.mrf.mxu0
      %v4059 = vadd.f32 0.0, %v4058
      %4060 = vmatmul.bf16.gmra.mxu0 %v3994
      %v4061 = vpop.f32.mrf.mxu0
      %v4062 = vadd.f32 0.0, %v4061
      %v4063 = vpop.f32.mrf.mxu0
      %v4064 = vadd.f32 0.0, %v4063
      %4065 = vmatmul.bf16.gmra.mxu0 %v3997
      %v4066 = vpop.f32.mrf.mxu0
      %v4067 = vadd.f32 0.0, %v4066
      %v4068 = vpop.f32.mrf.mxu0
      %v4069 = vadd.f32 0.0, %v4068
      %4070 = vmatmul.bf16.gmra.mxu0 %v4000
      %v4071 = vpop.f32.mrf.mxu0
      %v4072 = vadd.f32 0.0, %v4071
      %v4073 = vpop.f32.mrf.mxu0
      %v4074 = vadd.f32 0.0, %v4073
      %4075 = vmatmul.bf16.gmra.mxu0 %v4003
      %v4076 = vpop.f32.mrf.mxu0
      %v4077 = vadd.f32 0.0, %v4076
      %v4078 = vpop.f32.mrf.mxu0
      %v4079 = vadd.f32 0.0, %v4078
      %4080 = vmatmul.bf16.gmra.mxu0 %v4006
      %v4081 = vpop.f32.mrf.mxu0
      %v4082 = vadd.f32 0.0, %v4081
      %v4083 = vpop.f32.mrf.mxu0
      %v4084 = vadd.f32 0.0, %v4083
      %4085 = vmatmul.bf16.gmra.mxu0 %v4009
      %v4086 = vpop.f32.mrf.mxu0
      %v4087 = vadd.f32 0.0, %v4086
      %v4088 = vpop.f32.mrf.mxu0
      %v4089 = vadd.f32 0.0, %v4088
      %4090 = vmatmul.bf16.gmra.mxu0 %v4012
      %v4091 = vpop.f32.mrf.mxu0
      %v4092 = vadd.f32 0.0, %v4091
      %v4093 = vpop.f32.mrf.mxu0
      %v4094 = vadd.f32 0.0, %v4093
      %4095 = vmatmul.bf16.gmra.mxu0 %v4015
      %v4096 = vpop.f32.mrf.mxu0
      %v4097 = vadd.f32 0.0, %v4096
      %v4098 = vpop.f32.mrf.mxu0
      %v4099 = vadd.f32 0.0, %v4098
      %4100 = vmatmul.bf16.gmra.mxu0 %v4018
      %v4101 = vpop.f32.mrf.mxu0
      %v4102 = vadd.f32 0.0, %v4101
      %v4103 = vpop.f32.mrf.mxu0
      %v4104 = vadd.f32 0.0, %v4103
      %4105 = vmatmul.bf16.gmra.mxu0 %v4021
      %v4106 = vpop.f32.mrf.mxu0
      %v4107 = vadd.f32 0.0, %v4106
      %v4108 = vpop.f32.mrf.mxu0
      %v4109 = vadd.f32 0.0, %v4108
      %4110 = vmatmul.bf16.gmra.mxu0 %v4024
      %v4111 = vpop.f32.mrf.mxu0
      %v4112 = vadd.f32 0.0, %v4111
      %v4113 = vpop.f32.mrf.mxu0
      %v4114 = vadd.f32 0.0, %v4113
      %4115 = vmatmul.bf16.gmra.mxu0 %v4027
      %v4116 = vpop.f32.mrf.mxu0
      %v4117 = vadd.f32 0.0, %v4116
      %v4118 = vpop.f32.mrf.mxu0
      %v4119 = vadd.f32 0.0, %v4118
      %4120 = vmatmul.bf16.gmra.mxu0 %v4030
      %v4121 = vpop.f32.mrf.mxu0
      %v4122 = vadd.f32 0.0, %v4121
      %v4123 = vpop.f32.mrf.mxu0
      %v4124 = vadd.f32 0.0, %v4123
      %4125 = vmatmul.bf16.gmra.mxu0 %v4033
      %v4126 = vpop.f32.mrf.mxu0
      %v4127 = vadd.f32 0.0, %v4126
      %v4128 = vpop.f32.mrf.mxu0
      %v4129 = vadd.f32 0.0, %v4128
      %4130 = vmatmul.bf16.gmra.mxu0 %v4036
      %v4131 = vpop.f32.mrf.mxu0
      %v4132 = vadd.f32 0.0, %v4131
      %v4133 = vpop.f32.mrf.mxu0
      %v4134 = vadd.f32 0.0, %v4133
      %4135 = vmatmul.bf16.gmra.mxu0 %v4039
      %v4136 = vpop.f32.mrf.mxu0
      %v4137 = vadd.f32 0.0, %v4136
      %v4138 = vpop.f32.mrf.mxu0
      %v4139 = vadd.f32 0.0, %v4138
      %4140 = vmatmul.bf16.gmra.mxu0 %v4042
      %v4141 = vpop.f32.mrf.mxu0
      %v4142 = vadd.f32 0.0, %v4141
      %v4143 = vpop.f32.mrf.mxu0
      %v4144 = vadd.f32 0.0, %v4143
      %4145 = vdwg.mxu0
      %v4146 = vld [vmem:[#allocation4] sm:$0xff]
      %v4147 = vld [vmem:[#allocation4 + $0x8] sm:$0xff]
      %v4148 = vld [vmem:[#allocation4 + $0x10] sm:$0xff]
      %v4149 = vld [vmem:[#allocation4 + $0x18] sm:$0xff]
      %v4150 = vld [vmem:[#allocation4 + $0x20] sm:$0xff]
      %v4151 = vld [vmem:[#allocation4 + $0x28] sm:$0xff]
      %v4152 = vld [vmem:[#allocation4 + $0x30] sm:$0xff]
      %v4153 = vld [vmem:[#allocation4 + $0x38] sm:$0xff]
      %v4154 = vld [vmem:[#allocation4 + $0x40] sm:$0xff]
      %v4155 = vld [vmem:[#allocation4 + $0x48] sm:$0xff]
      %v4156 = vld [vmem:[#allocation4 + $0x50] sm:$0xff]
      %v4157 = vld [vmem:[#allocation4 + $0x58] sm:$0xff]
      %v4158 = vld [vmem:[#allocation4 + $0x60] sm:$0xff]
      %v4159 = vld [vmem:[#allocation4 + $0x68] sm:$0xff]
      %v4160 = vld [vmem:[#allocation4 + $0x70] sm:$0xff]
      %v4161 = vld [vmem:[#allocation4 + $0x78] sm:$0xff]
      %v4162 = vld [vmem:[#allocation4 + $0x80] sm:$0xff]
      %v4163 = vld [vmem:[#allocation4 + $0x88] sm:$0xff]
      %v4164 = vld [vmem:[#allocation4 + $0x90] sm:$0xff]
      %v4165 = vld [vmem:[#allocation4 + $0x98] sm:$0xff]
      %v4166 = vld [vmem:[#allocation4 + $0xa0] sm:$0xff]
      %v4167 = vld [vmem:[#allocation4 + $0xa8] sm:$0xff]
      %v4168 = vld [vmem:[#allocation4 + $0xb0] sm:$0xff]
      %v4169 = vld [vmem:[#allocation4 + $0xb8] sm:$0xff]
      %v4170 = vld [vmem:[#allocation4 + $0xc0] sm:$0xff]
      %v4171 = vld [vmem:[#allocation4 + $0xc8] sm:$0xff]
      %v4172 = vld [vmem:[#allocation4 + $0xd0] sm:$0xff]
      %v4173 = vld [vmem:[#allocation4 + $0xd8] sm:$0xff]
      %v4174 = vld [vmem:[#allocation4 + $0xe0] sm:$0xff]
      %v4175 = vld [vmem:[#allocation4 + $0xe8] sm:$0xff]
      %v4176 = vld [vmem:[#allocation4 + $0xf0] sm:$0xff]
      %v4177 = vld [vmem:[#allocation4 + $0xf8] sm:$0xff]
      %v4178 = vld [vmem:[#allocation4 + $0x100] sm:$0xff]
      %v4179 = vld [vmem:[#allocation4 + $0x108] sm:$0xff]
      %v4180 = vld [vmem:[#allocation4 + $0x110] sm:$0xff]
      %v4181 = vld [vmem:[#allocation4 + $0x118] sm:$0xff]
      %v4182 = vadd.f32 %v4146, %v4057
      %v4183 = vadd.f32 %v4147, %v4059
      %v4184 = vadd.f32 %v4148, %v4062
      %v4185 = vadd.f32 %v4149, %v4064
      %v4186 = vadd.f32 %v4150, %v4067
      %v4187 = vadd.f32 %v4151, %v4069
      %v4188 = vadd.f32 %v4152, %v4072
      %v4189 = vadd.f32 %v4153, %v4074
      %v4190 = vadd.f32 %v4154, %v4077
      %v4191 = vadd.f32 %v4155, %v4079
      %v4192 = vadd.f32 %v4156, %v4082
      %v4193 = vadd.f32 %v4157, %v4084
      %v4194 = vadd.f32 %v4158, %v4087
      %v4195 = vadd.f32 %v4159, %v4089
      %v4196 = vadd.f32 %v4160, %v4092
      %v4197 = vadd.f32 %v4161, %v4094
      %v4198 = vadd.f32 %v4162, %v4097
      %v4199 = vadd.f32 %v4163, %v4099
      %v4200 = vadd.f32 %v4164, %v4102
      %v4201 = vadd.f32 %v4165, %v4104
      %v4202 = vadd.f32 %v4166, %v4107
      %v4203 = vadd.f32 %v4167, %v4109
      %v4204 = vadd.f32 %v4168, %v4112
      %v4205 = vadd.f32 %v4169, %v4114
      %v4206 = vadd.f32 %v4170, %v4117
      %v4207 = vadd.f32 %v4171, %v4119
      %v4208 = vadd.f32 %v4172, %v4122
      %v4209 = vadd.f32 %v4173, %v4124
      %v4210 = vadd.f32 %v4174, %v4127
      %v4211 = vadd.f32 %v4175, %v4129
      %v4212 = vadd.f32 %v4176, %v4132
      %v4213 = vadd.f32 %v4177, %v4134
      %v4214 = vadd.f32 %v4178, %v4137
      %v4215 = vadd.f32 %v4179, %v4139
      %v4216 = vadd.f32 %v4180, %v4142
      %v4217 = vadd.f32 %v4181, %v4144
      %4218 = vst.msk [vmem:[#allocation4] sm:$0xff] %vm389, %v4182
      %4219 = vst.msk [vmem:[#allocation4 + $0x8] sm:$0xff] %vm389, %v4183
      %4220 = vst.msk [vmem:[#allocation4 + $0x10] sm:$0xff] %vm389, %v4184
      %4221 = vst.msk [vmem:[#allocation4 + $0x18] sm:$0xff] %vm389, %v4185
      %4222 = vst.msk [vmem:[#allocation4 + $0x20] sm:$0xff] %vm389, %v4186
      %4223 = vst.msk [vmem:[#allocation4 + $0x28] sm:$0xff] %vm389, %v4187
      %4224 = vst.msk [vmem:[#allocation4 + $0x30] sm:$0xff] %vm389, %v4188
      %4225 = vst.msk [vmem:[#allocation4 + $0x38] sm:$0xff] %vm389, %v4189
      %4226 = vst.msk [vmem:[#allocation4 + $0x40] sm:$0xff] %vm389, %v4190
      %4227 = vst.msk [vmem:[#allocation4 + $0x48] sm:$0xff] %vm389, %v4191
      %4228 = vst.msk [vmem:[#allocation4 + $0x50] sm:$0xff] %vm389, %v4192
      %4229 = vst.msk [vmem:[#allocation4 + $0x58] sm:$0xff] %vm389, %v4193
      %4230 = vst.msk [vmem:[#allocation4 + $0x60] sm:$0xff] %vm389, %v4194
      %4231 = vst.msk [vmem:[#allocation4 + $0x68] sm:$0xff] %vm389, %v4195
      %4232 = vst.msk [vmem:[#allocation4 + $0x70] sm:$0xff] %vm389, %v4196
      %4233 = vst.msk [vmem:[#allocation4 + $0x78] sm:$0xff] %vm389, %v4197
      %4234 = vst.msk [vmem:[#allocation4 + $0x80] sm:$0xff] %vm389, %v4198
      %4235 = vst.msk [vmem:[#allocation4 + $0x88] sm:$0xff] %vm389, %v4199
      %4236 = vst.msk [vmem:[#allocation4 + $0x90] sm:$0xff] %vm389, %v4200
      %4237 = vst.msk [vmem:[#allocation4 + $0x98] sm:$0xff] %vm389, %v4201
      %4238 = vst.msk [vmem:[#allocation4 + $0xa0] sm:$0xff] %vm389, %v4202
      %4239 = vst.msk [vmem:[#allocation4 + $0xa8] sm:$0xff] %vm389, %v4203
      %4240 = vst.msk [vmem:[#allocation4 + $0xb0] sm:$0xff] %vm389, %v4204
      %4241 = vst.msk [vmem:[#allocation4 + $0xb8] sm:$0xff] %vm389, %v4205
      %4242 = vst.msk [vmem:[#allocation4 + $0xc0] sm:$0xff] %vm389, %v4206
      %4243 = vst.msk [vmem:[#allocation4 + $0xc8] sm:$0xff] %vm389, %v4207
      %4244 = vst.msk [vmem:[#allocation4 + $0xd0] sm:$0xff] %vm389, %v4208
      %4245 = vst.msk [vmem:[#allocation4 + $0xd8] sm:$0xff] %vm389, %v4209
      %4246 = vst.msk [vmem:[#allocation4 + $0xe0] sm:$0xff] %vm389, %v4210
      %4247 = vst.msk [vmem:[#allocation4 + $0xe8] sm:$0xff] %vm389, %v4211
      %4248 = vst.msk [vmem:[#allocation4 + $0xf0] sm:$0xff] %vm389, %v4212
      %4249 = vst.msk [vmem:[#allocation4 + $0xf8] sm:$0xff] %vm389, %v4213
      %4250 = vst.msk [vmem:[#allocation4 + $0x100] sm:$0xff] %vm389, %v4214
      %4251 = vst.msk [vmem:[#allocation4 + $0x108] sm:$0xff] %vm389, %v4215
      %4252 = vst.msk [vmem:[#allocation4 + $0x110] sm:$0xff] %vm389, %v4216
      %4253 = vst.msk [vmem:[#allocation4 + $0x118] sm:$0xff] %vm389, %v4217
      %v4254 = vld [vmem:[#allocation3 + $0x2] sm:$0xff]
      %v4255 = vld [vmem:[#allocation3 + $0xa] sm:$0xff]
      %v4256 = vld [vmem:[#allocation3 + $0x12] sm:$0xff]
      %v4257 = vld [vmem:[#allocation3 + $0x1a] sm:$0xff]
      %v4258 = vld [vmem:[#allocation3 + $0x22] sm:$0xff]
      %v4259 = vld [vmem:[#allocation3 + $0x2a] sm:$0xff]
      %v4260 = vld [vmem:[#allocation3 + $0x32] sm:$0xff]
      %v4261 = vld [vmem:[#allocation3 + $0x3a] sm:$0xff]
      %v4262 = vld [vmem:[#allocation3 + $0x42] sm:$0xff]
      %v4263 = vld [vmem:[#allocation3 + $0x4a] sm:$0xff]
      %v4264 = vld [vmem:[#allocation3 + $0x52] sm:$0xff]
      %v4265 = vld [vmem:[#allocation3 + $0x5a] sm:$0xff]
      %v4266 = vld [vmem:[#allocation3 + $0x62] sm:$0xff]
      %v4267 = vld [vmem:[#allocation3 + $0x6a] sm:$0xff]
      %v4268 = vld [vmem:[#allocation3 + $0x72] sm:$0xff]
      %v4269 = vld [vmem:[#allocation3 + $0x7a] sm:$0xff]
      %v4270 = vld [vmem:[#allocation3 + $0x82] sm:$0xff]
      %v4271 = vld [vmem:[#allocation3 + $0x8a] sm:$0xff]
      %v4272 = vld [vmem:[#allocation3 + $0x92] sm:$0xff]
      %v4273 = vld [vmem:[#allocation3 + $0x9a] sm:$0xff]
      %v4274 = vld [vmem:[#allocation3 + $0xa2] sm:$0xff]
      %v4275 = vld [vmem:[#allocation3 + $0xaa] sm:$0xff]
      %v4276 = vld [vmem:[#allocation3 + $0xb2] sm:$0xff]
      %v4277 = vld [vmem:[#allocation3 + $0xba] sm:$0xff]
      %v4278 = vld [vmem:[#allocation3 + $0xc2] sm:$0xff]
      %v4279 = vld [vmem:[#allocation3 + $0xca] sm:$0xff]
      %v4280 = vld [vmem:[#allocation3 + $0xd2] sm:$0xff]
      %v4281 = vld [vmem:[#allocation3 + $0xda] sm:$0xff]
      %v4282 = vld [vmem:[#allocation3 + $0xe2] sm:$0xff]
      %v4283 = vld [vmem:[#allocation3 + $0xea] sm:$0xff]
      %v4284 = vld [vmem:[#allocation3 + $0xf2] sm:$0xff]
      %v4285 = vld [vmem:[#allocation3 + $0xfa] sm:$0xff]
      %v4286 = vld [vmem:[#allocation3 + $0x102] sm:$0xff]
      %v4287 = vld [vmem:[#allocation3 + $0x10a] sm:$0xff]
      %v4288 = vld [vmem:[#allocation3 + $0x112] sm:$0xff]
      %v4289 = vld [vmem:[#allocation3 + $0x11a] sm:$0xff]
      %v4290 = vpack.c.bf16 %v4255, %v4254
      %v4291 = vpack.c.bf16 %v4257, %v4256
      %v4292 = vpack.c.bf16 %v4259, %v4258
      %v4293 = vpack.c.bf16 %v4261, %v4260
      %v4294 = vpack.c.bf16 %v4263, %v4262
      %v4295 = vpack.c.bf16 %v4265, %v4264
      %v4296 = vpack.c.bf16 %v4267, %v4266
      %v4297 = vpack.c.bf16 %v4269, %v4268
      %v4298 = vpack.c.bf16 %v4271, %v4270
      %v4299 = vpack.c.bf16 %v4273, %v4272
      %v4300 = vpack.c.bf16 %v4275, %v4274
      %v4301 = vpack.c.bf16 %v4277, %v4276
      %v4302 = vpack.c.bf16 %v4279, %v4278
      %v4303 = vpack.c.bf16 %v4281, %v4280
      %v4304 = vpack.c.bf16 %v4283, %v4282
      %v4305 = vpack.c.bf16 %v4285, %v4284
      %v4306 = vpack.c.bf16 %v4287, %v4286
      %v4307 = vpack.c.bf16 %v4289, %v4288
      %s4308 = scalar_lea.vmem %s2, 8
      %v4309 = vld [vmem:[%s4308] sm:$0xf]
      %v4311 = vsel %vm389, %v4290, 0
      %v4314 = vsel %vm389, %v4291, 0
      %v4317 = vsel %vm389, %v4292, 0
      %v4320 = vsel %vm389, %v4293, 0
      %v4323 = vsel %vm389, %v4294, 0
      %v4326 = vsel %vm389, %v4295, 0
      %v4329 = vsel %vm389, %v4296, 0
      %v4332 = vsel %vm389, %v4297, 0
      %v4335 = vsel %vm389, %v4298, 0
      %v4338 = vsel %vm389, %v4299, 0
      %v4341 = vsel %vm389, %v4300, 0
      %v4344 = vsel %vm389, %v4301, 0
      %v4347 = vsel %vm389, %v4302, 0
      %v4350 = vsel %vm389, %v4303, 0
      %v4353 = vsel %vm389, %v4304, 0
      %v4356 = vsel %vm389, %v4305, 0
      %v4359 = vsel %vm389, %v4306, 0
      %v4362 = vsel %vm389, %v4307, 0
      %v4365 = vsel %vm548, %v4309, 0
      %4367 = vmatpush.bf16.msra.mxu0 0
      %4368 = vmatpush.bf16.msra.mxu0 0
      %4369 = vmatpush.bf16.msra.mxu0 0
      %4370 = vmatpush.bf16.msra.mxu0 0
      %4371 = vmatpush.bf16.msra.mxu0 0
      %4372 = vmatpush.bf16.msra.mxu0 0
      %4373 = vmatpush.bf16.msra.mxu0 0
      %4374 = vmatpush.bf16.msra.mxu0 %v4365
      %4375 = vmatmul.bf16.gmra.mxu0 %v4311
      %v4376 = vpop.f32.mrf.mxu0
      %v4377 = vadd.f32 0.0, %v4376
      %v4378 = vpop.f32.mrf.mxu0
      %v4379 = vadd.f32 0.0, %v4378
      %4380 = vmatmul.bf16.gmra.mxu0 %v4314
      %v4381 = vpop.f32.mrf.mxu0
      %v4382 = vadd.f32 0.0, %v4381
      %v4383 = vpop.f32.mrf.mxu0
      %v4384 = vadd.f32 0.0, %v4383
      %4385 = vmatmul.bf16.gmra.mxu0 %v4317
      %v4386 = vpop.f32.mrf.mxu0
      %v4387 = vadd.f32 0.0, %v4386
      %v4388 = vpop.f32.mrf.mxu0
      %v4389 = vadd.f32 0.0, %v4388
      %4390 = vmatmul.bf16.gmra.mxu0 %v4320
      %v4391 = vpop.f32.mrf.mxu0
      %v4392 = vadd.f32 0.0, %v4391
      %v4393 = vpop.f32.mrf.mxu0
      %v4394 = vadd.f32 0.0, %v4393
      %4395 = vmatmul.bf16.gmra.mxu0 %v4323
      %v4396 = vpop.f32.mrf.mxu0
      %v4397 = vadd.f32 0.0, %v4396
      %v4398 = vpop.f32.mrf.mxu0
      %v4399 = vadd.f32 0.0, %v4398
      %4400 = vmatmul.bf16.gmra.mxu0 %v4326
      %v4401 = vpop.f32.mrf.mxu0
      %v4402 = vadd.f32 0.0, %v4401
      %v4403 = vpop.f32.mrf.mxu0
      %v4404 = vadd.f32 0.0, %v4403
      %4405 = vmatmul.bf16.gmra.mxu0 %v4329
      %v4406 = vpop.f32.mrf.mxu0
      %v4407 = vadd.f32 0.0, %v4406
      %v4408 = vpop.f32.mrf.mxu0
      %v4409 = vadd.f32 0.0, %v4408
      %4410 = vmatmul.bf16.gmra.mxu0 %v4332
      %v4411 = vpop.f32.mrf.mxu0
      %v4412 = vadd.f32 0.0, %v4411
      %v4413 = vpop.f32.mrf.mxu0
      %v4414 = vadd.f32 0.0, %v4413
      %4415 = vmatmul.bf16.gmra.mxu0 %v4335
      %v4416 = vpop.f32.mrf.mxu0
      %v4417 = vadd.f32 0.0, %v4416
      %v4418 = vpop.f32.mrf.mxu0
      %v4419 = vadd.f32 0.0, %v4418
      %4420 = vmatmul.bf16.gmra.mxu0 %v4338
      %v4421 = vpop.f32.mrf.mxu0
      %v4422 = vadd.f32 0.0, %v4421
      %v4423 = vpop.f32.mrf.mxu0
      %v4424 = vadd.f32 0.0, %v4423
      %4425 = vmatmul.bf16.gmra.mxu0 %v4341
      %v4426 = vpop.f32.mrf.mxu0
      %v4427 = vadd.f32 0.0, %v4426
      %v4428 = vpop.f32.mrf.mxu0
      %v4429 = vadd.f32 0.0, %v4428
      %4430 = vmatmul.bf16.gmra.mxu0 %v4344
      %v4431 = vpop.f32.mrf.mxu0
      %v4432 = vadd.f32 0.0, %v4431
      %v4433 = vpop.f32.mrf.mxu0
      %v4434 = vadd.f32 0.0, %v4433
      %4435 = vmatmul.bf16.gmra.mxu0 %v4347
      %v4436 = vpop.f32.mrf.mxu0
      %v4437 = vadd.f32 0.0, %v4436
      %v4438 = vpop.f32.mrf.mxu0
      %v4439 = vadd.f32 0.0, %v4438
      %4440 = vmatmul.bf16.gmra.mxu0 %v4350
      %v4441 = vpop.f32.mrf.mxu0
      %v4442 = vadd.f32 0.0, %v4441
      %v4443 = vpop.f32.mrf.mxu0
      %v4444 = vadd.f32 0.0, %v4443
      %4445 = vmatmul.bf16.gmra.mxu0 %v4353
      %v4446 = vpop.f32.mrf.mxu0
      %v4447 = vadd.f32 0.0, %v4446
      %v4448 = vpop.f32.mrf.mxu0
      %v4449 = vadd.f32 0.0, %v4448
      %4450 = vmatmul.bf16.gmra.mxu0 %v4356
      %v4451 = vpop.f32.mrf.mxu0
      %v4452 = vadd.f32 0.0, %v4451
      %v4453 = vpop.f32.mrf.mxu0
      %v4454 = vadd.f32 0.0, %v4453
      %4455 = vmatmul.bf16.gmra.mxu0 %v4359
      %v4456 = vpop.f32.mrf.mxu0
      %v4457 = vadd.f32 0.0, %v4456
      %v4458 = vpop.f32.mrf.mxu0
      %v4459 = vadd.f32 0.0, %v4458
      %4460 = vmatmul.bf16.gmra.mxu0 %v4362
      %v4461 = vpop.f32.mrf.mxu0
      %v4462 = vadd.f32 0.0, %v4461
      %v4463 = vpop.f32.mrf.mxu0
      %v4464 = vadd.f32 0.0, %v4463
      %4465 = vdwg.mxu0
      %v4466 = vld [vmem:[#allocation4] sm:$0xff]
      %v4467 = vld [vmem:[#allocation4 + $0x8] sm:$0xff]
      %v4468 = vld [vmem:[#allocation4 + $0x10] sm:$0xff]
      %v4469 = vld [vmem:[#allocation4 + $0x18] sm:$0xff]
      %v4470 = vld [vmem:[#allocation4 + $0x20] sm:$0xff]
      %v4471 = vld [vmem:[#allocation4 + $0x28] sm:$0xff]
      %v4472 = vld [vmem:[#allocation4 + $0x30] sm:$0xff]
      %v4473 = vld [vmem:[#allocation4 + $0x38] sm:$0xff]
      %v4474 = vld [vmem:[#allocation4 + $0x40] sm:$0xff]
      %v4475 = vld [vmem:[#allocation4 + $0x48] sm:$0xff]
      %v4476 = vld [vmem:[#allocation4 + $0x50] sm:$0xff]
      %v4477 = vld [vmem:[#allocation4 + $0x58] sm:$0xff]
      %v4478 = vld [vmem:[#allocation4 + $0x60] sm:$0xff]
      %v4479 = vld [vmem:[#allocation4 + $0x68] sm:$0xff]
      %v4480 = vld [vmem:[#allocation4 + $0x70] sm:$0xff]
      %v4481 = vld [vmem:[#allocation4 + $0x78] sm:$0xff]
      %v4482 = vld [vmem:[#allocation4 + $0x80] sm:$0xff]
      %v4483 = vld [vmem:[#allocation4 + $0x88] sm:$0xff]
      %v4484 = vld [vmem:[#allocation4 + $0x90] sm:$0xff]
      %v4485 = vld [vmem:[#allocation4 + $0x98] sm:$0xff]
      %v4486 = vld [vmem:[#allocation4 + $0xa0] sm:$0xff]
      %v4487 = vld [vmem:[#allocation4 + $0xa8] sm:$0xff]
      %v4488 = vld [vmem:[#allocation4 + $0xb0] sm:$0xff]
      %v4489 = vld [vmem:[#allocation4 + $0xb8] sm:$0xff]
      %v4490 = vld [vmem:[#allocation4 + $0xc0] sm:$0xff]
      %v4491 = vld [vmem:[#allocation4 + $0xc8] sm:$0xff]
      %v4492 = vld [vmem:[#allocation4 + $0xd0] sm:$0xff]
      %v4493 = vld [vmem:[#allocation4 + $0xd8] sm:$0xff]
      %v4494 = vld [vmem:[#allocation4 + $0xe0] sm:$0xff]
      %v4495 = vld [vmem:[#allocation4 + $0xe8] sm:$0xff]
      %v4496 = vld [vmem:[#allocation4 + $0xf0] sm:$0xff]
      %v4497 = vld [vmem:[#allocation4 + $0xf8] sm:$0xff]
      %v4498 = vld [vmem:[#allocation4 + $0x100] sm:$0xff]
      %v4499 = vld [vmem:[#allocation4 + $0x108] sm:$0xff]
      %v4500 = vld [vmem:[#allocation4 + $0x110] sm:$0xff]
      %v4501 = vld [vmem:[#allocation4 + $0x118] sm:$0xff]
      %v4502 = vadd.f32 %v4466, %v4377
      %v4503 = vadd.f32 %v4467, %v4379
      %v4504 = vadd.f32 %v4468, %v4382
      %v4505 = vadd.f32 %v4469, %v4384
      %v4506 = vadd.f32 %v4470, %v4387
      %v4507 = vadd.f32 %v4471, %v4389
      %v4508 = vadd.f32 %v4472, %v4392
      %v4509 = vadd.f32 %v4473, %v4394
      %v4510 = vadd.f32 %v4474, %v4397
      %v4511 = vadd.f32 %v4475, %v4399
      %v4512 = vadd.f32 %v4476, %v4402
      %v4513 = vadd.f32 %v4477, %v4404
      %v4514 = vadd.f32 %v4478, %v4407
      %v4515 = vadd.f32 %v4479, %v4409
      %v4516 = vadd.f32 %v4480, %v4412
      %v4517 = vadd.f32 %v4481, %v4414
      %v4518 = vadd.f32 %v4482, %v4417
      %v4519 = vadd.f32 %v4483, %v4419
      %v4520 = vadd.f32 %v4484, %v4422
      %v4521 = vadd.f32 %v4485, %v4424
      %v4522 = vadd.f32 %v4486, %v4427
      %v4523 = vadd.f32 %v4487, %v4429
      %v4524 = vadd.f32 %v4488, %v4432
      %v4525 = vadd.f32 %v4489, %v4434
      %v4526 = vadd.f32 %v4490, %v4437
      %v4527 = vadd.f32 %v4491, %v4439
      %v4528 = vadd.f32 %v4492, %v4442
      %v4529 = vadd.f32 %v4493, %v4444
      %v4530 = vadd.f32 %v4494, %v4447
      %v4531 = vadd.f32 %v4495, %v4449
      %v4532 = vadd.f32 %v4496, %v4452
      %v4533 = vadd.f32 %v4497, %v4454
      %v4534 = vadd.f32 %v4498, %v4457
      %v4535 = vadd.f32 %v4499, %v4459
      %v4536 = vadd.f32 %v4500, %v4462
      %v4537 = vadd.f32 %v4501, %v4464
      %4538 = vst.msk [vmem:[#allocation4] sm:$0xff] %vm389, %v4502
      %4539 = vst.msk [vmem:[#allocation4 + $0x8] sm:$0xff] %vm389, %v4503
      %4540 = vst.msk [vmem:[#allocation4 + $0x10] sm:$0xff] %vm389, %v4504
      %4541 = vst.msk [vmem:[#allocation4 + $0x18] sm:$0xff] %vm389, %v4505
      %4542 = vst.msk [vmem:[#allocation4 + $0x20] sm:$0xff] %vm389, %v4506
      %4543 = vst.msk [vmem:[#allocation4 + $0x28] sm:$0xff] %vm389, %v4507
      %4544 = vst.msk [vmem:[#allocation4 + $0x30] sm:$0xff] %vm389, %v4508
      %4545 = vst.msk [vmem:[#allocation4 + $0x38] sm:$0xff] %vm389, %v4509
      %4546 = vst.msk [vmem:[#allocation4 + $0x40] sm:$0xff] %vm389, %v4510
      %4547 = vst.msk [vmem:[#allocation4 + $0x48] sm:$0xff] %vm389, %v4511
      %4548 = vst.msk [vmem:[#allocation4 + $0x50] sm:$0xff] %vm389, %v4512
      %4549 = vst.msk [vmem:[#allocation4 + $0x58] sm:$0xff] %vm389, %v4513
      %4550 = vst.msk [vmem:[#allocation4 + $0x60] sm:$0xff] %vm389, %v4514
      %4551 = vst.msk [vmem:[#allocation4 + $0x68] sm:$0xff] %vm389, %v4515
      %4552 = vst.msk [vmem:[#allocation4 + $0x70] sm:$0xff] %vm389, %v4516
      %4553 = vst.msk [vmem:[#allocation4 + $0x78] sm:$0xff] %vm389, %v4517
      %4554 = vst.msk [vmem:[#allocation4 + $0x80] sm:$0xff] %vm389, %v4518
      %4555 = vst.msk [vmem:[#allocation4 + $0x88] sm:$0xff] %vm389, %v4519
      %4556 = vst.msk [vmem:[#allocation4 + $0x90] sm:$0xff] %vm389, %v4520
      %4557 = vst.msk [vmem:[#allocation4 + $0x98] sm:$0xff] %vm389, %v4521
      %4558 = vst.msk [vmem:[#allocation4 + $0xa0] sm:$0xff] %vm389, %v4522
      %4559 = vst.msk [vmem:[#allocation4 + $0xa8] sm:$0xff] %vm389, %v4523
      %4560 = vst.msk [vmem:[#allocation4 + $0xb0] sm:$0xff] %vm389, %v4524
      %4561 = vst.msk [vmem:[#allocation4 + $0xb8] sm:$0xff] %vm389, %v4525
      %4562 = vst.msk [vmem:[#allocation4 + $0xc0] sm:$0xff] %vm389, %v4526
      %4563 = vst.msk [vmem:[#allocation4 + $0xc8] sm:$0xff] %vm389, %v4527
      %4564 = vst.msk [vmem:[#allocation4 + $0xd0] sm:$0xff] %vm389, %v4528
      %4565 = vst.msk [vmem:[#allocation4 + $0xd8] sm:$0xff] %vm389, %v4529
      %4566 = vst.msk [vmem:[#allocation4 + $0xe0] sm:$0xff] %vm389, %v4530
      %4567 = vst.msk [vmem:[#allocation4 + $0xe8] sm:$0xff] %vm389, %v4531
      %4568 = vst.msk [vmem:[#allocation4 + $0xf0] sm:$0xff] %vm389, %v4532
      %4569 = vst.msk [vmem:[#allocation4 + $0xf8] sm:$0xff] %vm389, %v4533
      %4570 = vst.msk [vmem:[#allocation4 + $0x100] sm:$0xff] %vm389, %v4534
      %4571 = vst.msk [vmem:[#allocation4 + $0x108] sm:$0xff] %vm389, %v4535
      %4572 = vst.msk [vmem:[#allocation4 + $0x110] sm:$0xff] %vm389, %v4536
      %4573 = vst.msk [vmem:[#allocation4 + $0x118] sm:$0xff] %vm389, %v4537
      %v4574 = vld [vmem:[#allocation3 + $0x12] sm:$0xff]
      %v4575 = vld [vmem:[#allocation3 + $0x1a] sm:$0xff]
      %v4576 = vld [vmem:[#allocation3 + $0x22] sm:$0xff]
      %v4577 = vld [vmem:[#allocation3 + $0x2a] sm:$0xff]
      %v4578 = vld [vmem:[#allocation3 + $0x32] sm:$0xff]
      %v4579 = vld [vmem:[#allocation3 + $0x3a] sm:$0xff]
      %v4580 = vld [vmem:[#allocation3 + $0x42] sm:$0xff]
      %v4581 = vld [vmem:[#allocation3 + $0x4a] sm:$0xff]
      %v4582 = vld [vmem:[#allocation3 + $0x52] sm:$0xff]
      %v4583 = vld [vmem:[#allocation3 + $0x5a] sm:$0xff]
      %v4584 = vld [vmem:[#allocation3 + $0x62] sm:$0xff]
      %v4585 = vld [vmem:[#allocation3 + $0x6a] sm:$0xff]
      %v4586 = vld [vmem:[#allocation3 + $0x72] sm:$0xff]
      %v4587 = vld [vmem:[#allocation3 + $0x7a] sm:$0xff]
      %v4588 = vld [vmem:[#allocation3 + $0x82] sm:$0xff]
      %v4589 = vld [vmem:[#allocation3 + $0x8a] sm:$0xff]
      %v4590 = vld [vmem:[#allocation3 + $0x92] sm:$0xff]
      %v4591 = vld [vmem:[#allocation3 + $0x9a] sm:$0xff]
      %v4592 = vld [vmem:[#allocation3 + $0xa2] sm:$0xff]
      %v4593 = vld [vmem:[#allocation3 + $0xaa] sm:$0xff]
      %v4594 = vld [vmem:[#allocation3 + $0xb2] sm:$0xff]
      %v4595 = vld [vmem:[#allocation3 + $0xba] sm:$0xff]
      %v4596 = vld [vmem:[#allocation3 + $0xc2] sm:$0xff]
      %v4597 = vld [vmem:[#allocation3 + $0xca] sm:$0xff]
      %v4598 = vld [vmem:[#allocation3 + $0xd2] sm:$0xff]
      %v4599 = vld [vmem:[#allocation3 + $0xda] sm:$0xff]
      %v4600 = vld [vmem:[#allocation3 + $0xe2] sm:$0xff]
      %v4601 = vld [vmem:[#allocation3 + $0xea] sm:$0xff]
      %v4602 = vld [vmem:[#allocation3 + $0xf2] sm:$0xff]
      %v4603 = vld [vmem:[#allocation3 + $0xfa] sm:$0xff]
      %v4604 = vld [vmem:[#allocation3 + $0x102] sm:$0xff]
      %v4605 = vld [vmem:[#allocation3 + $0x10a] sm:$0xff]
      %v4606 = vld [vmem:[#allocation3 + $0x112] sm:$0xff]
      %v4607 = vld [vmem:[#allocation3 + $0x11a] sm:$0xff]
      %v4608 = vld [vmem:[#allocation3 + $0x122] sm:$0xff]
      %v4609 = vld [vmem:[#allocation3 + $0x12a] sm:$0xff]
      %v4610 = vpack.c.bf16 %v4575, %v4574
      %v4611 = vpack.c.bf16 %v4577, %v4576
      %v4612 = vpack.c.bf16 %v4579, %v4578
      %v4613 = vpack.c.bf16 %v4581, %v4580
      %v4614 = vpack.c.bf16 %v4583, %v4582
      %v4615 = vpack.c.bf16 %v4585, %v4584
      %v4616 = vpack.c.bf16 %v4587, %v4586
      %v4617 = vpack.c.bf16 %v4589, %v4588
      %v4618 = vpack.c.bf16 %v4591, %v4590
      %v4619 = vpack.c.bf16 %v4593, %v4592
      %v4620 = vpack.c.bf16 %v4595, %v4594
      %v4621 = vpack.c.bf16 %v4597, %v4596
      %v4622 = vpack.c.bf16 %v4599, %v4598
      %v4623 = vpack.c.bf16 %v4601, %v4600
      %v4624 = vpack.c.bf16 %v4603, %v4602
      %v4625 = vpack.c.bf16 %v4605, %v4604
      %v4626 = vpack.c.bf16 %v4607, %v4606
      %v4627 = vpack.c.bf16 %v4609, %v4608
      %s4628 = scalar_lea.vmem %s2, 12
      %v4629 = vld [vmem:[%s4628] sm:$0xf]
      %v4631 = vsel %vm389, %v4610, 0
      %v4634 = vsel %vm389, %v4611, 0
      %v4637 = vsel %vm389, %v4612, 0
      %v4640 = vsel %vm389, %v4613, 0
      %v4643 = vsel %vm389, %v4614, 0
      %v4646 = vsel %vm389, %v4615, 0
      %v4649 = vsel %vm389, %v4616, 0
      %v4652 = vsel %vm389, %v4617, 0
      %v4655 = vsel %vm389, %v4618, 0
      %v4658 = vsel %vm389, %v4619, 0
      %v4661 = vsel %vm389, %v4620, 0
      %v4664 = vsel %vm389, %v4621, 0
      %v4667 = vsel %vm389, %v4622, 0
      %v4670 = vsel %vm389, %v4623, 0
      %v4673 = vsel %vm389, %v4624, 0
      %v4676 = vsel %vm389, %v4625, 0
      %v4679 = vsel %vm389, %v4626, 0
      %v4682 = vsel %vm389, %v4627, 0
      %v4685 = vsel %vm548, %v4629, 0
      %4687 = vmatpush.bf16.msra.mxu0 0
      %4688 = vmatpush.bf16.msra.mxu0 0
      %4689 = vmatpush.bf16.msra.mxu0 0
      %4690 = vmatpush.bf16.msra.mxu0 0
      %4691 = vmatpush.bf16.msra.mxu0 0
      %4692 = vmatpush.bf16.msra.mxu0 0
      %4693 = vmatpush.bf16.msra.mxu0 0
      %4694 = vmatpush.bf16.msra.mxu0 %v4685
      %4695 = vmatmul.bf16.gmra.mxu0 %v4631
      %v4696 = vpop.f32.mrf.mxu0
      %v4697 = vadd.f32 0.0, %v4696
      %v4698 = vpop.f32.mrf.mxu0
      %v4699 = vadd.f32 0.0, %v4698
      %4700 = vmatmul.bf16.gmra.mxu0 %v4634
      %v4701 = vpop.f32.mrf.mxu0
      %v4702 = vadd.f32 0.0, %v4701
      %v4703 = vpop.f32.mrf.mxu0
      %v4704 = vadd.f32 0.0, %v4703
      %4705 = vmatmul.bf16.gmra.mxu0 %v4637
      %v4706 = vpop.f32.mrf.mxu0
      %v4707 = vadd.f32 0.0, %v4706
      %v4708 = vpop.f32.mrf.mxu0
      %v4709 = vadd.f32 0.0, %v4708
      %4710 = vmatmul.bf16.gmra.mxu0 %v4640
      %v4711 = vpop.f32.mrf.mxu0
      %v4712 = vadd.f32 0.0, %v4711
      %v4713 = vpop.f32.mrf.mxu0
      %v4714 = vadd.f32 0.0, %v4713
      %4715 = vmatmul.bf16.gmra.mxu0 %v4643
      %v4716 = vpop.f32.mrf.mxu0
      %v4717 = vadd.f32 0.0, %v4716
      %v4718 = vpop.f32.mrf.mxu0
      %v4719 = vadd.f32 0.0, %v4718
      %4720 = vmatmul.bf16.gmra.mxu0 %v4646
      %v4721 = vpop.f32.mrf.mxu0
      %v4722 = vadd.f32 0.0, %v4721
      %v4723 = vpop.f32.mrf.mxu0
      %v4724 = vadd.f32 0.0, %v4723
      %4725 = vmatmul.bf16.gmra.mxu0 %v4649
      %v4726 = vpop.f32.mrf.mxu0
      %v4727 = vadd.f32 0.0, %v4726
      %v4728 = vpop.f32.mrf.mxu0
      %v4729 = vadd.f32 0.0, %v4728
      %4730 = vmatmul.bf16.gmra.mxu0 %v4652
      %v4731 = vpop.f32.mrf.mxu0
      %v4732 = vadd.f32 0.0, %v4731
      %v4733 = vpop.f32.mrf.mxu0
      %v4734 = vadd.f32 0.0, %v4733
      %4735 = vmatmul.bf16.gmra.mxu0 %v4655
      %v4736 = vpop.f32.mrf.mxu0
      %v4737 = vadd.f32 0.0, %v4736
      %v4738 = vpop.f32.mrf.mxu0
      %v4739 = vadd.f32 0.0, %v4738
      %4740 = vmatmul.bf16.gmra.mxu0 %v4658
      %v4741 = vpop.f32.mrf.mxu0
      %v4742 = vadd.f32 0.0, %v4741
      %v4743 = vpop.f32.mrf.mxu0
      %v4744 = vadd.f32 0.0, %v4743
      %4745 = vmatmul.bf16.gmra.mxu0 %v4661
      %v4746 = vpop.f32.mrf.mxu0
      %v4747 = vadd.f32 0.0, %v4746
      %v4748 = vpop.f32.mrf.mxu0
      %v4749 = vadd.f32 0.0, %v4748
      %4750 = vmatmul.bf16.gmra.mxu0 %v4664
      %v4751 = vpop.f32.mrf.mxu0
      %v4752 = vadd.f32 0.0, %v4751
      %v4753 = vpop.f32.mrf.mxu0
      %v4754 = vadd.f32 0.0, %v4753
      %4755 = vmatmul.bf16.gmra.mxu0 %v4667
      %v4756 = vpop.f32.mrf.mxu0
      %v4757 = vadd.f32 0.0, %v4756
      %v4758 = vpop.f32.mrf.mxu0
      %v4759 = vadd.f32 0.0, %v4758
      %4760 = vmatmul.bf16.gmra.mxu0 %v4670
      %v4761 = vpop.f32.mrf.mxu0
      %v4762 = vadd.f32 0.0, %v4761
      %v4763 = vpop.f32.mrf.mxu0
      %v4764 = vadd.f32 0.0, %v4763
      %4765 = vmatmul.bf16.gmra.mxu0 %v4673
      %v4766 = vpop.f32.mrf.mxu0
      %v4767 = vadd.f32 0.0, %v4766
      %v4768 = vpop.f32.mrf.mxu0
      %v4769 = vadd.f32 0.0, %v4768
      %4770 = vmatmul.bf16.gmra.mxu0 %v4676
      %v4771 = vpop.f32.mrf.mxu0
      %v4772 = vadd.f32 0.0, %v4771
      %v4773 = vpop.f32.mrf.mxu0
      %v4774 = vadd.f32 0.0, %v4773
      %4775 = vmatmul.bf16.gmra.mxu0 %v4679
      %v4776 = vpop.f32.mrf.mxu0
      %v4777 = vadd.f32 0.0, %v4776
      %v4778 = vpop.f32.mrf.mxu0
      %v4779 = vadd.f32 0.0, %v4778
      %4780 = vmatmul.bf16.gmra.mxu0 %v4682
      %v4781 = vpop.f32.mrf.mxu0
      %v4782 = vadd.f32 0.0, %v4781
      %v4783 = vpop.f32.mrf.mxu0
      %v4784 = vadd.f32 0.0, %v4783
      %4785 = vdwg.mxu0
      %v4786 = vld [vmem:[#allocation4] sm:$0xff]
      %v4787 = vld [vmem:[#allocation4 + $0x8] sm:$0xff]
      %v4788 = vld [vmem:[#allocation4 + $0x10] sm:$0xff]
      %v4789 = vld [vmem:[#allocation4 + $0x18] sm:$0xff]
      %v4790 = vld [vmem:[#allocation4 + $0x20] sm:$0xff]
      %v4791 = vld [vmem:[#allocation4 + $0x28] sm:$0xff]
      %v4792 = vld [vmem:[#allocation4 + $0x30] sm:$0xff]
      %v4793 = vld [vmem:[#allocation4 + $0x38] sm:$0xff]
      %v4794 = vld [vmem:[#allocation4 + $0x40] sm:$0xff]
      %v4795 = vld [vmem:[#allocation4 + $0x48] sm:$0xff]
      %v4796 = vld [vmem:[#allocation4 + $0x50] sm:$0xff]
      %v4797 = vld [vmem:[#allocation4 + $0x58] sm:$0xff]
      %v4798 = vld [vmem:[#allocation4 + $0x60] sm:$0xff]
      %v4799 = vld [vmem:[#allocation4 + $0x68] sm:$0xff]
      %v4800 = vld [vmem:[#allocation4 + $0x70] sm:$0xff]
      %v4801 = vld [vmem:[#allocation4 + $0x78] sm:$0xff]
      %v4802 = vld [vmem:[#allocation4 + $0x80] sm:$0xff]
      %v4803 = vld [vmem:[#allocation4 + $0x88] sm:$0xff]
      %v4804 = vld [vmem:[#allocation4 + $0x90] sm:$0xff]
      %v4805 = vld [vmem:[#allocation4 + $0x98] sm:$0xff]
      %v4806 = vld [vmem:[#allocation4 + $0xa0] sm:$0xff]
      %v4807 = vld [vmem:[#allocation4 + $0xa8] sm:$0xff]
      %v4808 = vld [vmem:[#allocation4 + $0xb0] sm:$0xff]
      %v4809 = vld [vmem:[#allocation4 + $0xb8] sm:$0xff]
      %v4810 = vld [vmem:[#allocation4 + $0xc0] sm:$0xff]
      %v4811 = vld [vmem:[#allocation4 + $0xc8] sm:$0xff]
      %v4812 = vld [vmem:[#allocation4 + $0xd0] sm:$0xff]
      %v4813 = vld [vmem:[#allocation4 + $0xd8] sm:$0xff]
      %v4814 = vld [vmem:[#allocation4 + $0xe0] sm:$0xff]
      %v4815 = vld [vmem:[#allocation4 + $0xe8] sm:$0xff]
      %v4816 = vld [vmem:[#allocation4 + $0xf0] sm:$0xff]
      %v4817 = vld [vmem:[#allocation4 + $0xf8] sm:$0xff]
      %v4818 = vld [vmem:[#allocation4 + $0x100] sm:$0xff]
      %v4819 = vld [vmem:[#allocation4 + $0x108] sm:$0xff]
      %v4820 = vld [vmem:[#allocation4 + $0x110] sm:$0xff]
      %v4821 = vld [vmem:[#allocation4 + $0x118] sm:$0xff]
      %v4822 = vadd.f32 %v4786, %v4697
      %v4823 = vadd.f32 %v4787, %v4699
      %v4824 = vadd.f32 %v4788, %v4702
      %v4825 = vadd.f32 %v4789, %v4704
      %v4826 = vadd.f32 %v4790, %v4707
      %v4827 = vadd.f32 %v4791, %v4709
      %v4828 = vadd.f32 %v4792, %v4712
      %v4829 = vadd.f32 %v4793, %v4714
      %v4830 = vadd.f32 %v4794, %v4717
      %v4831 = vadd.f32 %v4795, %v4719
      %v4832 = vadd.f32 %v4796, %v4722
      %v4833 = vadd.f32 %v4797, %v4724
      %v4834 = vadd.f32 %v4798, %v4727
      %v4835 = vadd.f32 %v4799, %v4729
      %v4836 = vadd.f32 %v4800, %v4732
      %v4837 = vadd.f32 %v4801, %v4734
      %v4838 = vadd.f32 %v4802, %v4737
      %v4839 = vadd.f32 %v4803, %v4739
      %v4840 = vadd.f32 %v4804, %v4742
      %v4841 = vadd.f32 %v4805, %v4744
      %v4842 = vadd.f32 %v4806, %v4747
      %v4843 = vadd.f32 %v4807, %v4749
      %v4844 = vadd.f32 %v4808, %v4752
      %v4845 = vadd.f32 %v4809, %v4754
      %v4846 = vadd.f32 %v4810, %v4757
      %v4847 = vadd.f32 %v4811, %v4759
      %v4848 = vadd.f32 %v4812, %v4762
      %v4849 = vadd.f32 %v4813, %v4764
      %v4850 = vadd.f32 %v4814, %v4767
      %v4851 = vadd.f32 %v4815, %v4769
      %v4852 = vadd.f32 %v4816, %v4772
      %v4853 = vadd.f32 %v4817, %v4774
      %v4854 = vadd.f32 %v4818, %v4777
      %v4855 = vadd.f32 %v4819, %v4779
      %v4856 = vadd.f32 %v4820, %v4782
      %v4857 = vadd.f32 %v4821, %v4784
      %4858 = vst.msk [vmem:[#allocation4] sm:$0xff] %vm389, %v4822
      %4859 = vst.msk [vmem:[#allocation4 + $0x8] sm:$0xff] %vm389, %v4823
      %4860 = vst.msk [vmem:[#allocation4 + $0x10] sm:$0xff] %vm389, %v4824
      %4861 = vst.msk [vmem:[#allocation4 + $0x18] sm:$0xff] %vm389, %v4825
      %4862 = vst.msk [vmem:[#allocation4 + $0x20] sm:$0xff] %vm389, %v4826
      %4863 = vst.msk [vmem:[#allocation4 + $0x28] sm:$0xff] %vm389, %v4827
      %4864 = vst.msk [vmem:[#allocation4 + $0x30] sm:$0xff] %vm389, %v4828
      %4865 = vst.msk [vmem:[#allocation4 + $0x38] sm:$0xff] %vm389, %v4829
      %4866 = vst.msk [vmem:[#allocation4 + $0x40] sm:$0xff] %vm389, %v4830
      %4867 = vst.msk [vmem:[#allocation4 + $0x48] sm:$0xff] %vm389, %v4831
      %4868 = vst.msk [vmem:[#allocation4 + $0x50] sm:$0xff] %vm389, %v4832
      %4869 = vst.msk [vmem:[#allocation4 + $0x58] sm:$0xff] %vm389, %v4833
      %4870 = vst.msk [vmem:[#allocation4 + $0x60] sm:$0xff] %vm389, %v4834
      %4871 = vst.msk [vmem:[#allocation4 + $0x68] sm:$0xff] %vm389, %v4835
      %4872 = vst.msk [vmem:[#allocation4 + $0x70] sm:$0xff] %vm389, %v4836
      %4873 = vst.msk [vmem:[#allocation4 + $0x78] sm:$0xff] %vm389, %v4837
      %4874 = vst.msk [vmem:[#allocation4 + $0x80] sm:$0xff] %vm389, %v4838
      %4875 = vst.msk [vmem:[#allocation4 + $0x88] sm:$0xff] %vm389, %v4839
      %4876 = vst.msk [vmem:[#allocation4 + $0x90] sm:$0xff] %vm389, %v4840
      %4877 = vst.msk [vmem:[#allocation4 + $0x98] sm:$0xff] %vm389, %v4841
      %4878 = vst.msk [vmem:[#allocation4 + $0xa0] sm:$0xff] %vm389, %v4842
      %4879 = vst.msk [vmem:[#allocation4 + $0xa8] sm:$0xff] %vm389, %v4843
      %4880 = vst.msk [vmem:[#allocation4 + $0xb0] sm:$0xff] %vm389, %v4844
      %4881 = vst.msk [vmem:[#allocation4 + $0xb8] sm:$0xff] %vm389, %v4845
      %4882 = vst.msk [vmem:[#allocation4 + $0xc0] sm:$0xff] %vm389, %v4846
      %4883 = vst.msk [vmem:[#allocation4 + $0xc8] sm:$0xff] %vm389, %v4847
      %4884 = vst.msk [vmem:[#allocation4 + $0xd0] sm:$0xff] %vm389, %v4848
      %4885 = vst.msk [vmem:[#allocation4 + $0xd8] sm:$0xff] %vm389, %v4849
      %4886 = vst.msk [vmem:[#allocation4 + $0xe0] sm:$0xff] %vm389, %v4850
      %4887 = vst.msk [vmem:[#allocation4 + $0xe8] sm:$0xff] %vm389, %v4851
      %4888 = vst.msk [vmem:[#allocation4 + $0xf0] sm:$0xff] %vm389, %v4852
      %4889 = vst.msk [vmem:[#allocation4 + $0xf8] sm:$0xff] %vm389, %v4853
      %4890 = vst.msk [vmem:[#allocation4 + $0x100] sm:$0xff] %vm389, %v4854
      %4891 = vst.msk [vmem:[#allocation4 + $0x108] sm:$0xff] %vm389, %v4855
      %4892 = vst.msk [vmem:[#allocation4 + $0x110] sm:$0xff] %vm389, %v4856
      %4893 = vst.msk [vmem:[#allocation4 + $0x118] sm:$0xff] %vm389, %v4857
      %v4894 = vld [vmem:[#allocation3 + $0x13] sm:$0xff]
      %v4895 = vld [vmem:[#allocation3 + $0x1b] sm:$0xff]
      %v4896 = vld [vmem:[#allocation3 + $0x23] sm:$0xff]
      %v4897 = vld [vmem:[#allocation3 + $0x2b] sm:$0xff]
      %v4898 = vld [vmem:[#allocation3 + $0x33] sm:$0xff]
      %v4899 = vld [vmem:[#allocation3 + $0x3b] sm:$0xff]
      %v4900 = vld [vmem:[#allocation3 + $0x43] sm:$0xff]
      %v4901 = vld [vmem:[#allocation3 + $0x4b] sm:$0xff]
      %v4902 = vld [vmem:[#allocation3 + $0x53] sm:$0xff]
      %v4903 = vld [vmem:[#allocation3 + $0x5b] sm:$0xff]
      %v4904 = vld [vmem:[#allocation3 + $0x63] sm:$0xff]
      %v4905 = vld [vmem:[#allocation3 + $0x6b] sm:$0xff]
      %v4906 = vld [vmem:[#allocation3 + $0x73] sm:$0xff]
      %v4907 = vld [vmem:[#allocation3 + $0x7b] sm:$0xff]
      %v4908 = vld [vmem:[#allocation3 + $0x83] sm:$0xff]
      %v4909 = vld [vmem:[#allocation3 + $0x8b] sm:$0xff]
      %v4910 = vld [vmem:[#allocation3 + $0x93] sm:$0xff]
      %v4911 = vld [vmem:[#allocation3 + $0x9b] sm:$0xff]
      %v4912 = vld [vmem:[#allocation3 + $0xa3] sm:$0xff]
      %v4913 = vld [vmem:[#allocation3 + $0xab] sm:$0xff]
      %v4914 = vld [vmem:[#allocation3 + $0xb3] sm:$0xff]
      %v4915 = vld [vmem:[#allocation3 + $0xbb] sm:$0xff]
      %v4916 = vld [vmem:[#allocation3 + $0xc3] sm:$0xff]
      %v4917 = vld [vmem:[#allocation3 + $0xcb] sm:$0xff]
      %v4918 = vld [vmem:[#allocation3 + $0xd3] sm:$0xff]
      %v4919 = vld [vmem:[#allocation3 + $0xdb] sm:$0xff]
      %v4920 = vld [vmem:[#allocation3 + $0xe3] sm:$0xff]
      %v4921 = vld [vmem:[#allocation3 + $0xeb] sm:$0xff]
      %v4922 = vld [vmem:[#allocation3 + $0xf3] sm:$0xff]
      %v4923 = vld [vmem:[#allocation3 + $0xfb] sm:$0xff]
      %v4924 = vld [vmem:[#allocation3 + $0x103] sm:$0xff]
      %v4925 = vld [vmem:[#allocation3 + $0x10b] sm:$0xff]
      %v4926 = vld [vmem:[#allocation3 + $0x113] sm:$0xff]
      %v4927 = vld [vmem:[#allocation3 + $0x11b] sm:$0xff]
      %v4928 = vld [vmem:[#allocation3 + $0x123] sm:$0xff]
      %v4929 = vld [vmem:[#allocation3 + $0x12b] sm:$0xff]
      %v4930 = vpack.c.bf16 %v4895, %v4894
      %v4931 = vpack.c.bf16 %v4897, %v4896
      %v4932 = vpack.c.bf16 %v4899, %v4898
      %v4933 = vpack.c.bf16 %v4901, %v4900
      %v4934 = vpack.c.bf16 %v4903, %v4902
      %v4935 = vpack.c.bf16 %v4905, %v4904
      %v4936 = vpack.c.bf16 %v4907, %v4906
      %v4937 = vpack.c.bf16 %v4909, %v4908
      %v4938 = vpack.c.bf16 %v4911, %v4910
      %v4939 = vpack.c.bf16 %v4913, %v4912
      %v4940 = vpack.c.bf16 %v4915, %v4914
      %v4941 = vpack.c.bf16 %v4917, %v4916
      %v4942 = vpack.c.bf16 %v4919, %v4918
      %v4943 = vpack.c.bf16 %v4921, %v4920
      %v4944 = vpack.c.bf16 %v4923, %v4922
      %v4945 = vpack.c.bf16 %v4925, %v4924
      %v4946 = vpack.c.bf16 %v4927, %v4926
      %v4947 = vpack.c.bf16 %v4929, %v4928
      %s4948 = scalar_lea.vmem %s2, 16
      %v4949 = vld [vmem:[%s4948] sm:$0xf]
      %v4951 = vsel %vm389, %v4930, 0
      %v4954 = vsel %vm389, %v4931, 0
      %v4957 = vsel %vm389, %v4932, 0
      %v4960 = vsel %vm389, %v4933, 0
      %v4963 = vsel %vm389, %v4934, 0
      %v4966 = vsel %vm389, %v4935, 0
      %v4969 = vsel %vm389, %v4936, 0
      %v4972 = vsel %vm389, %v4937, 0
      %v4975 = vsel %vm389, %v4938, 0
      %v4978 = vsel %vm389, %v4939, 0
      %v4981 = vsel %vm389, %v4940, 0
      %v4984 = vsel %vm389, %v4941, 0
      %v4987 = vsel %vm389, %v4942, 0
      %v4990 = vsel %vm389, %v4943, 0
      %v4993 = vsel %vm389, %v4944, 0
      %v4996 = vsel %vm389, %v4945, 0
      %v4999 = vsel %vm389, %v4946, 0
      %v5002 = vsel %vm389, %v4947, 0
      %v5005 = vsel %vm548, %v4949, 0
      %5007 = vmatpush.bf16.msra.mxu0 0
      %5008 = vmatpush.bf16.msra.mxu0 0
      %5009 = vmatpush.bf16.msra.mxu0 0
      %5010 = vmatpush.bf16.msra.mxu0 0
      %5011 = vmatpush.bf16.msra.mxu0 0
      %5012 = vmatpush.bf16.msra.mxu0 0
      %5013 = vmatpush.bf16.msra.mxu0 0
      %5014 = vmatpush.bf16.msra.mxu0 %v5005
      %5015 = vmatmul.bf16.gmra.mxu0 %v4951
      %v5016 = vpop.f32.mrf.mxu0
      %v5017 = vadd.f32 0.0, %v5016
      %v5018 = vpop.f32.mrf.mxu0
      %v5019 = vadd.f32 0.0, %v5018
      %5020 = vmatmul.bf16.gmra.mxu0 %v4954
      %v5021 = vpop.f32.mrf.mxu0
      %v5022 = vadd.f32 0.0, %v5021
      %v5023 = vpop.f32.mrf.mxu0
      %v5024 = vadd.f32 0.0, %v5023
      %5025 = vmatmul.bf16.gmra.mxu0 %v4957
      %v5026 = vpop.f32.mrf.mxu0
      %v5027 = vadd.f32 0.0, %v5026
      %v5028 = vpop.f32.mrf.mxu0
      %v5029 = vadd.f32 0.0, %v5028
      %5030 = vmatmul.bf16.gmra.mxu0 %v4960
      %v5031 = vpop.f32.mrf.mxu0
      %v5032 = vadd.f32 0.0, %v5031
      %v5033 = vpop.f32.mrf.mxu0
      %v5034 = vadd.f32 0.0, %v5033
      %5035 = vmatmul.bf16.gmra.mxu0 %v4963
      %v5036 = vpop.f32.mrf.mxu0
      %v5037 = vadd.f32 0.0, %v5036
      %v5038 = vpop.f32.mrf.mxu0
      %v5039 = vadd.f32 0.0, %v5038
      %5040 = vmatmul.bf16.gmra.mxu0 %v4966
      %v5041 = vpop.f32.mrf.mxu0
      %v5042 = vadd.f32 0.0, %v5041
      %v5043 = vpop.f32.mrf.mxu0
      %v5044 = vadd.f32 0.0, %v5043
      %5045 = vmatmul.bf16.gmra.mxu0 %v4969
      %v5046 = vpop.f32.mrf.mxu0
      %v5047 = vadd.f32 0.0, %v5046
      %v5048 = vpop.f32.mrf.mxu0
      %v5049 = vadd.f32 0.0, %v5048
      %5050 = vmatmul.bf16.gmra.mxu0 %v4972
      %v5051 = vpop.f32.mrf.mxu0
      %v5052 = vadd.f32 0.0, %v5051
      %v5053 = vpop.f32.mrf.mxu0
      %v5054 = vadd.f32 0.0, %v5053
      %5055 = vmatmul.bf16.gmra.mxu0 %v4975
      %v5056 = vpop.f32.mrf.mxu0
      %v5057 = vadd.f32 0.0, %v5056
      %v5058 = vpop.f32.mrf.mxu0
      %v5059 = vadd.f32 0.0, %v5058
      %5060 = vmatmul.bf16.gmra.mxu0 %v4978
      %v5061 = vpop.f32.mrf.mxu0
      %v5062 = vadd.f32 0.0, %v5061
      %v5063 = vpop.f32.mrf.mxu0
      %v5064 = vadd.f32 0.0, %v5063
      %5065 = vmatmul.bf16.gmra.mxu0 %v4981
      %v5066 = vpop.f32.mrf.mxu0
      %v5067 = vadd.f32 0.0, %v5066
      %v5068 = vpop.f32.mrf.mxu0
      %v5069 = vadd.f32 0.0, %v5068
      %5070 = vmatmul.bf16.gmra.mxu0 %v4984
      %v5071 = vpop.f32.mrf.mxu0
      %v5072 = vadd.f32 0.0, %v5071
      %v5073 = vpop.f32.mrf.mxu0
      %v5074 = vadd.f32 0.0, %v5073
      %5075 = vmatmul.bf16.gmra.mxu0 %v4987
      %v5076 = vpop.f32.mrf.mxu0
      %v5077 = vadd.f32 0.0, %v5076
      %v5078 = vpop.f32.mrf.mxu0
      %v5079 = vadd.f32 0.0, %v5078
      %5080 = vmatmul.bf16.gmra.mxu0 %v4990
      %v5081 = vpop.f32.mrf.mxu0
      %v5082 = vadd.f32 0.0, %v5081
      %v5083 = vpop.f32.mrf.mxu0
      %v5084 = vadd.f32 0.0, %v5083
      %5085 = vmatmul.bf16.gmra.mxu0 %v4993
      %v5086 = vpop.f32.mrf.mxu0
      %v5087 = vadd.f32 0.0, %v5086
      %v5088 = vpop.f32.mrf.mxu0
      %v5089 = vadd.f32 0.0, %v5088
      %5090 = vmatmul.bf16.gmra.mxu0 %v4996
      %v5091 = vpop.f32.mrf.mxu0
      %v5092 = vadd.f32 0.0, %v5091
      %v5093 = vpop.f32.mrf.mxu0
      %v5094 = vadd.f32 0.0, %v5093
      %5095 = vmatmul.bf16.gmra.mxu0 %v4999
      %v5096 = vpop.f32.mrf.mxu0
      %v5097 = vadd.f32 0.0, %v5096
      %v5098 = vpop.f32.mrf.mxu0
      %v5099 = vadd.f32 0.0, %v5098
      %5100 = vmatmul.bf16.gmra.mxu0 %v5002
      %v5101 = vpop.f32.mrf.mxu0
      %v5102 = vadd.f32 0.0, %v5101
      %v5103 = vpop.f32.mrf.mxu0
      %v5104 = vadd.f32 0.0, %v5103
      %5105 = vdwg.mxu0
      %v5106 = vld [vmem:[#allocation4] sm:$0xff]
      %v5107 = vld [vmem:[#allocation4 + $0x8] sm:$0xff]
      %v5108 = vld [vmem:[#allocation4 + $0x10] sm:$0xff]
      %v5109 = vld [vmem:[#allocation4 + $0x18] sm:$0xff]
      %v5110 = vld [vmem:[#allocation4 + $0x20] sm:$0xff]
      %v5111 = vld [vmem:[#allocation4 + $0x28] sm:$0xff]
      %v5112 = vld [vmem:[#allocation4 + $0x30] sm:$0xff]
      %v5113 = vld [vmem:[#allocation4 + $0x38] sm:$0xff]
      %v5114 = vld [vmem:[#allocation4 + $0x40] sm:$0xff]
      %v5115 = vld [vmem:[#allocation4 + $0x48] sm:$0xff]
      %v5116 = vld [vmem:[#allocation4 + $0x50] sm:$0xff]
      %v5117 = vld [vmem:[#allocation4 + $0x58] sm:$0xff]
      %v5118 = vld [vmem:[#allocation4 + $0x60] sm:$0xff]
      %v5119 = vld [vmem:[#allocation4 + $0x68] sm:$0xff]
      %v5120 = vld [vmem:[#allocation4 + $0x70] sm:$0xff]
      %v5121 = vld [vmem:[#allocation4 + $0x78] sm:$0xff]
      %v5122 = vld [vmem:[#allocation4 + $0x80] sm:$0xff]
      %v5123 = vld [vmem:[#allocation4 + $0x88] sm:$0xff]
      %v5124 = vld [vmem:[#allocation4 + $0x90] sm:$0xff]
      %v5125 = vld [vmem:[#allocation4 + $0x98] sm:$0xff]
      %v5126 = vld [vmem:[#allocation4 + $0xa0] sm:$0xff]
      %v5127 = vld [vmem:[#allocation4 + $0xa8] sm:$0xff]
      %v5128 = vld [vmem:[#allocation4 + $0xb0] sm:$0xff]
      %v5129 = vld [vmem:[#allocation4 + $0xb8] sm:$0xff]
      %v5130 = vld [vmem:[#allocation4 + $0xc0] sm:$0xff]
      %v5131 = vld [vmem:[#allocation4 + $0xc8] sm:$0xff]
      %v5132 = vld [vmem:[#allocation4 + $0xd0] sm:$0xff]
      %v5133 = vld [vmem:[#allocation4 + $0xd8] sm:$0xff]
      %v5134 = vld [vmem:[#allocation4 + $0xe0] sm:$0xff]
      %v5135 = vld [vmem:[#allocation4 + $0xe8] sm:$0xff]
      %v5136 = vld [vmem:[#allocation4 + $0xf0] sm:$0xff]
      %v5137 = vld [vmem:[#allocation4 + $0xf8] sm:$0xff]
      %v5138 = vld [vmem:[#allocation4 + $0x100] sm:$0xff]
      %v5139 = vld [vmem:[#allocation4 + $0x108] sm:$0xff]
      %v5140 = vld [vmem:[#allocation4 + $0x110] sm:$0xff]
      %v5141 = vld [vmem:[#allocation4 + $0x118] sm:$0xff]
      %v5142 = vadd.f32 %v5106, %v5017
      %v5143 = vadd.f32 %v5107, %v5019
      %v5144 = vadd.f32 %v5108, %v5022
      %v5145 = vadd.f32 %v5109, %v5024
      %v5146 = vadd.f32 %v5110, %v5027
      %v5147 = vadd.f32 %v5111, %v5029
      %v5148 = vadd.f32 %v5112, %v5032
      %v5149 = vadd.f32 %v5113, %v5034
      %v5150 = vadd.f32 %v5114, %v5037
      %v5151 = vadd.f32 %v5115, %v5039
      %v5152 = vadd.f32 %v5116, %v5042
      %v5153 = vadd.f32 %v5117, %v5044
      %v5154 = vadd.f32 %v5118, %v5047
      %v5155 = vadd.f32 %v5119, %v5049
      %v5156 = vadd.f32 %v5120, %v5052
      %v5157 = vadd.f32 %v5121, %v5054
      %v5158 = vadd.f32 %v5122, %v5057
      %v5159 = vadd.f32 %v5123, %v5059
      %v5160 = vadd.f32 %v5124, %v5062
      %v5161 = vadd.f32 %v5125, %v5064
      %v5162 = vadd.f32 %v5126, %v5067
      %v5163 = vadd.f32 %v5127, %v5069
      %v5164 = vadd.f32 %v5128, %v5072
      %v5165 = vadd.f32 %v5129, %v5074
      %v5166 = vadd.f32 %v5130, %v5077
      %v5167 = vadd.f32 %v5131, %v5079
      %v5168 = vadd.f32 %v5132, %v5082
      %v5169 = vadd.f32 %v5133, %v5084
      %v5170 = vadd.f32 %v5134, %v5087
      %v5171 = vadd.f32 %v5135, %v5089
      %v5172 = vadd.f32 %v5136, %v5092
      %v5173 = vadd.f32 %v5137, %v5094
      %v5174 = vadd.f32 %v5138, %v5097
      %v5175 = vadd.f32 %v5139, %v5099
      %v5176 = vadd.f32 %v5140, %v5102
      %v5177 = vadd.f32 %v5141, %v5104
      %5178 = vst.msk [vmem:[#allocation4] sm:$0xff] %vm389, %v5142
      %5179 = vst.msk [vmem:[#allocation4 + $0x8] sm:$0xff] %vm389, %v5143
      %5180 = vst.msk [vmem:[#allocation4 + $0x10] sm:$0xff] %vm389, %v5144
      %5181 = vst.msk [vmem:[#allocation4 + $0x18] sm:$0xff] %vm389, %v5145
      %5182 = vst.msk [vmem:[#allocation4 + $0x20] sm:$0xff] %vm389, %v5146
      %5183 = vst.msk [vmem:[#allocation4 + $0x28] sm:$0xff] %vm389, %v5147
      %5184 = vst.msk [vmem:[#allocation4 + $0x30] sm:$0xff] %vm389, %v5148
      %5185 = vst.msk [vmem:[#allocation4 + $0x38] sm:$0xff] %vm389, %v5149
      %5186 = vst.msk [vmem:[#allocation4 + $0x40] sm:$0xff] %vm389, %v5150
      %5187 = vst.msk [vmem:[#allocation4 + $0x48] sm:$0xff] %vm389, %v5151
      %5188 = vst.msk [vmem:[#allocation4 + $0x50] sm:$0xff] %vm389, %v5152
      %5189 = vst.msk [vmem:[#allocation4 + $0x58] sm:$0xff] %vm389, %v5153
      %5190 = vst.msk [vmem:[#allocation4 + $0x60] sm:$0xff] %vm389, %v5154
      %5191 = vst.msk [vmem:[#allocation4 + $0x68] sm:$0xff] %vm389, %v5155
      %5192 = vst.msk [vmem:[#allocation4 + $0x70] sm:$0xff] %vm389, %v5156
      %5193 = vst.msk [vmem:[#allocation4 + $0x78] sm:$0xff] %vm389, %v5157
      %5194 = vst.msk [vmem:[#allocation4 + $0x80] sm:$0xff] %vm389, %v5158
      %5195 = vst.msk [vmem:[#allocation4 + $0x88] sm:$0xff] %vm389, %v5159
      %5196 = vst.msk [vmem:[#allocation4 + $0x90] sm:$0xff] %vm389, %v5160
      %5197 = vst.msk [vmem:[#allocation4 + $0x98] sm:$0xff] %vm389, %v5161
      %5198 = vst.msk [vmem:[#allocation4 + $0xa0] sm:$0xff] %vm389, %v5162
      %5199 = vst.msk [vmem:[#allocation4 + $0xa8] sm:$0xff] %vm389, %v5163
      %5200 = vst.msk [vmem:[#allocation4 + $0xb0] sm:$0xff] %vm389, %v5164
      %5201 = vst.msk [vmem:[#allocation4 + $0xb8] sm:$0xff] %vm389, %v5165
      %5202 = vst.msk [vmem:[#allocation4 + $0xc0] sm:$0xff] %vm389, %v5166
      %5203 = vst.msk [vmem:[#allocation4 + $0xc8] sm:$0xff] %vm389, %v5167
      %5204 = vst.msk [vmem:[#allocation4 + $0xd0] sm:$0xff] %vm389, %v5168
      %5205 = vst.msk [vmem:[#allocation4 + $0xd8] sm:$0xff] %vm389, %v5169
      %5206 = vst.msk [vmem:[#allocation4 + $0xe0] sm:$0xff] %vm389, %v5170
      %5207 = vst.msk [vmem:[#allocation4 + $0xe8] sm:$0xff] %vm389, %v5171
      %5208 = vst.msk [vmem:[#allocation4 + $0xf0] sm:$0xff] %vm389, %v5172
      %5209 = vst.msk [vmem:[#allocation4 + $0xf8] sm:$0xff] %vm389, %v5173
      %5210 = vst.msk [vmem:[#allocation4 + $0x100] sm:$0xff] %vm389, %v5174
      %5211 = vst.msk [vmem:[#allocation4 + $0x108] sm:$0xff] %vm389, %v5175
      %5212 = vst.msk [vmem:[#allocation4 + $0x110] sm:$0xff] %vm389, %v5176
      %5213 = vst.msk [vmem:[#allocation4 + $0x118] sm:$0xff] %vm389, %v5177
      %v5214 = vld [vmem:[#allocation3 + $0x14] sm:$0xff]
      %v5215 = vld [vmem:[#allocation3 + $0x1c] sm:$0xff]
      %v5216 = vld [vmem:[#allocation3 + $0x24] sm:$0xff]
      %v5217 = vld [vmem:[#allocation3 + $0x2c] sm:$0xff]
      %v5218 = vld [vmem:[#allocation3 + $0x34] sm:$0xff]
      %v5219 = vld [vmem:[#allocation3 + $0x3c] sm:$0xff]
      %v5220 = vld [vmem:[#allocation3 + $0x44] sm:$0xff]
      %v5221 = vld [vmem:[#allocation3 + $0x4c] sm:$0xff]
      %v5222 = vld [vmem:[#allocation3 + $0x54] sm:$0xff]
      %v5223 = vld [vmem:[#allocation3 + $0x5c] sm:$0xff]
      %v5224 = vld [vmem:[#allocation3 + $0x64] sm:$0xff]
      %v5225 = vld [vmem:[#allocation3 + $0x6c] sm:$0xff]
      %v5226 = vld [vmem:[#allocation3 + $0x74] sm:$0xff]
      %v5227 = vld [vmem:[#allocation3 + $0x7c] sm:$0xff]
      %v5228 = vld [vmem:[#allocation3 + $0x84] sm:$0xff]
      %v5229 = vld [vmem:[#allocation3 + $0x8c] sm:$0xff]
      %v5230 = vld [vmem:[#allocation3 + $0x94] sm:$0xff]
      %v5231 = vld [vmem:[#allocation3 + $0x9c] sm:$0xff]
      %v5232 = vld [vmem:[#allocation3 + $0xa4] sm:$0xff]
      %v5233 = vld [vmem:[#allocation3 + $0xac] sm:$0xff]
      %v5234 = vld [vmem:[#allocation3 + $0xb4] sm:$0xff]
      %v5235 = vld [vmem:[#allocation3 + $0xbc] sm:$0xff]
      %v5236 = vld [vmem:[#allocation3 + $0xc4] sm:$0xff]
      %v5237 = vld [vmem:[#allocation3 + $0xcc] sm:$0xff]
      %v5238 = vld [vmem:[#allocation3 + $0xd4] sm:$0xff]
      %v5239 = vld [vmem:[#allocation3 + $0xdc] sm:$0xff]
      %v5240 = vld [vmem:[#allocation3 + $0xe4] sm:$0xff]
      %v5241 = vld [vmem:[#allocation3 + $0xec] sm:$0xff]
      %v5242 = vld [vmem:[#allocation3 + $0xf4] sm:$0xff]
      %v5243 = vld [vmem:[#allocation3 + $0xfc] sm:$0xff]
      %v5244 = vld [vmem:[#allocation3 + $0x104] sm:$0xff]
      %v5245 = vld [vmem:[#allocation3 + $0x10c] sm:$0xff]
      %v5246 = vld [vmem:[#allocation3 + $0x114] sm:$0xff]
      %v5247 = vld [vmem:[#allocation3 + $0x11c] sm:$0xff]
      %v5248 = vld [vmem:[#allocation3 + $0x124] sm:$0xff]
      %v5249 = vld [vmem:[#allocation3 + $0x12c] sm:$0xff]
      %v5250 = vpack.c.bf16 %v5215, %v5214
      %v5251 = vpack.c.bf16 %v5217, %v5216
      %v5252 = vpack.c.bf16 %v5219, %v5218
      %v5253 = vpack.c.bf16 %v5221, %v5220
      %v5254 = vpack.c.bf16 %v5223, %v5222
      %v5255 = vpack.c.bf16 %v5225, %v5224
      %v5256 = vpack.c.bf16 %v5227, %v5226
      %v5257 = vpack.c.bf16 %v5229, %v5228
      %v5258 = vpack.c.bf16 %v5231, %v5230
      %v5259 = vpack.c.bf16 %v5233, %v5232
      %v5260 = vpack.c.bf16 %v5235, %v5234
      %v5261 = vpack.c.bf16 %v5237, %v5236
      %v5262 = vpack.c.bf16 %v5239, %v5238
      %v5263 = vpack.c.bf16 %v5241, %v5240
      %v5264 = vpack.c.bf16 %v5243, %v5242
      %v5265 = vpack.c.bf16 %v5245, %v5244
      %v5266 = vpack.c.bf16 %v5247, %v5246
      %v5267 = vpack.c.bf16 %v5249, %v5248
      %s5268 = scalar_lea.vmem %s2, 20
      %v5269 = vld [vmem:[%s5268] sm:$0xf]
      %v5271 = vsel %vm389, %v5250, 0
      %v5274 = vsel %vm389, %v5251, 0
      %v5277 = vsel %vm389, %v5252, 0
      %v5280 = vsel %vm389, %v5253, 0
      %v5283 = vsel %vm389, %v5254, 0
      %v5286 = vsel %vm389, %v5255, 0
      %v5289 = vsel %vm389, %v5256, 0
      %v5292 = vsel %vm389, %v5257, 0
      %v5295 = vsel %vm389, %v5258, 0
      %v5298 = vsel %vm389, %v5259, 0
      %v5301 = vsel %vm389, %v5260, 0
      %v5304 = vsel %vm389, %v5261, 0
      %v5307 = vsel %vm389, %v5262, 0
      %v5310 = vsel %vm389, %v5263, 0
      %v5313 = vsel %vm389, %v5264, 0
      %v5316 = vsel %vm389, %v5265, 0
      %v5319 = vsel %vm389, %v5266, 0
      %v5322 = vsel %vm389, %v5267, 0
      %v5325 = vsel %vm548, %v5269, 0
      %5327 = vmatpush.bf16.msra.mxu0 0
      %5328 = vmatpush.bf16.msra.mxu0 0
      %5329 = vmatpush.bf16.msra.mxu0 0
      %5330 = vmatpush.bf16.msra.mxu0 0
      %5331 = vmatpush.bf16.msra.mxu0 0
      %5332 = vmatpush.bf16.msra.mxu0 0
      %5333 = vmatpush.bf16.msra.mxu0 0
      %5334 = vmatpush.bf16.msra.mxu0 %v5325
      %5335 = vmatmul.bf16.gmra.mxu0 %v5271
      %v5336 = vpop.f32.mrf.mxu0
      %v5337 = vadd.f32 0.0, %v5336
      %v5338 = vpop.f32.mrf.mxu0
      %v5339 = vadd.f32 0.0, %v5338
      %5340 = vmatmul.bf16.gmra.mxu0 %v5274
      %v5341 = vpop.f32.mrf.mxu0
      %v5342 = vadd.f32 0.0, %v5341
      %v5343 = vpop.f32.mrf.mxu0
      %v5344 = vadd.f32 0.0, %v5343
      %5345 = vmatmul.bf16.gmra.mxu0 %v5277
      %v5346 = vpop.f32.mrf.mxu0
      %v5347 = vadd.f32 0.0, %v5346
      %v5348 = vpop.f32.mrf.mxu0
      %v5349 = vadd.f32 0.0, %v5348
      %5350 = vmatmul.bf16.gmra.mxu0 %v5280
      %v5351 = vpop.f32.mrf.mxu0
      %v5352 = vadd.f32 0.0, %v5351
      %v5353 = vpop.f32.mrf.mxu0
      %v5354 = vadd.f32 0.0, %v5353
      %5355 = vmatmul.bf16.gmra.mxu0 %v5283
      %v5356 = vpop.f32.mrf.mxu0
      %v5357 = vadd.f32 0.0, %v5356
      %v5358 = vpop.f32.mrf.mxu0
      %v5359 = vadd.f32 0.0, %v5358
      %5360 = vmatmul.bf16.gmra.mxu0 %v5286
      %v5361 = vpop.f32.mrf.mxu0
      %v5362 = vadd.f32 0.0, %v5361
      %v5363 = vpop.f32.mrf.mxu0
      %v5364 = vadd.f32 0.0, %v5363
      %5365 = vmatmul.bf16.gmra.mxu0 %v5289
      %v5366 = vpop.f32.mrf.mxu0
      %v5367 = vadd.f32 0.0, %v5366
      %v5368 = vpop.f32.mrf.mxu0
      %v5369 = vadd.f32 0.0, %v5368
      %5370 = vmatmul.bf16.gmra.mxu0 %v5292
      %v5371 = vpop.f32.mrf.mxu0
      %v5372 = vadd.f32 0.0, %v5371
      %v5373 = vpop.f32.mrf.mxu0
      %v5374 = vadd.f32 0.0, %v5373
      %5375 = vmatmul.bf16.gmra.mxu0 %v5295
      %v5376 = vpop.f32.mrf.mxu0
      %v5377 = vadd.f32 0.0, %v5376
      %v5378 = vpop.f32.mrf.mxu0
      %v5379 = vadd.f32 0.0, %v5378
      %5380 = vmatmul.bf16.gmra.mxu0 %v5298
      %v5381 = vpop.f32.mrf.mxu0
      %v5382 = vadd.f32 0.0, %v5381
      %v5383 = vpop.f32.mrf.mxu0
      %v5384 = vadd.f32 0.0, %v5383
      %5385 = vmatmul.bf16.gmra.mxu0 %v5301
      %v5386 = vpop.f32.mrf.mxu0
      %v5387 = vadd.f32 0.0, %v5386
      %v5388 = vpop.f32.mrf.mxu0
      %v5389 = vadd.f32 0.0, %v5388
      %5390 = vmatmul.bf16.gmra.mxu0 %v5304
      %v5391 = vpop.f32.mrf.mxu0
      %v5392 = vadd.f32 0.0, %v5391
      %v5393 = vpop.f32.mrf.mxu0
      %v5394 = vadd.f32 0.0, %v5393
      %5395 = vmatmul.bf16.gmra.mxu0 %v5307
      %v5396 = vpop.f32.mrf.mxu0
      %v5397 = vadd.f32 0.0, %v5396
      %v5398 = vpop.f32.mrf.mxu0
      %v5399 = vadd.f32 0.0, %v5398
      %5400 = vmatmul.bf16.gmra.mxu0 %v5310
      %v5401 = vpop.f32.mrf.mxu0
      %v5402 = vadd.f32 0.0, %v5401
      %v5403 = vpop.f32.mrf.mxu0
      %v5404 = vadd.f32 0.0, %v5403
      %5405 = vmatmul.bf16.gmra.mxu0 %v5313
      %v5406 = vpop.f32.mrf.mxu0
      %v5407 = vadd.f32 0.0, %v5406
      %v5408 = vpop.f32.mrf.mxu0
      %v5409 = vadd.f32 0.0, %v5408
      %5410 = vmatmul.bf16.gmra.mxu0 %v5316
      %v5411 = vpop.f32.mrf.mxu0
      %v5412 = vadd.f32 0.0, %v5411
      %v5413 = vpop.f32.mrf.mxu0
      %v5414 = vadd.f32 0.0, %v5413
      %5415 = vmatmul.bf16.gmra.mxu0 %v5319
      %v5416 = vpop.f32.mrf.mxu0
      %v5417 = vadd.f32 0.0, %v5416
      %v5418 = vpop.f32.mrf.mxu0
      %v5419 = vadd.f32 0.0, %v5418
      %5420 = vmatmul.bf16.gmra.mxu0 %v5322
      %v5421 = vpop.f32.mrf.mxu0
      %v5422 = vadd.f32 0.0, %v5421
      %v5423 = vpop.f32.mrf.mxu0
      %v5424 = vadd.f32 0.0, %v5423
      %5425 = vdwg.mxu0
      %v5426 = vld [vmem:[#allocation4] sm:$0xff]
      %v5427 = vld [vmem:[#allocation4 + $0x8] sm:$0xff]
      %v5428 = vld [vmem:[#allocation4 + $0x10] sm:$0xff]
      %v5429 = vld [vmem:[#allocation4 + $0x18] sm:$0xff]
      %v5430 = vld [vmem:[#allocation4 + $0x20] sm:$0xff]
      %v5431 = vld [vmem:[#allocation4 + $0x28] sm:$0xff]
      %v5432 = vld [vmem:[#allocation4 + $0x30] sm:$0xff]
      %v5433 = vld [vmem:[#allocation4 + $0x38] sm:$0xff]
      %v5434 = vld [vmem:[#allocation4 + $0x40] sm:$0xff]
      %v5435 = vld [vmem:[#allocation4 + $0x48] sm:$0xff]
      %v5436 = vld [vmem:[#allocation4 + $0x50] sm:$0xff]
      %v5437 = vld [vmem:[#allocation4 + $0x58] sm:$0xff]
      %v5438 = vld [vmem:[#allocation4 + $0x60] sm:$0xff]
      %v5439 = vld [vmem:[#allocation4 + $0x68] sm:$0xff]
      %v5440 = vld [vmem:[#allocation4 + $0x70] sm:$0xff]
      %v5441 = vld [vmem:[#allocation4 + $0x78] sm:$0xff]
      %v5442 = vld [vmem:[#allocation4 + $0x80] sm:$0xff]
      %v5443 = vld [vmem:[#allocation4 + $0x88] sm:$0xff]
      %v5444 = vld [vmem:[#allocation4 + $0x90] sm:$0xff]
      %v5445 = vld [vmem:[#allocation4 + $0x98] sm:$0xff]
      %v5446 = vld [vmem:[#allocation4 + $0xa0] sm:$0xff]
      %v5447 = vld [vmem:[#allocation4 + $0xa8] sm:$0xff]
      %v5448 = vld [vmem:[#allocation4 + $0xb0] sm:$0xff]
      %v5449 = vld [vmem:[#allocation4 + $0xb8] sm:$0xff]
      %v5450 = vld [vmem:[#allocation4 + $0xc0] sm:$0xff]
      %v5451 = vld [vmem:[#allocation4 + $0xc8] sm:$0xff]
      %v5452 = vld [vmem:[#allocation4 + $0xd0] sm:$0xff]
      %v5453 = vld [vmem:[#allocation4 + $0xd8] sm:$0xff]
      %v5454 = vld [vmem:[#allocation4 + $0xe0] sm:$0xff]
      %v5455 = vld [vmem:[#allocation4 + $0xe8] sm:$0xff]
      %v5456 = vld [vmem:[#allocation4 + $0xf0] sm:$0xff]
      %v5457 = vld [vmem:[#allocation4 + $0xf8] sm:$0xff]
      %v5458 = vld [vmem:[#allocation4 + $0x100] sm:$0xff]
      %v5459 = vld [vmem:[#allocation4 + $0x108] sm:$0xff]
      %v5460 = vld [vmem:[#allocation4 + $0x110] sm:$0xff]
      %v5461 = vld [vmem:[#allocation4 + $0x118] sm:$0xff]
      %v5462 = vadd.f32 %v5426, %v5337
      %v5463 = vadd.f32 %v5427, %v5339
      %v5464 = vadd.f32 %v5428, %v5342
      %v5465 = vadd.f32 %v5429, %v5344
      %v5466 = vadd.f32 %v5430, %v5347
      %v5467 = vadd.f32 %v5431, %v5349
      %v5468 = vadd.f32 %v5432, %v5352
      %v5469 = vadd.f32 %v5433, %v5354
      %v5470 = vadd.f32 %v5434, %v5357
      %v5471 = vadd.f32 %v5435, %v5359
      %v5472 = vadd.f32 %v5436, %v5362
      %v5473 = vadd.f32 %v5437, %v5364
      %v5474 = vadd.f32 %v5438, %v5367
      %v5475 = vadd.f32 %v5439, %v5369
      %v5476 = vadd.f32 %v5440, %v5372
      %v5477 = vadd.f32 %v5441, %v5374
      %v5478 = vadd.f32 %v5442, %v5377
      %v5479 = vadd.f32 %v5443, %v5379
      %v5480 = vadd.f32 %v5444, %v5382
      %v5481 = vadd.f32 %v5445, %v5384
      %v5482 = vadd.f32 %v5446, %v5387
      %v5483 = vadd.f32 %v5447, %v5389
      %v5484 = vadd.f32 %v5448, %v5392
      %v5485 = vadd.f32 %v5449, %v5394
      %v5486 = vadd.f32 %v5450, %v5397
      %v5487 = vadd.f32 %v5451, %v5399
      %v5488 = vadd.f32 %v5452, %v5402
      %v5489 = vadd.f32 %v5453, %v5404
      %v5490 = vadd.f32 %v5454, %v5407
      %v5491 = vadd.f32 %v5455, %v5409
      %v5492 = vadd.f32 %v5456, %v5412
      %v5493 = vadd.f32 %v5457, %v5414
      %v5494 = vadd.f32 %v5458, %v5417
      %v5495 = vadd.f32 %v5459, %v5419
      %v5496 = vadd.f32 %v5460, %v5422
      %v5497 = vadd.f32 %v5461, %v5424
      %5498 = vst.msk [vmem:[#allocation4] sm:$0xff] %vm389, %v5462
      %5499 = vst.msk [vmem:[#allocation4 + $0x8] sm:$0xff] %vm389, %v5463
      %5500 = vst.msk [vmem:[#allocation4 + $0x10] sm:$0xff] %vm389, %v5464
      %5501 = vst.msk [vmem:[#allocation4 + $0x18] sm:$0xff] %vm389, %v5465
      %5502 = vst.msk [vmem:[#allocation4 + $0x20] sm:$0xff] %vm389, %v5466
      %5503 = vst.msk [vmem:[#allocation4 + $0x28] sm:$0xff] %vm389, %v5467
      %5504 = vst.msk [vmem:[#allocation4 + $0x30] sm:$0xff] %vm389, %v5468
      %5505 = vst.msk [vmem:[#allocation4 + $0x38] sm:$0xff] %vm389, %v5469
      %5506 = vst.msk [vmem:[#allocation4 + $0x40] sm:$0xff] %vm389, %v5470
      %5507 = vst.msk [vmem:[#allocation4 + $0x48] sm:$0xff] %vm389, %v5471
      %5508 = vst.msk [vmem:[#allocation4 + $0x50] sm:$0xff] %vm389, %v5472
      %5509 = vst.msk [vmem:[#allocation4 + $0x58] sm:$0xff] %vm389, %v5473
      %5510 = vst.msk [vmem:[#allocation4 + $0x60] sm:$0xff] %vm389, %v5474
      %5511 = vst.msk [vmem:[#allocation4 + $0x68] sm:$0xff] %vm389, %v5475
      %5512 = vst.msk [vmem:[#allocation4 + $0x70] sm:$0xff] %vm389, %v5476
      %5513 = vst.msk [vmem:[#allocation4 + $0x78] sm:$0xff] %vm389, %v5477
      %5514 = vst.msk [vmem:[#allocation4 + $0x80] sm:$0xff] %vm389, %v5478
      %5515 = vst.msk [vmem:[#allocation4 + $0x88] sm:$0xff] %vm389, %v5479
      %5516 = vst.msk [vmem:[#allocation4 + $0x90] sm:$0xff] %vm389, %v5480
      %5517 = vst.msk [vmem:[#allocation4 + $0x98] sm:$0xff] %vm389, %v5481
      %5518 = vst.msk [vmem:[#allocation4 + $0xa0] sm:$0xff] %vm389, %v5482
      %5519 = vst.msk [vmem:[#allocation4 + $0xa8] sm:$0xff] %vm389, %v5483
      %5520 = vst.msk [vmem:[#allocation4 + $0xb0] sm:$0xff] %vm389, %v5484
      %5521 = vst.msk [vmem:[#allocation4 + $0xb8] sm:$0xff] %vm389, %v5485
      %5522 = vst.msk [vmem:[#allocation4 + $0xc0] sm:$0xff] %vm389, %v5486
      %5523 = vst.msk [vmem:[#allocation4 + $0xc8] sm:$0xff] %vm389, %v5487
      %5524 = vst.msk [vmem:[#allocation4 + $0xd0] sm:$0xff] %vm389, %v5488
      %5525 = vst.msk [vmem:[#allocation4 + $0xd8] sm:$0xff] %vm389, %v5489
      %5526 = vst.msk [vmem:[#allocation4 + $0xe0] sm:$0xff] %vm389, %v5490
      %5527 = vst.msk [vmem:[#allocation4 + $0xe8] sm:$0xff] %vm389, %v5491
      %5528 = vst.msk [vmem:[#allocation4 + $0xf0] sm:$0xff] %vm389, %v5492
      %5529 = vst.msk [vmem:[#allocation4 + $0xf8] sm:$0xff] %vm389, %v5493
      %5530 = vst.msk [vmem:[#allocation4 + $0x100] sm:$0xff] %vm389, %v5494
      %5531 = vst.msk [vmem:[#allocation4 + $0x108] sm:$0xff] %vm389, %v5495
      %5532 = vst.msk [vmem:[#allocation4 + $0x110] sm:$0xff] %vm389, %v5496
      %5533 = vst.msk [vmem:[#allocation4 + $0x118] sm:$0xff] %vm389, %v5497
      %v5534 = vld [vmem:[#allocation3 + $0x24] sm:$0xff]
      %v5535 = vld [vmem:[#allocation3 + $0x2c] sm:$0xff]
      %v5536 = vld [vmem:[#allocation3 + $0x34] sm:$0xff]
      %v5537 = vld [vmem:[#allocation3 + $0x3c] sm:$0xff]
      %v5538 = vld [vmem:[#allocation3 + $0x44] sm:$0xff]
      %v5539 = vld [vmem:[#allocation3 + $0x4c] sm:$0xff]
      %v5540 = vld [vmem:[#allocation3 + $0x54] sm:$0xff]
      %v5541 = vld [vmem:[#allocation3 + $0x5c] sm:$0xff]
      %v5542 = vld [vmem:[#allocation3 + $0x64] sm:$0xff]
      %v5543 = vld [vmem:[#allocation3 + $0x6c] sm:$0xff]
      %v5544 = vld [vmem:[#allocation3 + $0x74] sm:$0xff]
      %v5545 = vld [vmem:[#allocation3 + $0x7c] sm:$0xff]
      %v5546 = vld [vmem:[#allocation3 + $0x84] sm:$0xff]
      %v5547 = vld [vmem:[#allocation3 + $0x8c] sm:$0xff]
      %v5548 = vld [vmem:[#allocation3 + $0x94] sm:$0xff]
      %v5549 = vld [vmem:[#allocation3 + $0x9c] sm:$0xff]
      %v5550 = vld [vmem:[#allocation3 + $0xa4] sm:$0xff]
      %v5551 = vld [vmem:[#allocation3 + $0xac] sm:$0xff]
      %v5552 = vld [vmem:[#allocation3 + $0xb4] sm:$0xff]
      %v5553 = vld [vmem:[#allocation3 + $0xbc] sm:$0xff]
      %v5554 = vld [vmem:[#allocation3 + $0xc4] sm:$0xff]
      %v5555 = vld [vmem:[#allocation3 + $0xcc] sm:$0xff]
      %v5556 = vld [vmem:[#allocation3 + $0xd4] sm:$0xff]
      %v5557 = vld [vmem:[#allocation3 + $0xdc] sm:$0xff]
      %v5558 = vld [vmem:[#allocation3 + $0xe4] sm:$0xff]
      %v5559 = vld [vmem:[#allocation3 + $0xec] sm:$0xff]
      %v5560 = vld [vmem:[#allocation3 + $0xf4] sm:$0xff]
      %v5561 = vld [vmem:[#allocation3 + $0xfc] sm:$0xff]
      %v5562 = vld [vmem:[#allocation3 + $0x104] sm:$0xff]
      %v5563 = vld [vmem:[#allocation3 + $0x10c] sm:$0xff]
      %v5564 = vld [vmem:[#allocation3 + $0x114] sm:$0xff]
      %v5565 = vld [vmem:[#allocation3 + $0x11c] sm:$0xff]
      %v5566 = vld [vmem:[#allocation3 + $0x124] sm:$0xff]
      %v5567 = vld [vmem:[#allocation3 + $0x12c] sm:$0xff]
      %v5568 = vld [vmem:[#allocation3 + $0x134] sm:$0xff]
      %v5569 = vld [vmem:[#allocation3 + $0x13c] sm:$0xff]
      %v5570 = vpack.c.bf16 %v5535, %v5534
      %v5571 = vpack.c.bf16 %v5537, %v5536
      %v5572 = vpack.c.bf16 %v5539, %v5538
      %v5573 = vpack.c.bf16 %v5541, %v5540
      %v5574 = vpack.c.bf16 %v5543, %v5542
      %v5575 = vpack.c.bf16 %v5545, %v5544
      %v5576 = vpack.c.bf16 %v5547, %v5546
      %v5577 = vpack.c.bf16 %v5549, %v5548
      %v5578 = vpack.c.bf16 %v5551, %v5550
      %v5579 = vpack.c.bf16 %v5553, %v5552
      %v5580 = vpack.c.bf16 %v5555, %v5554
      %v5581 = vpack.c.bf16 %v5557, %v5556
      %v5582 = vpack.c.bf16 %v5559, %v5558
      %v5583 = vpack.c.bf16 %v5561, %v5560
      %v5584 = vpack.c.bf16 %v5563, %v5562
      %v5585 = vpack.c.bf16 %v5565, %v5564
      %v5586 = vpack.c.bf16 %v5567, %v5566
      %v5587 = vpack.c.bf16 %v5569, %v5568
      %s5588 = scalar_lea.vmem %s2, 24
      %v5589 = vld [vmem:[%s5588] sm:$0xf]
      %v5591 = vsel %vm389, %v5570, 0
      %v5594 = vsel %vm389, %v5571, 0
      %v5597 = vsel %vm389, %v5572, 0
      %v5600 = vsel %vm389, %v5573, 0
      %v5603 = vsel %vm389, %v5574, 0
      %v5606 = vsel %vm389, %v5575, 0
      %v5609 = vsel %vm389, %v5576, 0
      %v5612 = vsel %vm389, %v5577, 0
      %v5615 = vsel %vm389, %v5578, 0
      %v5618 = vsel %vm389, %v5579, 0
      %v5621 = vsel %vm389, %v5580, 0
      %v5624 = vsel %vm389, %v5581, 0
      %v5627 = vsel %vm389, %v5582, 0
      %v5630 = vsel %vm389, %v5583, 0
      %v5633 = vsel %vm389, %v5584, 0
      %v5636 = vsel %vm389, %v5585, 0
      %v5639 = vsel %vm389, %v5586, 0
      %v5642 = vsel %vm389, %v5587, 0
      %v5645 = vsel %vm548, %v5589, 0
      %5647 = vmatpush.bf16.msra.mxu0 0
      %5648 = vmatpush.bf16.msra.mxu0 0
      %5649 = vmatpush.bf16.msra.mxu0 0
      %5650 = vmatpush.bf16.msra.mxu0 0
      %5651 = vmatpush.bf16.msra.mxu0 0
      %5652 = vmatpush.bf16.msra.mxu0 0
      %5653 = vmatpush.bf16.msra.mxu0 0
      %5654 = vmatpush.bf16.msra.mxu0 %v5645
      %5655 = vmatmul.bf16.gmra.mxu0 %v5591
      %v5656 = vpop.f32.mrf.mxu0
      %v5657 = vadd.f32 0.0, %v5656
      %v5658 = vpop.f32.mrf.mxu0
      %v5659 = vadd.f32 0.0, %v5658
      %5660 = vmatmul.bf16.gmra.mxu0 %v5594
      %v5661 = vpop.f32.mrf.mxu0
      %v5662 = vadd.f32 0.0, %v5661
      %v5663 = vpop.f32.mrf.mxu0
      %v5664 = vadd.f32 0.0, %v5663
      %5665 = vmatmul.bf16.gmra.mxu0 %v5597
      %v5666 = vpop.f32.mrf.mxu0
      %v5667 = vadd.f32 0.0, %v5666
      %v5668 = vpop.f32.mrf.mxu0
      %v5669 = vadd.f32 0.0, %v5668
      %5670 = vmatmul.bf16.gmra.mxu0 %v5600
      %v5671 = vpop.f32.mrf.mxu0
      %v5672 = vadd.f32 0.0, %v5671
      %v5673 = vpop.f32.mrf.mxu0
      %v5674 = vadd.f32 0.0, %v5673
      %5675 = vmatmul.bf16.gmra.mxu0 %v5603
      %v5676 = vpop.f32.mrf.mxu0
      %v5677 = vadd.f32 0.0, %v5676
      %v5678 = vpop.f32.mrf.mxu0
      %v5679 = vadd.f32 0.0, %v5678
      %5680 = vmatmul.bf16.gmra.mxu0 %v5606
      %v5681 = vpop.f32.mrf.mxu0
      %v5682 = vadd.f32 0.0, %v5681
      %v5683 = vpop.f32.mrf.mxu0
      %v5684 = vadd.f32 0.0, %v5683
      %5685 = vmatmul.bf16.gmra.mxu0 %v5609
      %v5686 = vpop.f32.mrf.mxu0
      %v5687 = vadd.f32 0.0, %v5686
      %v5688 = vpop.f32.mrf.mxu0
      %v5689 = vadd.f32 0.0, %v5688
      %5690 = vmatmul.bf16.gmra.mxu0 %v5612
      %v5691 = vpop.f32.mrf.mxu0
      %v5692 = vadd.f32 0.0, %v5691
      %v5693 = vpop.f32.mrf.mxu0
      %v5694 = vadd.f32 0.0, %v5693
      %5695 = vmatmul.bf16.gmra.mxu0 %v5615
      %v5696 = vpop.f32.mrf.mxu0
      %v5697 = vadd.f32 0.0, %v5696
      %v5698 = vpop.f32.mrf.mxu0
      %v5699 = vadd.f32 0.0, %v5698
      %5700 = vmatmul.bf16.gmra.mxu0 %v5618
      %v5701 = vpop.f32.mrf.mxu0
      %v5702 = vadd.f32 0.0, %v5701
      %v5703 = vpop.f32.mrf.mxu0
      %v5704 = vadd.f32 0.0, %v5703
      %5705 = vmatmul.bf16.gmra.mxu0 %v5621
      %v5706 = vpop.f32.mrf.mxu0
      %v5707 = vadd.f32 0.0, %v5706
      %v5708 = vpop.f32.mrf.mxu0
      %v5709 = vadd.f32 0.0, %v5708
      %5710 = vmatmul.bf16.gmra.mxu0 %v5624
      %v5711 = vpop.f32.mrf.mxu0
      %v5712 = vadd.f32 0.0, %v5711
      %v5713 = vpop.f32.mrf.mxu0
      %v5714 = vadd.f32 0.0, %v5713
      %5715 = vmatmul.bf16.gmra.mxu0 %v5627
      %v5716 = vpop.f32.mrf.mxu0
      %v5717 = vadd.f32 0.0, %v5716
      %v5718 = vpop.f32.mrf.mxu0
      %v5719 = vadd.f32 0.0, %v5718
      %5720 = vmatmul.bf16.gmra.mxu0 %v5630
      %v5721 = vpop.f32.mrf.mxu0
      %v5722 = vadd.f32 0.0, %v5721
      %v5723 = vpop.f32.mrf.mxu0
      %v5724 = vadd.f32 0.0, %v5723
      %5725 = vmatmul.bf16.gmra.mxu0 %v5633
      %v5726 = vpop.f32.mrf.mxu0
      %v5727 = vadd.f32 0.0, %v5726
      %v5728 = vpop.f32.mrf.mxu0
      %v5729 = vadd.f32 0.0, %v5728
      %5730 = vmatmul.bf16.gmra.mxu0 %v5636
      %v5731 = vpop.f32.mrf.mxu0
      %v5732 = vadd.f32 0.0, %v5731
      %v5733 = vpop.f32.mrf.mxu0
      %v5734 = vadd.f32 0.0, %v5733
      %5735 = vmatmul.bf16.gmra.mxu0 %v5639
      %v5736 = vpop.f32.mrf.mxu0
      %v5737 = vadd.f32 0.0, %v5736
      %v5738 = vpop.f32.mrf.mxu0
      %v5739 = vadd.f32 0.0, %v5738
      %5740 = vmatmul.bf16.gmra.mxu0 %v5642
      %v5741 = vpop.f32.mrf.mxu0
      %v5742 = vadd.f32 0.0, %v5741
      %v5743 = vpop.f32.mrf.mxu0
      %v5744 = vadd.f32 0.0, %v5743
      %5745 = vdwg.mxu0
      %v5746 = vld [vmem:[#allocation4] sm:$0xff]
      %v5747 = vld [vmem:[#allocation4 + $0x8] sm:$0xff]
      %v5748 = vld [vmem:[#allocation4 + $0x10] sm:$0xff]
      %v5749 = vld [vmem:[#allocation4 + $0x18] sm:$0xff]
      %v5750 = vld [vmem:[#allocation4 + $0x20] sm:$0xff]
      %v5751 = vld [vmem:[#allocation4 + $0x28] sm:$0xff]
      %v5752 = vld [vmem:[#allocation4 + $0x30] sm:$0xff]
      %v5753 = vld [vmem:[#allocation4 + $0x38] sm:$0xff]
      %v5754 = vld [vmem:[#allocation4 + $0x40] sm:$0xff]
      %v5755 = vld [vmem:[#allocation4 + $0x48] sm:$0xff]
      %v5756 = vld [vmem:[#allocation4 + $0x50] sm:$0xff]
      %v5757 = vld [vmem:[#allocation4 + $0x58] sm:$0xff]
      %v5758 = vld [vmem:[#allocation4 + $0x60] sm:$0xff]
      %v5759 = vld [vmem:[#allocation4 + $0x68] sm:$0xff]
      %v5760 = vld [vmem:[#allocation4 + $0x70] sm:$0xff]
      %v5761 = vld [vmem:[#allocation4 + $0x78] sm:$0xff]
      %v5762 = vld [vmem:[#allocation4 + $0x80] sm:$0xff]
      %v5763 = vld [vmem:[#allocation4 + $0x88] sm:$0xff]
      %v5764 = vld [vmem:[#allocation4 + $0x90] sm:$0xff]
      %v5765 = vld [vmem:[#allocation4 + $0x98] sm:$0xff]
      %v5766 = vld [vmem:[#allocation4 + $0xa0] sm:$0xff]
      %v5767 = vld [vmem:[#allocation4 + $0xa8] sm:$0xff]
      %v5768 = vld [vmem:[#allocation4 + $0xb0] sm:$0xff]
      %v5769 = vld [vmem:[#allocation4 + $0xb8] sm:$0xff]
      %v5770 = vld [vmem:[#allocation4 + $0xc0] sm:$0xff]
      %v5771 = vld [vmem:[#allocation4 + $0xc8] sm:$0xff]
      %v5772 = vld [vmem:[#allocation4 + $0xd0] sm:$0xff]
      %v5773 = vld [vmem:[#allocation4 + $0xd8] sm:$0xff]
      %v5774 = vld [vmem:[#allocation4 + $0xe0] sm:$0xff]
      %v5775 = vld [vmem:[#allocation4 + $0xe8] sm:$0xff]
      %v5776 = vld [vmem:[#allocation4 + $0xf0] sm:$0xff]
      %v5777 = vld [vmem:[#allocation4 + $0xf8] sm:$0xff]
      %v5778 = vld [vmem:[#allocation4 + $0x100] sm:$0xff]
      %v5779 = vld [vmem:[#allocation4 + $0x108] sm:$0xff]
      %v5780 = vld [vmem:[#allocation4 + $0x110] sm:$0xff]
      %v5781 = vld [vmem:[#allocation4 + $0x118] sm:$0xff]
      %v5782 = vadd.f32 %v5746, %v5657
      %v5783 = vadd.f32 %v5747, %v5659
      %v5784 = vadd.f32 %v5748, %v5662
      %v5785 = vadd.f32 %v5749, %v5664
      %v5786 = vadd.f32 %v5750, %v5667
      %v5787 = vadd.f32 %v5751, %v5669
      %v5788 = vadd.f32 %v5752, %v5672
      %v5789 = vadd.f32 %v5753, %v5674
      %v5790 = vadd.f32 %v5754, %v5677
      %v5791 = vadd.f32 %v5755, %v5679
      %v5792 = vadd.f32 %v5756, %v5682
      %v5793 = vadd.f32 %v5757, %v5684
      %v5794 = vadd.f32 %v5758, %v5687
      %v5795 = vadd.f32 %v5759, %v5689
      %v5796 = vadd.f32 %v5760, %v5692
      %v5797 = vadd.f32 %v5761, %v5694
      %v5798 = vadd.f32 %v5762, %v5697
      %v5799 = vadd.f32 %v5763, %v5699
      %v5800 = vadd.f32 %v5764, %v5702
      %v5801 = vadd.f32 %v5765, %v5704
      %v5802 = vadd.f32 %v5766, %v5707
      %v5803 = vadd.f32 %v5767, %v5709
      %v5804 = vadd.f32 %v5768, %v5712
      %v5805 = vadd.f32 %v5769, %v5714
      %v5806 = vadd.f32 %v5770, %v5717
      %v5807 = vadd.f32 %v5771, %v5719
      %v5808 = vadd.f32 %v5772, %v5722
      %v5809 = vadd.f32 %v5773, %v5724
      %v5810 = vadd.f32 %v5774, %v5727
      %v5811 = vadd.f32 %v5775, %v5729
      %v5812 = vadd.f32 %v5776, %v5732
      %v5813 = vadd.f32 %v5777, %v5734
      %v5814 = vadd.f32 %v5778, %v5737
      %v5815 = vadd.f32 %v5779, %v5739
      %v5816 = vadd.f32 %v5780, %v5742
      %v5817 = vadd.f32 %v5781, %v5744
      %5818 = vst.msk [vmem:[#allocation4] sm:$0xff] %vm389, %v5782
      %5819 = vst.msk [vmem:[#allocation4 + $0x8] sm:$0xff] %vm389, %v5783
      %5820 = vst.msk [vmem:[#allocation4 + $0x10] sm:$0xff] %vm389, %v5784
      %5821 = vst.msk [vmem:[#allocation4 + $0x18] sm:$0xff] %vm389, %v5785
      %5822 = vst.msk [vmem:[#allocation4 + $0x20] sm:$0xff] %vm389, %v5786
      %5823 = vst.msk [vmem:[#allocation4 + $0x28] sm:$0xff] %vm389, %v5787
      %5824 = vst.msk [vmem:[#allocation4 + $0x30] sm:$0xff] %vm389, %v5788
      %5825 = vst.msk [vmem:[#allocation4 + $0x38] sm:$0xff] %vm389, %v5789
      %5826 = vst.msk [vmem:[#allocation4 + $0x40] sm:$0xff] %vm389, %v5790
      %5827 = vst.msk [vmem:[#allocation4 + $0x48] sm:$0xff] %vm389, %v5791
      %5828 = vst.msk [vmem:[#allocation4 + $0x50] sm:$0xff] %vm389, %v5792
      %5829 = vst.msk [vmem:[#allocation4 + $0x58] sm:$0xff] %vm389, %v5793
      %5830 = vst.msk [vmem:[#allocation4 + $0x60] sm:$0xff] %vm389, %v5794
      %5831 = vst.msk [vmem:[#allocation4 + $0x68] sm:$0xff] %vm389, %v5795
      %5832 = vst.msk [vmem:[#allocation4 + $0x70] sm:$0xff] %vm389, %v5796
      %5833 = vst.msk [vmem:[#allocation4 + $0x78] sm:$0xff] %vm389, %v5797
      %5834 = vst.msk [vmem:[#allocation4 + $0x80] sm:$0xff] %vm389, %v5798
      %5835 = vst.msk [vmem:[#allocation4 + $0x88] sm:$0xff] %vm389, %v5799
      %5836 = vst.msk [vmem:[#allocation4 + $0x90] sm:$0xff] %vm389, %v5800
      %5837 = vst.msk [vmem:[#allocation4 + $0x98] sm:$0xff] %vm389, %v5801
      %5838 = vst.msk [vmem:[#allocation4 + $0xa0] sm:$0xff] %vm389, %v5802
      %5839 = vst.msk [vmem:[#allocation4 + $0xa8] sm:$0xff] %vm389, %v5803
      %5840 = vst.msk [vmem:[#allocation4 + $0xb0] sm:$0xff] %vm389, %v5804
      %5841 = vst.msk [vmem:[#allocation4 + $0xb8] sm:$0xff] %vm389, %v5805
      %5842 = vst.msk [vmem:[#allocation4 + $0xc0] sm:$0xff] %vm389, %v5806
      %5843 = vst.msk [vmem:[#allocation4 + $0xc8] sm:$0xff] %vm389, %v5807
      %5844 = vst.msk [vmem:[#allocation4 + $0xd0] sm:$0xff] %vm389, %v5808
      %5845 = vst.msk [vmem:[#allocation4 + $0xd8] sm:$0xff] %vm389, %v5809
      %5846 = vst.msk [vmem:[#allocation4 + $0xe0] sm:$0xff] %vm389, %v5810
      %5847 = vst.msk [vmem:[#allocation4 + $0xe8] sm:$0xff] %vm389, %v5811
      %5848 = vst.msk [vmem:[#allocation4 + $0xf0] sm:$0xff] %vm389, %v5812
      %5849 = vst.msk [vmem:[#allocation4 + $0xf8] sm:$0xff] %vm389, %v5813
      %5850 = vst.msk [vmem:[#allocation4 + $0x100] sm:$0xff] %vm389, %v5814
      %5851 = vst.msk [vmem:[#allocation4 + $0x108] sm:$0xff] %vm389, %v5815
      %5852 = vst.msk [vmem:[#allocation4 + $0x110] sm:$0xff] %vm389, %v5816
      %5853 = vst.msk [vmem:[#allocation4 + $0x118] sm:$0xff] %vm389, %v5817
      %v5854 = vld [vmem:[#allocation3 + $0x25] sm:$0xff]
      %v5855 = vld [vmem:[#allocation3 + $0x2d] sm:$0xff]
      %v5856 = vld [vmem:[#allocation3 + $0x35] sm:$0xff]
      %v5857 = vld [vmem:[#allocation3 + $0x3d] sm:$0xff]
      %v5858 = vld [vmem:[#allocation3 + $0x45] sm:$0xff]
      %v5859 = vld [vmem:[#allocation3 + $0x4d] sm:$0xff]
      %v5860 = vld [vmem:[#allocation3 + $0x55] sm:$0xff]
      %v5861 = vld [vmem:[#allocation3 + $0x5d] sm:$0xff]
      %v5862 = vld [vmem:[#allocation3 + $0x65] sm:$0xff]
      %v5863 = vld [vmem:[#allocation3 + $0x6d] sm:$0xff]
      %v5864 = vld [vmem:[#allocation3 + $0x75] sm:$0xff]
      %v5865 = vld [vmem:[#allocation3 + $0x7d] sm:$0xff]
      %v5866 = vld [vmem:[#allocation3 + $0x85] sm:$0xff]
      %v5867 = vld [vmem:[#allocation3 + $0x8d] sm:$0xff]
      %v5868 = vld [vmem:[#allocation3 + $0x95] sm:$0xff]
      %v5869 = vld [vmem:[#allocation3 + $0x9d] sm:$0xff]
      %v5870 = vld [vmem:[#allocation3 + $0xa5] sm:$0xff]
      %v5871 = vld [vmem:[#allocation3 + $0xad] sm:$0xff]
      %v5872 = vld [vmem:[#allocation3 + $0xb5] sm:$0xff]
      %v5873 = vld [vmem:[#allocation3 + $0xbd] sm:$0xff]
      %v5874 = vld [vmem:[#allocation3 + $0xc5] sm:$0xff]
      %v5875 = vld [vmem:[#allocation3 + $0xcd] sm:$0xff]
      %v5876 = vld [vmem:[#allocation3 + $0xd5] sm:$0xff]
      %v5877 = vld [vmem:[#allocation3 + $0xdd] sm:$0xff]
      %v5878 = vld [vmem:[#allocation3 + $0xe5] sm:$0xff]
      %v5879 = vld [vmem:[#allocation3 + $0xed] sm:$0xff]
      %v5880 = vld [vmem:[#allocation3 + $0xf5] sm:$0xff]
      %v5881 = vld [vmem:[#allocation3 + $0xfd] sm:$0xff]
      %v5882 = vld [vmem:[#allocation3 + $0x105] sm:$0xff]
      %v5883 = vld [vmem:[#allocation3 + $0x10d] sm:$0xff]
      %v5884 = vld [vmem:[#allocation3 + $0x115] sm:$0xff]
      %v5885 = vld [vmem:[#allocation3 + $0x11d] sm:$0xff]
      %v5886 = vld [vmem:[#allocation3 + $0x125] sm:$0xff]
      %v5887 = vld [vmem:[#allocation3 + $0x12d] sm:$0xff]
      %v5888 = vld [vmem:[#allocation3 + $0x135] sm:$0xff]
      %v5889 = vld [vmem:[#allocation3 + $0x13d] sm:$0xff]
      %v5890 = vpack.c.bf16 %v5855, %v5854
      %v5891 = vpack.c.bf16 %v5857, %v5856
      %v5892 = vpack.c.bf16 %v5859, %v5858
      %v5893 = vpack.c.bf16 %v5861, %v5860
      %v5894 = vpack.c.bf16 %v5863, %v5862
      %v5895 = vpack.c.bf16 %v5865, %v5864
      %v5896 = vpack.c.bf16 %v5867, %v5866
      %v5897 = vpack.c.bf16 %v5869, %v5868
      %v5898 = vpack.c.bf16 %v5871, %v5870
      %v5899 = vpack.c.bf16 %v5873, %v5872
      %v5900 = vpack.c.bf16 %v5875, %v5874
      %v5901 = vpack.c.bf16 %v5877, %v5876
      %v5902 = vpack.c.bf16 %v5879, %v5878
      %v5903 = vpack.c.bf16 %v5881, %v5880
      %v5904 = vpack.c.bf16 %v5883, %v5882
      %v5905 = vpack.c.bf16 %v5885, %v5884
      %v5906 = vpack.c.bf16 %v5887, %v5886
      %v5907 = vpack.c.bf16 %v5889, %v5888
      %s5908 = scalar_lea.vmem %s2, 28
      %v5909 = vld [vmem:[%s5908] sm:$0xf]
      %v5911 = vsel %vm389, %v5890, 0
      %v5914 = vsel %vm389, %v5891, 0
      %v5917 = vsel %vm389, %v5892, 0
      %v5920 = vsel %vm389, %v5893, 0
      %v5923 = vsel %vm389, %v5894, 0
      %v5926 = vsel %vm389, %v5895, 0
      %v5929 = vsel %vm389, %v5896, 0
      %v5932 = vsel %vm389, %v5897, 0
      %v5935 = vsel %vm389, %v5898, 0
      %v5938 = vsel %vm389, %v5899, 0
      %v5941 = vsel %vm389, %v5900, 0
      %v5944 = vsel %vm389, %v5901, 0
      %v5947 = vsel %vm389, %v5902, 0
      %v5950 = vsel %vm389, %v5903, 0
      %v5953 = vsel %vm389, %v5904, 0
      %v5956 = vsel %vm389, %v5905, 0
      %v5959 = vsel %vm389, %v5906, 0
      %v5962 = vsel %vm389, %v5907, 0
      %v5965 = vsel %vm548, %v5909, 0
      %5967 = vmatpush.bf16.msra.mxu0 0
      %5968 = vmatpush.bf16.msra.mxu0 0
      %5969 = vmatpush.bf16.msra.mxu0 0
      %5970 = vmatpush.bf16.msra.mxu0 0
      %5971 = vmatpush.bf16.msra.mxu0 0
      %5972 = vmatpush.bf16.msra.mxu0 0
      %5973 = vmatpush.bf16.msra.mxu0 0
      %5974 = vmatpush.bf16.msra.mxu0 %v5965
      %5975 = vmatmul.bf16.gmra.mxu0 %v5911
      %v5976 = vpop.f32.mrf.mxu0
      %v5977 = vadd.f32 0.0, %v5976
      %v5978 = vpop.f32.mrf.mxu0
      %v5979 = vadd.f32 0.0, %v5978
      %5980 = vmatmul.bf16.gmra.mxu0 %v5914
      %v5981 = vpop.f32.mrf.mxu0
      %v5982 = vadd.f32 0.0, %v5981
      %v5983 = vpop.f32.mrf.mxu0
      %v5984 = vadd.f32 0.0, %v5983
      %5985 = vmatmul.bf16.gmra.mxu0 %v5917
      %v5986 = vpop.f32.mrf.mxu0
      %v5987 = vadd.f32 0.0, %v5986
      %v5988 = vpop.f32.mrf.mxu0
      %v5989 = vadd.f32 0.0, %v5988
      %5990 = vmatmul.bf16.gmra.mxu0 %v5920
      %v5991 = vpop.f32.mrf.mxu0
      %v5992 = vadd.f32 0.0, %v5991
      %v5993 = vpop.f32.mrf.mxu0
      %v5994 = vadd.f32 0.0, %v5993
      %5995 = vmatmul.bf16.gmra.mxu0 %v5923
      %v5996 = vpop.f32.mrf.mxu0
      %v5997 = vadd.f32 0.0, %v5996
      %v5998 = vpop.f32.mrf.mxu0
      %v5999 = vadd.f32 0.0, %v5998
      %6000 = vmatmul.bf16.gmra.mxu0 %v5926
      %v6001 = vpop.f32.mrf.mxu0
      %v6002 = vadd.f32 0.0, %v6001
      %v6003 = vpop.f32.mrf.mxu0
      %v6004 = vadd.f32 0.0, %v6003
      %6005 = vmatmul.bf16.gmra.mxu0 %v5929
      %v6006 = vpop.f32.mrf.mxu0
      %v6007 = vadd.f32 0.0, %v6006
      %v6008 = vpop.f32.mrf.mxu0
      %v6009 = vadd.f32 0.0, %v6008
      %6010 = vmatmul.bf16.gmra.mxu0 %v5932
      %v6011 = vpop.f32.mrf.mxu0
      %v6012 = vadd.f32 0.0, %v6011
      %v6013 = vpop.f32.mrf.mxu0
      %v6014 = vadd.f32 0.0, %v6013
      %6015 = vmatmul.bf16.gmra.mxu0 %v5935
      %v6016 = vpop.f32.mrf.mxu0
      %v6017 = vadd.f32 0.0, %v6016
      %v6018 = vpop.f32.mrf.mxu0
      %v6019 = vadd.f32 0.0, %v6018
      %6020 = vmatmul.bf16.gmra.mxu0 %v5938
      %v6021 = vpop.f32.mrf.mxu0
      %v6022 = vadd.f32 0.0, %v6021
      %v6023 = vpop.f32.mrf.mxu0
      %v6024 = vadd.f32 0.0, %v6023
      %6025 = vmatmul.bf16.gmra.mxu0 %v5941
      %v6026 = vpop.f32.mrf.mxu0
      %v6027 = vadd.f32 0.0, %v6026
      %v6028 = vpop.f32.mrf.mxu0
      %v6029 = vadd.f32 0.0, %v6028
      %6030 = vmatmul.bf16.gmra.mxu0 %v5944
      %v6031 = vpop.f32.mrf.mxu0
      %v6032 = vadd.f32 0.0, %v6031
      %v6033 = vpop.f32.mrf.mxu0
      %v6034 = vadd.f32 0.0, %v6033
      %6035 = vmatmul.bf16.gmra.mxu0 %v5947
      %v6036 = vpop.f32.mrf.mxu0
      %v6037 = vadd.f32 0.0, %v6036
      %v6038 = vpop.f32.mrf.mxu0
      %v6039 = vadd.f32 0.0, %v6038
      %6040 = vmatmul.bf16.gmra.mxu0 %v5950
      %v6041 = vpop.f32.mrf.mxu0
      %v6042 = vadd.f32 0.0, %v6041
      %v6043 = vpop.f32.mrf.mxu0
      %v6044 = vadd.f32 0.0, %v6043
      %6045 = vmatmul.bf16.gmra.mxu0 %v5953
      %v6046 = vpop.f32.mrf.mxu0
      %v6047 = vadd.f32 0.0, %v6046
      %v6048 = vpop.f32.mrf.mxu0
      %v6049 = vadd.f32 0.0, %v6048
      %6050 = vmatmul.bf16.gmra.mxu0 %v5956
      %v6051 = vpop.f32.mrf.mxu0
      %v6052 = vadd.f32 0.0, %v6051
      %v6053 = vpop.f32.mrf.mxu0
      %v6054 = vadd.f32 0.0, %v6053
      %6055 = vmatmul.bf16.gmra.mxu0 %v5959
      %v6056 = vpop.f32.mrf.mxu0
      %v6057 = vadd.f32 0.0, %v6056
      %v6058 = vpop.f32.mrf.mxu0
      %v6059 = vadd.f32 0.0, %v6058
      %6060 = vmatmul.bf16.gmra.mxu0 %v5962
      %v6061 = vpop.f32.mrf.mxu0
      %v6062 = vadd.f32 0.0, %v6061
      %v6063 = vpop.f32.mrf.mxu0
      %v6064 = vadd.f32 0.0, %v6063
      %6065 = vdwg.mxu0
      %v6066 = vld [vmem:[#allocation4] sm:$0xff]
      %v6067 = vld [vmem:[#allocation4 + $0x8] sm:$0xff]
      %v6068 = vld [vmem:[#allocation4 + $0x10] sm:$0xff]
      %v6069 = vld [vmem:[#allocation4 + $0x18] sm:$0xff]
      %v6070 = vld [vmem:[#allocation4 + $0x20] sm:$0xff]
      %v6071 = vld [vmem:[#allocation4 + $0x28] sm:$0xff]
      %v6072 = vld [vmem:[#allocation4 + $0x30] sm:$0xff]
      %v6073 = vld [vmem:[#allocation4 + $0x38] sm:$0xff]
      %v6074 = vld [vmem:[#allocation4 + $0x40] sm:$0xff]
      %v6075 = vld [vmem:[#allocation4 + $0x48] sm:$0xff]
      %v6076 = vld [vmem:[#allocation4 + $0x50] sm:$0xff]
      %v6077 = vld [vmem:[#allocation4 + $0x58] sm:$0xff]
      %v6078 = vld [vmem:[#allocation4 + $0x60] sm:$0xff]
      %v6079 = vld [vmem:[#allocation4 + $0x68] sm:$0xff]
      %v6080 = vld [vmem:[#allocation4 + $0x70] sm:$0xff]
      %v6081 = vld [vmem:[#allocation4 + $0x78] sm:$0xff]
      %v6082 = vld [vmem:[#allocation4 + $0x80] sm:$0xff]
      %v6083 = vld [vmem:[#allocation4 + $0x88] sm:$0xff]
      %v6084 = vld [vmem:[#allocation4 + $0x90] sm:$0xff]
      %v6085 = vld [vmem:[#allocation4 + $0x98] sm:$0xff]
      %v6086 = vld [vmem:[#allocation4 + $0xa0] sm:$0xff]
      %v6087 = vld [vmem:[#allocation4 + $0xa8] sm:$0xff]
      %v6088 = vld [vmem:[#allocation4 + $0xb0] sm:$0xff]
      %v6089 = vld [vmem:[#allocation4 + $0xb8] sm:$0xff]
      %v6090 = vld [vmem:[#allocation4 + $0xc0] sm:$0xff]
      %v6091 = vld [vmem:[#allocation4 + $0xc8] sm:$0xff]
      %v6092 = vld [vmem:[#allocation4 + $0xd0] sm:$0xff]
      %v6093 = vld [vmem:[#allocation4 + $0xd8] sm:$0xff]
      %v6094 = vld [vmem:[#allocation4 + $0xe0] sm:$0xff]
      %v6095 = vld [vmem:[#allocation4 + $0xe8] sm:$0xff]
      %v6096 = vld [vmem:[#allocation4 + $0xf0] sm:$0xff]
      %v6097 = vld [vmem:[#allocation4 + $0xf8] sm:$0xff]
      %v6098 = vld [vmem:[#allocation4 + $0x100] sm:$0xff]
      %v6099 = vld [vmem:[#allocation4 + $0x108] sm:$0xff]
      %v6100 = vld [vmem:[#allocation4 + $0x110] sm:$0xff]
      %v6101 = vld [vmem:[#allocation4 + $0x118] sm:$0xff]
      %v6102 = vadd.f32 %v6066, %v5977
      %v6103 = vadd.f32 %v6067, %v5979
      %v6104 = vadd.f32 %v6068, %v5982
      %v6105 = vadd.f32 %v6069, %v5984
      %v6106 = vadd.f32 %v6070, %v5987
      %v6107 = vadd.f32 %v6071, %v5989
      %v6108 = vadd.f32 %v6072, %v5992
      %v6109 = vadd.f32 %v6073, %v5994
      %v6110 = vadd.f32 %v6074, %v5997
      %v6111 = vadd.f32 %v6075, %v5999
      %v6112 = vadd.f32 %v6076, %v6002
      %v6113 = vadd.f32 %v6077, %v6004
      %v6114 = vadd.f32 %v6078, %v6007
      %v6115 = vadd.f32 %v6079, %v6009
      %v6116 = vadd.f32 %v6080, %v6012
      %v6117 = vadd.f32 %v6081, %v6014
      %v6118 = vadd.f32 %v6082, %v6017
      %v6119 = vadd.f32 %v6083, %v6019
      %v6120 = vadd.f32 %v6084, %v6022
      %v6121 = vadd.f32 %v6085, %v6024
      %v6122 = vadd.f32 %v6086, %v6027
      %v6123 = vadd.f32 %v6087, %v6029
      %v6124 = vadd.f32 %v6088, %v6032
      %v6125 = vadd.f32 %v6089, %v6034
      %v6126 = vadd.f32 %v6090, %v6037
      %v6127 = vadd.f32 %v6091, %v6039
      %v6128 = vadd.f32 %v6092, %v6042
      %v6129 = vadd.f32 %v6093, %v6044
      %v6130 = vadd.f32 %v6094, %v6047
      %v6131 = vadd.f32 %v6095, %v6049
      %v6132 = vadd.f32 %v6096, %v6052
      %v6133 = vadd.f32 %v6097, %v6054
      %v6134 = vadd.f32 %v6098, %v6057
      %v6135 = vadd.f32 %v6099, %v6059
      %v6136 = vadd.f32 %v6100, %v6062
      %v6137 = vadd.f32 %v6101, %v6064
      %6138 = vst.msk [vmem:[#allocation4] sm:$0xff] %vm389, %v6102
      %6139 = vst.msk [vmem:[#allocation4 + $0x8] sm:$0xff] %vm389, %v6103
      %6140 = vst.msk [vmem:[#allocation4 + $0x10] sm:$0xff] %vm389, %v6104
      %6141 = vst.msk [vmem:[#allocation4 + $0x18] sm:$0xff] %vm389, %v6105
      %6142 = vst.msk [vmem:[#allocation4 + $0x20] sm:$0xff] %vm389, %v6106
      %6143 = vst.msk [vmem:[#allocation4 + $0x28] sm:$0xff] %vm389, %v6107
      %6144 = vst.msk [vmem:[#allocation4 + $0x30] sm:$0xff] %vm389, %v6108
      %6145 = vst.msk [vmem:[#allocation4 + $0x38] sm:$0xff] %vm389, %v6109
      %6146 = vst.msk [vmem:[#allocation4 + $0x40] sm:$0xff] %vm389, %v6110
      %6147 = vst.msk [vmem:[#allocation4 + $0x48] sm:$0xff] %vm389, %v6111
      %6148 = vst.msk [vmem:[#allocation4 + $0x50] sm:$0xff] %vm389, %v6112
      %6149 = vst.msk [vmem:[#allocation4 + $0x58] sm:$0xff] %vm389, %v6113
      %6150 = vst.msk [vmem:[#allocation4 + $0x60] sm:$0xff] %vm389, %v6114
      %6151 = vst.msk [vmem:[#allocation4 + $0x68] sm:$0xff] %vm389, %v6115
      %6152 = vst.msk [vmem:[#allocation4 + $0x70] sm:$0xff] %vm389, %v6116
      %6153 = vst.msk [vmem:[#allocation4 + $0x78] sm:$0xff] %vm389, %v6117
      %6154 = vst.msk [vmem:[#allocation4 + $0x80] sm:$0xff] %vm389, %v6118
      %6155 = vst.msk [vmem:[#allocation4 + $0x88] sm:$0xff] %vm389, %v6119
      %6156 = vst.msk [vmem:[#allocation4 + $0x90] sm:$0xff] %vm389, %v6120
      %6157 = vst.msk [vmem:[#allocation4 + $0x98] sm:$0xff] %vm389, %v6121
      %6158 = vst.msk [vmem:[#allocation4 + $0xa0] sm:$0xff] %vm389, %v6122
      %6159 = vst.msk [vmem:[#allocation4 + $0xa8] sm:$0xff] %vm389, %v6123
      %6160 = vst.msk [vmem:[#allocation4 + $0xb0] sm:$0xff] %vm389, %v6124
      %6161 = vst.msk [vmem:[#allocation4 + $0xb8] sm:$0xff] %vm389, %v6125
      %6162 = vst.msk [vmem:[#allocation4 + $0xc0] sm:$0xff] %vm389, %v6126
      %6163 = vst.msk [vmem:[#allocation4 + $0xc8] sm:$0xff] %vm389, %v6127
      %6164 = vst.msk [vmem:[#allocation4 + $0xd0] sm:$0xff] %vm389, %v6128
      %6165 = vst.msk [vmem:[#allocation4 + $0xd8] sm:$0xff] %vm389, %v6129
      %6166 = vst.msk [vmem:[#allocation4 + $0xe0] sm:$0xff] %vm389, %v6130
      %6167 = vst.msk [vmem:[#allocation4 + $0xe8] sm:$0xff] %vm389, %v6131
      %6168 = vst.msk [vmem:[#allocation4 + $0xf0] sm:$0xff] %vm389, %v6132
      %6169 = vst.msk [vmem:[#allocation4 + $0xf8] sm:$0xff] %vm389, %v6133
      %6170 = vst.msk [vmem:[#allocation4 + $0x100] sm:$0xff] %vm389, %v6134
      %6171 = vst.msk [vmem:[#allocation4 + $0x108] sm:$0xff] %vm389, %v6135
      %6172 = vst.msk [vmem:[#allocation4 + $0x110] sm:$0xff] %vm389, %v6136
      %6173 = vst.msk [vmem:[#allocation4 + $0x118] sm:$0xff] %vm389, %v6137
      %v6174 = vld [vmem:[#allocation3 + $0x26] sm:$0xff]
      %v6175 = vld [vmem:[#allocation3 + $0x2e] sm:$0xff]
      %v6176 = vld [vmem:[#allocation3 + $0x36] sm:$0xff]
      %v6177 = vld [vmem:[#allocation3 + $0x3e] sm:$0xff]
      %v6178 = vld [vmem:[#allocation3 + $0x46] sm:$0xff]
      %v6179 = vld [vmem:[#allocation3 + $0x4e] sm:$0xff]
      %v6180 = vld [vmem:[#allocation3 + $0x56] sm:$0xff]
      %v6181 = vld [vmem:[#allocation3 + $0x5e] sm:$0xff]
      %v6182 = vld [vmem:[#allocation3 + $0x66] sm:$0xff]
      %v6183 = vld [vmem:[#allocation3 + $0x6e] sm:$0xff]
      %v6184 = vld [vmem:[#allocation3 + $0x76] sm:$0xff]
      %v6185 = vld [vmem:[#allocation3 + $0x7e] sm:$0xff]
      %v6186 = vld [vmem:[#allocation3 + $0x86] sm:$0xff]
      %v6187 = vld [vmem:[#allocation3 + $0x8e] sm:$0xff]
      %v6188 = vld [vmem:[#allocation3 + $0x96] sm:$0xff]
      %v6189 = vld [vmem:[#allocation3 + $0x9e] sm:$0xff]
      %v6190 = vld [vmem:[#allocation3 + $0xa6] sm:$0xff]
      %v6191 = vld [vmem:[#allocation3 + $0xae] sm:$0xff]
      %v6192 = vld [vmem:[#allocation3 + $0xb6] sm:$0xff]
      %v6193 = vld [vmem:[#allocation3 + $0xbe] sm:$0xff]
      %v6194 = vld [vmem:[#allocation3 + $0xc6] sm:$0xff]
      %v6195 = vld [vmem:[#allocation3 + $0xce] sm:$0xff]
      %v6196 = vld [vmem:[#allocation3 + $0xd6] sm:$0xff]
      %v6197 = vld [vmem:[#allocation3 + $0xde] sm:$0xff]
      %v6198 = vld [vmem:[#allocation3 + $0xe6] sm:$0xff]
      %v6199 = vld [vmem:[#allocation3 + $0xee] sm:$0xff]
      %v6200 = vld [vmem:[#allocation3 + $0xf6] sm:$0xff]
      %v6201 = vld [vmem:[#allocation3 + $0xfe] sm:$0xff]
      %v6202 = vld [vmem:[#allocation3 + $0x106] sm:$0xff]
      %v6203 = vld [vmem:[#allocation3 + $0x10e] sm:$0xff]
      %v6204 = vld [vmem:[#allocation3 + $0x116] sm:$0xff]
      %v6205 = vld [vmem:[#allocation3 + $0x11e] sm:$0xff]
      %v6206 = vld [vmem:[#allocation3 + $0x126] sm:$0xff]
      %v6207 = vld [vmem:[#allocation3 + $0x12e] sm:$0xff]
      %v6208 = vld [vmem:[#allocation3 + $0x136] sm:$0xff]
      %v6209 = vld [vmem:[#allocation3 + $0x13e] sm:$0xff]
      %v6210 = vpack.c.bf16 %v6175, %v6174
      %v6211 = vpack.c.bf16 %v6177, %v6176
      %v6212 = vpack.c.bf16 %v6179, %v6178
      %v6213 = vpack.c.bf16 %v6181, %v6180
      %v6214 = vpack.c.bf16 %v6183, %v6182
      %v6215 = vpack.c.bf16 %v6185, %v6184
      %v6216 = vpack.c.bf16 %v6187, %v6186
      %v6217 = vpack.c.bf16 %v6189, %v6188
      %v6218 = vpack.c.bf16 %v6191, %v6190
      %v6219 = vpack.c.bf16 %v6193, %v6192
      %v6220 = vpack.c.bf16 %v6195, %v6194
      %v6221 = vpack.c.bf16 %v6197, %v6196
      %v6222 = vpack.c.bf16 %v6199, %v6198
      %v6223 = vpack.c.bf16 %v6201, %v6200
      %v6224 = vpack.c.bf16 %v6203, %v6202
      %v6225 = vpack.c.bf16 %v6205, %v6204
      %v6226 = vpack.c.bf16 %v6207, %v6206
      %v6227 = vpack.c.bf16 %v6209, %v6208
      %s6228 = scalar_lea.vmem %s2, 32
      %v6229 = vld [vmem:[%s6228] sm:$0xf]
      %v6231 = vsel %vm389, %v6210, 0
      %v6234 = vsel %vm389, %v6211, 0
      %v6237 = vsel %vm389, %v6212, 0
      %v6240 = vsel %vm389, %v6213, 0
      %v6243 = vsel %vm389, %v6214, 0
      %v6246 = vsel %vm389, %v6215, 0
      %v6249 = vsel %vm389, %v6216, 0
      %v6252 = vsel %vm389, %v6217, 0
      %v6255 = vsel %vm389, %v6218, 0
      %v6258 = vsel %vm389, %v6219, 0
      %v6261 = vsel %vm389, %v6220, 0
      %v6264 = vsel %vm389, %v6221, 0
      %v6267 = vsel %vm389, %v6222, 0
      %v6270 = vsel %vm389, %v6223, 0
      %v6273 = vsel %vm389, %v6224, 0
      %v6276 = vsel %vm389, %v6225, 0
      %v6279 = vsel %vm389, %v6226, 0
      %v6282 = vsel %vm389, %v6227, 0
      %v6285 = vsel %vm548, %v6229, 0
      %6287 = vmatpush.bf16.msra.mxu0 0
      %6288 = vmatpush.bf16.msra.mxu0 0
      %6289 = vmatpush.bf16.msra.mxu0 0
      %6290 = vmatpush.bf16.msra.mxu0 0
      %6291 = vmatpush.bf16.msra.mxu0 0
      %6292 = vmatpush.bf16.msra.mxu0 0
      %6293 = vmatpush.bf16.msra.mxu0 0
      %6294 = vmatpush.bf16.msra.mxu0 %v6285
      %6295 = vmatmul.bf16.gmra.mxu0 %v6231
      %v6296 = vpop.f32.mrf.mxu0
      %v6297 = vadd.f32 0.0, %v6296
      %v6298 = vpop.f32.mrf.mxu0
      %v6299 = vadd.f32 0.0, %v6298
      %6300 = vmatmul.bf16.gmra.mxu0 %v6234
      %v6301 = vpop.f32.mrf.mxu0
      %v6302 = vadd.f32 0.0, %v6301
      %v6303 = vpop.f32.mrf.mxu0
      %v6304 = vadd.f32 0.0, %v6303
      %6305 = vmatmul.bf16.gmra.mxu0 %v6237
      %v6306 = vpop.f32.mrf.mxu0
      %v6307 = vadd.f32 0.0, %v6306
      %v6308 = vpop.f32.mrf.mxu0
      %v6309 = vadd.f32 0.0, %v6308
      %6310 = vmatmul.bf16.gmra.mxu0 %v6240
      %v6311 = vpop.f32.mrf.mxu0
      %v6312 = vadd.f32 0.0, %v6311
      %v6313 = vpop.f32.mrf.mxu0
      %v6314 = vadd.f32 0.0, %v6313
      %6315 = vmatmul.bf16.gmra.mxu0 %v6243
      %v6316 = vpop.f32.mrf.mxu0
      %v6317 = vadd.f32 0.0, %v6316
      %v6318 = vpop.f32.mrf.mxu0
      %v6319 = vadd.f32 0.0, %v6318
      %6320 = vmatmul.bf16.gmra.mxu0 %v6246
      %v6321 = vpop.f32.mrf.mxu0
      %v6322 = vadd.f32 0.0, %v6321
      %v6323 = vpop.f32.mrf.mxu0
      %v6324 = vadd.f32 0.0, %v6323
      %6325 = vmatmul.bf16.gmra.mxu0 %v6249
      %v6326 = vpop.f32.mrf.mxu0
      %v6327 = vadd.f32 0.0, %v6326
      %v6328 = vpop.f32.mrf.mxu0
      %v6329 = vadd.f32 0.0, %v6328
      %6330 = vmatmul.bf16.gmra.mxu0 %v6252
      %v6331 = vpop.f32.mrf.mxu0
      %v6332 = vadd.f32 0.0, %v6331
      %v6333 = vpop.f32.mrf.mxu0
      %v6334 = vadd.f32 0.0, %v6333
      %6335 = vmatmul.bf16.gmra.mxu0 %v6255
      %v6336 = vpop.f32.mrf.mxu0
      %v6337 = vadd.f32 0.0, %v6336
      %v6338 = vpop.f32.mrf.mxu0
      %v6339 = vadd.f32 0.0, %v6338
      %6340 = vmatmul.bf16.gmra.mxu0 %v6258
      %v6341 = vpop.f32.mrf.mxu0
      %v6342 = vadd.f32 0.0, %v6341
      %v6343 = vpop.f32.mrf.mxu0
      %v6344 = vadd.f32 0.0, %v6343
      %6345 = vmatmul.bf16.gmra.mxu0 %v6261
      %v6346 = vpop.f32.mrf.mxu0
      %v6347 = vadd.f32 0.0, %v6346
      %v6348 = vpop.f32.mrf.mxu0
      %v6349 = vadd.f32 0.0, %v6348
      %6350 = vmatmul.bf16.gmra.mxu0 %v6264
      %v6351 = vpop.f32.mrf.mxu0
      %v6352 = vadd.f32 0.0, %v6351
      %v6353 = vpop.f32.mrf.mxu0
      %v6354 = vadd.f32 0.0, %v6353
      %6355 = vmatmul.bf16.gmra.mxu0 %v6267
      %v6356 = vpop.f32.mrf.mxu0
      %v6357 = vadd.f32 0.0, %v6356
      %v6358 = vpop.f32.mrf.mxu0
      %v6359 = vadd.f32 0.0, %v6358
      %6360 = vmatmul.bf16.gmra.mxu0 %v6270
      %v6361 = vpop.f32.mrf.mxu0
      %v6362 = vadd.f32 0.0, %v6361
      %v6363 = vpop.f32.mrf.mxu0
      %v6364 = vadd.f32 0.0, %v6363
      %6365 = vmatmul.bf16.gmra.mxu0 %v6273
      %v6366 = vpop.f32.mrf.mxu0
      %v6367 = vadd.f32 0.0, %v6366
      %v6368 = vpop.f32.mrf.mxu0
      %v6369 = vadd.f32 0.0, %v6368
      %6370 = vmatmul.bf16.gmra.mxu0 %v6276
      %v6371 = vpop.f32.mrf.mxu0
      %v6372 = vadd.f32 0.0, %v6371
      %v6373 = vpop.f32.mrf.mxu0
      %v6374 = vadd.f32 0.0, %v6373
      %6375 = vmatmul.bf16.gmra.mxu0 %v6279
      %v6376 = vpop.f32.mrf.mxu0
      %v6377 = vadd.f32 0.0, %v6376
      %v6378 = vpop.f32.mrf.mxu0
      %v6379 = vadd.f32 0.0, %v6378
      %6380 = vmatmul.bf16.gmra.mxu0 %v6282
      %v6381 = vpop.f32.mrf.mxu0
      %v6382 = vadd.f32 0.0, %v6381
      %v6383 = vpop.f32.mrf.mxu0
      %v6384 = vadd.f32 0.0, %v6383
      %6385 = vdwg.mxu0
      %v6386 = vld [vmem:[#allocation4] sm:$0xff]
      %v6387 = vld [vmem:[#allocation4 + $0x8] sm:$0xff]
      %v6388 = vld [vmem:[#allocation4 + $0x10] sm:$0xff]
      %v6389 = vld [vmem:[#allocation4 + $0x18] sm:$0xff]
      %v6390 = vld [vmem:[#allocation4 + $0x20] sm:$0xff]
      %v6391 = vld [vmem:[#allocation4 + $0x28] sm:$0xff]
      %v6392 = vld [vmem:[#allocation4 + $0x30] sm:$0xff]
      %v6393 = vld [vmem:[#allocation4 + $0x38] sm:$0xff]
      %v6394 = vld [vmem:[#allocation4 + $0x40] sm:$0xff]
      %v6395 = vld [vmem:[#allocation4 + $0x48] sm:$0xff]
      %v6396 = vld [vmem:[#allocation4 + $0x50] sm:$0xff]
      %v6397 = vld [vmem:[#allocation4 + $0x58] sm:$0xff]
      %v6398 = vld [vmem:[#allocation4 + $0x60] sm:$0xff]
      %v6399 = vld [vmem:[#allocation4 + $0x68] sm:$0xff]
      %v6400 = vld [vmem:[#allocation4 + $0x70] sm:$0xff]
      %v6401 = vld [vmem:[#allocation4 + $0x78] sm:$0xff]
      %v6402 = vld [vmem:[#allocation4 + $0x80] sm:$0xff]
      %v6403 = vld [vmem:[#allocation4 + $0x88] sm:$0xff]
      %v6404 = vld [vmem:[#allocation4 + $0x90] sm:$0xff]
      %v6405 = vld [vmem:[#allocation4 + $0x98] sm:$0xff]
      %v6406 = vld [vmem:[#allocation4 + $0xa0] sm:$0xff]
      %v6407 = vld [vmem:[#allocation4 + $0xa8] sm:$0xff]
      %v6408 = vld [vmem:[#allocation4 + $0xb0] sm:$0xff]
      %v6409 = vld [vmem:[#allocation4 + $0xb8] sm:$0xff]
      %v6410 = vld [vmem:[#allocation4 + $0xc0] sm:$0xff]
      %v6411 = vld [vmem:[#allocation4 + $0xc8] sm:$0xff]
      %v6412 = vld [vmem:[#allocation4 + $0xd0] sm:$0xff]
      %v6413 = vld [vmem:[#allocation4 + $0xd8] sm:$0xff]
      %v6414 = vld [vmem:[#allocation4 + $0xe0] sm:$0xff]
      %v6415 = vld [vmem:[#allocation4 + $0xe8] sm:$0xff]
      %v6416 = vld [vmem:[#allocation4 + $0xf0] sm:$0xff]
      %v6417 = vld [vmem:[#allocation4 + $0xf8] sm:$0xff]
      %v6418 = vld [vmem:[#allocation4 + $0x100] sm:$0xff]
      %v6419 = vld [vmem:[#allocation4 + $0x108] sm:$0xff]
      %v6420 = vld [vmem:[#allocation4 + $0x110] sm:$0xff]
      %v6421 = vld [vmem:[#allocation4 + $0x118] sm:$0xff]
      %v6422 = vadd.f32 %v6386, %v6297
      %v6423 = vadd.f32 %v6387, %v6299
      %v6424 = vadd.f32 %v6388, %v6302
      %v6425 = vadd.f32 %v6389, %v6304
      %v6426 = vadd.f32 %v6390, %v6307
      %v6427 = vadd.f32 %v6391, %v6309
      %v6428 = vadd.f32 %v6392, %v6312
      %v6429 = vadd.f32 %v6393, %v6314
      %v6430 = vadd.f32 %v6394, %v6317
      %v6431 = vadd.f32 %v6395, %v6319
      %v6432 = vadd.f32 %v6396, %v6322
      %v6433 = vadd.f32 %v6397, %v6324
      %v6434 = vadd.f32 %v6398, %v6327
      %v6435 = vadd.f32 %v6399, %v6329
      %v6436 = vadd.f32 %v6400, %v6332
      %v6437 = vadd.f32 %v6401, %v6334
      %v6438 = vadd.f32 %v6402, %v6337
      %v6439 = vadd.f32 %v6403, %v6339
      %v6440 = vadd.f32 %v6404, %v6342
      %v6441 = vadd.f32 %v6405, %v6344
      %v6442 = vadd.f32 %v6406, %v6347
      %v6443 = vadd.f32 %v6407, %v6349
      %v6444 = vadd.f32 %v6408, %v6352
      %v6445 = vadd.f32 %v6409, %v6354
      %v6446 = vadd.f32 %v6410, %v6357
      %v6447 = vadd.f32 %v6411, %v6359
      %v6448 = vadd.f32 %v6412, %v6362
      %v6449 = vadd.f32 %v6413, %v6364
      %v6450 = vadd.f32 %v6414, %v6367
      %v6451 = vadd.f32 %v6415, %v6369
      %v6452 = vadd.f32 %v6416, %v6372
      %v6453 = vadd.f32 %v6417, %v6374
      %v6454 = vadd.f32 %v6418, %v6377
      %v6455 = vadd.f32 %v6419, %v6379
      %v6456 = vadd.f32 %v6420, %v6382
      %v6457 = vadd.f32 %v6421, %v6384
      %6458 = vst.msk [vmem:[#allocation4] sm:$0xff] %vm389, %v6422
      %6459 = vst.msk [vmem:[#allocation4 + $0x8] sm:$0xff] %vm389, %v6423
      %6460 = vst.msk [vmem:[#allocation4 + $0x10] sm:$0xff] %vm389, %v6424
      %6461 = vst.msk [vmem:[#allocation4 + $0x18] sm:$0xff] %vm389, %v6425
      %6462 = vst.msk [vmem:[#allocation4 + $0x20] sm:$0xff] %vm389, %v6426
      %6463 = vst.msk [vmem:[#allocation4 + $0x28] sm:$0xff] %vm389, %v6427
      %6464 = vst.msk [vmem:[#allocation4 + $0x30] sm:$0xff] %vm389, %v6428
      %6465 = vst.msk [vmem:[#allocation4 + $0x38] sm:$0xff] %vm389, %v6429
      %6466 = vst.msk [vmem:[#allocation4 + $0x40] sm:$0xff] %vm389, %v6430
      %6467 = vst.msk [vmem:[#allocation4 + $0x48] sm:$0xff] %vm389, %v6431
      %6468 = vst.msk [vmem:[#allocation4 + $0x50] sm:$0xff] %vm389, %v6432
      %6469 = vst.msk [vmem:[#allocation4 + $0x58] sm:$0xff] %vm389, %v6433
      %6470 = vst.msk [vmem:[#allocation4 + $0x60] sm:$0xff] %vm389, %v6434
      %6471 = vst.msk [vmem:[#allocation4 + $0x68] sm:$0xff] %vm389, %v6435
      %6472 = vst.msk [vmem:[#allocation4 + $0x70] sm:$0xff] %vm389, %v6436
      %6473 = vst.msk [vmem:[#allocation4 + $0x78] sm:$0xff] %vm389, %v6437
      %6474 = vst.msk [vmem:[#allocation4 + $0x80] sm:$0xff] %vm389, %v6438
      %6475 = vst.msk [vmem:[#allocation4 + $0x88] sm:$0xff] %vm389, %v6439
      %6476 = vst.msk [vmem:[#allocation4 + $0x90] sm:$0xff] %vm389, %v6440
      %6477 = vst.msk [vmem:[#allocation4 + $0x98] sm:$0xff] %vm389, %v6441
      %6478 = vst.msk [vmem:[#allocation4 + $0xa0] sm:$0xff] %vm389, %v6442
      %6479 = vst.msk [vmem:[#allocation4 + $0xa8] sm:$0xff] %vm389, %v6443
      %6480 = vst.msk [vmem:[#allocation4 + $0xb0] sm:$0xff] %vm389, %v6444
      %6481 = vst.msk [vmem:[#allocation4 + $0xb8] sm:$0xff] %vm389, %v6445
      %6482 = vst.msk [vmem:[#allocation4 + $0xc0] sm:$0xff] %vm389, %v6446
      %6483 = vst.msk [vmem:[#allocation4 + $0xc8] sm:$0xff] %vm389, %v6447
      %6484 = vst.msk [vmem:[#allocation4 + $0xd0] sm:$0xff] %vm389, %v6448
      %6485 = vst.msk [vmem:[#allocation4 + $0xd8] sm:$0xff] %vm389, %v6449
      %6486 = vst.msk [vmem:[#allocation4 + $0xe0] sm:$0xff] %vm389, %v6450
      %6487 = vst.msk [vmem:[#allocation4 + $0xe8] sm:$0xff] %vm389, %v6451
      %6488 = vst.msk [vmem:[#allocation4 + $0xf0] sm:$0xff] %vm389, %v6452
      %6489 = vst.msk [vmem:[#allocation4 + $0xf8] sm:$0xff] %vm389, %v6453
      %6490 = vst.msk [vmem:[#allocation4 + $0x100] sm:$0xff] %vm389, %v6454
      %6491 = vst.msk [vmem:[#allocation4 + $0x108] sm:$0xff] %vm389, %v6455
      %6492 = vst.msk [vmem:[#allocation4 + $0x110] sm:$0xff] %vm389, %v6456
      %6493 = vst.msk [vmem:[#allocation4 + $0x118] sm:$0xff] %vm389, %v6457
      %v6494 = vld [vmem:[#allocation2 + $0x13] sm:$0xff]
      %v6495 = vld [vmem:[#allocation2 + $0x1b] sm:$0xff]
      %v6496 = vld [vmem:[#allocation2 + $0x23] sm:$0xff]
      %v6497 = vld [vmem:[#allocation2 + $0x2b] sm:$0xff]
      %v6498 = vld [vmem:[#allocation2 + $0x33] sm:$0xff]
      %v6499 = vld [vmem:[#allocation2 + $0x3b] sm:$0xff]
      %v6500 = vld [vmem:[#allocation2 + $0x43] sm:$0xff]
      %v6501 = vld [vmem:[#allocation2 + $0x4b] sm:$0xff]
      %v6502 = vld [vmem:[#allocation2 + $0x53] sm:$0xff]
      %v6503 = vld [vmem:[#allocation2 + $0x5b] sm:$0xff]
      %v6504 = vld [vmem:[#allocation2 + $0x63] sm:$0xff]
      %v6505 = vld [vmem:[#allocation2 + $0x6b] sm:$0xff]
      %v6506 = vld [vmem:[#allocation2 + $0x73] sm:$0xff]
      %v6507 = vld [vmem:[#allocation2 + $0x7b] sm:$0xff]
      %v6508 = vld [vmem:[#allocation2 + $0x83] sm:$0xff]
      %v6509 = vld [vmem:[#allocation2 + $0x8b] sm:$0xff]
      %v6510 = vld [vmem:[#allocation2 + $0x93] sm:$0xff]
      %v6511 = vld [vmem:[#allocation2 + $0x9b] sm:$0xff]
      %v6512 = vld [vmem:[#allocation2 + $0xa3] sm:$0xff]
      %v6513 = vld [vmem:[#allocation2 + $0xab] sm:$0xff]
      %v6514 = vld [vmem:[#allocation2 + $0xb3] sm:$0xff]
      %v6515 = vld [vmem:[#allocation2 + $0xbb] sm:$0xff]
      %v6516 = vld [vmem:[#allocation2 + $0xc3] sm:$0xff]
      %v6517 = vld [vmem:[#allocation2 + $0xcb] sm:$0xff]
      %v6518 = vld [vmem:[#allocation2 + $0xd3] sm:$0xff]
      %v6519 = vld [vmem:[#allocation2 + $0xdb] sm:$0xff]
      %v6520 = vld [vmem:[#allocation2 + $0xe3] sm:$0xff]
      %v6521 = vld [vmem:[#allocation2 + $0xeb] sm:$0xff]
      %v6522 = vld [vmem:[#allocation2 + $0xf3] sm:$0xff]
      %v6523 = vld [vmem:[#allocation2 + $0xfb] sm:$0xff]
      %v6524 = vld [vmem:[#allocation2 + $0x103] sm:$0xff]
      %v6525 = vld [vmem:[#allocation2 + $0x10b] sm:$0xff]
      %v6526 = vld [vmem:[#allocation2 + $0x113] sm:$0xff]
      %v6527 = vld [vmem:[#allocation2 + $0x11b] sm:$0xff]
      %v6528 = vld [vmem:[#allocation2 + $0x123] sm:$0xff]
      %v6529 = vld [vmem:[#allocation2 + $0x12b] sm:$0xff]
      %v6530 = vld [vmem:[#allocation4] sm:$0xff]
      %v6531 = vld [vmem:[#allocation4 + $0x8] sm:$0xff]
      %v6532 = vld [vmem:[#allocation4 + $0x10] sm:$0xff]
      %v6533 = vld [vmem:[#allocation4 + $0x18] sm:$0xff]
      %v6534 = vld [vmem:[#allocation4 + $0x20] sm:$0xff]
      %v6535 = vld [vmem:[#allocation4 + $0x28] sm:$0xff]
      %v6536 = vld [vmem:[#allocation4 + $0x30] sm:$0xff]
      %v6537 = vld [vmem:[#allocation4 + $0x38] sm:$0xff]
      %v6538 = vld [vmem:[#allocation4 + $0x40] sm:$0xff]
      %v6539 = vld [vmem:[#allocation4 + $0x48] sm:$0xff]
      %v6540 = vld [vmem:[#allocation4 + $0x50] sm:$0xff]
      %v6541 = vld [vmem:[#allocation4 + $0x58] sm:$0xff]
      %v6542 = vld [vmem:[#allocation4 + $0x60] sm:$0xff]
      %v6543 = vld [vmem:[#allocation4 + $0x68] sm:$0xff]
      %v6544 = vld [vmem:[#allocation4 + $0x70] sm:$0xff]
      %v6545 = vld [vmem:[#allocation4 + $0x78] sm:$0xff]
      %v6546 = vld [vmem:[#allocation4 + $0x80] sm:$0xff]
      %v6547 = vld [vmem:[#allocation4 + $0x88] sm:$0xff]
      %v6548 = vld [vmem:[#allocation4 + $0x90] sm:$0xff]
      %v6549 = vld [vmem:[#allocation4 + $0x98] sm:$0xff]
      %v6550 = vld [vmem:[#allocation4 + $0xa0] sm:$0xff]
      %v6551 = vld [vmem:[#allocation4 + $0xa8] sm:$0xff]
      %v6552 = vld [vmem:[#allocation4 + $0xb0] sm:$0xff]
      %v6553 = vld [vmem:[#allocation4 + $0xb8] sm:$0xff]
      %v6554 = vld [vmem:[#allocation4 + $0xc0] sm:$0xff]
      %v6555 = vld [vmem:[#allocation4 + $0xc8] sm:$0xff]
      %v6556 = vld [vmem:[#allocation4 + $0xd0] sm:$0xff]
      %v6557 = vld [vmem:[#allocation4 + $0xd8] sm:$0xff]
      %v6558 = vld [vmem:[#allocation4 + $0xe0] sm:$0xff]
      %v6559 = vld [vmem:[#allocation4 + $0xe8] sm:$0xff]
      %v6560 = vld [vmem:[#allocation4 + $0xf0] sm:$0xff]
      %v6561 = vld [vmem:[#allocation4 + $0xf8] sm:$0xff]
      %v6562 = vld [vmem:[#allocation4 + $0x100] sm:$0xff]
      %v6563 = vld [vmem:[#allocation4 + $0x108] sm:$0xff]
      %v6564 = vld [vmem:[#allocation4 + $0x110] sm:$0xff]
      %v6565 = vld [vmem:[#allocation4 + $0x118] sm:$0xff]
      %v6566 = vld [vmem:[%s5] sm:$0x1]
      %v6568 = vperm.slane %v6566, 0
      %v6570 = vmul.f32 %v6530, %v6568
      %v6571 = vmul.f32 %v6531, %v6568
      %v6572 = vmul.f32 %v6532, %v6568
      %v6573 = vmul.f32 %v6533, %v6568
      %v6574 = vmul.f32 %v6534, %v6568
      %v6575 = vmul.f32 %v6535, %v6568
      %v6576 = vmul.f32 %v6536, %v6568
      %v6577 = vmul.f32 %v6537, %v6568
      %v6578 = vmul.f32 %v6538, %v6568
      %v6579 = vmul.f32 %v6539, %v6568
      %v6580 = vmul.f32 %v6540, %v6568
      %v6581 = vmul.f32 %v6541, %v6568
      %v6582 = vmul.f32 %v6542, %v6568
      %v6583 = vmul.f32 %v6543, %v6568
      %v6584 = vmul.f32 %v6544, %v6568
      %v6585 = vmul.f32 %v6545, %v6568
      %v6586 = vmul.f32 %v6546, %v6568
      %v6587 = vmul.f32 %v6547, %v6568
      %v6588 = vmul.f32 %v6548, %v6568
      %v6589 = vmul.f32 %v6549, %v6568
      %v6590 = vmul.f32 %v6550, %v6568
      %v6591 = vmul.f32 %v6551, %v6568
      %v6592 = vmul.f32 %v6552, %v6568
      %v6593 = vmul.f32 %v6553, %v6568
      %v6594 = vmul.f32 %v6554, %v6568
      %v6595 = vmul.f32 %v6555, %v6568
      %v6596 = vmul.f32 %v6556, %v6568
      %v6597 = vmul.f32 %v6557, %v6568
      %v6598 = vmul.f32 %v6558, %v6568
      %v6599 = vmul.f32 %v6559, %v6568
      %v6600 = vmul.f32 %v6560, %v6568
      %v6601 = vmul.f32 %v6561, %v6568
      %v6602 = vmul.f32 %v6562, %v6568
      %v6603 = vmul.f32 %v6563, %v6568
      %v6604 = vmul.f32 %v6564, %v6568
      %v6605 = vmul.f32 %v6565, %v6568
      %v6606 = vld [vmem:[%s6] sm:$0x1]
      %v6608 = vperm.slane %v6606, 0
      %v6610 = vadd.f32 %v6570, %v6608
      %v6611 = vadd.f32 %v6571, %v6608
      %v6612 = vadd.f32 %v6572, %v6608
      %v6613 = vadd.f32 %v6573, %v6608
      %v6614 = vadd.f32 %v6574, %v6608
      %v6615 = vadd.f32 %v6575, %v6608
      %v6616 = vadd.f32 %v6576, %v6608
      %v6617 = vadd.f32 %v6577, %v6608
      %v6618 = vadd.f32 %v6578, %v6608
      %v6619 = vadd.f32 %v6579, %v6608
      %v6620 = vadd.f32 %v6580, %v6608
      %v6621 = vadd.f32 %v6581, %v6608
      %v6622 = vadd.f32 %v6582, %v6608
      %v6623 = vadd.f32 %v6583, %v6608
      %v6624 = vadd.f32 %v6584, %v6608
      %v6625 = vadd.f32 %v6585, %v6608
      %v6626 = vadd.f32 %v6586, %v6608
      %v6627 = vadd.f32 %v6587, %v6608
      %v6628 = vadd.f32 %v6588, %v6608
      %v6629 = vadd.f32 %v6589, %v6608
      %v6630 = vadd.f32 %v6590, %v6608
      %v6631 = vadd.f32 %v6591, %v6608
      %v6632 = vadd.f32 %v6592, %v6608
      %v6633 = vadd.f32 %v6593, %v6608
      %v6634 = vadd.f32 %v6594, %v6608
      %v6635 = vadd.f32 %v6595, %v6608
      %v6636 = vadd.f32 %v6596, %v6608
      %v6637 = vadd.f32 %v6597, %v6608
      %v6638 = vadd.f32 %v6598, %v6608
      %v6639 = vadd.f32 %v6599, %v6608
      %v6640 = vadd.f32 %v6600, %v6608
      %v6641 = vadd.f32 %v6601, %v6608
      %v6642 = vadd.f32 %v6602, %v6608
      %v6643 = vadd.f32 %v6603, %v6608
      %v6644 = vadd.f32 %v6604, %v6608
      %v6645 = vadd.f32 %v6605, %v6608
      %v6646 = vadd.f32 %v6610, %v6494
      %v6647 = vadd.f32 %v6611, %v6495
      %v6648 = vadd.f32 %v6612, %v6496
      %v6649 = vadd.f32 %v6613, %v6497
      %v6650 = vadd.f32 %v6614, %v6498
      %v6651 = vadd.f32 %v6615, %v6499
      %v6652 = vadd.f32 %v6616, %v6500
      %v6653 = vadd.f32 %v6617, %v6501
      %v6654 = vadd.f32 %v6618, %v6502
      %v6655 = vadd.f32 %v6619, %v6503
      %v6656 = vadd.f32 %v6620, %v6504
      %v6657 = vadd.f32 %v6621, %v6505
      %v6658 = vadd.f32 %v6622, %v6506
      %v6659 = vadd.f32 %v6623, %v6507
      %v6660 = vadd.f32 %v6624, %v6508
      %v6661 = vadd.f32 %v6625, %v6509
      %v6662 = vadd.f32 %v6626, %v6510
      %v6663 = vadd.f32 %v6627, %v6511
      %v6664 = vadd.f32 %v6628, %v6512
      %v6665 = vadd.f32 %v6629, %v6513
      %v6666 = vadd.f32 %v6630, %v6514
      %v6667 = vadd.f32 %v6631, %v6515
      %v6668 = vadd.f32 %v6632, %v6516
      %v6669 = vadd.f32 %v6633, %v6517
      %v6670 = vadd.f32 %v6634, %v6518
      %v6671 = vadd.f32 %v6635, %v6519
      %v6672 = vadd.f32 %v6636, %v6520
      %v6673 = vadd.f32 %v6637, %v6521
      %v6674 = vadd.f32 %v6638, %v6522
      %v6675 = vadd.f32 %v6639, %v6523
      %v6676 = vadd.f32 %v6640, %v6524
      %v6677 = vadd.f32 %v6641, %v6525
      %v6678 = vadd.f32 %v6642, %v6526
      %v6679 = vadd.f32 %v6643, %v6527
      %v6680 = vadd.f32 %v6644, %v6528
      %v6681 = vadd.f32 %v6645, %v6529
      %v6682 = vmax.f32 %v6646, 0.0
      %v6683 = vmax.f32 %v6647, 0.0
      %v6684 = vmax.f32 %v6648, 0.0
      %v6685 = vmax.f32 %v6649, 0.0
      %v6686 = vmax.f32 %v6650, 0.0
      %v6687 = vmax.f32 %v6651, 0.0
      %v6688 = vmax.f32 %v6652, 0.0
      %v6689 = vmax.f32 %v6653, 0.0
      %v6690 = vmax.f32 %v6654, 0.0
      %v6691 = vmax.f32 %v6655, 0.0
      %v6692 = vmax.f32 %v6656, 0.0
      %v6693 = vmax.f32 %v6657, 0.0
      %v6694 = vmax.f32 %v6658, 0.0
      %v6695 = vmax.f32 %v6659, 0.0
      %v6696 = vmax.f32 %v6660, 0.0
      %v6697 = vmax.f32 %v6661, 0.0
      %v6698 = vmax.f32 %v6662, 0.0
      %v6699 = vmax.f32 %v6663, 0.0
      %v6700 = vmax.f32 %v6664, 0.0
      %v6701 = vmax.f32 %v6665, 0.0
      %v6702 = vmax.f32 %v6666, 0.0
      %v6703 = vmax.f32 %v6667, 0.0
      %v6704 = vmax.f32 %v6668, 0.0
      %v6705 = vmax.f32 %v6669, 0.0
      %v6706 = vmax.f32 %v6670, 0.0
      %v6707 = vmax.f32 %v6671, 0.0
      %v6708 = vmax.f32 %v6672, 0.0
      %v6709 = vmax.f32 %v6673, 0.0
      %v6710 = vmax.f32 %v6674, 0.0
      %v6711 = vmax.f32 %v6675, 0.0
      %v6712 = vmax.f32 %v6676, 0.0
      %v6713 = vmax.f32 %v6677, 0.0
      %v6714 = vmax.f32 %v6678, 0.0
      %v6715 = vmax.f32 %v6679, 0.0
      %v6716 = vmax.f32 %v6680, 0.0
      %v6717 = vmax.f32 %v6681, 0.0
      %6718 = vst.msk [vmem:[%s305] sm:$0xff] %vm389, %v6682
      %6719 = vst.msk [vmem:[%s305 + $0x8] sm:$0xff] %vm389, %v6683
      %6720 = vst.msk [vmem:[%s305 + $0x10] sm:$0xff] %vm389, %v6684
      %6721 = vst.msk [vmem:[%s305 + $0x18] sm:$0xff] %vm389, %v6685
      %6722 = vst.msk [vmem:[%s305 + $0x20] sm:$0xff] %vm389, %v6686
      %6723 = vst.msk [vmem:[%s305 + $0x28] sm:$0xff] %vm389, %v6687
      %6724 = vst.msk [vmem:[%s305 + $0x30] sm:$0xff] %vm389, %v6688
      %6725 = vst.msk [vmem:[%s305 + $0x38] sm:$0xff] %vm389, %v6689
      %6726 = vst.msk [vmem:[%s305 + $0x40] sm:$0xff] %vm389, %v6690
      %6727 = vst.msk [vmem:[%s305 + $0x48] sm:$0xff] %vm389, %v6691
      %6728 = vst.msk [vmem:[%s305 + $0x50] sm:$0xff] %vm389, %v6692
      %6729 = vst.msk [vmem:[%s305 + $0x58] sm:$0xff] %vm389, %v6693
      %6730 = vst.msk [vmem:[%s305 + $0x60] sm:$0xff] %vm389, %v6694
      %6731 = vst.msk [vmem:[%s305 + $0x68] sm:$0xff] %vm389, %v6695
      %6732 = vst.msk [vmem:[%s305 + $0x70] sm:$0xff] %vm389, %v6696
      %6733 = vst.msk [vmem:[%s305 + $0x78] sm:$0xff] %vm389, %v6697
      %6734 = vst.msk [vmem:[%s305 + $0x80] sm:$0xff] %vm389, %v6698
      %6735 = vst.msk [vmem:[%s305 + $0x88] sm:$0xff] %vm389, %v6699
      %6736 = vst.msk [vmem:[%s305 + $0x90] sm:$0xff] %vm389, %v6700
      %6737 = vst.msk [vmem:[%s305 + $0x98] sm:$0xff] %vm389, %v6701
      %6738 = vst.msk [vmem:[%s305 + $0xa0] sm:$0xff] %vm389, %v6702
      %6739 = vst.msk [vmem:[%s305 + $0xa8] sm:$0xff] %vm389, %v6703
      %6740 = vst.msk [vmem:[%s305 + $0xb0] sm:$0xff] %vm389, %v6704
      %6741 = vst.msk [vmem:[%s305 + $0xb8] sm:$0xff] %vm389, %v6705
      %6742 = vst.msk [vmem:[%s305 + $0xc0] sm:$0xff] %vm389, %v6706
      %6743 = vst.msk [vmem:[%s305 + $0xc8] sm:$0xff] %vm389, %v6707
      %6744 = vst.msk [vmem:[%s305 + $0xd0] sm:$0xff] %vm389, %v6708
      %6745 = vst.msk [vmem:[%s305 + $0xd8] sm:$0xff] %vm389, %v6709
      %6746 = vst.msk [vmem:[%s305 + $0xe0] sm:$0xff] %vm389, %v6710
      %6747 = vst.msk [vmem:[%s305 + $0xe8] sm:$0xff] %vm389, %v6711
      %6748 = vst.msk [vmem:[%s305 + $0xf0] sm:$0xff] %vm389, %v6712
      %6749 = vst.msk [vmem:[%s305 + $0xf8] sm:$0xff] %vm389, %v6713
      %6750 = vst.msk [vmem:[%s305 + $0x100] sm:$0xff] %vm389, %v6714
      %6751 = vst.msk [vmem:[%s305 + $0x108] sm:$0xff] %vm389, %v6715
      %6752 = vst.msk [vmem:[%s305 + $0x110] sm:$0xff] %vm389, %v6716
      %6753 = vst.msk [vmem:[%s305 + $0x118] sm:$0xff] %vm389, %v6717
      %p6754 = scmp.lt.s32.totalorder %s19, 1
      %s6755 = scalar_select %p6754, %s19, 1
      %s6756 = smul.addr %s6755, 36
      %s6757 = smul.addr %s6756, 8
      %s6758 = scalar_lea.vmem %s8, %s6757
      // Predicated region
      $region53: #{tpu_custom_call.1} parent=51 // pred_check
        %p6759 = pneg %p210
      $region54: #{tpu_custom_call.1} parent=51 // pred_check_branch
        %6761 = sbr.rel (%p6759) target = $region56
      $region55: #{tpu_custom_call.1} parent=51 // pred_region
        _
      $region56: #{tpu_custom_call.1} parent=51 // pred_fallthru
        _
    $region52: #{tpu_custom_call.1} parent=5 // pred_fallthru
      _
    %p6762 = scmp.le.s32.totalorder 2, %s14
    // Predicated region
    $region57: #{tpu_custom_call.1} parent=5 // pred_check
      %p6763 = pneg %p6762
    $region58: #{tpu_custom_call.1} parent=5 // pred_check_branch
      %6765 = sbr.rel (%p6763) target = $region60
    $region59: #{tpu_custom_call.1} parent=5 // pred_region
      %s6766 = ssub.s32 %s14, 2
      // Predicated region
      $region61: #{tpu_custom_call.1} parent=59 // pred_check
        %p6767 = pneg %p216
      $region62: #{tpu_custom_call.1} parent=59 // pred_check_branch
        %6769 = sbr.rel (%p6767) target = $region64
      $region63: #{tpu_custom_call.1} parent=59 // pred_region
        %p6770 = scmp.lt.s32.totalorder %s20, 1
        %s6771 = scalar_select %p6770, %s20, 1
        %s6772 = smul.addr %s6771, 36
        %s6773 = smul.addr %s6772, 8
        %s6774 = scalar_lea.vmem %s8, %s6773
      $region64: #{tpu_custom_call.1} parent=59 // pred_fallthru
        _
    $region60: #{tpu_custom_call.1} parent=5 // pred_fallthru
      _
  $region6: #{tpu_custom_call.1} parent=0 // loop_footer
    %s18 = sadd.s32 1, %s14
  $region7: #{tpu_custom_call.1} parent=0 // loop_footer_branch
    %13 = sbr.rel target = $region3
  $region8: #{tpu_custom_call.1} parent=0 // loop_exit
    _

</llo_original>
